<compile_context>
chip_gen: v7x
topology: tpu7x:2x2x1
jax: 0.10.0
libtpu: 0.0.40
codegen_flags: <defaults>
</compile_context>

<pallas_src>
import jax
import jax.numpy as jnp
import numpy as np
from jax import lax
from jax.experimental import pallas as pl
from jax.experimental.pallas import tpu as pltpu


# ----------------------------------------------------------------------------
# host-side constant construction
# ----------------------------------------------------------------------------
def _bilinear_matrix(n):
    """[2n, n] bilinear x2 upsample matrix, align_corners=False (PyTorch)."""
    u = np.zeros((2 * n, n), np.float32)
    for o in range(2 * n):
        src = max((o + 0.5) / 2.0 - 0.5, 0.0)
        i0 = int(np.floor(src))
        frac = src - i0
        i1 = min(i0 + 1, n - 1)
        u[o, i0] += 1.0 - frac
        u[o, i1] += frac
    return u


def _shifted_col_upsample_ops(w):
    """[3, W, 2W]: right-multiply operators producing the x2-upsampled row
    already shifted by (dx-1) columns with zero padding, for dx = 0, 1, 2.
    (Folds the conv's column taps into the W-upsample matmul.)"""
    uw_t = _bilinear_matrix(w).T                      # [W, 2W]
    zc = np.zeros((w, 1), np.float32)
    return np.stack(
        [
            np.concatenate([zc, uw_t[:, :-1]], axis=1),   # reads up col x-1
            uw_t,                                          # reads up col x
            np.concatenate([uw_t[:, 1:], zc], axis=1),     # reads up col x+1
        ],
        axis=0,
    )


# ----------------------------------------------------------------------------
# kernel 1: bilinear x2 upsample + 3x3 conv (no bias) + per-image BN partials
# ----------------------------------------------------------------------------
def _upsample_conv_kernel(x_ref, uh_ref, uw_ref, w_ref,
                          conv_ref, sum_ref, sq_ref):
    # x_ref   : [1, C, H, W]     one NCHW image
    # uh_ref  : [H2, H]          bilinear H-upsample matrix (incl. interleave)
    # uw_ref  : [3, W, W2]       dx-shifted bilinear W-upsample matrices
    # w_ref   : [F, C*9] (SMEM)  conv weights, scalar-indexed (k = c*9+dy*3+dx)
    # conv_ref: [1, F, H2, W2]   pre-BN conv output
    # sum_ref : [1, F, 1, 1]     per-image per-channel sum
    # sq_ref  : [1, F, 1, 1]     per-image per-channel sum of squares
    _, C, H, W = x_ref.shape
    F = conv_ref.shape[1]
    H2, W2 = 2 * H, 2 * W

    # leading-dim-only reshape (layout preserving, H % 8 == 0)
    x2d = x_ref[0].reshape(C * H, W)
    uh = uh_ref[...]

    # W-direction: upsample + 2x interleave + conv column tap, one matmul per
    # dx tap, batched over all channels/rows.  -> [C, H, W2] each.
    xw = [
        jnp.dot(x2d, uw_ref[dx], preferred_element_type=jnp.float32)
        .reshape(C, H, W2)
        for dx in range(3)
    ]

    zrow = jnp.zeros((1, W2), jnp.float32)
    accs = [jnp.zeros((H2, W2), jnp.float32) for _ in range(F)]

    for c in range(C):
        for dx in range(3):
            # H-direction upsample (+ row interleave) of this channel/tap.
            base = jnp.dot(uh, xw[dx][c],
                           preferred_element_type=jnp.float32)     # [H2, W2]
            # conv row (dy) taps: cheap sublane shifts with zero rows,
            # hoisted out of the per-output-channel loop.
            taps = (
                jnp.concatenate([zrow, base[:-1]], axis=0),   # dy=0 -> y-1
                base,                                          # dy=1 -> y
                jnp.concatenate([base[1:], zrow], axis=0),     # dy=2 -> y+1
            )
            for dy in range(3):
                t = taps[dy]
                k = c * 9 + dy * 3 + dx
                # pure-VPU conv: scalar weight (SMEM) x lane-dense plane
                for f in range(F):
                    accs[f] = accs[f] + w_ref[f, k] * t

    acc = jnp.stack(accs, axis=0)                                  # [F, H2, W2]
    conv_ref[0] = acc

    # per-image BatchNorm partial statistics (combined across images in the
    # wrapper; this keeps the batch grid axis truly parallel).
    s_w = jnp.sum(acc, axis=2, keepdims=True)                      # [F, H2, 1]
    sum_ref[0] = jnp.sum(s_w, axis=1, keepdims=True)               # [F, 1, 1]
    q_w = jnp.sum(acc * acc, axis=2, keepdims=True)
    sq_ref[0] = jnp.sum(q_w, axis=1, keepdims=True)


# ----------------------------------------------------------------------------
# kernel 2: BatchNorm affine (precomputed scale/shift) + ReLU, lane-dense
# ----------------------------------------------------------------------------
def _bn_relu_kernel(y_ref, scale_ref, shift_ref, out_ref):
    # y_ref   : [1, F, H2*W2]   pre-BN conv activations (1024-lane dense)
    # scale   : [F, 1]          gamma * rsqrt(var + eps)
    # shift   : [F, 1]          beta - mean * scale
    # out_ref : [1, F, H2*W2]
    y = y_ref[0]
    out_ref[0] = jnp.maximum(y * scale_ref[...] + shift_ref[...], 0.0)


# ----------------------------------------------------------------------------
# wrapper: NCHW in / NCHW out (matches the PyTorch module)
# ----------------------------------------------------------------------------
def new_block_up(x_nchw, conv_w, conv_b, bn_gamma, bn_beta, eps=1e-5):
    N, C, H, W = x_nchw.shape
    F = conv_w.shape[0]
    H2, W2 = 2 * H, 2 * W
    assert H % 8 == 0, "H must be a multiple of 8 for the layout-free reshape"

    x = x_nchw.astype(jnp.float32)
    uh = jnp.asarray(_bilinear_matrix(H))                  # [H2, H]
    uw = jnp.asarray(_shifted_col_upsample_ops(W))         # [3, W, W2]
    # conv weights for SMEM scalar access: w_s[f, c*9 + dy*3 + dx]
    w_s = conv_w.astype(jnp.float32).reshape(F, C * 9)
    # NOTE: conv_b is intentionally unused - training-mode BatchNorm subtracts
    # the per-channel mean, which cancels the conv bias exactly.
    del conv_b

    # ---- pass 1: upsample + conv + per-image BN partial sums --------------
    conv_out, s1, s2 = pl.pallas_call(
        _upsample_conv_kernel,
        grid=(N,),
        in_specs=[
            pl.BlockSpec((1, C, H, W), lambda n: (n, 0, 0, 0)),
            pl.BlockSpec((H2, H), lambda n: (0, 0)),
            pl.BlockSpec((3, W, W2), lambda n: (0, 0, 0)),
            pl.BlockSpec(memory_space=pltpu.MemorySpace.SMEM),
        ],
        out_specs=(
            pl.BlockSpec((1, F, H2, W2), lambda n: (n, 0, 0, 0)),
            pl.BlockSpec((1, F, 1, 1), lambda n: (n, 0, 0, 0)),
            pl.BlockSpec((1, F, 1, 1), lambda n: (n, 0, 0, 0)),
        ),
        out_shape=(
            jax.ShapeDtypeStruct((N, F, H2, W2), jnp.float32),
            jax.ShapeDtypeStruct((N, F, 1, 1), jnp.float32),
            jax.ShapeDtypeStruct((N, F, 1, 1), jnp.float32),
        ),
        compiler_params=pltpu.CompilerParams(
            dimension_semantics=("parallel",)),
    )(x, uh, uw, w_s)

    # ---- combine BN statistics (tiny [F]-sized math, plain JAX) -----------
    cnt = float(N * H2 * W2)
    tot = jnp.sum(s1, axis=0).reshape(F)
    tot_sq = jnp.sum(s2, axis=0).reshape(F)
    mean = tot / cnt
    var = tot_sq / cnt - mean * mean               # biased (training mode)
    scale = bn_gamma.astype(jnp.float32) * lax.rsqrt(var + eps)
    shift = bn_beta.astype(jnp.float32) - mean * scale

    # free metadata reshape: minor dim becomes H2*W2 (1024) -> dense stores
    conv_flat = conv_out.reshape(N, F, H2 * W2)

    # ---- pass 2: normalize + ReLU (lane-dense) -----------------------------
    out_flat = pl.pallas_call(
        _bn_relu_kernel,
        grid=(N,),
        in_specs=[
            pl.BlockSpec((1, F, H2 * W2), lambda n: (n, 0, 0)),
            pl.BlockSpec((F, 1), lambda n: (0, 0)),
            pl.BlockSpec((F, 1), lambda n: (0, 0)),
        ],
        out_specs=pl.BlockSpec((1, F, H2 * W2), lambda n: (n, 0, 0)),
        out_shape=jax.ShapeDtypeStruct((N, F, H2 * W2), jnp.float32),
        compiler_params=pltpu.CompilerParams(
            dimension_semantics=("parallel",)),
    )(conv_flat, scale.reshape(F, 1), shift.reshape(F, 1))

    # free metadata reshape back to NCHW
    return out_flat.reshape(N, F, H2, W2)

    # TODO(synk): for large H, add row-block tiling with a 1-row halo in the
    # pass-1 BlockSpecs (and batch the per-channel H-upsample matmul) to keep
    # the per-step working set within v7x's 64 MiB VMEM.


# ----------------------------------------------------------------------------
# pure-JAX reference (sanity check only)
# ----------------------------------------------------------------------------
def _reference(x_nchw, conv_w, conv_b, bn_gamma, bn_beta, eps=1e-5):
    N, C, H, W = x_nchw.shape
    uh = jnp.asarray(_bilinear_matrix(H))
    uw = jnp.asarray(_bilinear_matrix(W))
    up = jnp.einsum('ph,qw,nchw->ncpq', uh, uw, x_nchw)
    conv = lax.conv_general_dilated(
        up, conv_w, window_strides=(1, 1), padding=((1, 1), (1, 1)),
        dimension_numbers=('NCHW', 'OIHW', 'NCHW'))
    conv = conv + conv_b[None, :, None, None]
    mean = conv.mean(axis=(0, 2, 3), keepdims=True)
    var = ((conv - mean) ** 2).mean(axis=(0, 2, 3), keepdims=True)
    y = (conv - mean) * lax.rsqrt(var + eps)
    y = y * bn_gamma[None, :, None, None] + bn_beta[None, :, None, None]
    return jnp.maximum(y, 0.0)


if __name__ == "__main__":
    N, C, H, W, F = 2, 4, 16, 16, 8   # in_channels=4, nFilters=8
    key = jax.random.PRNGKey(0)
    k1, k2, k3, k4, k5 = jax.random.split(key, 5)

    x = jax.random.normal(k1, (N, C, H, W), jnp.float32)
    conv_w = 0.2 * jax.random.normal(k2, (F, C, 3, 3), jnp.float32)
    conv_b = 0.1 * jax.random.normal(k3, (F,), jnp.float32)
    bn_gamma = 1.0 + 0.1 * jax.random.normal(k4, (F,), jnp.float32)
    bn_beta = 0.1 * jax.random.normal(k5, (F,), jnp.float32)

    out = new_block_up(x, conv_w, conv_b, bn_gamma, bn_beta)
    out = jax.block_until_ready(out)

    ref = _reference(x, conv_w, conv_b, bn_gamma, bn_beta)
    np.testing.assert_allclose(np.asarray(out), np.asarray(ref),
                               rtol=1e-2, atol=1e-2)
    assert out.shape == (N, F, 2 * H, 2 * W)
    print("KERNEL_OK")
</pallas_src>

<mosaic_0001>
module attributes {stable_mosaic.version = 11 : i64} {
  func.func @_upsample_conv_kernel(%arg0: i32, %arg1: memref<1x4x16x16xf32, #tpu.memory_space<vmem>>, %arg2: memref<32x16xf32, #tpu.memory_space<vmem>>, %arg3: memref<3x16x32xf32, #tpu.memory_space<vmem>>, %arg4: memref<8x36xf32, #tpu.memory_space<smem>>, %arg5: memref<1x8x32x32xf32, #tpu.memory_space<vmem>>, %arg6: memref<1x8x1x1xf32, #tpu.memory_space<vmem>>, %arg7: memref<1x8x1x1xf32, #tpu.memory_space<vmem>>) attributes {dimension_semantics = [#tpu.dimension_semantics<parallel>], iteration_bounds = array<i64: 2>, scalar_prefetch = 0 : i64, scratch_operands = 0 : i64, tpu.core_type = #tpu.core_type<tc>, window_params = [{transform_indices = @transform_0, window_bounds = array<i64: 1, 4, 16, 16>}, {pipeline_mode = #tpu.pipeline_mode<synchronous>, transform_indices = @transform_1, window_bounds = array<i64: 32, 16>}, {pipeline_mode = #tpu.pipeline_mode<synchronous>, transform_indices = @transform_2, window_bounds = array<i64: 3, 16, 32>}, {transform_indices = @transform_3, window_bounds = array<i64: 8, 36>}, {transform_indices = @transform_4, window_bounds = array<i64: 1, 8, 32, 32>}, {transform_indices = @transform_5, window_bounds = array<i64: 1, 8, 1, 1>}, {transform_indices = @transform_6, window_bounds = array<i64: 1, 8, 1, 1>}]} {
    %c0 = arith.constant 0 : index
    %c0_0 = arith.constant 0 : index
    %c0_1 = arith.constant 0 : index
    %c0_2 = arith.constant 0 : index
    %0 = vector.load %arg1[%c0, %c0_0, %c0_1, %c0_2] : memref<1x4x16x16xf32, #tpu.memory_space<vmem>>, vector<1x4x16x16xf32>
    %1 = vector.shape_cast %0 : vector<1x4x16x16xf32> to vector<4x16x16xf32>
    %2 = vector.shape_cast %1 : vector<4x16x16xf32> to vector<64x16xf32>
    %c0_3 = arith.constant 0 : index
    %c0_4 = arith.constant 0 : index
    %3 = vector.load %arg2[%c0_3, %c0_4] : memref<32x16xf32, #tpu.memory_space<vmem>>, vector<32x16xf32>
    %c0_5 = arith.constant 0 : index
    %c0_6 = arith.constant 0 : index
    %c0_7 = arith.constant 0 : index
    %4 = vector.load %arg3[%c0_5, %c0_6, %c0_7] : memref<3x16x32xf32, #tpu.memory_space<vmem>>, vector<1x16x32xf32>
    %5 = vector.shape_cast %4 : vector<1x16x32xf32> to vector<16x32xf32>
    %cst = arith.constant dense<0.000000e+00> : vector<64x32xf32>
    %6 = tpu.matmul %2, %5, %cst {dimension_numbers = #tpu.dot_dimension_numbers<[1], [0], [0], [1], [0, 0, 1, 1], [], []>} : vector<64x16xf32>, vector<16x32xf32>, vector<64x32xf32> -> vector<64x32xf32>
    %7 = vector.shape_cast %6 : vector<64x32xf32> to vector<4x16x32xf32>
    %c1 = arith.constant 1 : index
    %c0_8 = arith.constant 0 : index
    %c0_9 = arith.constant 0 : index
    %8 = vector.load %arg3[%c1, %c0_8, %c0_9] : memref<3x16x32xf32, #tpu.memory_space<vmem>>, vector<1x16x32xf32>
    %9 = vector.shape_cast %8 : vector<1x16x32xf32> to vector<16x32xf32>
    %cst_10 = arith.constant dense<0.000000e+00> : vector<64x32xf32>
    %10 = tpu.matmul %2, %9, %cst_10 {dimension_numbers = #tpu.dot_dimension_numbers<[1], [0], [0], [1], [0, 0, 1, 1], [], []>} : vector<64x16xf32>, vector<16x32xf32>, vector<64x32xf32> -> vector<64x32xf32>
    %11 = vector.shape_cast %10 : vector<64x32xf32> to vector<4x16x32xf32>
    %c2 = arith.constant 2 : index
    %c0_11 = arith.constant 0 : index
    %c0_12 = arith.constant 0 : index
    %12 = vector.load %arg3[%c2, %c0_11, %c0_12] : memref<3x16x32xf32, #tpu.memory_space<vmem>>, vector<1x16x32xf32>
    %13 = vector.shape_cast %12 : vector<1x16x32xf32> to vector<16x32xf32>
    %cst_13 = arith.constant dense<0.000000e+00> : vector<64x32xf32>
    %14 = tpu.matmul %2, %13, %cst_13 {dimension_numbers = #tpu.dot_dimension_numbers<[1], [0], [0], [1], [0, 0, 1, 1], [], []>} : vector<64x16xf32>, vector<16x32xf32>, vector<64x32xf32> -> vector<64x32xf32>
    %15 = vector.shape_cast %14 : vector<64x32xf32> to vector<4x16x32xf32>
    %cst_14 = arith.constant 0.000000e+00 : f32
    %16 = vector.broadcast %cst_14 : f32 to vector<1x32xf32>
    %cst_15 = arith.constant 0.000000e+00 : f32
    %17 = vector.broadcast %cst_15 : f32 to vector<32x32xf32>
    %cst_16 = arith.constant 0.000000e+00 : f32
    %18 = vector.broadcast %cst_16 : f32 to vector<32x32xf32>
    %cst_17 = arith.constant 0.000000e+00 : f32
    %19 = vector.broadcast %cst_17 : f32 to vector<32x32xf32>
    %cst_18 = arith.constant 0.000000e+00 : f32
    %20 = vector.broadcast %cst_18 : f32 to vector<32x32xf32>
    %cst_19 = arith.constant 0.000000e+00 : f32
    %21 = vector.broadcast %cst_19 : f32 to vector<32x32xf32>
    %cst_20 = arith.constant 0.000000e+00 : f32
    %22 = vector.broadcast %cst_20 : f32 to vector<32x32xf32>
    %cst_21 = arith.constant 0.000000e+00 : f32
    %23 = vector.broadcast %cst_21 : f32 to vector<32x32xf32>
    %cst_22 = arith.constant 0.000000e+00 : f32
    %24 = vector.broadcast %cst_22 : f32 to vector<32x32xf32>
    %25 = vector.extract_strided_slice %7 {offsets = [0, 0, 0], sizes = [1, 16, 32], strides = [1, 1, 1]} : vector<4x16x32xf32> to vector<1x16x32xf32>
    %26 = vector.shape_cast %25 : vector<1x16x32xf32> to vector<16x32xf32>
    %cst_23 = arith.constant dense<0.000000e+00> : vector<32x32xf32>
    %27 = tpu.matmul %3, %26, %cst_23 {dimension_numbers = #tpu.dot_dimension_numbers<[1], [0], [0], [1], [0, 0, 1, 1], [], []>} : vector<32x16xf32>, vector<16x32xf32>, vector<32x32xf32> -> vector<32x32xf32>
    %28 = vector.extract_strided_slice %27 {offsets = [0, 0], sizes = [31, 32], strides = [1, 1]} : vector<32x32xf32> to vector<31x32xf32>
    %29 = tpu.concatenate %16, %28 in 0 : vector<1x32xf32>, vector<31x32xf32> -> vector<32x32xf32>
    %30 = vector.extract_strided_slice %27 {offsets = [1, 0], sizes = [31, 32], strides = [1, 1]} : vector<32x32xf32> to vector<31x32xf32>
    %31 = tpu.concatenate %30, %16 in 0 : vector<31x32xf32>, vector<1x32xf32> -> vector<32x32xf32>
    %c0_24 = arith.constant 0 : index
    %c0_25 = arith.constant 0 : index
    %32 = memref.load %arg4[%c0_24, %c0_25] : memref<8x36xf32, #tpu.memory_space<smem>>
    %33 = vector.broadcast %32 : f32 to vector<32x32xf32>
    %34 = arith.mulf %33, %29 : vector<32x32xf32>
    %35 = arith.addf %17, %34 : vector<32x32xf32>
    %c1_26 = arith.constant 1 : index
    %c0_27 = arith.constant 0 : index
    %36 = memref.load %arg4[%c1_26, %c0_27] : memref<8x36xf32, #tpu.memory_space<smem>>
    %37 = vector.broadcast %36 : f32 to vector<32x32xf32>
    %38 = arith.mulf %37, %29 : vector<32x32xf32>
    %39 = arith.addf %18, %38 : vector<32x32xf32>
    %c2_28 = arith.constant 2 : index
    %c0_29 = arith.constant 0 : index
    %40 = memref.load %arg4[%c2_28, %c0_29] : memref<8x36xf32, #tpu.memory_space<smem>>
    %41 = vector.broadcast %40 : f32 to vector<32x32xf32>
    %42 = arith.mulf %41, %29 : vector<32x32xf32>
    %43 = arith.addf %19, %42 : vector<32x32xf32>
    %c3 = arith.constant 3 : index
    %c0_30 = arith.constant 0 : index
    %44 = memref.load %arg4[%c3, %c0_30] : memref<8x36xf32, #tpu.memory_space<smem>>
    %45 = vector.broadcast %44 : f32 to vector<32x32xf32>
    %46 = arith.mulf %45, %29 : vector<32x32xf32>
    %47 = arith.addf %20, %46 : vector<32x32xf32>
    %c4 = arith.constant 4 : index
    %c0_31 = arith.constant 0 : index
    %48 = memref.load %arg4[%c4, %c0_31] : memref<8x36xf32, #tpu.memory_space<smem>>
    %49 = vector.broadcast %48 : f32 to vector<32x32xf32>
    %50 = arith.mulf %49, %29 : vector<32x32xf32>
    %51 = arith.addf %21, %50 : vector<32x32xf32>
    %c5 = arith.constant 5 : index
    %c0_32 = arith.constant 0 : index
    %52 = memref.load %arg4[%c5, %c0_32] : memref<8x36xf32, #tpu.memory_space<smem>>
    %53 = vector.broadcast %52 : f32 to vector<32x32xf32>
    %54 = arith.mulf %53, %29 : vector<32x32xf32>
    %55 = arith.addf %22, %54 : vector<32x32xf32>
    %c6 = arith.constant 6 : index
    %c0_33 = arith.constant 0 : index
    %56 = memref.load %arg4[%c6, %c0_33] : memref<8x36xf32, #tpu.memory_space<smem>>
    %57 = vector.broadcast %56 : f32 to vector<32x32xf32>
    %58 = arith.mulf %57, %29 : vector<32x32xf32>
    %59 = arith.addf %23, %58 : vector<32x32xf32>
    %c7 = arith.constant 7 : index
    %c0_34 = arith.constant 0 : index
    %60 = memref.load %arg4[%c7, %c0_34] : memref<8x36xf32, #tpu.memory_space<smem>>
    %61 = vector.broadcast %60 : f32 to vector<32x32xf32>
    %62 = arith.mulf %61, %29 : vector<32x32xf32>
    %63 = arith.addf %24, %62 : vector<32x32xf32>
    %c0_35 = arith.constant 0 : index
    %c3_36 = arith.constant 3 : index
    %64 = memref.load %arg4[%c0_35, %c3_36] : memref<8x36xf32, #tpu.memory_space<smem>>
    %65 = vector.broadcast %64 : f32 to vector<32x32xf32>
    %66 = arith.mulf %65, %27 : vector<32x32xf32>
    %67 = arith.addf %35, %66 : vector<32x32xf32>
    %c1_37 = arith.constant 1 : index
    %c3_38 = arith.constant 3 : index
    %68 = memref.load %arg4[%c1_37, %c3_38] : memref<8x36xf32, #tpu.memory_space<smem>>
    %69 = vector.broadcast %68 : f32 to vector<32x32xf32>
    %70 = arith.mulf %69, %27 : vector<32x32xf32>
    %71 = arith.addf %39, %70 : vector<32x32xf32>
    %c2_39 = arith.constant 2 : index
    %c3_40 = arith.constant 3 : index
    %72 = memref.load %arg4[%c2_39, %c3_40] : memref<8x36xf32, #tpu.memory_space<smem>>
    %73 = vector.broadcast %72 : f32 to vector<32x32xf32>
    %74 = arith.mulf %73, %27 : vector<32x32xf32>
    %75 = arith.addf %43, %74 : vector<32x32xf32>
    %c3_41 = arith.constant 3 : index
    %c3_42 = arith.constant 3 : index
    %76 = memref.load %arg4[%c3_41, %c3_42] : memref<8x36xf32, #tpu.memory_space<smem>>
    %77 = vector.broadcast %76 : f32 to vector<32x32xf32>
    %78 = arith.mulf %77, %27 : vector<32x32xf32>
    %79 = arith.addf %47, %78 : vector<32x32xf32>
    %c4_43 = arith.constant 4 : index
    %c3_44 = arith.constant 3 : index
    %80 = memref.load %arg4[%c4_43, %c3_44] : memref<8x36xf32, #tpu.memory_space<smem>>
    %81 = vector.broadcast %80 : f32 to vector<32x32xf32>
    %82 = arith.mulf %81, %27 : vector<32x32xf32>
    %83 = arith.addf %51, %82 : vector<32x32xf32>
    %c5_45 = arith.constant 5 : index
    %c3_46 = arith.constant 3 : index
    %84 = memref.load %arg4[%c5_45, %c3_46] : memref<8x36xf32, #tpu.memory_space<smem>>
    %85 = vector.broadcast %84 : f32 to vector<32x32xf32>
    %86 = arith.mulf %85, %27 : vector<32x32xf32>
    %87 = arith.addf %55, %86 : vector<32x32xf32>
    %c6_47 = arith.constant 6 : index
    %c3_48 = arith.constant 3 : index
    %88 = memref.load %arg4[%c6_47, %c3_48] : memref<8x36xf32, #tpu.memory_space<smem>>
    %89 = vector.broadcast %88 : f32 to vector<32x32xf32>
    %90 = arith.mulf %89, %27 : vector<32x32xf32>
    %91 = arith.addf %59, %90 : vector<32x32xf32>
    %c7_49 = arith.constant 7 : index
    %c3_50 = arith.constant 3 : index
    %92 = memref.load %arg4[%c7_49, %c3_50] : memref<8x36xf32, #tpu.memory_space<smem>>
    %93 = vector.broadcast %92 : f32 to vector<32x32xf32>
    %94 = arith.mulf %93, %27 : vector<32x32xf32>
    %95 = arith.addf %63, %94 : vector<32x32xf32>
    %c0_51 = arith.constant 0 : index
    %c6_52 = arith.constant 6 : index
    %96 = memref.load %arg4[%c0_51, %c6_52] : memref<8x36xf32, #tpu.memory_space<smem>>
    %97 = vector.broadcast %96 : f32 to vector<32x32xf32>
    %98 = arith.mulf %97, %31 : vector<32x32xf32>
    %99 = arith.addf %67, %98 : vector<32x32xf32>
    %c1_53 = arith.constant 1 : index
    %c6_54 = arith.constant 6 : index
    %100 = memref.load %arg4[%c1_53, %c6_54] : memref<8x36xf32, #tpu.memory_space<smem>>
    %101 = vector.broadcast %100 : f32 to vector<32x32xf32>
    %102 = arith.mulf %101, %31 : vector<32x32xf32>
    %103 = arith.addf %71, %102 : vector<32x32xf32>
    %c2_55 = arith.constant 2 : index
    %c6_56 = arith.constant 6 : index
    %104 = memref.load %arg4[%c2_55, %c6_56] : memref<8x36xf32, #tpu.memory_space<smem>>
    %105 = vector.broadcast %104 : f32 to vector<32x32xf32>
    %106 = arith.mulf %105, %31 : vector<32x32xf32>
    %107 = arith.addf %75, %106 : vector<32x32xf32>
    %c3_57 = arith.constant 3 : index
    %c6_58 = arith.constant 6 : index
    %108 = memref.load %arg4[%c3_57, %c6_58] : memref<8x36xf32, #tpu.memory_space<smem>>
    %109 = vector.broadcast %108 : f32 to vector<32x32xf32>
    %110 = arith.mulf %109, %31 : vector<32x32xf32>
    %111 = arith.addf %79, %110 : vector<32x32xf32>
    %c4_59 = arith.constant 4 : index
    %c6_60 = arith.constant 6 : index
    %112 = memref.load %arg4[%c4_59, %c6_60] : memref<8x36xf32, #tpu.memory_space<smem>>
    %113 = vector.broadcast %112 : f32 to vector<32x32xf32>
    %114 = arith.mulf %113, %31 : vector<32x32xf32>
    %115 = arith.addf %83, %114 : vector<32x32xf32>
    %c5_61 = arith.constant 5 : index
    %c6_62 = arith.constant 6 : index
    %116 = memref.load %arg4[%c5_61, %c6_62] : memref<8x36xf32, #tpu.memory_space<smem>>
    %117 = vector.broadcast %116 : f32 to vector<32x32xf32>
    %118 = arith.mulf %117, %31 : vector<32x32xf32>
    %119 = arith.addf %87, %118 : vector<32x32xf32>
    %c6_63 = arith.constant 6 : index
    %c6_64 = arith.constant 6 : index
    %120 = memref.load %arg4[%c6_63, %c6_64] : memref<8x36xf32, #tpu.memory_space<smem>>
    %121 = vector.broadcast %120 : f32 to vector<32x32xf32>
    %122 = arith.mulf %121, %31 : vector<32x32xf32>
    %123 = arith.addf %91, %122 : vector<32x32xf32>
    %c7_65 = arith.constant 7 : index
    %c6_66 = arith.constant 6 : index
    %124 = memref.load %arg4[%c7_65, %c6_66] : memref<8x36xf32, #tpu.memory_space<smem>>
    %125 = vector.broadcast %124 : f32 to vector<32x32xf32>
    %126 = arith.mulf %125, %31 : vector<32x32xf32>
    %127 = arith.addf %95, %126 : vector<32x32xf32>
    %128 = vector.extract_strided_slice %11 {offsets = [0, 0, 0], sizes = [1, 16, 32], strides = [1, 1, 1]} : vector<4x16x32xf32> to vector<1x16x32xf32>
    %129 = vector.shape_cast %128 : vector<1x16x32xf32> to vector<16x32xf32>
    %cst_67 = arith.constant dense<0.000000e+00> : vector<32x32xf32>
    %130 = tpu.matmul %3, %129, %cst_67 {dimension_numbers = #tpu.dot_dimension_numbers<[1], [0], [0], [1], [0, 0, 1, 1], [], []>} : vector<32x16xf32>, vector<16x32xf32>, vector<32x32xf32> -> vector<32x32xf32>
    %131 = vector.extract_strided_slice %130 {offsets = [0, 0], sizes = [31, 32], strides = [1, 1]} : vector<32x32xf32> to vector<31x32xf32>
    %132 = tpu.concatenate %16, %131 in 0 : vector<1x32xf32>, vector<31x32xf32> -> vector<32x32xf32>
    %133 = vector.extract_strided_slice %130 {offsets = [1, 0], sizes = [31, 32], strides = [1, 1]} : vector<32x32xf32> to vector<31x32xf32>
    %134 = tpu.concatenate %133, %16 in 0 : vector<31x32xf32>, vector<1x32xf32> -> vector<32x32xf32>
    %c0_68 = arith.constant 0 : index
    %c1_69 = arith.constant 1 : index
    %135 = memref.load %arg4[%c0_68, %c1_69] : memref<8x36xf32, #tpu.memory_space<smem>>
    %136 = vector.broadcast %135 : f32 to vector<32x32xf32>
    %137 = arith.mulf %136, %132 : vector<32x32xf32>
    %138 = arith.addf %99, %137 : vector<32x32xf32>
    %c1_70 = arith.constant 1 : index
    %c1_71 = arith.constant 1 : index
    %139 = memref.load %arg4[%c1_70, %c1_71] : memref<8x36xf32, #tpu.memory_space<smem>>
    %140 = vector.broadcast %139 : f32 to vector<32x32xf32>
    %141 = arith.mulf %140, %132 : vector<32x32xf32>
    %142 = arith.addf %103, %141 : vector<32x32xf32>
    %c2_72 = arith.constant 2 : index
    %c1_73 = arith.constant 1 : index
    %143 = memref.load %arg4[%c2_72, %c1_73] : memref<8x36xf32, #tpu.memory_space<smem>>
    %144 = vector.broadcast %143 : f32 to vector<32x32xf32>
    %145 = arith.mulf %144, %132 : vector<32x32xf32>
    %146 = arith.addf %107, %145 : vector<32x32xf32>
    %c3_74 = arith.constant 3 : index
    %c1_75 = arith.constant 1 : index
    %147 = memref.load %arg4[%c3_74, %c1_75] : memref<8x36xf32, #tpu.memory_space<smem>>
    %148 = vector.broadcast %147 : f32 to vector<32x32xf32>
    %149 = arith.mulf %148, %132 : vector<32x32xf32>
    %150 = arith.addf %111, %149 : vector<32x32xf32>
    %c4_76 = arith.constant 4 : index
    %c1_77 = arith.constant 1 : index
    %151 = memref.load %arg4[%c4_76, %c1_77] : memref<8x36xf32, #tpu.memory_space<smem>>
    %152 = vector.broadcast %151 : f32 to vector<32x32xf32>
    %153 = arith.mulf %152, %132 : vector<32x32xf32>
    %154 = arith.addf %115, %153 : vector<32x32xf32>
    %c5_78 = arith.constant 5 : index
    %c1_79 = arith.constant 1 : index
    %155 = memref.load %arg4[%c5_78, %c1_79] : memref<8x36xf32, #tpu.memory_space<smem>>
    %156 = vector.broadcast %155 : f32 to vector<32x32xf32>
    %157 = arith.mulf %156, %132 : vector<32x32xf32>
    %158 = arith.addf %119, %157 : vector<32x32xf32>
    %c6_80 = arith.constant 6 : index
    %c1_81 = arith.constant 1 : index
    %159 = memref.load %arg4[%c6_80, %c1_81] : memref<8x36xf32, #tpu.memory_space<smem>>
    %160 = vector.broadcast %159 : f32 to vector<32x32xf32>
    %161 = arith.mulf %160, %132 : vector<32x32xf32>
    %162 = arith.addf %123, %161 : vector<32x32xf32>
    %c7_82 = arith.constant 7 : index
    %c1_83 = arith.constant 1 : index
    %163 = memref.load %arg4[%c7_82, %c1_83] : memref<8x36xf32, #tpu.memory_space<smem>>
    %164 = vector.broadcast %163 : f32 to vector<32x32xf32>
    %165 = arith.mulf %164, %132 : vector<32x32xf32>
    %166 = arith.addf %127, %165 : vector<32x32xf32>
    %c0_84 = arith.constant 0 : index
    %c4_85 = arith.constant 4 : index
    %167 = memref.load %arg4[%c0_84, %c4_85] : memref<8x36xf32, #tpu.memory_space<smem>>
    %168 = vector.broadcast %167 : f32 to vector<32x32xf32>
    %169 = arith.mulf %168, %130 : vector<32x32xf32>
    %170 = arith.addf %138, %169 : vector<32x32xf32>
    %c1_86 = arith.constant 1 : index
    %c4_87 = arith.constant 4 : index
    %171 = memref.load %arg4[%c1_86, %c4_87] : memref<8x36xf32, #tpu.memory_space<smem>>
    %172 = vector.broadcast %171 : f32 to vector<32x32xf32>
    %173 = arith.mulf %172, %130 : vector<32x32xf32>
    %174 = arith.addf %142, %173 : vector<32x32xf32>
    %c2_88 = arith.constant 2 : index
    %c4_89 = arith.constant 4 : index
    %175 = memref.load %arg4[%c2_88, %c4_89] : memref<8x36xf32, #tpu.memory_space<smem>>
    %176 = vector.broadcast %175 : f32 to vector<32x32xf32>
    %177 = arith.mulf %176, %130 : vector<32x32xf32>
    %178 = arith.addf %146, %177 : vector<32x32xf32>
    %c3_90 = arith.constant 3 : index
    %c4_91 = arith.constant 4 : index
    %179 = memref.load %arg4[%c3_90, %c4_91] : memref<8x36xf32, #tpu.memory_space<smem>>
    %180 = vector.broadcast %179 : f32 to vector<32x32xf32>
    %181 = arith.mulf %180, %130 : vector<32x32xf32>
    %182 = arith.addf %150, %181 : vector<32x32xf32>
    %c4_92 = arith.constant 4 : index
    %c4_93 = arith.constant 4 : index
    %183 = memref.load %arg4[%c4_92, %c4_93] : memref<8x36xf32, #tpu.memory_space<smem>>
    %184 = vector.broadcast %183 : f32 to vector<32x32xf32>
    %185 = arith.mulf %184, %130 : vector<32x32xf32>
    %186 = arith.addf %154, %185 : vector<32x32xf32>
    %c5_94 = arith.constant 5 : index
    %c4_95 = arith.constant 4 : index
    %187 = memref.load %arg4[%c5_94, %c4_95] : memref<8x36xf32, #tpu.memory_space<smem>>
    %188 = vector.broadcast %187 : f32 to vector<32x32xf32>
    %189 = arith.mulf %188, %130 : vector<32x32xf32>
    %190 = arith.addf %158, %189 : vector<32x32xf32>
    %c6_96 = arith.constant 6 : index
    %c4_97 = arith.constant 4 : index
    %191 = memref.load %arg4[%c6_96, %c4_97] : memref<8x36xf32, #tpu.memory_space<smem>>
    %192 = vector.broadcast %191 : f32 to vector<32x32xf32>
    %193 = arith.mulf %192, %130 : vector<32x32xf32>
    %194 = arith.addf %162, %193 : vector<32x32xf32>
    %c7_98 = arith.constant 7 : index
    %c4_99 = arith.constant 4 : index
    %195 = memref.load %arg4[%c7_98, %c4_99] : memref<8x36xf32, #tpu.memory_space<smem>>
    %196 = vector.broadcast %195 : f32 to vector<32x32xf32>
    %197 = arith.mulf %196, %130 : vector<32x32xf32>
    %198 = arith.addf %166, %197 : vector<32x32xf32>
    %c0_100 = arith.constant 0 : index
    %c7_101 = arith.constant 7 : index
    %199 = memref.load %arg4[%c0_100, %c7_101] : memref<8x36xf32, #tpu.memory_space<smem>>
    %200 = vector.broadcast %199 : f32 to vector<32x32xf32>
    %201 = arith.mulf %200, %134 : vector<32x32xf32>
    %202 = arith.addf %170, %201 : vector<32x32xf32>
    %c1_102 = arith.constant 1 : index
    %c7_103 = arith.constant 7 : index
    %203 = memref.load %arg4[%c1_102, %c7_103] : memref<8x36xf32, #tpu.memory_space<smem>>
    %204 = vector.broadcast %203 : f32 to vector<32x32xf32>
    %205 = arith.mulf %204, %134 : vector<32x32xf32>
    %206 = arith.addf %174, %205 : vector<32x32xf32>
    %c2_104 = arith.constant 2 : index
    %c7_105 = arith.constant 7 : index
    %207 = memref.load %arg4[%c2_104, %c7_105] : memref<8x36xf32, #tpu.memory_space<smem>>
    %208 = vector.broadcast %207 : f32 to vector<32x32xf32>
    %209 = arith.mulf %208, %134 : vector<32x32xf32>
    %210 = arith.addf %178, %209 : vector<32x32xf32>
    %c3_106 = arith.constant 3 : index
    %c7_107 = arith.constant 7 : index
    %211 = memref.load %arg4[%c3_106, %c7_107] : memref<8x36xf32, #tpu.memory_space<smem>>
    %212 = vector.broadcast %211 : f32 to vector<32x32xf32>
    %213 = arith.mulf %212, %134 : vector<32x32xf32>
    %214 = arith.addf %182, %213 : vector<32x32xf32>
    %c4_108 = arith.constant 4 : index
    %c7_109 = arith.constant 7 : index
    %215 = memref.load %arg4[%c4_108, %c7_109] : memref<8x36xf32, #tpu.memory_space<smem>>
    %216 = vector.broadcast %215 : f32 to vector<32x32xf32>
    %217 = arith.mulf %216, %134 : vector<32x32xf32>
    %218 = arith.addf %186, %217 : vector<32x32xf32>
    %c5_110 = arith.constant 5 : index
    %c7_111 = arith.constant 7 : index
    %219 = memref.load %arg4[%c5_110, %c7_111] : memref<8x36xf32, #tpu.memory_space<smem>>
    %220 = vector.broadcast %219 : f32 to vector<32x32xf32>
    %221 = arith.mulf %220, %134 : vector<32x32xf32>
    %222 = arith.addf %190, %221 : vector<32x32xf32>
    %c6_112 = arith.constant 6 : index
    %c7_113 = arith.constant 7 : index
    %223 = memref.load %arg4[%c6_112, %c7_113] : memref<8x36xf32, #tpu.memory_space<smem>>
    %224 = vector.broadcast %223 : f32 to vector<32x32xf32>
    %225 = arith.mulf %224, %134 : vector<32x32xf32>
    %226 = arith.addf %194, %225 : vector<32x32xf32>
    %c7_114 = arith.constant 7 : index
    %c7_115 = arith.constant 7 : index
    %227 = memref.load %arg4[%c7_114, %c7_115] : memref<8x36xf32, #tpu.memory_space<smem>>
    %228 = vector.broadcast %227 : f32 to vector<32x32xf32>
    %229 = arith.mulf %228, %134 : vector<32x32xf32>
    %230 = arith.addf %198, %229 : vector<32x32xf32>
    %231 = vector.extract_strided_slice %15 {offsets = [0, 0, 0], sizes = [1, 16, 32], strides = [1, 1, 1]} : vector<4x16x32xf32> to vector<1x16x32xf32>
    %232 = vector.shape_cast %231 : vector<1x16x32xf32> to vector<16x32xf32>
    %cst_116 = arith.constant dense<0.000000e+00> : vector<32x32xf32>
    %233 = tpu.matmul %3, %232, %cst_116 {dimension_numbers = #tpu.dot_dimension_numbers<[1], [0], [0], [1], [0, 0, 1, 1], [], []>} : vector<32x16xf32>, vector<16x32xf32>, vector<32x32xf32> -> vector<32x32xf32>
    %234 = vector.extract_strided_slice %233 {offsets = [0, 0], sizes = [31, 32], strides = [1, 1]} : vector<32x32xf32> to vector<31x32xf32>
    %235 = tpu.concatenate %16, %234 in 0 : vector<1x32xf32>, vector<31x32xf32> -> vector<32x32xf32>
    %236 = vector.extract_strided_slice %233 {offsets = [1, 0], sizes = [31, 32], strides = [1, 1]} : vector<32x32xf32> to vector<31x32xf32>
    %237 = tpu.concatenate %236, %16 in 0 : vector<31x32xf32>, vector<1x32xf32> -> vector<32x32xf32>
    %c0_117 = arith.constant 0 : index
    %c2_118 = arith.constant 2 : index
    %238 = memref.load %arg4[%c0_117, %c2_118] : memref<8x36xf32, #tpu.memory_space<smem>>
    %239 = vector.broadcast %238 : f32 to vector<32x32xf32>
    %240 = arith.mulf %239, %235 : vector<32x32xf32>
    %241 = arith.addf %202, %240 : vector<32x32xf32>
    %c1_119 = arith.constant 1 : index
    %c2_120 = arith.constant 2 : index
    %242 = memref.load %arg4[%c1_119, %c2_120] : memref<8x36xf32, #tpu.memory_space<smem>>
    %243 = vector.broadcast %242 : f32 to vector<32x32xf32>
    %244 = arith.mulf %243, %235 : vector<32x32xf32>
    %245 = arith.addf %206, %244 : vector<32x32xf32>
    %c2_121 = arith.constant 2 : index
    %c2_122 = arith.constant 2 : index
    %246 = memref.load %arg4[%c2_121, %c2_122] : memref<8x36xf32, #tpu.memory_space<smem>>
    %247 = vector.broadcast %246 : f32 to vector<32x32xf32>
    %248 = arith.mulf %247, %235 : vector<32x32xf32>
    %249 = arith.addf %210, %248 : vector<32x32xf32>
    %c3_123 = arith.constant 3 : index
    %c2_124 = arith.constant 2 : index
    %250 = memref.load %arg4[%c3_123, %c2_124] : memref<8x36xf32, #tpu.memory_space<smem>>
    %251 = vector.broadcast %250 : f32 to vector<32x32xf32>
    %252 = arith.mulf %251, %235 : vector<32x32xf32>
    %253 = arith.addf %214, %252 : vector<32x32xf32>
    %c4_125 = arith.constant 4 : index
    %c2_126 = arith.constant 2 : index
    %254 = memref.load %arg4[%c4_125, %c2_126] : memref<8x36xf32, #tpu.memory_space<smem>>
    %255 = vector.broadcast %254 : f32 to vector<32x32xf32>
    %256 = arith.mulf %255, %235 : vector<32x32xf32>
    %257 = arith.addf %218, %256 : vector<32x32xf32>
    %c5_127 = arith.constant 5 : index
    %c2_128 = arith.constant 2 : index
    %258 = memref.load %arg4[%c5_127, %c2_128] : memref<8x36xf32, #tpu.memory_space<smem>>
    %259 = vector.broadcast %258 : f32 to vector<32x32xf32>
    %260 = arith.mulf %259, %235 : vector<32x32xf32>
    %261 = arith.addf %222, %260 : vector<32x32xf32>
    %c6_129 = arith.constant 6 : index
    %c2_130 = arith.constant 2 : index
    %262 = memref.load %arg4[%c6_129, %c2_130] : memref<8x36xf32, #tpu.memory_space<smem>>
    %263 = vector.broadcast %262 : f32 to vector<32x32xf32>
    %264 = arith.mulf %263, %235 : vector<32x32xf32>
    %265 = arith.addf %226, %264 : vector<32x32xf32>
    %c7_131 = arith.constant 7 : index
    %c2_132 = arith.constant 2 : index
    %266 = memref.load %arg4[%c7_131, %c2_132] : memref<8x36xf32, #tpu.memory_space<smem>>
    %267 = vector.broadcast %266 : f32 to vector<32x32xf32>
    %268 = arith.mulf %267, %235 : vector<32x32xf32>
    %269 = arith.addf %230, %268 : vector<32x32xf32>
    %c0_133 = arith.constant 0 : index
    %c5_134 = arith.constant 5 : index
    %270 = memref.load %arg4[%c0_133, %c5_134] : memref<8x36xf32, #tpu.memory_space<smem>>
    %271 = vector.broadcast %270 : f32 to vector<32x32xf32>
    %272 = arith.mulf %271, %233 : vector<32x32xf32>
    %273 = arith.addf %241, %272 : vector<32x32xf32>
    %c1_135 = arith.constant 1 : index
    %c5_136 = arith.constant 5 : index
    %274 = memref.load %arg4[%c1_135, %c5_136] : memref<8x36xf32, #tpu.memory_space<smem>>
    %275 = vector.broadcast %274 : f32 to vector<32x32xf32>
    %276 = arith.mulf %275, %233 : vector<32x32xf32>
    %277 = arith.addf %245, %276 : vector<32x32xf32>
    %c2_137 = arith.constant 2 : index
    %c5_138 = arith.constant 5 : index
    %278 = memref.load %arg4[%c2_137, %c5_138] : memref<8x36xf32, #tpu.memory_space<smem>>
    %279 = vector.broadcast %278 : f32 to vector<32x32xf32>
    %280 = arith.mulf %279, %233 : vector<32x32xf32>
    %281 = arith.addf %249, %280 : vector<32x32xf32>
    %c3_139 = arith.constant 3 : index
    %c5_140 = arith.constant 5 : index
    %282 = memref.load %arg4[%c3_139, %c5_140] : memref<8x36xf32, #tpu.memory_space<smem>>
    %283 = vector.broadcast %282 : f32 to vector<32x32xf32>
    %284 = arith.mulf %283, %233 : vector<32x32xf32>
    %285 = arith.addf %253, %284 : vector<32x32xf32>
    %c4_141 = arith.constant 4 : index
    %c5_142 = arith.constant 5 : index
    %286 = memref.load %arg4[%c4_141, %c5_142] : memref<8x36xf32, #tpu.memory_space<smem>>
    %287 = vector.broadcast %286 : f32 to vector<32x32xf32>
    %288 = arith.mulf %287, %233 : vector<32x32xf32>
    %289 = arith.addf %257, %288 : vector<32x32xf32>
    %c5_143 = arith.constant 5 : index
    %c5_144 = arith.constant 5 : index
    %290 = memref.load %arg4[%c5_143, %c5_144] : memref<8x36xf32, #tpu.memory_space<smem>>
    %291 = vector.broadcast %290 : f32 to vector<32x32xf32>
    %292 = arith.mulf %291, %233 : vector<32x32xf32>
    %293 = arith.addf %261, %292 : vector<32x32xf32>
    %c6_145 = arith.constant 6 : index
    %c5_146 = arith.constant 5 : index
    %294 = memref.load %arg4[%c6_145, %c5_146] : memref<8x36xf32, #tpu.memory_space<smem>>
    %295 = vector.broadcast %294 : f32 to vector<32x32xf32>
    %296 = arith.mulf %295, %233 : vector<32x32xf32>
    %297 = arith.addf %265, %296 : vector<32x32xf32>
    %c7_147 = arith.constant 7 : index
    %c5_148 = arith.constant 5 : index
    %298 = memref.load %arg4[%c7_147, %c5_148] : memref<8x36xf32, #tpu.memory_space<smem>>
    %299 = vector.broadcast %298 : f32 to vector<32x32xf32>
    %300 = arith.mulf %299, %233 : vector<32x32xf32>
    %301 = arith.addf %269, %300 : vector<32x32xf32>
    %c0_149 = arith.constant 0 : index
    %c8 = arith.constant 8 : index
    %302 = memref.load %arg4[%c0_149, %c8] : memref<8x36xf32, #tpu.memory_space<smem>>
    %303 = vector.broadcast %302 : f32 to vector<32x32xf32>
    %304 = arith.mulf %303, %237 : vector<32x32xf32>
    %305 = arith.addf %273, %304 : vector<32x32xf32>
    %c1_150 = arith.constant 1 : index
    %c8_151 = arith.constant 8 : index
    %306 = memref.load %arg4[%c1_150, %c8_151] : memref<8x36xf32, #tpu.memory_space<smem>>
    %307 = vector.broadcast %306 : f32 to vector<32x32xf32>
    %308 = arith.mulf %307, %237 : vector<32x32xf32>
    %309 = arith.addf %277, %308 : vector<32x32xf32>
    %c2_152 = arith.constant 2 : index
    %c8_153 = arith.constant 8 : index
    %310 = memref.load %arg4[%c2_152, %c8_153] : memref<8x36xf32, #tpu.memory_space<smem>>
    %311 = vector.broadcast %310 : f32 to vector<32x32xf32>
    %312 = arith.mulf %311, %237 : vector<32x32xf32>
    %313 = arith.addf %281, %312 : vector<32x32xf32>
    %c3_154 = arith.constant 3 : index
    %c8_155 = arith.constant 8 : index
    %314 = memref.load %arg4[%c3_154, %c8_155] : memref<8x36xf32, #tpu.memory_space<smem>>
    %315 = vector.broadcast %314 : f32 to vector<32x32xf32>
    %316 = arith.mulf %315, %237 : vector<32x32xf32>
    %317 = arith.addf %285, %316 : vector<32x32xf32>
    %c4_156 = arith.constant 4 : index
    %c8_157 = arith.constant 8 : index
    %318 = memref.load %arg4[%c4_156, %c8_157] : memref<8x36xf32, #tpu.memory_space<smem>>
    %319 = vector.broadcast %318 : f32 to vector<32x32xf32>
    %320 = arith.mulf %319, %237 : vector<32x32xf32>
    %321 = arith.addf %289, %320 : vector<32x32xf32>
    %c5_158 = arith.constant 5 : index
    %c8_159 = arith.constant 8 : index
    %322 = memref.load %arg4[%c5_158, %c8_159] : memref<8x36xf32, #tpu.memory_space<smem>>
    %323 = vector.broadcast %322 : f32 to vector<32x32xf32>
    %324 = arith.mulf %323, %237 : vector<32x32xf32>
    %325 = arith.addf %293, %324 : vector<32x32xf32>
    %c6_160 = arith.constant 6 : index
    %c8_161 = arith.constant 8 : index
    %326 = memref.load %arg4[%c6_160, %c8_161] : memref<8x36xf32, #tpu.memory_space<smem>>
    %327 = vector.broadcast %326 : f32 to vector<32x32xf32>
    %328 = arith.mulf %327, %237 : vector<32x32xf32>
    %329 = arith.addf %297, %328 : vector<32x32xf32>
    %c7_162 = arith.constant 7 : index
    %c8_163 = arith.constant 8 : index
    %330 = memref.load %arg4[%c7_162, %c8_163] : memref<8x36xf32, #tpu.memory_space<smem>>
    %331 = vector.broadcast %330 : f32 to vector<32x32xf32>
    %332 = arith.mulf %331, %237 : vector<32x32xf32>
    %333 = arith.addf %301, %332 : vector<32x32xf32>
    %334 = vector.extract_strided_slice %7 {offsets = [1, 0, 0], sizes = [1, 16, 32], strides = [1, 1, 1]} : vector<4x16x32xf32> to vector<1x16x32xf32>
    %335 = vector.shape_cast %334 : vector<1x16x32xf32> to vector<16x32xf32>
    %cst_164 = arith.constant dense<0.000000e+00> : vector<32x32xf32>
    %336 = tpu.matmul %3, %335, %cst_164 {dimension_numbers = #tpu.dot_dimension_numbers<[1], [0], [0], [1], [0, 0, 1, 1], [], []>} : vector<32x16xf32>, vector<16x32xf32>, vector<32x32xf32> -> vector<32x32xf32>
    %337 = vector.extract_strided_slice %336 {offsets = [0, 0], sizes = [31, 32], strides = [1, 1]} : vector<32x32xf32> to vector<31x32xf32>
    %338 = tpu.concatenate %16, %337 in 0 : vector<1x32xf32>, vector<31x32xf32> -> vector<32x32xf32>
    %339 = vector.extract_strided_slice %336 {offsets = [1, 0], sizes = [31, 32], strides = [1, 1]} : vector<32x32xf32> to vector<31x32xf32>
    %340 = tpu.concatenate %339, %16 in 0 : vector<31x32xf32>, vector<1x32xf32> -> vector<32x32xf32>
    %c0_165 = arith.constant 0 : index
    %c9 = arith.constant 9 : index
    %341 = memref.load %arg4[%c0_165, %c9] : memref<8x36xf32, #tpu.memory_space<smem>>
    %342 = vector.broadcast %341 : f32 to vector<32x32xf32>
    %343 = arith.mulf %342, %338 : vector<32x32xf32>
    %344 = arith.addf %305, %343 : vector<32x32xf32>
    %c1_166 = arith.constant 1 : index
    %c9_167 = arith.constant 9 : index
    %345 = memref.load %arg4[%c1_166, %c9_167] : memref<8x36xf32, #tpu.memory_space<smem>>
    %346 = vector.broadcast %345 : f32 to vector<32x32xf32>
    %347 = arith.mulf %346, %338 : vector<32x32xf32>
    %348 = arith.addf %309, %347 : vector<32x32xf32>
    %c2_168 = arith.constant 2 : index
    %c9_169 = arith.constant 9 : index
    %349 = memref.load %arg4[%c2_168, %c9_169] : memref<8x36xf32, #tpu.memory_space<smem>>
    %350 = vector.broadcast %349 : f32 to vector<32x32xf32>
    %351 = arith.mulf %350, %338 : vector<32x32xf32>
    %352 = arith.addf %313, %351 : vector<32x32xf32>
    %c3_170 = arith.constant 3 : index
    %c9_171 = arith.constant 9 : index
    %353 = memref.load %arg4[%c3_170, %c9_171] : memref<8x36xf32, #tpu.memory_space<smem>>
    %354 = vector.broadcast %353 : f32 to vector<32x32xf32>
    %355 = arith.mulf %354, %338 : vector<32x32xf32>
    %356 = arith.addf %317, %355 : vector<32x32xf32>
    %c4_172 = arith.constant 4 : index
    %c9_173 = arith.constant 9 : index
    %357 = memref.load %arg4[%c4_172, %c9_173] : memref<8x36xf32, #tpu.memory_space<smem>>
    %358 = vector.broadcast %357 : f32 to vector<32x32xf32>
    %359 = arith.mulf %358, %338 : vector<32x32xf32>
    %360 = arith.addf %321, %359 : vector<32x32xf32>
    %c5_174 = arith.constant 5 : index
    %c9_175 = arith.constant 9 : index
    %361 = memref.load %arg4[%c5_174, %c9_175] : memref<8x36xf32, #tpu.memory_space<smem>>
    %362 = vector.broadcast %361 : f32 to vector<32x32xf32>
    %363 = arith.mulf %362, %338 : vector<32x32xf32>
    %364 = arith.addf %325, %363 : vector<32x32xf32>
    %c6_176 = arith.constant 6 : index
    %c9_177 = arith.constant 9 : index
    %365 = memref.load %arg4[%c6_176, %c9_177] : memref<8x36xf32, #tpu.memory_space<smem>>
    %366 = vector.broadcast %365 : f32 to vector<32x32xf32>
    %367 = arith.mulf %366, %338 : vector<32x32xf32>
    %368 = arith.addf %329, %367 : vector<32x32xf32>
    %c7_178 = arith.constant 7 : index
    %c9_179 = arith.constant 9 : index
    %369 = memref.load %arg4[%c7_178, %c9_179] : memref<8x36xf32, #tpu.memory_space<smem>>
    %370 = vector.broadcast %369 : f32 to vector<32x32xf32>
    %371 = arith.mulf %370, %338 : vector<32x32xf32>
    %372 = arith.addf %333, %371 : vector<32x32xf32>
    %c0_180 = arith.constant 0 : index
    %c12 = arith.constant 12 : index
    %373 = memref.load %arg4[%c0_180, %c12] : memref<8x36xf32, #tpu.memory_space<smem>>
    %374 = vector.broadcast %373 : f32 to vector<32x32xf32>
    %375 = arith.mulf %374, %336 : vector<32x32xf32>
    %376 = arith.addf %344, %375 : vector<32x32xf32>
    %c1_181 = arith.constant 1 : index
    %c12_182 = arith.constant 12 : index
    %377 = memref.load %arg4[%c1_181, %c12_182] : memref<8x36xf32, #tpu.memory_space<smem>>
    %378 = vector.broadcast %377 : f32 to vector<32x32xf32>
    %379 = arith.mulf %378, %336 : vector<32x32xf32>
    %380 = arith.addf %348, %379 : vector<32x32xf32>
    %c2_183 = arith.constant 2 : index
    %c12_184 = arith.constant 12 : index
    %381 = memref.load %arg4[%c2_183, %c12_184] : memref<8x36xf32, #tpu.memory_space<smem>>
    %382 = vector.broadcast %381 : f32 to vector<32x32xf32>
    %383 = arith.mulf %382, %336 : vector<32x32xf32>
    %384 = arith.addf %352, %383 : vector<32x32xf32>
    %c3_185 = arith.constant 3 : index
    %c12_186 = arith.constant 12 : index
    %385 = memref.load %arg4[%c3_185, %c12_186] : memref<8x36xf32, #tpu.memory_space<smem>>
    %386 = vector.broadcast %385 : f32 to vector<32x32xf32>
    %387 = arith.mulf %386, %336 : vector<32x32xf32>
    %388 = arith.addf %356, %387 : vector<32x32xf32>
    %c4_187 = arith.constant 4 : index
    %c12_188 = arith.constant 12 : index
    %389 = memref.load %arg4[%c4_187, %c12_188] : memref<8x36xf32, #tpu.memory_space<smem>>
    %390 = vector.broadcast %389 : f32 to vector<32x32xf32>
    %391 = arith.mulf %390, %336 : vector<32x32xf32>
    %392 = arith.addf %360, %391 : vector<32x32xf32>
    %c5_189 = arith.constant 5 : index
    %c12_190 = arith.constant 12 : index
    %393 = memref.load %arg4[%c5_189, %c12_190] : memref<8x36xf32, #tpu.memory_space<smem>>
    %394 = vector.broadcast %393 : f32 to vector<32x32xf32>
    %395 = arith.mulf %394, %336 : vector<32x32xf32>
    %396 = arith.addf %364, %395 : vector<32x32xf32>
    %c6_191 = arith.constant 6 : index
    %c12_192 = arith.constant 12 : index
    %397 = memref.load %arg4[%c6_191, %c12_192] : memref<8x36xf32, #tpu.memory_space<smem>>
    %398 = vector.broadcast %397 : f32 to vector<32x32xf32>
    %399 = arith.mulf %398, %336 : vector<32x32xf32>
    %400 = arith.addf %368, %399 : vector<32x32xf32>
    %c7_193 = arith.constant 7 : index
    %c12_194 = arith.constant 12 : index
    %401 = memref.load %arg4[%c7_193, %c12_194] : memref<8x36xf32, #tpu.memory_space<smem>>
    %402 = vector.broadcast %401 : f32 to vector<32x32xf32>
    %403 = arith.mulf %402, %336 : vector<32x32xf32>
    %404 = arith.addf %372, %403 : vector<32x32xf32>
    %c0_195 = arith.constant 0 : index
    %c15 = arith.constant 15 : index
    %405 = memref.load %arg4[%c0_195, %c15] : memref<8x36xf32, #tpu.memory_space<smem>>
    %406 = vector.broadcast %405 : f32 to vector<32x32xf32>
    %407 = arith.mulf %406, %340 : vector<32x32xf32>
    %408 = arith.addf %376, %407 : vector<32x32xf32>
    %c1_196 = arith.constant 1 : index
    %c15_197 = arith.constant 15 : index
    %409 = memref.load %arg4[%c1_196, %c15_197] : memref<8x36xf32, #tpu.memory_space<smem>>
    %410 = vector.broadcast %409 : f32 to vector<32x32xf32>
    %411 = arith.mulf %410, %340 : vector<32x32xf32>
    %412 = arith.addf %380, %411 : vector<32x32xf32>
    %c2_198 = arith.constant 2 : index
    %c15_199 = arith.constant 15 : index
    %413 = memref.load %arg4[%c2_198, %c15_199] : memref<8x36xf32, #tpu.memory_space<smem>>
    %414 = vector.broadcast %413 : f32 to vector<32x32xf32>
    %415 = arith.mulf %414, %340 : vector<32x32xf32>
    %416 = arith.addf %384, %415 : vector<32x32xf32>
    %c3_200 = arith.constant 3 : index
    %c15_201 = arith.constant 15 : index
    %417 = memref.load %arg4[%c3_200, %c15_201] : memref<8x36xf32, #tpu.memory_space<smem>>
    %418 = vector.broadcast %417 : f32 to vector<32x32xf32>
    %419 = arith.mulf %418, %340 : vector<32x32xf32>
    %420 = arith.addf %388, %419 : vector<32x32xf32>
    %c4_202 = arith.constant 4 : index
    %c15_203 = arith.constant 15 : index
    %421 = memref.load %arg4[%c4_202, %c15_203] : memref<8x36xf32, #tpu.memory_space<smem>>
    %422 = vector.broadcast %421 : f32 to vector<32x32xf32>
    %423 = arith.mulf %422, %340 : vector<32x32xf32>
    %424 = arith.addf %392, %423 : vector<32x32xf32>
    %c5_204 = arith.constant 5 : index
    %c15_205 = arith.constant 15 : index
    %425 = memref.load %arg4[%c5_204, %c15_205] : memref<8x36xf32, #tpu.memory_space<smem>>
    %426 = vector.broadcast %425 : f32 to vector<32x32xf32>
    %427 = arith.mulf %426, %340 : vector<32x32xf32>
    %428 = arith.addf %396, %427 : vector<32x32xf32>
    %c6_206 = arith.constant 6 : index
    %c15_207 = arith.constant 15 : index
    %429 = memref.load %arg4[%c6_206, %c15_207] : memref<8x36xf32, #tpu.memory_space<smem>>
    %430 = vector.broadcast %429 : f32 to vector<32x32xf32>
    %431 = arith.mulf %430, %340 : vector<32x32xf32>
    %432 = arith.addf %400, %431 : vector<32x32xf32>
    %c7_208 = arith.constant 7 : index
    %c15_209 = arith.constant 15 : index
    %433 = memref.load %arg4[%c7_208, %c15_209] : memref<8x36xf32, #tpu.memory_space<smem>>
    %434 = vector.broadcast %433 : f32 to vector<32x32xf32>
    %435 = arith.mulf %434, %340 : vector<32x32xf32>
    %436 = arith.addf %404, %435 : vector<32x32xf32>
    %437 = vector.extract_strided_slice %11 {offsets = [1, 0, 0], sizes = [1, 16, 32], strides = [1, 1, 1]} : vector<4x16x32xf32> to vector<1x16x32xf32>
    %438 = vector.shape_cast %437 : vector<1x16x32xf32> to vector<16x32xf32>
    %cst_210 = arith.constant dense<0.000000e+00> : vector<32x32xf32>
    %439 = tpu.matmul %3, %438, %cst_210 {dimension_numbers = #tpu.dot_dimension_numbers<[1], [0], [0], [1], [0, 0, 1, 1], [], []>} : vector<32x16xf32>, vector<16x32xf32>, vector<32x32xf32> -> vector<32x32xf32>
    %440 = vector.extract_strided_slice %439 {offsets = [0, 0], sizes = [31, 32], strides = [1, 1]} : vector<32x32xf32> to vector<31x32xf32>
    %441 = tpu.concatenate %16, %440 in 0 : vector<1x32xf32>, vector<31x32xf32> -> vector<32x32xf32>
    %442 = vector.extract_strided_slice %439 {offsets = [1, 0], sizes = [31, 32], strides = [1, 1]} : vector<32x32xf32> to vector<31x32xf32>
    %443 = tpu.concatenate %442, %16 in 0 : vector<31x32xf32>, vector<1x32xf32> -> vector<32x32xf32>
    %c0_211 = arith.constant 0 : index
    %c10 = arith.constant 10 : index
    %444 = memref.load %arg4[%c0_211, %c10] : memref<8x36xf32, #tpu.memory_space<smem>>
    %445 = vector.broadcast %444 : f32 to vector<32x32xf32>
    %446 = arith.mulf %445, %441 : vector<32x32xf32>
    %447 = arith.addf %408, %446 : vector<32x32xf32>
    %c1_212 = arith.constant 1 : index
    %c10_213 = arith.constant 10 : index
    %448 = memref.load %arg4[%c1_212, %c10_213] : memref<8x36xf32, #tpu.memory_space<smem>>
    %449 = vector.broadcast %448 : f32 to vector<32x32xf32>
    %450 = arith.mulf %449, %441 : vector<32x32xf32>
    %451 = arith.addf %412, %450 : vector<32x32xf32>
    %c2_214 = arith.constant 2 : index
    %c10_215 = arith.constant 10 : index
    %452 = memref.load %arg4[%c2_214, %c10_215] : memref<8x36xf32, #tpu.memory_space<smem>>
    %453 = vector.broadcast %452 : f32 to vector<32x32xf32>
    %454 = arith.mulf %453, %441 : vector<32x32xf32>
    %455 = arith.addf %416, %454 : vector<32x32xf32>
    %c3_216 = arith.constant 3 : index
    %c10_217 = arith.constant 10 : index
    %456 = memref.load %arg4[%c3_216, %c10_217] : memref<8x36xf32, #tpu.memory_space<smem>>
    %457 = vector.broadcast %456 : f32 to vector<32x32xf32>
    %458 = arith.mulf %457, %441 : vector<32x32xf32>
    %459 = arith.addf %420, %458 : vector<32x32xf32>
    %c4_218 = arith.constant 4 : index
    %c10_219 = arith.constant 10 : index
    %460 = memref.load %arg4[%c4_218, %c10_219] : memref<8x36xf32, #tpu.memory_space<smem>>
    %461 = vector.broadcast %460 : f32 to vector<32x32xf32>
    %462 = arith.mulf %461, %441 : vector<32x32xf32>
    %463 = arith.addf %424, %462 : vector<32x32xf32>
    %c5_220 = arith.constant 5 : index
    %c10_221 = arith.constant 10 : index
    %464 = memref.load %arg4[%c5_220, %c10_221] : memref<8x36xf32, #tpu.memory_space<smem>>
    %465 = vector.broadcast %464 : f32 to vector<32x32xf32>
    %466 = arith.mulf %465, %441 : vector<32x32xf32>
    %467 = arith.addf %428, %466 : vector<32x32xf32>
    %c6_222 = arith.constant 6 : index
    %c10_223 = arith.constant 10 : index
    %468 = memref.load %arg4[%c6_222, %c10_223] : memref<8x36xf32, #tpu.memory_space<smem>>
    %469 = vector.broadcast %468 : f32 to vector<32x32xf32>
    %470 = arith.mulf %469, %441 : vector<32x32xf32>
    %471 = arith.addf %432, %470 : vector<32x32xf32>
    %c7_224 = arith.constant 7 : index
    %c10_225 = arith.constant 10 : index
    %472 = memref.load %arg4[%c7_224, %c10_225] : memref<8x36xf32, #tpu.memory_space<smem>>
    %473 = vector.broadcast %472 : f32 to vector<32x32xf32>
    %474 = arith.mulf %473, %441 : vector<32x32xf32>
    %475 = arith.addf %436, %474 : vector<32x32xf32>
    %c0_226 = arith.constant 0 : index
    %c13 = arith.constant 13 : index
    %476 = memref.load %arg4[%c0_226, %c13] : memref<8x36xf32, #tpu.memory_space<smem>>
    %477 = vector.broadcast %476 : f32 to vector<32x32xf32>
    %478 = arith.mulf %477, %439 : vector<32x32xf32>
    %479 = arith.addf %447, %478 : vector<32x32xf32>
    %c1_227 = arith.constant 1 : index
    %c13_228 = arith.constant 13 : index
    %480 = memref.load %arg4[%c1_227, %c13_228] : memref<8x36xf32, #tpu.memory_space<smem>>
    %481 = vector.broadcast %480 : f32 to vector<32x32xf32>
    %482 = arith.mulf %481, %439 : vector<32x32xf32>
    %483 = arith.addf %451, %482 : vector<32x32xf32>
    %c2_229 = arith.constant 2 : index
    %c13_230 = arith.constant 13 : index
    %484 = memref.load %arg4[%c2_229, %c13_230] : memref<8x36xf32, #tpu.memory_space<smem>>
    %485 = vector.broadcast %484 : f32 to vector<32x32xf32>
    %486 = arith.mulf %485, %439 : vector<32x32xf32>
    %487 = arith.addf %455, %486 : vector<32x32xf32>
    %c3_231 = arith.constant 3 : index
    %c13_232 = arith.constant 13 : index
    %488 = memref.load %arg4[%c3_231, %c13_232] : memref<8x36xf32, #tpu.memory_space<smem>>
    %489 = vector.broadcast %488 : f32 to vector<32x32xf32>
    %490 = arith.mulf %489, %439 : vector<32x32xf32>
    %491 = arith.addf %459, %490 : vector<32x32xf32>
    %c4_233 = arith.constant 4 : index
    %c13_234 = arith.constant 13 : index
    %492 = memref.load %arg4[%c4_233, %c13_234] : memref<8x36xf32, #tpu.memory_space<smem>>
    %493 = vector.broadcast %492 : f32 to vector<32x32xf32>
    %494 = arith.mulf %493, %439 : vector<32x32xf32>
    %495 = arith.addf %463, %494 : vector<32x32xf32>
    %c5_235 = arith.constant 5 : index
    %c13_236 = arith.constant 13 : index
    %496 = memref.load %arg4[%c5_235, %c13_236] : memref<8x36xf32, #tpu.memory_space<smem>>
    %497 = vector.broadcast %496 : f32 to vector<32x32xf32>
    %498 = arith.mulf %497, %439 : vector<32x32xf32>
    %499 = arith.addf %467, %498 : vector<32x32xf32>
    %c6_237 = arith.constant 6 : index
    %c13_238 = arith.constant 13 : index
    %500 = memref.load %arg4[%c6_237, %c13_238] : memref<8x36xf32, #tpu.memory_space<smem>>
    %501 = vector.broadcast %500 : f32 to vector<32x32xf32>
    %502 = arith.mulf %501, %439 : vector<32x32xf32>
    %503 = arith.addf %471, %502 : vector<32x32xf32>
    %c7_239 = arith.constant 7 : index
    %c13_240 = arith.constant 13 : index
    %504 = memref.load %arg4[%c7_239, %c13_240] : memref<8x36xf32, #tpu.memory_space<smem>>
    %505 = vector.broadcast %504 : f32 to vector<32x32xf32>
    %506 = arith.mulf %505, %439 : vector<32x32xf32>
    %507 = arith.addf %475, %506 : vector<32x32xf32>
    %c0_241 = arith.constant 0 : index
    %c16 = arith.constant 16 : index
    %508 = memref.load %arg4[%c0_241, %c16] : memref<8x36xf32, #tpu.memory_space<smem>>
    %509 = vector.broadcast %508 : f32 to vector<32x32xf32>
    %510 = arith.mulf %509, %443 : vector<32x32xf32>
    %511 = arith.addf %479, %510 : vector<32x32xf32>
    %c1_242 = arith.constant 1 : index
    %c16_243 = arith.constant 16 : index
    %512 = memref.load %arg4[%c1_242, %c16_243] : memref<8x36xf32, #tpu.memory_space<smem>>
    %513 = vector.broadcast %512 : f32 to vector<32x32xf32>
    %514 = arith.mulf %513, %443 : vector<32x32xf32>
    %515 = arith.addf %483, %514 : vector<32x32xf32>
    %c2_244 = arith.constant 2 : index
    %c16_245 = arith.constant 16 : index
    %516 = memref.load %arg4[%c2_244, %c16_245] : memref<8x36xf32, #tpu.memory_space<smem>>
    %517 = vector.broadcast %516 : f32 to vector<32x32xf32>
    %518 = arith.mulf %517, %443 : vector<32x32xf32>
    %519 = arith.addf %487, %518 : vector<32x32xf32>
    %c3_246 = arith.constant 3 : index
    %c16_247 = arith.constant 16 : index
    %520 = memref.load %arg4[%c3_246, %c16_247] : memref<8x36xf32, #tpu.memory_space<smem>>
    %521 = vector.broadcast %520 : f32 to vector<32x32xf32>
    %522 = arith.mulf %521, %443 : vector<32x32xf32>
    %523 = arith.addf %491, %522 : vector<32x32xf32>
    %c4_248 = arith.constant 4 : index
    %c16_249 = arith.constant 16 : index
    %524 = memref.load %arg4[%c4_248, %c16_249] : memref<8x36xf32, #tpu.memory_space<smem>>
    %525 = vector.broadcast %524 : f32 to vector<32x32xf32>
    %526 = arith.mulf %525, %443 : vector<32x32xf32>
    %527 = arith.addf %495, %526 : vector<32x32xf32>
    %c5_250 = arith.constant 5 : index
    %c16_251 = arith.constant 16 : index
    %528 = memref.load %arg4[%c5_250, %c16_251] : memref<8x36xf32, #tpu.memory_space<smem>>
    %529 = vector.broadcast %528 : f32 to vector<32x32xf32>
    %530 = arith.mulf %529, %443 : vector<32x32xf32>
    %531 = arith.addf %499, %530 : vector<32x32xf32>
    %c6_252 = arith.constant 6 : index
    %c16_253 = arith.constant 16 : index
    %532 = memref.load %arg4[%c6_252, %c16_253] : memref<8x36xf32, #tpu.memory_space<smem>>
    %533 = vector.broadcast %532 : f32 to vector<32x32xf32>
    %534 = arith.mulf %533, %443 : vector<32x32xf32>
    %535 = arith.addf %503, %534 : vector<32x32xf32>
    %c7_254 = arith.constant 7 : index
    %c16_255 = arith.constant 16 : index
    %536 = memref.load %arg4[%c7_254, %c16_255] : memref<8x36xf32, #tpu.memory_space<smem>>
    %537 = vector.broadcast %536 : f32 to vector<32x32xf32>
    %538 = arith.mulf %537, %443 : vector<32x32xf32>
    %539 = arith.addf %507, %538 : vector<32x32xf32>
    %540 = vector.extract_strided_slice %15 {offsets = [1, 0, 0], sizes = [1, 16, 32], strides = [1, 1, 1]} : vector<4x16x32xf32> to vector<1x16x32xf32>
    %541 = vector.shape_cast %540 : vector<1x16x32xf32> to vector<16x32xf32>
    %cst_256 = arith.constant dense<0.000000e+00> : vector<32x32xf32>
    %542 = tpu.matmul %3, %541, %cst_256 {dimension_numbers = #tpu.dot_dimension_numbers<[1], [0], [0], [1], [0, 0, 1, 1], [], []>} : vector<32x16xf32>, vector<16x32xf32>, vector<32x32xf32> -> vector<32x32xf32>
    %543 = vector.extract_strided_slice %542 {offsets = [0, 0], sizes = [31, 32], strides = [1, 1]} : vector<32x32xf32> to vector<31x32xf32>
    %544 = tpu.concatenate %16, %543 in 0 : vector<1x32xf32>, vector<31x32xf32> -> vector<32x32xf32>
    %545 = vector.extract_strided_slice %542 {offsets = [1, 0], sizes = [31, 32], strides = [1, 1]} : vector<32x32xf32> to vector<31x32xf32>
    %546 = tpu.concatenate %545, %16 in 0 : vector<31x32xf32>, vector<1x32xf32> -> vector<32x32xf32>
    %c0_257 = arith.constant 0 : index
    %c11 = arith.constant 11 : index
    %547 = memref.load %arg4[%c0_257, %c11] : memref<8x36xf32, #tpu.memory_space<smem>>
    %548 = vector.broadcast %547 : f32 to vector<32x32xf32>
    %549 = arith.mulf %548, %544 : vector<32x32xf32>
    %550 = arith.addf %511, %549 : vector<32x32xf32>
    %c1_258 = arith.constant 1 : index
    %c11_259 = arith.constant 11 : index
    %551 = memref.load %arg4[%c1_258, %c11_259] : memref<8x36xf32, #tpu.memory_space<smem>>
    %552 = vector.broadcast %551 : f32 to vector<32x32xf32>
    %553 = arith.mulf %552, %544 : vector<32x32xf32>
    %554 = arith.addf %515, %553 : vector<32x32xf32>
    %c2_260 = arith.constant 2 : index
    %c11_261 = arith.constant 11 : index
    %555 = memref.load %arg4[%c2_260, %c11_261] : memref<8x36xf32, #tpu.memory_space<smem>>
    %556 = vector.broadcast %555 : f32 to vector<32x32xf32>
    %557 = arith.mulf %556, %544 : vector<32x32xf32>
    %558 = arith.addf %519, %557 : vector<32x32xf32>
    %c3_262 = arith.constant 3 : index
    %c11_263 = arith.constant 11 : index
    %559 = memref.load %arg4[%c3_262, %c11_263] : memref<8x36xf32, #tpu.memory_space<smem>>
    %560 = vector.broadcast %559 : f32 to vector<32x32xf32>
    %561 = arith.mulf %560, %544 : vector<32x32xf32>
    %562 = arith.addf %523, %561 : vector<32x32xf32>
    %c4_264 = arith.constant 4 : index
    %c11_265 = arith.constant 11 : index
    %563 = memref.load %arg4[%c4_264, %c11_265] : memref<8x36xf32, #tpu.memory_space<smem>>
    %564 = vector.broadcast %563 : f32 to vector<32x32xf32>
    %565 = arith.mulf %564, %544 : vector<32x32xf32>
    %566 = arith.addf %527, %565 : vector<32x32xf32>
    %c5_266 = arith.constant 5 : index
    %c11_267 = arith.constant 11 : index
    %567 = memref.load %arg4[%c5_266, %c11_267] : memref<8x36xf32, #tpu.memory_space<smem>>
    %568 = vector.broadcast %567 : f32 to vector<32x32xf32>
    %569 = arith.mulf %568, %544 : vector<32x32xf32>
    %570 = arith.addf %531, %569 : vector<32x32xf32>
    %c6_268 = arith.constant 6 : index
    %c11_269 = arith.constant 11 : index
    %571 = memref.load %arg4[%c6_268, %c11_269] : memref<8x36xf32, #tpu.memory_space<smem>>
    %572 = vector.broadcast %571 : f32 to vector<32x32xf32>
    %573 = arith.mulf %572, %544 : vector<32x32xf32>
    %574 = arith.addf %535, %573 : vector<32x32xf32>
    %c7_270 = arith.constant 7 : index
    %c11_271 = arith.constant 11 : index
    %575 = memref.load %arg4[%c7_270, %c11_271] : memref<8x36xf32, #tpu.memory_space<smem>>
    %576 = vector.broadcast %575 : f32 to vector<32x32xf32>
    %577 = arith.mulf %576, %544 : vector<32x32xf32>
    %578 = arith.addf %539, %577 : vector<32x32xf32>
    %c0_272 = arith.constant 0 : index
    %c14 = arith.constant 14 : index
    %579 = memref.load %arg4[%c0_272, %c14] : memref<8x36xf32, #tpu.memory_space<smem>>
    %580 = vector.broadcast %579 : f32 to vector<32x32xf32>
    %581 = arith.mulf %580, %542 : vector<32x32xf32>
    %582 = arith.addf %550, %581 : vector<32x32xf32>
    %c1_273 = arith.constant 1 : index
    %c14_274 = arith.constant 14 : index
    %583 = memref.load %arg4[%c1_273, %c14_274] : memref<8x36xf32, #tpu.memory_space<smem>>
    %584 = vector.broadcast %583 : f32 to vector<32x32xf32>
    %585 = arith.mulf %584, %542 : vector<32x32xf32>
    %586 = arith.addf %554, %585 : vector<32x32xf32>
    %c2_275 = arith.constant 2 : index
    %c14_276 = arith.constant 14 : index
    %587 = memref.load %arg4[%c2_275, %c14_276] : memref<8x36xf32, #tpu.memory_space<smem>>
    %588 = vector.broadcast %587 : f32 to vector<32x32xf32>
    %589 = arith.mulf %588, %542 : vector<32x32xf32>
    %590 = arith.addf %558, %589 : vector<32x32xf32>
    %c3_277 = arith.constant 3 : index
    %c14_278 = arith.constant 14 : index
    %591 = memref.load %arg4[%c3_277, %c14_278] : memref<8x36xf32, #tpu.memory_space<smem>>
    %592 = vector.broadcast %591 : f32 to vector<32x32xf32>
    %593 = arith.mulf %592, %542 : vector<32x32xf32>
    %594 = arith.addf %562, %593 : vector<32x32xf32>
    %c4_279 = arith.constant 4 : index
    %c14_280 = arith.constant 14 : index
    %595 = memref.load %arg4[%c4_279, %c14_280] : memref<8x36xf32, #tpu.memory_space<smem>>
    %596 = vector.broadcast %595 : f32 to vector<32x32xf32>
    %597 = arith.mulf %596, %542 : vector<32x32xf32>
    %598 = arith.addf %566, %597 : vector<32x32xf32>
    %c5_281 = arith.constant 5 : index
    %c14_282 = arith.constant 14 : index
    %599 = memref.load %arg4[%c5_281, %c14_282] : memref<8x36xf32, #tpu.memory_space<smem>>
    %600 = vector.broadcast %599 : f32 to vector<32x32xf32>
    %601 = arith.mulf %600, %542 : vector<32x32xf32>
    %602 = arith.addf %570, %601 : vector<32x32xf32>
    %c6_283 = arith.constant 6 : index
    %c14_284 = arith.constant 14 : index
    %603 = memref.load %arg4[%c6_283, %c14_284] : memref<8x36xf32, #tpu.memory_space<smem>>
    %604 = vector.broadcast %603 : f32 to vector<32x32xf32>
    %605 = arith.mulf %604, %542 : vector<32x32xf32>
    %606 = arith.addf %574, %605 : vector<32x32xf32>
    %c7_285 = arith.constant 7 : index
    %c14_286 = arith.constant 14 : index
    %607 = memref.load %arg4[%c7_285, %c14_286] : memref<8x36xf32, #tpu.memory_space<smem>>
    %608 = vector.broadcast %607 : f32 to vector<32x32xf32>
    %609 = arith.mulf %608, %542 : vector<32x32xf32>
    %610 = arith.addf %578, %609 : vector<32x32xf32>
    %c0_287 = arith.constant 0 : index
    %c17 = arith.constant 17 : index
    %611 = memref.load %arg4[%c0_287, %c17] : memref<8x36xf32, #tpu.memory_space<smem>>
    %612 = vector.broadcast %611 : f32 to vector<32x32xf32>
    %613 = arith.mulf %612, %546 : vector<32x32xf32>
    %614 = arith.addf %582, %613 : vector<32x32xf32>
    %c1_288 = arith.constant 1 : index
    %c17_289 = arith.constant 17 : index
    %615 = memref.load %arg4[%c1_288, %c17_289] : memref<8x36xf32, #tpu.memory_space<smem>>
    %616 = vector.broadcast %615 : f32 to vector<32x32xf32>
    %617 = arith.mulf %616, %546 : vector<32x32xf32>
    %618 = arith.addf %586, %617 : vector<32x32xf32>
    %c2_290 = arith.constant 2 : index
    %c17_291 = arith.constant 17 : index
    %619 = memref.load %arg4[%c2_290, %c17_291] : memref<8x36xf32, #tpu.memory_space<smem>>
    %620 = vector.broadcast %619 : f32 to vector<32x32xf32>
    %621 = arith.mulf %620, %546 : vector<32x32xf32>
    %622 = arith.addf %590, %621 : vector<32x32xf32>
    %c3_292 = arith.constant 3 : index
    %c17_293 = arith.constant 17 : index
    %623 = memref.load %arg4[%c3_292, %c17_293] : memref<8x36xf32, #tpu.memory_space<smem>>
    %624 = vector.broadcast %623 : f32 to vector<32x32xf32>
    %625 = arith.mulf %624, %546 : vector<32x32xf32>
    %626 = arith.addf %594, %625 : vector<32x32xf32>
    %c4_294 = arith.constant 4 : index
    %c17_295 = arith.constant 17 : index
    %627 = memref.load %arg4[%c4_294, %c17_295] : memref<8x36xf32, #tpu.memory_space<smem>>
    %628 = vector.broadcast %627 : f32 to vector<32x32xf32>
    %629 = arith.mulf %628, %546 : vector<32x32xf32>
    %630 = arith.addf %598, %629 : vector<32x32xf32>
    %c5_296 = arith.constant 5 : index
    %c17_297 = arith.constant 17 : index
    %631 = memref.load %arg4[%c5_296, %c17_297] : memref<8x36xf32, #tpu.memory_space<smem>>
    %632 = vector.broadcast %631 : f32 to vector<32x32xf32>
    %633 = arith.mulf %632, %546 : vector<32x32xf32>
    %634 = arith.addf %602, %633 : vector<32x32xf32>
    %c6_298 = arith.constant 6 : index
    %c17_299 = arith.constant 17 : index
    %635 = memref.load %arg4[%c6_298, %c17_299] : memref<8x36xf32, #tpu.memory_space<smem>>
    %636 = vector.broadcast %635 : f32 to vector<32x32xf32>
    %637 = arith.mulf %636, %546 : vector<32x32xf32>
    %638 = arith.addf %606, %637 : vector<32x32xf32>
    %c7_300 = arith.constant 7 : index
    %c17_301 = arith.constant 17 : index
    %639 = memref.load %arg4[%c7_300, %c17_301] : memref<8x36xf32, #tpu.memory_space<smem>>
    %640 = vector.broadcast %639 : f32 to vector<32x32xf32>
    %641 = arith.mulf %640, %546 : vector<32x32xf32>
    %642 = arith.addf %610, %641 : vector<32x32xf32>
    %643 = vector.extract_strided_slice %7 {offsets = [2, 0, 0], sizes = [1, 16, 32], strides = [1, 1, 1]} : vector<4x16x32xf32> to vector<1x16x32xf32>
    %644 = vector.shape_cast %643 : vector<1x16x32xf32> to vector<16x32xf32>
    %cst_302 = arith.constant dense<0.000000e+00> : vector<32x32xf32>
    %645 = tpu.matmul %3, %644, %cst_302 {dimension_numbers = #tpu.dot_dimension_numbers<[1], [0], [0], [1], [0, 0, 1, 1], [], []>} : vector<32x16xf32>, vector<16x32xf32>, vector<32x32xf32> -> vector<32x32xf32>
    %646 = vector.extract_strided_slice %645 {offsets = [0, 0], sizes = [31, 32], strides = [1, 1]} : vector<32x32xf32> to vector<31x32xf32>
    %647 = tpu.concatenate %16, %646 in 0 : vector<1x32xf32>, vector<31x32xf32> -> vector<32x32xf32>
    %648 = vector.extract_strided_slice %645 {offsets = [1, 0], sizes = [31, 32], strides = [1, 1]} : vector<32x32xf32> to vector<31x32xf32>
    %649 = tpu.concatenate %648, %16 in 0 : vector<31x32xf32>, vector<1x32xf32> -> vector<32x32xf32>
    %c0_303 = arith.constant 0 : index
    %c18 = arith.constant 18 : index
    %650 = memref.load %arg4[%c0_303, %c18] : memref<8x36xf32, #tpu.memory_space<smem>>
    %651 = vector.broadcast %650 : f32 to vector<32x32xf32>
    %652 = arith.mulf %651, %647 : vector<32x32xf32>
    %653 = arith.addf %614, %652 : vector<32x32xf32>
    %c1_304 = arith.constant 1 : index
    %c18_305 = arith.constant 18 : index
    %654 = memref.load %arg4[%c1_304, %c18_305] : memref<8x36xf32, #tpu.memory_space<smem>>
    %655 = vector.broadcast %654 : f32 to vector<32x32xf32>
    %656 = arith.mulf %655, %647 : vector<32x32xf32>
    %657 = arith.addf %618, %656 : vector<32x32xf32>
    %c2_306 = arith.constant 2 : index
    %c18_307 = arith.constant 18 : index
    %658 = memref.load %arg4[%c2_306, %c18_307] : memref<8x36xf32, #tpu.memory_space<smem>>
    %659 = vector.broadcast %658 : f32 to vector<32x32xf32>
    %660 = arith.mulf %659, %647 : vector<32x32xf32>
    %661 = arith.addf %622, %660 : vector<32x32xf32>
    %c3_308 = arith.constant 3 : index
    %c18_309 = arith.constant 18 : index
    %662 = memref.load %arg4[%c3_308, %c18_309] : memref<8x36xf32, #tpu.memory_space<smem>>
    %663 = vector.broadcast %662 : f32 to vector<32x32xf32>
    %664 = arith.mulf %663, %647 : vector<32x32xf32>
    %665 = arith.addf %626, %664 : vector<32x32xf32>
    %c4_310 = arith.constant 4 : index
    %c18_311 = arith.constant 18 : index
    %666 = memref.load %arg4[%c4_310, %c18_311] : memref<8x36xf32, #tpu.memory_space<smem>>
    %667 = vector.broadcast %666 : f32 to vector<32x32xf32>
    %668 = arith.mulf %667, %647 : vector<32x32xf32>
    %669 = arith.addf %630, %668 : vector<32x32xf32>
    %c5_312 = arith.constant 5 : index
    %c18_313 = arith.constant 18 : index
    %670 = memref.load %arg4[%c5_312, %c18_313] : memref<8x36xf32, #tpu.memory_space<smem>>
    %671 = vector.broadcast %670 : f32 to vector<32x32xf32>
    %672 = arith.mulf %671, %647 : vector<32x32xf32>
    %673 = arith.addf %634, %672 : vector<32x32xf32>
    %c6_314 = arith.constant 6 : index
    %c18_315 = arith.constant 18 : index
    %674 = memref.load %arg4[%c6_314, %c18_315] : memref<8x36xf32, #tpu.memory_space<smem>>
    %675 = vector.broadcast %674 : f32 to vector<32x32xf32>
    %676 = arith.mulf %675, %647 : vector<32x32xf32>
    %677 = arith.addf %638, %676 : vector<32x32xf32>
    %c7_316 = arith.constant 7 : index
    %c18_317 = arith.constant 18 : index
    %678 = memref.load %arg4[%c7_316, %c18_317] : memref<8x36xf32, #tpu.memory_space<smem>>
    %679 = vector.broadcast %678 : f32 to vector<32x32xf32>
    %680 = arith.mulf %679, %647 : vector<32x32xf32>
    %681 = arith.addf %642, %680 : vector<32x32xf32>
    %c0_318 = arith.constant 0 : index
    %c21 = arith.constant 21 : index
    %682 = memref.load %arg4[%c0_318, %c21] : memref<8x36xf32, #tpu.memory_space<smem>>
    %683 = vector.broadcast %682 : f32 to vector<32x32xf32>
    %684 = arith.mulf %683, %645 : vector<32x32xf32>
    %685 = arith.addf %653, %684 : vector<32x32xf32>
    %c1_319 = arith.constant 1 : index
    %c21_320 = arith.constant 21 : index
    %686 = memref.load %arg4[%c1_319, %c21_320] : memref<8x36xf32, #tpu.memory_space<smem>>
    %687 = vector.broadcast %686 : f32 to vector<32x32xf32>
    %688 = arith.mulf %687, %645 : vector<32x32xf32>
    %689 = arith.addf %657, %688 : vector<32x32xf32>
    %c2_321 = arith.constant 2 : index
    %c21_322 = arith.constant 21 : index
    %690 = memref.load %arg4[%c2_321, %c21_322] : memref<8x36xf32, #tpu.memory_space<smem>>
    %691 = vector.broadcast %690 : f32 to vector<32x32xf32>
    %692 = arith.mulf %691, %645 : vector<32x32xf32>
    %693 = arith.addf %661, %692 : vector<32x32xf32>
    %c3_323 = arith.constant 3 : index
    %c21_324 = arith.constant 21 : index
    %694 = memref.load %arg4[%c3_323, %c21_324] : memref<8x36xf32, #tpu.memory_space<smem>>
    %695 = vector.broadcast %694 : f32 to vector<32x32xf32>
    %696 = arith.mulf %695, %645 : vector<32x32xf32>
    %697 = arith.addf %665, %696 : vector<32x32xf32>
    %c4_325 = arith.constant 4 : index
    %c21_326 = arith.constant 21 : index
    %698 = memref.load %arg4[%c4_325, %c21_326] : memref<8x36xf32, #tpu.memory_space<smem>>
    %699 = vector.broadcast %698 : f32 to vector<32x32xf32>
    %700 = arith.mulf %699, %645 : vector<32x32xf32>
    %701 = arith.addf %669, %700 : vector<32x32xf32>
    %c5_327 = arith.constant 5 : index
    %c21_328 = arith.constant 21 : index
    %702 = memref.load %arg4[%c5_327, %c21_328] : memref<8x36xf32, #tpu.memory_space<smem>>
    %703 = vector.broadcast %702 : f32 to vector<32x32xf32>
    %704 = arith.mulf %703, %645 : vector<32x32xf32>
    %705 = arith.addf %673, %704 : vector<32x32xf32>
    %c6_329 = arith.constant 6 : index
    %c21_330 = arith.constant 21 : index
    %706 = memref.load %arg4[%c6_329, %c21_330] : memref<8x36xf32, #tpu.memory_space<smem>>
    %707 = vector.broadcast %706 : f32 to vector<32x32xf32>
    %708 = arith.mulf %707, %645 : vector<32x32xf32>
    %709 = arith.addf %677, %708 : vector<32x32xf32>
    %c7_331 = arith.constant 7 : index
    %c21_332 = arith.constant 21 : index
    %710 = memref.load %arg4[%c7_331, %c21_332] : memref<8x36xf32, #tpu.memory_space<smem>>
    %711 = vector.broadcast %710 : f32 to vector<32x32xf32>
    %712 = arith.mulf %711, %645 : vector<32x32xf32>
    %713 = arith.addf %681, %712 : vector<32x32xf32>
    %c0_333 = arith.constant 0 : index
    %c24 = arith.constant 24 : index
    %714 = memref.load %arg4[%c0_333, %c24] : memref<8x36xf32, #tpu.memory_space<smem>>
    %715 = vector.broadcast %714 : f32 to vector<32x32xf32>
    %716 = arith.mulf %715, %649 : vector<32x32xf32>
    %717 = arith.addf %685, %716 : vector<32x32xf32>
    %c1_334 = arith.constant 1 : index
    %c24_335 = arith.constant 24 : index
    %718 = memref.load %arg4[%c1_334, %c24_335] : memref<8x36xf32, #tpu.memory_space<smem>>
    %719 = vector.broadcast %718 : f32 to vector<32x32xf32>
    %720 = arith.mulf %719, %649 : vector<32x32xf32>
    %721 = arith.addf %689, %720 : vector<32x32xf32>
    %c2_336 = arith.constant 2 : index
    %c24_337 = arith.constant 24 : index
    %722 = memref.load %arg4[%c2_336, %c24_337] : memref<8x36xf32, #tpu.memory_space<smem>>
    %723 = vector.broadcast %722 : f32 to vector<32x32xf32>
    %724 = arith.mulf %723, %649 : vector<32x32xf32>
    %725 = arith.addf %693, %724 : vector<32x32xf32>
    %c3_338 = arith.constant 3 : index
    %c24_339 = arith.constant 24 : index
    %726 = memref.load %arg4[%c3_338, %c24_339] : memref<8x36xf32, #tpu.memory_space<smem>>
    %727 = vector.broadcast %726 : f32 to vector<32x32xf32>
    %728 = arith.mulf %727, %649 : vector<32x32xf32>
    %729 = arith.addf %697, %728 : vector<32x32xf32>
    %c4_340 = arith.constant 4 : index
    %c24_341 = arith.constant 24 : index
    %730 = memref.load %arg4[%c4_340, %c24_341] : memref<8x36xf32, #tpu.memory_space<smem>>
    %731 = vector.broadcast %730 : f32 to vector<32x32xf32>
    %732 = arith.mulf %731, %649 : vector<32x32xf32>
    %733 = arith.addf %701, %732 : vector<32x32xf32>
    %c5_342 = arith.constant 5 : index
    %c24_343 = arith.constant 24 : index
    %734 = memref.load %arg4[%c5_342, %c24_343] : memref<8x36xf32, #tpu.memory_space<smem>>
    %735 = vector.broadcast %734 : f32 to vector<32x32xf32>
    %736 = arith.mulf %735, %649 : vector<32x32xf32>
    %737 = arith.addf %705, %736 : vector<32x32xf32>
    %c6_344 = arith.constant 6 : index
    %c24_345 = arith.constant 24 : index
    %738 = memref.load %arg4[%c6_344, %c24_345] : memref<8x36xf32, #tpu.memory_space<smem>>
    %739 = vector.broadcast %738 : f32 to vector<32x32xf32>
    %740 = arith.mulf %739, %649 : vector<32x32xf32>
    %741 = arith.addf %709, %740 : vector<32x32xf32>
    %c7_346 = arith.constant 7 : index
    %c24_347 = arith.constant 24 : index
    %742 = memref.load %arg4[%c7_346, %c24_347] : memref<8x36xf32, #tpu.memory_space<smem>>
    %743 = vector.broadcast %742 : f32 to vector<32x32xf32>
    %744 = arith.mulf %743, %649 : vector<32x32xf32>
    %745 = arith.addf %713, %744 : vector<32x32xf32>
    %746 = vector.extract_strided_slice %11 {offsets = [2, 0, 0], sizes = [1, 16, 32], strides = [1, 1, 1]} : vector<4x16x32xf32> to vector<1x16x32xf32>
    %747 = vector.shape_cast %746 : vector<1x16x32xf32> to vector<16x32xf32>
    %cst_348 = arith.constant dense<0.000000e+00> : vector<32x32xf32>
    %748 = tpu.matmul %3, %747, %cst_348 {dimension_numbers = #tpu.dot_dimension_numbers<[1], [0], [0], [1], [0, 0, 1, 1], [], []>} : vector<32x16xf32>, vector<16x32xf32>, vector<32x32xf32> -> vector<32x32xf32>
    %749 = vector.extract_strided_slice %748 {offsets = [0, 0], sizes = [31, 32], strides = [1, 1]} : vector<32x32xf32> to vector<31x32xf32>
    %750 = tpu.concatenate %16, %749 in 0 : vector<1x32xf32>, vector<31x32xf32> -> vector<32x32xf32>
    %751 = vector.extract_strided_slice %748 {offsets = [1, 0], sizes = [31, 32], strides = [1, 1]} : vector<32x32xf32> to vector<31x32xf32>
    %752 = tpu.concatenate %751, %16 in 0 : vector<31x32xf32>, vector<1x32xf32> -> vector<32x32xf32>
    %c0_349 = arith.constant 0 : index
    %c19 = arith.constant 19 : index
    %753 = memref.load %arg4[%c0_349, %c19] : memref<8x36xf32, #tpu.memory_space<smem>>
    %754 = vector.broadcast %753 : f32 to vector<32x32xf32>
    %755 = arith.mulf %754, %750 : vector<32x32xf32>
    %756 = arith.addf %717, %755 : vector<32x32xf32>
    %c1_350 = arith.constant 1 : index
    %c19_351 = arith.constant 19 : index
    %757 = memref.load %arg4[%c1_350, %c19_351] : memref<8x36xf32, #tpu.memory_space<smem>>
    %758 = vector.broadcast %757 : f32 to vector<32x32xf32>
    %759 = arith.mulf %758, %750 : vector<32x32xf32>
    %760 = arith.addf %721, %759 : vector<32x32xf32>
    %c2_352 = arith.constant 2 : index
    %c19_353 = arith.constant 19 : index
    %761 = memref.load %arg4[%c2_352, %c19_353] : memref<8x36xf32, #tpu.memory_space<smem>>
    %762 = vector.broadcast %761 : f32 to vector<32x32xf32>
    %763 = arith.mulf %762, %750 : vector<32x32xf32>
    %764 = arith.addf %725, %763 : vector<32x32xf32>
    %c3_354 = arith.constant 3 : index
    %c19_355 = arith.constant 19 : index
    %765 = memref.load %arg4[%c3_354, %c19_355] : memref<8x36xf32, #tpu.memory_space<smem>>
    %766 = vector.broadcast %765 : f32 to vector<32x32xf32>
    %767 = arith.mulf %766, %750 : vector<32x32xf32>
    %768 = arith.addf %729, %767 : vector<32x32xf32>
    %c4_356 = arith.constant 4 : index
    %c19_357 = arith.constant 19 : index
    %769 = memref.load %arg4[%c4_356, %c19_357] : memref<8x36xf32, #tpu.memory_space<smem>>
    %770 = vector.broadcast %769 : f32 to vector<32x32xf32>
    %771 = arith.mulf %770, %750 : vector<32x32xf32>
    %772 = arith.addf %733, %771 : vector<32x32xf32>
    %c5_358 = arith.constant 5 : index
    %c19_359 = arith.constant 19 : index
    %773 = memref.load %arg4[%c5_358, %c19_359] : memref<8x36xf32, #tpu.memory_space<smem>>
    %774 = vector.broadcast %773 : f32 to vector<32x32xf32>
    %775 = arith.mulf %774, %750 : vector<32x32xf32>
    %776 = arith.addf %737, %775 : vector<32x32xf32>
    %c6_360 = arith.constant 6 : index
    %c19_361 = arith.constant 19 : index
    %777 = memref.load %arg4[%c6_360, %c19_361] : memref<8x36xf32, #tpu.memory_space<smem>>
    %778 = vector.broadcast %777 : f32 to vector<32x32xf32>
    %779 = arith.mulf %778, %750 : vector<32x32xf32>
    %780 = arith.addf %741, %779 : vector<32x32xf32>
    %c7_362 = arith.constant 7 : index
    %c19_363 = arith.constant 19 : index
    %781 = memref.load %arg4[%c7_362, %c19_363] : memref<8x36xf32, #tpu.memory_space<smem>>
    %782 = vector.broadcast %781 : f32 to vector<32x32xf32>
    %783 = arith.mulf %782, %750 : vector<32x32xf32>
    %784 = arith.addf %745, %783 : vector<32x32xf32>
    %c0_364 = arith.constant 0 : index
    %c22 = arith.constant 22 : index
    %785 = memref.load %arg4[%c0_364, %c22] : memref<8x36xf32, #tpu.memory_space<smem>>
    %786 = vector.broadcast %785 : f32 to vector<32x32xf32>
    %787 = arith.mulf %786, %748 : vector<32x32xf32>
    %788 = arith.addf %756, %787 : vector<32x32xf32>
    %c1_365 = arith.constant 1 : index
    %c22_366 = arith.constant 22 : index
    %789 = memref.load %arg4[%c1_365, %c22_366] : memref<8x36xf32, #tpu.memory_space<smem>>
    %790 = vector.broadcast %789 : f32 to vector<32x32xf32>
    %791 = arith.mulf %790, %748 : vector<32x32xf32>
    %792 = arith.addf %760, %791 : vector<32x32xf32>
    %c2_367 = arith.constant 2 : index
    %c22_368 = arith.constant 22 : index
    %793 = memref.load %arg4[%c2_367, %c22_368] : memref<8x36xf32, #tpu.memory_space<smem>>
    %794 = vector.broadcast %793 : f32 to vector<32x32xf32>
    %795 = arith.mulf %794, %748 : vector<32x32xf32>
    %796 = arith.addf %764, %795 : vector<32x32xf32>
    %c3_369 = arith.constant 3 : index
    %c22_370 = arith.constant 22 : index
    %797 = memref.load %arg4[%c3_369, %c22_370] : memref<8x36xf32, #tpu.memory_space<smem>>
    %798 = vector.broadcast %797 : f32 to vector<32x32xf32>
    %799 = arith.mulf %798, %748 : vector<32x32xf32>
    %800 = arith.addf %768, %799 : vector<32x32xf32>
    %c4_371 = arith.constant 4 : index
    %c22_372 = arith.constant 22 : index
    %801 = memref.load %arg4[%c4_371, %c22_372] : memref<8x36xf32, #tpu.memory_space<smem>>
    %802 = vector.broadcast %801 : f32 to vector<32x32xf32>
    %803 = arith.mulf %802, %748 : vector<32x32xf32>
    %804 = arith.addf %772, %803 : vector<32x32xf32>
    %c5_373 = arith.constant 5 : index
    %c22_374 = arith.constant 22 : index
    %805 = memref.load %arg4[%c5_373, %c22_374] : memref<8x36xf32, #tpu.memory_space<smem>>
    %806 = vector.broadcast %805 : f32 to vector<32x32xf32>
    %807 = arith.mulf %806, %748 : vector<32x32xf32>
    %808 = arith.addf %776, %807 : vector<32x32xf32>
    %c6_375 = arith.constant 6 : index
    %c22_376 = arith.constant 22 : index
    %809 = memref.load %arg4[%c6_375, %c22_376] : memref<8x36xf32, #tpu.memory_space<smem>>
    %810 = vector.broadcast %809 : f32 to vector<32x32xf32>
    %811 = arith.mulf %810, %748 : vector<32x32xf32>
    %812 = arith.addf %780, %811 : vector<32x32xf32>
    %c7_377 = arith.constant 7 : index
    %c22_378 = arith.constant 22 : index
    %813 = memref.load %arg4[%c7_377, %c22_378] : memref<8x36xf32, #tpu.memory_space<smem>>
    %814 = vector.broadcast %813 : f32 to vector<32x32xf32>
    %815 = arith.mulf %814, %748 : vector<32x32xf32>
    %816 = arith.addf %784, %815 : vector<32x32xf32>
    %c0_379 = arith.constant 0 : index
    %c25 = arith.constant 25 : index
    %817 = memref.load %arg4[%c0_379, %c25] : memref<8x36xf32, #tpu.memory_space<smem>>
    %818 = vector.broadcast %817 : f32 to vector<32x32xf32>
    %819 = arith.mulf %818, %752 : vector<32x32xf32>
    %820 = arith.addf %788, %819 : vector<32x32xf32>
    %c1_380 = arith.constant 1 : index
    %c25_381 = arith.constant 25 : index
    %821 = memref.load %arg4[%c1_380, %c25_381] : memref<8x36xf32, #tpu.memory_space<smem>>
    %822 = vector.broadcast %821 : f32 to vector<32x32xf32>
    %823 = arith.mulf %822, %752 : vector<32x32xf32>
    %824 = arith.addf %792, %823 : vector<32x32xf32>
    %c2_382 = arith.constant 2 : index
    %c25_383 = arith.constant 25 : index
    %825 = memref.load %arg4[%c2_382, %c25_383] : memref<8x36xf32, #tpu.memory_space<smem>>
    %826 = vector.broadcast %825 : f32 to vector<32x32xf32>
    %827 = arith.mulf %826, %752 : vector<32x32xf32>
    %828 = arith.addf %796, %827 : vector<32x32xf32>
    %c3_384 = arith.constant 3 : index
    %c25_385 = arith.constant 25 : index
    %829 = memref.load %arg4[%c3_384, %c25_385] : memref<8x36xf32, #tpu.memory_space<smem>>
    %830 = vector.broadcast %829 : f32 to vector<32x32xf32>
    %831 = arith.mulf %830, %752 : vector<32x32xf32>
    %832 = arith.addf %800, %831 : vector<32x32xf32>
    %c4_386 = arith.constant 4 : index
    %c25_387 = arith.constant 25 : index
    %833 = memref.load %arg4[%c4_386, %c25_387] : memref<8x36xf32, #tpu.memory_space<smem>>
    %834 = vector.broadcast %833 : f32 to vector<32x32xf32>
    %835 = arith.mulf %834, %752 : vector<32x32xf32>
    %836 = arith.addf %804, %835 : vector<32x32xf32>
    %c5_388 = arith.constant 5 : index
    %c25_389 = arith.constant 25 : index
    %837 = memref.load %arg4[%c5_388, %c25_389] : memref<8x36xf32, #tpu.memory_space<smem>>
    %838 = vector.broadcast %837 : f32 to vector<32x32xf32>
    %839 = arith.mulf %838, %752 : vector<32x32xf32>
    %840 = arith.addf %808, %839 : vector<32x32xf32>
    %c6_390 = arith.constant 6 : index
    %c25_391 = arith.constant 25 : index
    %841 = memref.load %arg4[%c6_390, %c25_391] : memref<8x36xf32, #tpu.memory_space<smem>>
    %842 = vector.broadcast %841 : f32 to vector<32x32xf32>
    %843 = arith.mulf %842, %752 : vector<32x32xf32>
    %844 = arith.addf %812, %843 : vector<32x32xf32>
    %c7_392 = arith.constant 7 : index
    %c25_393 = arith.constant 25 : index
    %845 = memref.load %arg4[%c7_392, %c25_393] : memref<8x36xf32, #tpu.memory_space<smem>>
    %846 = vector.broadcast %845 : f32 to vector<32x32xf32>
    %847 = arith.mulf %846, %752 : vector<32x32xf32>
    %848 = arith.addf %816, %847 : vector<32x32xf32>
    %849 = vector.extract_strided_slice %15 {offsets = [2, 0, 0], sizes = [1, 16, 32], strides = [1, 1, 1]} : vector<4x16x32xf32> to vector<1x16x32xf32>
    %850 = vector.shape_cast %849 : vector<1x16x32xf32> to vector<16x32xf32>
    %cst_394 = arith.constant dense<0.000000e+00> : vector<32x32xf32>
    %851 = tpu.matmul %3, %850, %cst_394 {dimension_numbers = #tpu.dot_dimension_numbers<[1], [0], [0], [1], [0, 0, 1, 1], [], []>} : vector<32x16xf32>, vector<16x32xf32>, vector<32x32xf32> -> vector<32x32xf32>
    %852 = vector.extract_strided_slice %851 {offsets = [0, 0], sizes = [31, 32], strides = [1, 1]} : vector<32x32xf32> to vector<31x32xf32>
    %853 = tpu.concatenate %16, %852 in 0 : vector<1x32xf32>, vector<31x32xf32> -> vector<32x32xf32>
    %854 = vector.extract_strided_slice %851 {offsets = [1, 0], sizes = [31, 32], strides = [1, 1]} : vector<32x32xf32> to vector<31x32xf32>
    %855 = tpu.concatenate %854, %16 in 0 : vector<31x32xf32>, vector<1x32xf32> -> vector<32x32xf32>
    %c0_395 = arith.constant 0 : index
    %c20 = arith.constant 20 : index
    %856 = memref.load %arg4[%c0_395, %c20] : memref<8x36xf32, #tpu.memory_space<smem>>
    %857 = vector.broadcast %856 : f32 to vector<32x32xf32>
    %858 = arith.mulf %857, %853 : vector<32x32xf32>
    %859 = arith.addf %820, %858 : vector<32x32xf32>
    %c1_396 = arith.constant 1 : index
    %c20_397 = arith.constant 20 : index
    %860 = memref.load %arg4[%c1_396, %c20_397] : memref<8x36xf32, #tpu.memory_space<smem>>
    %861 = vector.broadcast %860 : f32 to vector<32x32xf32>
    %862 = arith.mulf %861, %853 : vector<32x32xf32>
    %863 = arith.addf %824, %862 : vector<32x32xf32>
    %c2_398 = arith.constant 2 : index
    %c20_399 = arith.constant 20 : index
    %864 = memref.load %arg4[%c2_398, %c20_399] : memref<8x36xf32, #tpu.memory_space<smem>>
    %865 = vector.broadcast %864 : f32 to vector<32x32xf32>
    %866 = arith.mulf %865, %853 : vector<32x32xf32>
    %867 = arith.addf %828, %866 : vector<32x32xf32>
    %c3_400 = arith.constant 3 : index
    %c20_401 = arith.constant 20 : index
    %868 = memref.load %arg4[%c3_400, %c20_401] : memref<8x36xf32, #tpu.memory_space<smem>>
    %869 = vector.broadcast %868 : f32 to vector<32x32xf32>
    %870 = arith.mulf %869, %853 : vector<32x32xf32>
    %871 = arith.addf %832, %870 : vector<32x32xf32>
    %c4_402 = arith.constant 4 : index
    %c20_403 = arith.constant 20 : index
    %872 = memref.load %arg4[%c4_402, %c20_403] : memref<8x36xf32, #tpu.memory_space<smem>>
    %873 = vector.broadcast %872 : f32 to vector<32x32xf32>
    %874 = arith.mulf %873, %853 : vector<32x32xf32>
    %875 = arith.addf %836, %874 : vector<32x32xf32>
    %c5_404 = arith.constant 5 : index
    %c20_405 = arith.constant 20 : index
    %876 = memref.load %arg4[%c5_404, %c20_405] : memref<8x36xf32, #tpu.memory_space<smem>>
    %877 = vector.broadcast %876 : f32 to vector<32x32xf32>
    %878 = arith.mulf %877, %853 : vector<32x32xf32>
    %879 = arith.addf %840, %878 : vector<32x32xf32>
    %c6_406 = arith.constant 6 : index
    %c20_407 = arith.constant 20 : index
    %880 = memref.load %arg4[%c6_406, %c20_407] : memref<8x36xf32, #tpu.memory_space<smem>>
    %881 = vector.broadcast %880 : f32 to vector<32x32xf32>
    %882 = arith.mulf %881, %853 : vector<32x32xf32>
    %883 = arith.addf %844, %882 : vector<32x32xf32>
    %c7_408 = arith.constant 7 : index
    %c20_409 = arith.constant 20 : index
    %884 = memref.load %arg4[%c7_408, %c20_409] : memref<8x36xf32, #tpu.memory_space<smem>>
    %885 = vector.broadcast %884 : f32 to vector<32x32xf32>
    %886 = arith.mulf %885, %853 : vector<32x32xf32>
    %887 = arith.addf %848, %886 : vector<32x32xf32>
    %c0_410 = arith.constant 0 : index
    %c23 = arith.constant 23 : index
    %888 = memref.load %arg4[%c0_410, %c23] : memref<8x36xf32, #tpu.memory_space<smem>>
    %889 = vector.broadcast %888 : f32 to vector<32x32xf32>
    %890 = arith.mulf %889, %851 : vector<32x32xf32>
    %891 = arith.addf %859, %890 : vector<32x32xf32>
    %c1_411 = arith.constant 1 : index
    %c23_412 = arith.constant 23 : index
    %892 = memref.load %arg4[%c1_411, %c23_412] : memref<8x36xf32, #tpu.memory_space<smem>>
    %893 = vector.broadcast %892 : f32 to vector<32x32xf32>
    %894 = arith.mulf %893, %851 : vector<32x32xf32>
    %895 = arith.addf %863, %894 : vector<32x32xf32>
    %c2_413 = arith.constant 2 : index
    %c23_414 = arith.constant 23 : index
    %896 = memref.load %arg4[%c2_413, %c23_414] : memref<8x36xf32, #tpu.memory_space<smem>>
    %897 = vector.broadcast %896 : f32 to vector<32x32xf32>
    %898 = arith.mulf %897, %851 : vector<32x32xf32>
    %899 = arith.addf %867, %898 : vector<32x32xf32>
    %c3_415 = arith.constant 3 : index
    %c23_416 = arith.constant 23 : index
    %900 = memref.load %arg4[%c3_415, %c23_416] : memref<8x36xf32, #tpu.memory_space<smem>>
    %901 = vector.broadcast %900 : f32 to vector<32x32xf32>
    %902 = arith.mulf %901, %851 : vector<32x32xf32>
    %903 = arith.addf %871, %902 : vector<32x32xf32>
    %c4_417 = arith.constant 4 : index
    %c23_418 = arith.constant 23 : index
    %904 = memref.load %arg4[%c4_417, %c23_418] : memref<8x36xf32, #tpu.memory_space<smem>>
    %905 = vector.broadcast %904 : f32 to vector<32x32xf32>
    %906 = arith.mulf %905, %851 : vector<32x32xf32>
    %907 = arith.addf %875, %906 : vector<32x32xf32>
    %c5_419 = arith.constant 5 : index
    %c23_420 = arith.constant 23 : index
    %908 = memref.load %arg4[%c5_419, %c23_420] : memref<8x36xf32, #tpu.memory_space<smem>>
    %909 = vector.broadcast %908 : f32 to vector<32x32xf32>
    %910 = arith.mulf %909, %851 : vector<32x32xf32>
    %911 = arith.addf %879, %910 : vector<32x32xf32>
    %c6_421 = arith.constant 6 : index
    %c23_422 = arith.constant 23 : index
    %912 = memref.load %arg4[%c6_421, %c23_422] : memref<8x36xf32, #tpu.memory_space<smem>>
    %913 = vector.broadcast %912 : f32 to vector<32x32xf32>
    %914 = arith.mulf %913, %851 : vector<32x32xf32>
    %915 = arith.addf %883, %914 : vector<32x32xf32>
    %c7_423 = arith.constant 7 : index
    %c23_424 = arith.constant 23 : index
    %916 = memref.load %arg4[%c7_423, %c23_424] : memref<8x36xf32, #tpu.memory_space<smem>>
    %917 = vector.broadcast %916 : f32 to vector<32x32xf32>
    %918 = arith.mulf %917, %851 : vector<32x32xf32>
    %919 = arith.addf %887, %918 : vector<32x32xf32>
    %c0_425 = arith.constant 0 : index
    %c26 = arith.constant 26 : index
    %920 = memref.load %arg4[%c0_425, %c26] : memref<8x36xf32, #tpu.memory_space<smem>>
    %921 = vector.broadcast %920 : f32 to vector<32x32xf32>
    %922 = arith.mulf %921, %855 : vector<32x32xf32>
    %923 = arith.addf %891, %922 : vector<32x32xf32>
    %c1_426 = arith.constant 1 : index
    %c26_427 = arith.constant 26 : index
    %924 = memref.load %arg4[%c1_426, %c26_427] : memref<8x36xf32, #tpu.memory_space<smem>>
    %925 = vector.broadcast %924 : f32 to vector<32x32xf32>
    %926 = arith.mulf %925, %855 : vector<32x32xf32>
    %927 = arith.addf %895, %926 : vector<32x32xf32>
    %c2_428 = arith.constant 2 : index
    %c26_429 = arith.constant 26 : index
    %928 = memref.load %arg4[%c2_428, %c26_429] : memref<8x36xf32, #tpu.memory_space<smem>>
    %929 = vector.broadcast %928 : f32 to vector<32x32xf32>
    %930 = arith.mulf %929, %855 : vector<32x32xf32>
    %931 = arith.addf %899, %930 : vector<32x32xf32>
    %c3_430 = arith.constant 3 : index
    %c26_431 = arith.constant 26 : index
    %932 = memref.load %arg4[%c3_430, %c26_431] : memref<8x36xf32, #tpu.memory_space<smem>>
    %933 = vector.broadcast %932 : f32 to vector<32x32xf32>
    %934 = arith.mulf %933, %855 : vector<32x32xf32>
    %935 = arith.addf %903, %934 : vector<32x32xf32>
    %c4_432 = arith.constant 4 : index
    %c26_433 = arith.constant 26 : index
    %936 = memref.load %arg4[%c4_432, %c26_433] : memref<8x36xf32, #tpu.memory_space<smem>>
    %937 = vector.broadcast %936 : f32 to vector<32x32xf32>
    %938 = arith.mulf %937, %855 : vector<32x32xf32>
    %939 = arith.addf %907, %938 : vector<32x32xf32>
    %c5_434 = arith.constant 5 : index
    %c26_435 = arith.constant 26 : index
    %940 = memref.load %arg4[%c5_434, %c26_435] : memref<8x36xf32, #tpu.memory_space<smem>>
    %941 = vector.broadcast %940 : f32 to vector<32x32xf32>
    %942 = arith.mulf %941, %855 : vector<32x32xf32>
    %943 = arith.addf %911, %942 : vector<32x32xf32>
    %c6_436 = arith.constant 6 : index
    %c26_437 = arith.constant 26 : index
    %944 = memref.load %arg4[%c6_436, %c26_437] : memref<8x36xf32, #tpu.memory_space<smem>>
    %945 = vector.broadcast %944 : f32 to vector<32x32xf32>
    %946 = arith.mulf %945, %855 : vector<32x32xf32>
    %947 = arith.addf %915, %946 : vector<32x32xf32>
    %c7_438 = arith.constant 7 : index
    %c26_439 = arith.constant 26 : index
    %948 = memref.load %arg4[%c7_438, %c26_439] : memref<8x36xf32, #tpu.memory_space<smem>>
    %949 = vector.broadcast %948 : f32 to vector<32x32xf32>
    %950 = arith.mulf %949, %855 : vector<32x32xf32>
    %951 = arith.addf %919, %950 : vector<32x32xf32>
    %952 = vector.extract_strided_slice %7 {offsets = [3, 0, 0], sizes = [1, 16, 32], strides = [1, 1, 1]} : vector<4x16x32xf32> to vector<1x16x32xf32>
    %953 = vector.shape_cast %952 : vector<1x16x32xf32> to vector<16x32xf32>
    %cst_440 = arith.constant dense<0.000000e+00> : vector<32x32xf32>
    %954 = tpu.matmul %3, %953, %cst_440 {dimension_numbers = #tpu.dot_dimension_numbers<[1], [0], [0], [1], [0, 0, 1, 1], [], []>} : vector<32x16xf32>, vector<16x32xf32>, vector<32x32xf32> -> vector<32x32xf32>
    %955 = vector.extract_strided_slice %954 {offsets = [0, 0], sizes = [31, 32], strides = [1, 1]} : vector<32x32xf32> to vector<31x32xf32>
    %956 = tpu.concatenate %16, %955 in 0 : vector<1x32xf32>, vector<31x32xf32> -> vector<32x32xf32>
    %957 = vector.extract_strided_slice %954 {offsets = [1, 0], sizes = [31, 32], strides = [1, 1]} : vector<32x32xf32> to vector<31x32xf32>
    %958 = tpu.concatenate %957, %16 in 0 : vector<31x32xf32>, vector<1x32xf32> -> vector<32x32xf32>
    %c0_441 = arith.constant 0 : index
    %c27 = arith.constant 27 : index
    %959 = memref.load %arg4[%c0_441, %c27] : memref<8x36xf32, #tpu.memory_space<smem>>
    %960 = vector.broadcast %959 : f32 to vector<32x32xf32>
    %961 = arith.mulf %960, %956 : vector<32x32xf32>
    %962 = arith.addf %923, %961 : vector<32x32xf32>
    %c1_442 = arith.constant 1 : index
    %c27_443 = arith.constant 27 : index
    %963 = memref.load %arg4[%c1_442, %c27_443] : memref<8x36xf32, #tpu.memory_space<smem>>
    %964 = vector.broadcast %963 : f32 to vector<32x32xf32>
    %965 = arith.mulf %964, %956 : vector<32x32xf32>
    %966 = arith.addf %927, %965 : vector<32x32xf32>
    %c2_444 = arith.constant 2 : index
    %c27_445 = arith.constant 27 : index
    %967 = memref.load %arg4[%c2_444, %c27_445] : memref<8x36xf32, #tpu.memory_space<smem>>
    %968 = vector.broadcast %967 : f32 to vector<32x32xf32>
    %969 = arith.mulf %968, %956 : vector<32x32xf32>
    %970 = arith.addf %931, %969 : vector<32x32xf32>
    %c3_446 = arith.constant 3 : index
    %c27_447 = arith.constant 27 : index
    %971 = memref.load %arg4[%c3_446, %c27_447] : memref<8x36xf32, #tpu.memory_space<smem>>
    %972 = vector.broadcast %971 : f32 to vector<32x32xf32>
    %973 = arith.mulf %972, %956 : vector<32x32xf32>
    %974 = arith.addf %935, %973 : vector<32x32xf32>
    %c4_448 = arith.constant 4 : index
    %c27_449 = arith.constant 27 : index
    %975 = memref.load %arg4[%c4_448, %c27_449] : memref<8x36xf32, #tpu.memory_space<smem>>
    %976 = vector.broadcast %975 : f32 to vector<32x32xf32>
    %977 = arith.mulf %976, %956 : vector<32x32xf32>
    %978 = arith.addf %939, %977 : vector<32x32xf32>
    %c5_450 = arith.constant 5 : index
    %c27_451 = arith.constant 27 : index
    %979 = memref.load %arg4[%c5_450, %c27_451] : memref<8x36xf32, #tpu.memory_space<smem>>
    %980 = vector.broadcast %979 : f32 to vector<32x32xf32>
    %981 = arith.mulf %980, %956 : vector<32x32xf32>
    %982 = arith.addf %943, %981 : vector<32x32xf32>
    %c6_452 = arith.constant 6 : index
    %c27_453 = arith.constant 27 : index
    %983 = memref.load %arg4[%c6_452, %c27_453] : memref<8x36xf32, #tpu.memory_space<smem>>
    %984 = vector.broadcast %983 : f32 to vector<32x32xf32>
    %985 = arith.mulf %984, %956 : vector<32x32xf32>
    %986 = arith.addf %947, %985 : vector<32x32xf32>
    %c7_454 = arith.constant 7 : index
    %c27_455 = arith.constant 27 : index
    %987 = memref.load %arg4[%c7_454, %c27_455] : memref<8x36xf32, #tpu.memory_space<smem>>
    %988 = vector.broadcast %987 : f32 to vector<32x32xf32>
    %989 = arith.mulf %988, %956 : vector<32x32xf32>
    %990 = arith.addf %951, %989 : vector<32x32xf32>
    %c0_456 = arith.constant 0 : index
    %c30 = arith.constant 30 : index
    %991 = memref.load %arg4[%c0_456, %c30] : memref<8x36xf32, #tpu.memory_space<smem>>
    %992 = vector.broadcast %991 : f32 to vector<32x32xf32>
    %993 = arith.mulf %992, %954 : vector<32x32xf32>
    %994 = arith.addf %962, %993 : vector<32x32xf32>
    %c1_457 = arith.constant 1 : index
    %c30_458 = arith.constant 30 : index
    %995 = memref.load %arg4[%c1_457, %c30_458] : memref<8x36xf32, #tpu.memory_space<smem>>
    %996 = vector.broadcast %995 : f32 to vector<32x32xf32>
    %997 = arith.mulf %996, %954 : vector<32x32xf32>
    %998 = arith.addf %966, %997 : vector<32x32xf32>
    %c2_459 = arith.constant 2 : index
    %c30_460 = arith.constant 30 : index
    %999 = memref.load %arg4[%c2_459, %c30_460] : memref<8x36xf32, #tpu.memory_space<smem>>
    %1000 = vector.broadcast %999 : f32 to vector<32x32xf32>
    %1001 = arith.mulf %1000, %954 : vector<32x32xf32>
    %1002 = arith.addf %970, %1001 : vector<32x32xf32>
    %c3_461 = arith.constant 3 : index
    %c30_462 = arith.constant 30 : index
    %1003 = memref.load %arg4[%c3_461, %c30_462] : memref<8x36xf32, #tpu.memory_space<smem>>
    %1004 = vector.broadcast %1003 : f32 to vector<32x32xf32>
    %1005 = arith.mulf %1004, %954 : vector<32x32xf32>
    %1006 = arith.addf %974, %1005 : vector<32x32xf32>
    %c4_463 = arith.constant 4 : index
    %c30_464 = arith.constant 30 : index
    %1007 = memref.load %arg4[%c4_463, %c30_464] : memref<8x36xf32, #tpu.memory_space<smem>>
    %1008 = vector.broadcast %1007 : f32 to vector<32x32xf32>
    %1009 = arith.mulf %1008, %954 : vector<32x32xf32>
    %1010 = arith.addf %978, %1009 : vector<32x32xf32>
    %c5_465 = arith.constant 5 : index
    %c30_466 = arith.constant 30 : index
    %1011 = memref.load %arg4[%c5_465, %c30_466] : memref<8x36xf32, #tpu.memory_space<smem>>
    %1012 = vector.broadcast %1011 : f32 to vector<32x32xf32>
    %1013 = arith.mulf %1012, %954 : vector<32x32xf32>
    %1014 = arith.addf %982, %1013 : vector<32x32xf32>
    %c6_467 = arith.constant 6 : index
    %c30_468 = arith.constant 30 : index
    %1015 = memref.load %arg4[%c6_467, %c30_468] : memref<8x36xf32, #tpu.memory_space<smem>>
    %1016 = vector.broadcast %1015 : f32 to vector<32x32xf32>
    %1017 = arith.mulf %1016, %954 : vector<32x32xf32>
    %1018 = arith.addf %986, %1017 : vector<32x32xf32>
    %c7_469 = arith.constant 7 : index
    %c30_470 = arith.constant 30 : index
    %1019 = memref.load %arg4[%c7_469, %c30_470] : memref<8x36xf32, #tpu.memory_space<smem>>
    %1020 = vector.broadcast %1019 : f32 to vector<32x32xf32>
    %1021 = arith.mulf %1020, %954 : vector<32x32xf32>
    %1022 = arith.addf %990, %1021 : vector<32x32xf32>
    %c0_471 = arith.constant 0 : index
    %c33 = arith.constant 33 : index
    %1023 = memref.load %arg4[%c0_471, %c33] : memref<8x36xf32, #tpu.memory_space<smem>>
    %1024 = vector.broadcast %1023 : f32 to vector<32x32xf32>
    %1025 = arith.mulf %1024, %958 : vector<32x32xf32>
    %1026 = arith.addf %994, %1025 : vector<32x32xf32>
    %c1_472 = arith.constant 1 : index
    %c33_473 = arith.constant 33 : index
    %1027 = memref.load %arg4[%c1_472, %c33_473] : memref<8x36xf32, #tpu.memory_space<smem>>
    %1028 = vector.broadcast %1027 : f32 to vector<32x32xf32>
    %1029 = arith.mulf %1028, %958 : vector<32x32xf32>
    %1030 = arith.addf %998, %1029 : vector<32x32xf32>
    %c2_474 = arith.constant 2 : index
    %c33_475 = arith.constant 33 : index
    %1031 = memref.load %arg4[%c2_474, %c33_475] : memref<8x36xf32, #tpu.memory_space<smem>>
    %1032 = vector.broadcast %1031 : f32 to vector<32x32xf32>
    %1033 = arith.mulf %1032, %958 : vector<32x32xf32>
    %1034 = arith.addf %1002, %1033 : vector<32x32xf32>
    %c3_476 = arith.constant 3 : index
    %c33_477 = arith.constant 33 : index
    %1035 = memref.load %arg4[%c3_476, %c33_477] : memref<8x36xf32, #tpu.memory_space<smem>>
    %1036 = vector.broadcast %1035 : f32 to vector<32x32xf32>
    %1037 = arith.mulf %1036, %958 : vector<32x32xf32>
    %1038 = arith.addf %1006, %1037 : vector<32x32xf32>
    %c4_478 = arith.constant 4 : index
    %c33_479 = arith.constant 33 : index
    %1039 = memref.load %arg4[%c4_478, %c33_479] : memref<8x36xf32, #tpu.memory_space<smem>>
    %1040 = vector.broadcast %1039 : f32 to vector<32x32xf32>
    %1041 = arith.mulf %1040, %958 : vector<32x32xf32>
    %1042 = arith.addf %1010, %1041 : vector<32x32xf32>
    %c5_480 = arith.constant 5 : index
    %c33_481 = arith.constant 33 : index
    %1043 = memref.load %arg4[%c5_480, %c33_481] : memref<8x36xf32, #tpu.memory_space<smem>>
    %1044 = vector.broadcast %1043 : f32 to vector<32x32xf32>
    %1045 = arith.mulf %1044, %958 : vector<32x32xf32>
    %1046 = arith.addf %1014, %1045 : vector<32x32xf32>
    %c6_482 = arith.constant 6 : index
    %c33_483 = arith.constant 33 : index
    %1047 = memref.load %arg4[%c6_482, %c33_483] : memref<8x36xf32, #tpu.memory_space<smem>>
    %1048 = vector.broadcast %1047 : f32 to vector<32x32xf32>
    %1049 = arith.mulf %1048, %958 : vector<32x32xf32>
    %1050 = arith.addf %1018, %1049 : vector<32x32xf32>
    %c7_484 = arith.constant 7 : index
    %c33_485 = arith.constant 33 : index
    %1051 = memref.load %arg4[%c7_484, %c33_485] : memref<8x36xf32, #tpu.memory_space<smem>>
    %1052 = vector.broadcast %1051 : f32 to vector<32x32xf32>
    %1053 = arith.mulf %1052, %958 : vector<32x32xf32>
    %1054 = arith.addf %1022, %1053 : vector<32x32xf32>
    %1055 = vector.extract_strided_slice %11 {offsets = [3, 0, 0], sizes = [1, 16, 32], strides = [1, 1, 1]} : vector<4x16x32xf32> to vector<1x16x32xf32>
    %1056 = vector.shape_cast %1055 : vector<1x16x32xf32> to vector<16x32xf32>
    %cst_486 = arith.constant dense<0.000000e+00> : vector<32x32xf32>
    %1057 = tpu.matmul %3, %1056, %cst_486 {dimension_numbers = #tpu.dot_dimension_numbers<[1], [0], [0], [1], [0, 0, 1, 1], [], []>} : vector<32x16xf32>, vector<16x32xf32>, vector<32x32xf32> -> vector<32x32xf32>
    %1058 = vector.extract_strided_slice %1057 {offsets = [0, 0], sizes = [31, 32], strides = [1, 1]} : vector<32x32xf32> to vector<31x32xf32>
    %1059 = tpu.concatenate %16, %1058 in 0 : vector<1x32xf32>, vector<31x32xf32> -> vector<32x32xf32>
    %1060 = vector.extract_strided_slice %1057 {offsets = [1, 0], sizes = [31, 32], strides = [1, 1]} : vector<32x32xf32> to vector<31x32xf32>
    %1061 = tpu.concatenate %1060, %16 in 0 : vector<31x32xf32>, vector<1x32xf32> -> vector<32x32xf32>
    %c0_487 = arith.constant 0 : index
    %c28 = arith.constant 28 : index
    %1062 = memref.load %arg4[%c0_487, %c28] : memref<8x36xf32, #tpu.memory_space<smem>>
    %1063 = vector.broadcast %1062 : f32 to vector<32x32xf32>
    %1064 = arith.mulf %1063, %1059 : vector<32x32xf32>
    %1065 = arith.addf %1026, %1064 : vector<32x32xf32>
    %c1_488 = arith.constant 1 : index
    %c28_489 = arith.constant 28 : index
    %1066 = memref.load %arg4[%c1_488, %c28_489] : memref<8x36xf32, #tpu.memory_space<smem>>
    %1067 = vector.broadcast %1066 : f32 to vector<32x32xf32>
    %1068 = arith.mulf %1067, %1059 : vector<32x32xf32>
    %1069 = arith.addf %1030, %1068 : vector<32x32xf32>
    %c2_490 = arith.constant 2 : index
    %c28_491 = arith.constant 28 : index
    %1070 = memref.load %arg4[%c2_490, %c28_491] : memref<8x36xf32, #tpu.memory_space<smem>>
    %1071 = vector.broadcast %1070 : f32 to vector<32x32xf32>
    %1072 = arith.mulf %1071, %1059 : vector<32x32xf32>
    %1073 = arith.addf %1034, %1072 : vector<32x32xf32>
    %c3_492 = arith.constant 3 : index
    %c28_493 = arith.constant 28 : index
    %1074 = memref.load %arg4[%c3_492, %c28_493] : memref<8x36xf32, #tpu.memory_space<smem>>
    %1075 = vector.broadcast %1074 : f32 to vector<32x32xf32>
    %1076 = arith.mulf %1075, %1059 : vector<32x32xf32>
    %1077 = arith.addf %1038, %1076 : vector<32x32xf32>
    %c4_494 = arith.constant 4 : index
    %c28_495 = arith.constant 28 : index
    %1078 = memref.load %arg4[%c4_494, %c28_495] : memref<8x36xf32, #tpu.memory_space<smem>>
    %1079 = vector.broadcast %1078 : f32 to vector<32x32xf32>
    %1080 = arith.mulf %1079, %1059 : vector<32x32xf32>
    %1081 = arith.addf %1042, %1080 : vector<32x32xf32>
    %c5_496 = arith.constant 5 : index
    %c28_497 = arith.constant 28 : index
    %1082 = memref.load %arg4[%c5_496, %c28_497] : memref<8x36xf32, #tpu.memory_space<smem>>
    %1083 = vector.broadcast %1082 : f32 to vector<32x32xf32>
    %1084 = arith.mulf %1083, %1059 : vector<32x32xf32>
    %1085 = arith.addf %1046, %1084 : vector<32x32xf32>
    %c6_498 = arith.constant 6 : index
    %c28_499 = arith.constant 28 : index
    %1086 = memref.load %arg4[%c6_498, %c28_499] : memref<8x36xf32, #tpu.memory_space<smem>>
    %1087 = vector.broadcast %1086 : f32 to vector<32x32xf32>
    %1088 = arith.mulf %1087, %1059 : vector<32x32xf32>
    %1089 = arith.addf %1050, %1088 : vector<32x32xf32>
    %c7_500 = arith.constant 7 : index
    %c28_501 = arith.constant 28 : index
    %1090 = memref.load %arg4[%c7_500, %c28_501] : memref<8x36xf32, #tpu.memory_space<smem>>
    %1091 = vector.broadcast %1090 : f32 to vector<32x32xf32>
    %1092 = arith.mulf %1091, %1059 : vector<32x32xf32>
    %1093 = arith.addf %1054, %1092 : vector<32x32xf32>
    %c0_502 = arith.constant 0 : index
    %c31 = arith.constant 31 : index
    %1094 = memref.load %arg4[%c0_502, %c31] : memref<8x36xf32, #tpu.memory_space<smem>>
    %1095 = vector.broadcast %1094 : f32 to vector<32x32xf32>
    %1096 = arith.mulf %1095, %1057 : vector<32x32xf32>
    %1097 = arith.addf %1065, %1096 : vector<32x32xf32>
    %c1_503 = arith.constant 1 : index
    %c31_504 = arith.constant 31 : index
    %1098 = memref.load %arg4[%c1_503, %c31_504] : memref<8x36xf32, #tpu.memory_space<smem>>
    %1099 = vector.broadcast %1098 : f32 to vector<32x32xf32>
    %1100 = arith.mulf %1099, %1057 : vector<32x32xf32>
    %1101 = arith.addf %1069, %1100 : vector<32x32xf32>
    %c2_505 = arith.constant 2 : index
    %c31_506 = arith.constant 31 : index
    %1102 = memref.load %arg4[%c2_505, %c31_506] : memref<8x36xf32, #tpu.memory_space<smem>>
    %1103 = vector.broadcast %1102 : f32 to vector<32x32xf32>
    %1104 = arith.mulf %1103, %1057 : vector<32x32xf32>
    %1105 = arith.addf %1073, %1104 : vector<32x32xf32>
    %c3_507 = arith.constant 3 : index
    %c31_508 = arith.constant 31 : index
    %1106 = memref.load %arg4[%c3_507, %c31_508] : memref<8x36xf32, #tpu.memory_space<smem>>
    %1107 = vector.broadcast %1106 : f32 to vector<32x32xf32>
    %1108 = arith.mulf %1107, %1057 : vector<32x32xf32>
    %1109 = arith.addf %1077, %1108 : vector<32x32xf32>
    %c4_509 = arith.constant 4 : index
    %c31_510 = arith.constant 31 : index
    %1110 = memref.load %arg4[%c4_509, %c31_510] : memref<8x36xf32, #tpu.memory_space<smem>>
    %1111 = vector.broadcast %1110 : f32 to vector<32x32xf32>
    %1112 = arith.mulf %1111, %1057 : vector<32x32xf32>
    %1113 = arith.addf %1081, %1112 : vector<32x32xf32>
    %c5_511 = arith.constant 5 : index
    %c31_512 = arith.constant 31 : index
    %1114 = memref.load %arg4[%c5_511, %c31_512] : memref<8x36xf32, #tpu.memory_space<smem>>
    %1115 = vector.broadcast %1114 : f32 to vector<32x32xf32>
    %1116 = arith.mulf %1115, %1057 : vector<32x32xf32>
    %1117 = arith.addf %1085, %1116 : vector<32x32xf32>
    %c6_513 = arith.constant 6 : index
    %c31_514 = arith.constant 31 : index
    %1118 = memref.load %arg4[%c6_513, %c31_514] : memref<8x36xf32, #tpu.memory_space<smem>>
    %1119 = vector.broadcast %1118 : f32 to vector<32x32xf32>
    %1120 = arith.mulf %1119, %1057 : vector<32x32xf32>
    %1121 = arith.addf %1089, %1120 : vector<32x32xf32>
    %c7_515 = arith.constant 7 : index
    %c31_516 = arith.constant 31 : index
    %1122 = memref.load %arg4[%c7_515, %c31_516] : memref<8x36xf32, #tpu.memory_space<smem>>
    %1123 = vector.broadcast %1122 : f32 to vector<32x32xf32>
    %1124 = arith.mulf %1123, %1057 : vector<32x32xf32>
    %1125 = arith.addf %1093, %1124 : vector<32x32xf32>
    %c0_517 = arith.constant 0 : index
    %c34 = arith.constant 34 : index
    %1126 = memref.load %arg4[%c0_517, %c34] : memref<8x36xf32, #tpu.memory_space<smem>>
    %1127 = vector.broadcast %1126 : f32 to vector<32x32xf32>
    %1128 = arith.mulf %1127, %1061 : vector<32x32xf32>
    %1129 = arith.addf %1097, %1128 : vector<32x32xf32>
    %c1_518 = arith.constant 1 : index
    %c34_519 = arith.constant 34 : index
    %1130 = memref.load %arg4[%c1_518, %c34_519] : memref<8x36xf32, #tpu.memory_space<smem>>
    %1131 = vector.broadcast %1130 : f32 to vector<32x32xf32>
    %1132 = arith.mulf %1131, %1061 : vector<32x32xf32>
    %1133 = arith.addf %1101, %1132 : vector<32x32xf32>
    %c2_520 = arith.constant 2 : index
    %c34_521 = arith.constant 34 : index
    %1134 = memref.load %arg4[%c2_520, %c34_521] : memref<8x36xf32, #tpu.memory_space<smem>>
    %1135 = vector.broadcast %1134 : f32 to vector<32x32xf32>
    %1136 = arith.mulf %1135, %1061 : vector<32x32xf32>
    %1137 = arith.addf %1105, %1136 : vector<32x32xf32>
    %c3_522 = arith.constant 3 : index
    %c34_523 = arith.constant 34 : index
    %1138 = memref.load %arg4[%c3_522, %c34_523] : memref<8x36xf32, #tpu.memory_space<smem>>
    %1139 = vector.broadcast %1138 : f32 to vector<32x32xf32>
    %1140 = arith.mulf %1139, %1061 : vector<32x32xf32>
    %1141 = arith.addf %1109, %1140 : vector<32x32xf32>
    %c4_524 = arith.constant 4 : index
    %c34_525 = arith.constant 34 : index
    %1142 = memref.load %arg4[%c4_524, %c34_525] : memref<8x36xf32, #tpu.memory_space<smem>>
    %1143 = vector.broadcast %1142 : f32 to vector<32x32xf32>
    %1144 = arith.mulf %1143, %1061 : vector<32x32xf32>
    %1145 = arith.addf %1113, %1144 : vector<32x32xf32>
    %c5_526 = arith.constant 5 : index
    %c34_527 = arith.constant 34 : index
    %1146 = memref.load %arg4[%c5_526, %c34_527] : memref<8x36xf32, #tpu.memory_space<smem>>
    %1147 = vector.broadcast %1146 : f32 to vector<32x32xf32>
    %1148 = arith.mulf %1147, %1061 : vector<32x32xf32>
    %1149 = arith.addf %1117, %1148 : vector<32x32xf32>
    %c6_528 = arith.constant 6 : index
    %c34_529 = arith.constant 34 : index
    %1150 = memref.load %arg4[%c6_528, %c34_529] : memref<8x36xf32, #tpu.memory_space<smem>>
    %1151 = vector.broadcast %1150 : f32 to vector<32x32xf32>
    %1152 = arith.mulf %1151, %1061 : vector<32x32xf32>
    %1153 = arith.addf %1121, %1152 : vector<32x32xf32>
    %c7_530 = arith.constant 7 : index
    %c34_531 = arith.constant 34 : index
    %1154 = memref.load %arg4[%c7_530, %c34_531] : memref<8x36xf32, #tpu.memory_space<smem>>
    %1155 = vector.broadcast %1154 : f32 to vector<32x32xf32>
    %1156 = arith.mulf %1155, %1061 : vector<32x32xf32>
    %1157 = arith.addf %1125, %1156 : vector<32x32xf32>
    %1158 = vector.extract_strided_slice %15 {offsets = [3, 0, 0], sizes = [1, 16, 32], strides = [1, 1, 1]} : vector<4x16x32xf32> to vector<1x16x32xf32>
    %1159 = vector.shape_cast %1158 : vector<1x16x32xf32> to vector<16x32xf32>
    %cst_532 = arith.constant dense<0.000000e+00> : vector<32x32xf32>
    %1160 = tpu.matmul %3, %1159, %cst_532 {dimension_numbers = #tpu.dot_dimension_numbers<[1], [0], [0], [1], [0, 0, 1, 1], [], []>} : vector<32x16xf32>, vector<16x32xf32>, vector<32x32xf32> -> vector<32x32xf32>
    %1161 = vector.extract_strided_slice %1160 {offsets = [0, 0], sizes = [31, 32], strides = [1, 1]} : vector<32x32xf32> to vector<31x32xf32>
    %1162 = tpu.concatenate %16, %1161 in 0 : vector<1x32xf32>, vector<31x32xf32> -> vector<32x32xf32>
    %1163 = vector.extract_strided_slice %1160 {offsets = [1, 0], sizes = [31, 32], strides = [1, 1]} : vector<32x32xf32> to vector<31x32xf32>
    %1164 = tpu.concatenate %1163, %16 in 0 : vector<31x32xf32>, vector<1x32xf32> -> vector<32x32xf32>
    %c0_533 = arith.constant 0 : index
    %c29 = arith.constant 29 : index
    %1165 = memref.load %arg4[%c0_533, %c29] : memref<8x36xf32, #tpu.memory_space<smem>>
    %1166 = vector.broadcast %1165 : f32 to vector<32x32xf32>
    %1167 = arith.mulf %1166, %1162 : vector<32x32xf32>
    %1168 = arith.addf %1129, %1167 : vector<32x32xf32>
    %c1_534 = arith.constant 1 : index
    %c29_535 = arith.constant 29 : index
    %1169 = memref.load %arg4[%c1_534, %c29_535] : memref<8x36xf32, #tpu.memory_space<smem>>
    %1170 = vector.broadcast %1169 : f32 to vector<32x32xf32>
    %1171 = arith.mulf %1170, %1162 : vector<32x32xf32>
    %1172 = arith.addf %1133, %1171 : vector<32x32xf32>
    %c2_536 = arith.constant 2 : index
    %c29_537 = arith.constant 29 : index
    %1173 = memref.load %arg4[%c2_536, %c29_537] : memref<8x36xf32, #tpu.memory_space<smem>>
    %1174 = vector.broadcast %1173 : f32 to vector<32x32xf32>
    %1175 = arith.mulf %1174, %1162 : vector<32x32xf32>
    %1176 = arith.addf %1137, %1175 : vector<32x32xf32>
    %c3_538 = arith.constant 3 : index
    %c29_539 = arith.constant 29 : index
    %1177 = memref.load %arg4[%c3_538, %c29_539] : memref<8x36xf32, #tpu.memory_space<smem>>
    %1178 = vector.broadcast %1177 : f32 to vector<32x32xf32>
    %1179 = arith.mulf %1178, %1162 : vector<32x32xf32>
    %1180 = arith.addf %1141, %1179 : vector<32x32xf32>
    %c4_540 = arith.constant 4 : index
    %c29_541 = arith.constant 29 : index
    %1181 = memref.load %arg4[%c4_540, %c29_541] : memref<8x36xf32, #tpu.memory_space<smem>>
    %1182 = vector.broadcast %1181 : f32 to vector<32x32xf32>
    %1183 = arith.mulf %1182, %1162 : vector<32x32xf32>
    %1184 = arith.addf %1145, %1183 : vector<32x32xf32>
    %c5_542 = arith.constant 5 : index
    %c29_543 = arith.constant 29 : index
    %1185 = memref.load %arg4[%c5_542, %c29_543] : memref<8x36xf32, #tpu.memory_space<smem>>
    %1186 = vector.broadcast %1185 : f32 to vector<32x32xf32>
    %1187 = arith.mulf %1186, %1162 : vector<32x32xf32>
    %1188 = arith.addf %1149, %1187 : vector<32x32xf32>
    %c6_544 = arith.constant 6 : index
    %c29_545 = arith.constant 29 : index
    %1189 = memref.load %arg4[%c6_544, %c29_545] : memref<8x36xf32, #tpu.memory_space<smem>>
    %1190 = vector.broadcast %1189 : f32 to vector<32x32xf32>
    %1191 = arith.mulf %1190, %1162 : vector<32x32xf32>
    %1192 = arith.addf %1153, %1191 : vector<32x32xf32>
    %c7_546 = arith.constant 7 : index
    %c29_547 = arith.constant 29 : index
    %1193 = memref.load %arg4[%c7_546, %c29_547] : memref<8x36xf32, #tpu.memory_space<smem>>
    %1194 = vector.broadcast %1193 : f32 to vector<32x32xf32>
    %1195 = arith.mulf %1194, %1162 : vector<32x32xf32>
    %1196 = arith.addf %1157, %1195 : vector<32x32xf32>
    %c0_548 = arith.constant 0 : index
    %c32 = arith.constant 32 : index
    %1197 = memref.load %arg4[%c0_548, %c32] : memref<8x36xf32, #tpu.memory_space<smem>>
    %1198 = vector.broadcast %1197 : f32 to vector<32x32xf32>
    %1199 = arith.mulf %1198, %1160 : vector<32x32xf32>
    %1200 = arith.addf %1168, %1199 : vector<32x32xf32>
    %c1_549 = arith.constant 1 : index
    %c32_550 = arith.constant 32 : index
    %1201 = memref.load %arg4[%c1_549, %c32_550] : memref<8x36xf32, #tpu.memory_space<smem>>
    %1202 = vector.broadcast %1201 : f32 to vector<32x32xf32>
    %1203 = arith.mulf %1202, %1160 : vector<32x32xf32>
    %1204 = arith.addf %1172, %1203 : vector<32x32xf32>
    %c2_551 = arith.constant 2 : index
    %c32_552 = arith.constant 32 : index
    %1205 = memref.load %arg4[%c2_551, %c32_552] : memref<8x36xf32, #tpu.memory_space<smem>>
    %1206 = vector.broadcast %1205 : f32 to vector<32x32xf32>
    %1207 = arith.mulf %1206, %1160 : vector<32x32xf32>
    %1208 = arith.addf %1176, %1207 : vector<32x32xf32>
    %c3_553 = arith.constant 3 : index
    %c32_554 = arith.constant 32 : index
    %1209 = memref.load %arg4[%c3_553, %c32_554] : memref<8x36xf32, #tpu.memory_space<smem>>
    %1210 = vector.broadcast %1209 : f32 to vector<32x32xf32>
    %1211 = arith.mulf %1210, %1160 : vector<32x32xf32>
    %1212 = arith.addf %1180, %1211 : vector<32x32xf32>
    %c4_555 = arith.constant 4 : index
    %c32_556 = arith.constant 32 : index
    %1213 = memref.load %arg4[%c4_555, %c32_556] : memref<8x36xf32, #tpu.memory_space<smem>>
    %1214 = vector.broadcast %1213 : f32 to vector<32x32xf32>
    %1215 = arith.mulf %1214, %1160 : vector<32x32xf32>
    %1216 = arith.addf %1184, %1215 : vector<32x32xf32>
    %c5_557 = arith.constant 5 : index
    %c32_558 = arith.constant 32 : index
    %1217 = memref.load %arg4[%c5_557, %c32_558] : memref<8x36xf32, #tpu.memory_space<smem>>
    %1218 = vector.broadcast %1217 : f32 to vector<32x32xf32>
    %1219 = arith.mulf %1218, %1160 : vector<32x32xf32>
    %1220 = arith.addf %1188, %1219 : vector<32x32xf32>
    %c6_559 = arith.constant 6 : index
    %c32_560 = arith.constant 32 : index
    %1221 = memref.load %arg4[%c6_559, %c32_560] : memref<8x36xf32, #tpu.memory_space<smem>>
    %1222 = vector.broadcast %1221 : f32 to vector<32x32xf32>
    %1223 = arith.mulf %1222, %1160 : vector<32x32xf32>
    %1224 = arith.addf %1192, %1223 : vector<32x32xf32>
    %c7_561 = arith.constant 7 : index
    %c32_562 = arith.constant 32 : index
    %1225 = memref.load %arg4[%c7_561, %c32_562] : memref<8x36xf32, #tpu.memory_space<smem>>
    %1226 = vector.broadcast %1225 : f32 to vector<32x32xf32>
    %1227 = arith.mulf %1226, %1160 : vector<32x32xf32>
    %1228 = arith.addf %1196, %1227 : vector<32x32xf32>
    %c0_563 = arith.constant 0 : index
    %c35 = arith.constant 35 : index
    %1229 = memref.load %arg4[%c0_563, %c35] : memref<8x36xf32, #tpu.memory_space<smem>>
    %1230 = vector.broadcast %1229 : f32 to vector<32x32xf32>
    %1231 = arith.mulf %1230, %1164 : vector<32x32xf32>
    %1232 = arith.addf %1200, %1231 : vector<32x32xf32>
    %c1_564 = arith.constant 1 : index
    %c35_565 = arith.constant 35 : index
    %1233 = memref.load %arg4[%c1_564, %c35_565] : memref<8x36xf32, #tpu.memory_space<smem>>
    %1234 = vector.broadcast %1233 : f32 to vector<32x32xf32>
    %1235 = arith.mulf %1234, %1164 : vector<32x32xf32>
    %1236 = arith.addf %1204, %1235 : vector<32x32xf32>
    %c2_566 = arith.constant 2 : index
    %c35_567 = arith.constant 35 : index
    %1237 = memref.load %arg4[%c2_566, %c35_567] : memref<8x36xf32, #tpu.memory_space<smem>>
    %1238 = vector.broadcast %1237 : f32 to vector<32x32xf32>
    %1239 = arith.mulf %1238, %1164 : vector<32x32xf32>
    %1240 = arith.addf %1208, %1239 : vector<32x32xf32>
    %c3_568 = arith.constant 3 : index
    %c35_569 = arith.constant 35 : index
    %1241 = memref.load %arg4[%c3_568, %c35_569] : memref<8x36xf32, #tpu.memory_space<smem>>
    %1242 = vector.broadcast %1241 : f32 to vector<32x32xf32>
    %1243 = arith.mulf %1242, %1164 : vector<32x32xf32>
    %1244 = arith.addf %1212, %1243 : vector<32x32xf32>
    %c4_570 = arith.constant 4 : index
    %c35_571 = arith.constant 35 : index
    %1245 = memref.load %arg4[%c4_570, %c35_571] : memref<8x36xf32, #tpu.memory_space<smem>>
    %1246 = vector.broadcast %1245 : f32 to vector<32x32xf32>
    %1247 = arith.mulf %1246, %1164 : vector<32x32xf32>
    %1248 = arith.addf %1216, %1247 : vector<32x32xf32>
    %c5_572 = arith.constant 5 : index
    %c35_573 = arith.constant 35 : index
    %1249 = memref.load %arg4[%c5_572, %c35_573] : memref<8x36xf32, #tpu.memory_space<smem>>
    %1250 = vector.broadcast %1249 : f32 to vector<32x32xf32>
    %1251 = arith.mulf %1250, %1164 : vector<32x32xf32>
    %1252 = arith.addf %1220, %1251 : vector<32x32xf32>
    %c6_574 = arith.constant 6 : index
    %c35_575 = arith.constant 35 : index
    %1253 = memref.load %arg4[%c6_574, %c35_575] : memref<8x36xf32, #tpu.memory_space<smem>>
    %1254 = vector.broadcast %1253 : f32 to vector<32x32xf32>
    %1255 = arith.mulf %1254, %1164 : vector<32x32xf32>
    %1256 = arith.addf %1224, %1255 : vector<32x32xf32>
    %c7_576 = arith.constant 7 : index
    %c35_577 = arith.constant 35 : index
    %1257 = memref.load %arg4[%c7_576, %c35_577] : memref<8x36xf32, #tpu.memory_space<smem>>
    %1258 = vector.broadcast %1257 : f32 to vector<32x32xf32>
    %1259 = arith.mulf %1258, %1164 : vector<32x32xf32>
    %1260 = arith.addf %1228, %1259 : vector<32x32xf32>
    %1261 = vector.shape_cast %1232 : vector<32x32xf32> to vector<1x32x32xf32>
    %1262 = vector.shape_cast %1236 : vector<32x32xf32> to vector<1x32x32xf32>
    %1263 = vector.shape_cast %1240 : vector<32x32xf32> to vector<1x32x32xf32>
    %1264 = vector.shape_cast %1244 : vector<32x32xf32> to vector<1x32x32xf32>
    %1265 = vector.shape_cast %1248 : vector<32x32xf32> to vector<1x32x32xf32>
    %1266 = vector.shape_cast %1252 : vector<32x32xf32> to vector<1x32x32xf32>
    %1267 = vector.shape_cast %1256 : vector<32x32xf32> to vector<1x32x32xf32>
    %1268 = vector.shape_cast %1260 : vector<32x32xf32> to vector<1x32x32xf32>
    %1269 = tpu.concatenate %1261, %1262, %1263, %1264, %1265, %1266, %1267, %1268 in 0 : vector<1x32x32xf32>, vector<1x32x32xf32>, vector<1x32x32xf32>, vector<1x32x32xf32>, vector<1x32x32xf32>, vector<1x32x32xf32>, vector<1x32x32xf32>, vector<1x32x32xf32> -> vector<8x32x32xf32>
    %c0_578 = arith.constant 0 : index
    %c0_579 = arith.constant 0 : index
    %c0_580 = arith.constant 0 : index
    %c0_581 = arith.constant 0 : index
    %1270 = vector.load %arg5[%c0_578, %c0_579, %c0_580, %c0_581] : memref<1x8x32x32xf32, #tpu.memory_space<vmem>>, vector<1x8x32x32xf32>
    %1271 = vector.shape_cast %1270 : vector<1x8x32x32xf32> to vector<8x32x32xf32>
    %1272 = vector.shape_cast %1269 : vector<8x32x32xf32> to vector<1x8x32x32xf32>
    tpu.vector_store %arg5[%c0_578, %c0_579, %c0_580, %c0_581], %1272 {strides = array<i32>} : memref<1x8x32x32xf32, #tpu.memory_space<vmem>>, vector<1x8x32x32xf32>,
    %cst_582 = arith.constant dense<0.000000e+00> : vector<8x32xf32>
    %1273 = vector.multi_reduction <add>, %1269, %cst_582 [2] : vector<8x32x32xf32> to vector<8x32xf32>
    %1274 = vector.shape_cast %1273 : vector<8x32xf32> to vector<8x32x1xf32>
    %cst_583 = arith.constant dense<0.000000e+00> : vector<8x1xf32>
    %1275 = vector.multi_reduction <add>, %1274, %cst_583 [1] : vector<8x32x1xf32> to vector<8x1xf32>
    %1276 = vector.shape_cast %1275 : vector<8x1xf32> to vector<8x1x1xf32>
    %c0_584 = arith.constant 0 : index
    %c0_585 = arith.constant 0 : index
    %c0_586 = arith.constant 0 : index
    %c0_587 = arith.constant 0 : index
    %1277 = vector.load %arg6[%c0_584, %c0_585, %c0_586, %c0_587] : memref<1x8x1x1xf32, #tpu.memory_space<vmem>>, vector<1x8x1x1xf32>
    %1278 = vector.shape_cast %1277 : vector<1x8x1x1xf32> to vector<8x1x1xf32>
    %1279 = vector.shape_cast %1276 : vector<8x1x1xf32> to vector<1x8x1x1xf32>
    tpu.vector_store %arg6[%c0_584, %c0_585, %c0_586, %c0_587], %1279 {strides = array<i32>} : memref<1x8x1x1xf32, #tpu.memory_space<vmem>>, vector<1x8x1x1xf32>,
    %1280 = arith.mulf %1269, %1269 : vector<8x32x32xf32>
    %cst_588 = arith.constant dense<0.000000e+00> : vector<8x32xf32>
    %1281 = vector.multi_reduction <add>, %1280, %cst_588 [2] : vector<8x32x32xf32> to vector<8x32xf32>
    %1282 = vector.shape_cast %1281 : vector<8x32xf32> to vector<8x32x1xf32>
    %cst_589 = arith.constant dense<0.000000e+00> : vector<8x1xf32>
    %1283 = vector.multi_reduction <add>, %1282, %cst_589 [1] : vector<8x32x1xf32> to vector<8x1xf32>
    %1284 = vector.shape_cast %1283 : vector<8x1xf32> to vector<8x1x1xf32>
    %c0_590 = arith.constant 0 : index
    %c0_591 = arith.constant 0 : index
    %c0_592 = arith.constant 0 : index
    %c0_593 = arith.constant 0 : index
    %1285 = vector.load %arg7[%c0_590, %c0_591, %c0_592, %c0_593] : memref<1x8x1x1xf32, #tpu.memory_space<vmem>>, vector<1x8x1x1xf32>
    %1286 = vector.shape_cast %1285 : vector<1x8x1x1xf32> to vector<8x1x1xf32>
    %1287 = vector.shape_cast %1284 : vector<8x1x1xf32> to vector<1x8x1x1xf32>
    tpu.vector_store %arg7[%c0_590, %c0_591, %c0_592, %c0_593], %1287 {strides = array<i32>} : memref<1x8x1x1xf32, #tpu.memory_space<vmem>>, vector<1x8x1x1xf32>,
    return
  }
  func.func @transform_0(%arg0: i32) -> (i32, i32, i32, i32) {
    %c0_i32 = arith.constant 0 : i32
    %c0_i32_0 = arith.constant 0 : i32
    %c0_i32_1 = arith.constant 0 : i32
    %c0_i32_2 = arith.constant 0 : i32
    return %arg0, %c0_i32, %c0_i32_0, %c0_i32_1 : i32, i32, i32, i32
  }
  func.func @transform_1(%arg0: i32) -> (i32, i32) {
    %c0_i32 = arith.constant 0 : i32
    %c0_i32_0 = arith.constant 0 : i32
    %c0_i32_1 = arith.constant 0 : i32
    return %c0_i32, %c0_i32_0 : i32, i32
  }
  func.func @transform_2(%arg0: i32) -> (i32, i32, i32) {
    %c0_i32 = arith.constant 0 : i32
    %c0_i32_0 = arith.constant 0 : i32
    %c0_i32_1 = arith.constant 0 : i32
    %c0_i32_2 = arith.constant 0 : i32
    return %c0_i32, %c0_i32_0, %c0_i32_1 : i32, i32, i32
  }
  func.func @transform_3(%arg0: i32) -> (i32, i32) {
    %c0_i32 = arith.constant 0 : i32
    %c0_i32_0 = arith.constant 0 : i32
    %c0_i32_1 = arith.constant 0 : i32
    return %c0_i32, %c0_i32_0 : i32, i32
  }
  func.func @transform_4(%arg0: i32) -> (i32, i32, i32, i32) {
    %c0_i32 = arith.constant 0 : i32
    %c0_i32_0 = arith.constant 0 : i32
    %c0_i32_1 = arith.constant 0 : i32
    %c0_i32_2 = arith.constant 0 : i32
    return %arg0, %c0_i32, %c0_i32_0, %c0_i32_1 : i32, i32, i32, i32
  }
  func.func @transform_5(%arg0: i32) -> (i32, i32, i32, i32) {
    %c0_i32 = arith.constant 0 : i32
    %c0_i32_0 = arith.constant 0 : i32
    %c0_i32_1 = arith.constant 0 : i32
    %c0_i32_2 = arith.constant 0 : i32
    return %arg0, %c0_i32, %c0_i32_0, %c0_i32_1 : i32, i32, i32, i32
  }
  func.func @transform_6(%arg0: i32) -> (i32, i32, i32, i32) {
    %c0_i32 = arith.constant 0 : i32
    %c0_i32_0 = arith.constant 0 : i32
    %c0_i32_1 = arith.constant 0 : i32
    %c0_i32_2 = arith.constant 0 : i32
    return %arg0, %c0_i32, %c0_i32_0, %c0_i32_1 : i32, i32, i32, i32
  }
}

</mosaic_0001>

<llo_original>
// kernel: tpu_custom_call.1
$region0: #{tpu_custom_call.1}
  #allocation0 [shape = 'u32[]', space=smem, size = 0x4, offset = 0x4, fixed_abs, tag = 'smem constant byte address 0x4 - core index']
  #allocation1 [shape = 'u32[144,128]{1,0:T(1,128)}', space=vmem, size = 0x12000, scoped, tag = 'internal scratch']
  %s0 = inlined_call_operand.hbm [shape: f32[2,4,16,16], index: 0, kind: input, shape index: {}]
  %s1 = inlined_call_operand.vmem [shape: f32[32,16], index: 1, kind: input, shape index: {}]
  %s2 = inlined_call_operand.vmem [shape: f32[3,16,32], index: 2, kind: input, shape index: {}]
  %s3 = inlined_call_operand.vmem [shape: f32[8,36], index: 3, kind: input, shape index: {}]
  %s4 = inlined_call_operand.hbm [shape: f32[2,8,32,32], index: 4, kind: output, shape index: {0}]
  %s5 = inlined_call_operand.vmem [shape: f32[2,8,1,1], index: 5, kind: output, shape index: {1}]
  %s6 = inlined_call_operand.vmem [shape: f32[2,8,1,1], index: 6, kind: output, shape index: {2}]
  %7 = xla_tuple %s4, %s5, %s6
  %s8 = sld [smem:[#allocation0]]
  $region73: #{tpu_custom_call.1} parent=0
    _
  %s10 = ssub.s32 1, %s8
  %s11 = scalar_select 0, %s10, %s8
  $region1: #{tpu_custom_call.1} parent=0
    #allocation2 [shape = 'u8[65536]{0}', space=vmem, size = 0x10000, scoped, tag = 'input window, operand 0']
    #allocation3 [shape = 's32[2]{0}', space=sflag, size = 0x8, scoped, tag = 'scoped memory for tpu_custom_call.1']
    #allocation4 [shape = 's32[2]{0}', space=sflag, size = 0x8, scoped, tag = 'scoped memory for tpu_custom_call.1']
    #allocation5 [shape = 's32[2]{0}', space=sflag, size = 0x8, scoped, tag = 'scoped memory for tpu_custom_call.1']
    #allocation6 [shape = 'u8[4096]{0}', space=smem, size = 0x1000, scoped, tag = 'input window, operand 3, single buffered']
    #allocation7 [shape = 'u8[262144]{0}', space=vmem, size = 0x40000, scoped, tag = 'output window, operand 0']
    %12 = vsyncpa [#allocation3], 0
    %s13 = scalar_lea.sflag [#allocation3], 1
    %14 = vsyncpa %s13, 0
    %15 = vsyncpa [#allocation5], 0
    %16 = vsyncpa [#allocation4], 0
    %s17 = scalar_lea.sflag [#allocation4], 1
    %18 = vsyncpa %s17, 0
    loop: start=0, step=1, limit=4
    $region2: #{tpu_custom_call.1} parent=1 // loop_pre_header
      _
    $region3: #{tpu_custom_call.1} parent=1 // loop_header
      %s20 = sphi 0, %s24
      %p21 = scmp.ge.s32.totalorder %s20, 4
      %s30 = sphi 0, %s32
      %s33 = sphi 0, %s30
      %s34 = sphi 0, %s33
      %s50 = sphi 0, %s34
      %s54 = sphi 0, %s54
      %s56 = sphi 0, %s54
      %s57 = sphi 0, %s56
      %s71 = sphi 0, %s57
      %s75 = sphi 0, %s75
      %s77 = sphi 0, %s75
      %s78 = sphi 0, %s77
      %s92 = sphi 0, %s78
      %s96 = sphi 0, %s96
      %s98 = sphi 0, %s96
      %s99 = sphi 0, %s98
      %s113 = sphi 0, %s99
      %s119 = sphi 0, %s121
      %s122 = sphi 0, %s119
      %s123 = sphi 0, %s122
      %s139 = sphi 0, %s123
      %s145 = sphi 0, %s147
      %s148 = sphi 0, %s145
      %s149 = sphi 0, %s148
      %s165 = sphi 0, %s149
      %s171 = sphi 0, %s173
      %s174 = sphi 0, %s171
      %s175 = sphi 0, %s174
      %s191 = sphi 0, %s175
    $region4: #{tpu_custom_call.1} parent=1 // loop_header_branch
      %23 = sbr.rel (%p21) target = $region8
    $region5: #{tpu_custom_call.1} parent=1 // loop_body
      %s25 = ssub.s32 %s20, 1
      %s26 = ssub.s32 %s20, 2
      %s27 = sadd.s32 %s20, 1
      %s28 = ssub.s32 %s20, %s27
      %p29 = scmp.eq.s32.totalorder %s28, 0
      %s31 = sadd.s32 %s30, 1
      %s32 = scalar_select %p29, %s30, %s31
      %p35 = pneg %p29
      %p36 = scmp.eq.s32.totalorder %s20, 1
      %p37 = por %p35, %p36
      %p38 = scmp.ne.s32.totalorder %s30, %s33
      %p39 = scmp.eq.s32.totalorder %s20, 0
      %p40 = por %p38, %p39
      %p41 = scmp.ne.s32.totalorder %s30, %s33
      %p42 = scmp.eq.s32.totalorder %s25, 1
      %p43 = por %p41, %p42
      %p44 = scmp.ne.s32.totalorder %s33, %s34
      %p45 = scmp.eq.s32.totalorder %s25, 0
      %p46 = por %p44, %p45
      %p47 = scmp.ne.s32.totalorder %s33, %s34
      %p48 = scmp.eq.s32.totalorder %s26, 1
      %p49 = por %p47, %p48
      %p51 = scmp.ne.s32.totalorder %s34, %s50
      %p52 = scmp.eq.s32.totalorder %s26, 0
      %p53 = por %p51, %p52
      %s55 = sadd.s32 %s54, 1
      %p58 = scmp.eq.s32.totalorder %s20, 1
      %p59 = scmp.ne.s32.totalorder %s54, %s56
      %p60 = scmp.eq.s32.totalorder %s20, 0
      %p61 = por %p59, %p60
      %p62 = scmp.ne.s32.totalorder %s54, %s56
      %p63 = scmp.eq.s32.totalorder %s25, 1
      %p64 = por %p62, %p63
      %p65 = scmp.ne.s32.totalorder %s56, %s57
      %p66 = scmp.eq.s32.totalorder %s25, 0
      %p67 = por %p65, %p66
      %p68 = scmp.ne.s32.totalorder %s56, %s57
      %p69 = scmp.eq.s32.totalorder %s26, 1
      %p70 = por %p68, %p69
      %p72 = scmp.ne.s32.totalorder %s57, %s71
      %p73 = scmp.eq.s32.totalorder %s26, 0
      %p74 = por %p72, %p73
      %s76 = sadd.s32 %s75, 1
      %p79 = scmp.eq.s32.totalorder %s20, 1
      %p80 = scmp.ne.s32.totalorder %s75, %s77
      %p81 = scmp.eq.s32.totalorder %s20, 0
      %p82 = por %p80, %p81
      %p83 = scmp.ne.s32.totalorder %s75, %s77
      %p84 = scmp.eq.s32.totalorder %s25, 1
      %p85 = por %p83, %p84
      %p86 = scmp.ne.s32.totalorder %s77, %s78
      %p87 = scmp.eq.s32.totalorder %s25, 0
      %p88 = por %p86, %p87
      %p89 = scmp.ne.s32.totalorder %s77, %s78
      %p90 = scmp.eq.s32.totalorder %s26, 1
      %p91 = por %p89, %p90
      %p93 = scmp.ne.s32.totalorder %s78, %s92
      %p94 = scmp.eq.s32.totalorder %s26, 0
      %p95 = por %p93, %p94
      %s97 = sadd.s32 %s96, 1
      %p100 = scmp.eq.s32.totalorder %s20, 1
      %p101 = scmp.ne.s32.totalorder %s96, %s98
      %p102 = scmp.eq.s32.totalorder %s20, 0
      %p103 = por %p101, %p102
      %p104 = scmp.ne.s32.totalorder %s96, %s98
      %p105 = scmp.eq.s32.totalorder %s25, 1
      %p106 = por %p104, %p105
      %p107 = scmp.ne.s32.totalorder %s98, %s99
      %p108 = scmp.eq.s32.totalorder %s25, 0
      %p109 = por %p107, %p108
      %p110 = scmp.ne.s32.totalorder %s98, %s99
      %p111 = scmp.eq.s32.totalorder %s26, 1
      %p112 = por %p110, %p111
      %p114 = scmp.ne.s32.totalorder %s99, %s113
      %p115 = scmp.eq.s32.totalorder %s26, 0
      %p116 = por %p114, %p115
      %s117 = ssub.s32 %s20, %s27
      %p118 = scmp.eq.s32.totalorder %s117, 0
      %s120 = sadd.s32 %s119, 1
      %s121 = scalar_select %p118, %s119, %s120
      %p124 = pneg %p118
      %p125 = scmp.eq.s32.totalorder %s20, 1
      %p126 = por %p124, %p125
      %p127 = scmp.ne.s32.totalorder %s119, %s122
      %p128 = scmp.eq.s32.totalorder %s20, 0
      %p129 = por %p127, %p128
      %p130 = scmp.ne.s32.totalorder %s119, %s122
      %p131 = scmp.eq.s32.totalorder %s25, 1
      %p132 = por %p130, %p131
      %p133 = scmp.ne.s32.totalorder %s122, %s123
      %p134 = scmp.eq.s32.totalorder %s25, 0
      %p135 = por %p133, %p134
      %p136 = scmp.ne.s32.totalorder %s122, %s123
      %p137 = scmp.eq.s32.totalorder %s26, 1
      %p138 = por %p136, %p137
      %p140 = scmp.ne.s32.totalorder %s123, %s139
      %p141 = scmp.eq.s32.totalorder %s26, 0
      %p142 = por %p140, %p141
      %s143 = ssub.s32 %s20, %s27
      %p144 = scmp.eq.s32.totalorder %s143, 0
      %s146 = sadd.s32 %s145, 1
      %s147 = scalar_select %p144, %s145, %s146
      %p150 = pneg %p144
      %p151 = scmp.eq.s32.totalorder %s20, 1
      %p152 = por %p150, %p151
      %p153 = scmp.ne.s32.totalorder %s145, %s148
      %p154 = scmp.eq.s32.totalorder %s20, 0
      %p155 = por %p153, %p154
      %p156 = scmp.ne.s32.totalorder %s145, %s148
      %p157 = scmp.eq.s32.totalorder %s25, 1
      %p158 = por %p156, %p157
      %p159 = scmp.ne.s32.totalorder %s148, %s149
      %p160 = scmp.eq.s32.totalorder %s25, 0
      %p161 = por %p159, %p160
      %p162 = scmp.ne.s32.totalorder %s148, %s149
      %p163 = scmp.eq.s32.totalorder %s26, 1
      %p164 = por %p162, %p163
      %p166 = scmp.ne.s32.totalorder %s149, %s165
      %p167 = scmp.eq.s32.totalorder %s26, 0
      %p168 = por %p166, %p167
      %s169 = ssub.s32 %s20, %s27
      %p170 = scmp.eq.s32.totalorder %s169, 0
      %s172 = sadd.s32 %s171, 1
      %s173 = scalar_select %p170, %s171, %s172
      %p176 = pneg %p170
      %p177 = scmp.eq.s32.totalorder %s20, 1
      %p178 = por %p176, %p177
      %p179 = scmp.ne.s32.totalorder %s171, %s174
      %p180 = scmp.eq.s32.totalorder %s20, 0
      %p181 = por %p179, %p180
      %p182 = scmp.ne.s32.totalorder %s171, %s174
      %p183 = scmp.eq.s32.totalorder %s25, 1
      %p184 = por %p182, %p183
      %p185 = scmp.ne.s32.totalorder %s174, %s175
      %p186 = scmp.eq.s32.totalorder %s25, 0
      %p187 = por %p185, %p186
      %p188 = scmp.ne.s32.totalorder %s174, %s175
      %p189 = scmp.eq.s32.totalorder %s26, 1
      %p190 = por %p188, %p189
      %p192 = scmp.ne.s32.totalorder %s175, %s191
      %p193 = scmp.eq.s32.totalorder %s26, 0
      %p194 = por %p192, %p193
      %p195 = scmp.le.s32.totalorder 1, %s20
      %p196 = scmp.lt.s32.totalorder %s20, 3
      %p197 = pnand %p195, %p196
      %p198 = pneg %p197
      // Predicated region
      $region9: #{tpu_custom_call.1} parent=5 // pred_check
        _
      $region10: #{tpu_custom_call.1} parent=5 // pred_check_branch
        %200 = sbr.rel (%p197) target = $region12
      $region11: #{tpu_custom_call.1} parent=5 // pred_region
        %s201 = ssub.s32 %s20, 1
        // Predicated region
        $region13: #{tpu_custom_call.1} parent=11 // pred_check
          %p202 = pneg %p67
        $region14: #{tpu_custom_call.1} parent=11 // pred_check_branch
          %204 = sbr.rel (%p202) target = $region16
        $region15: #{tpu_custom_call.1} parent=11 // pred_region
          _
        $region16: #{tpu_custom_call.1} parent=11 // pred_fallthru
          _
        // Predicated region
        $region17: #{tpu_custom_call.1} parent=11 // pred_check
          %p205 = pneg %p88
        $region18: #{tpu_custom_call.1} parent=11 // pred_check_branch
          %207 = sbr.rel (%p205) target = $region20
        $region19: #{tpu_custom_call.1} parent=11 // pred_region
          _
        $region20: #{tpu_custom_call.1} parent=11 // pred_fallthru
          _
        // Predicated region
        $region21: #{tpu_custom_call.1} parent=11 // pred_check
          %p208 = pneg %p109
        $region22: #{tpu_custom_call.1} parent=11 // pred_check_branch
          %210 = sbr.rel (%p208) target = $region24
        $region23: #{tpu_custom_call.1} parent=11 // pred_region
          %s212 = ssub.s32 128, 128
          %213 = vsyncadd [#allocation5], %s212
          %s215 = sshll.u32 %s3, 4
          %s216 = int_to_ptr.vmem [resolvable:$true] %s215
          %218 = dma.vmem_to_smem %s216, 128, [#allocation6], [#allocation5]
        $region24: #{tpu_custom_call.1} parent=11 // pred_fallthru
          _
      $region12: #{tpu_custom_call.1} parent=5 // pred_fallthru
        _
      %p219 = scmp.lt.s32.totalorder %s20, 2
      // Predicated region
      $region25: #{tpu_custom_call.1} parent=5 // pred_check
        %p220 = pneg %p219
      $region26: #{tpu_custom_call.1} parent=5 // pred_check_branch
        %222 = sbr.rel (%p220) target = $region28
      $region27: #{tpu_custom_call.1} parent=5 // pred_region
        // Predicated region
        $region29: #{tpu_custom_call.1} parent=27 // pred_check
          %p223 = pneg %p40
        $region30: #{tpu_custom_call.1} parent=27 // pred_check_branch
          %225 = sbr.rel (%p223) target = $region32
        $region31: #{tpu_custom_call.1} parent=27 // pred_region
          %s226 = sand.u32 %s30, 1
          %s227 = scalar_lea.sflag [#allocation3], %s226
          %s228 = sand.u32 %s30, 1
          %s229 = smul.addr %s228, 64
          %s230 = scalar_lea.vmem [#allocation2], %s229
          %s232 = ssub.s32 1024, 1024
          %233 = vsyncadd %s227, %s232
          %s234 = smul.addr %s20, 8
          %s235 = smul.addr %s234, 128
          %s236 = scalar_lea.hbm %s0, %s235
          %s237 = sshll.u32 %s230, 4
          %s238 = int_to_ptr.vmem [resolvable:$true] %s237
          %243 = dma.hbm_to_vmem [thread:$0]  %s236, 1024, %s238, %s227, 128, 128, 8
        $region32: #{tpu_custom_call.1} parent=27 // pred_fallthru
          _
      $region28: #{tpu_custom_call.1} parent=5 // pred_fallthru
        _
      %p244 = scmp.le.s32.totalorder 1, %s20
      %p245 = scmp.lt.s32.totalorder %s20, 3
      %p246 = pnand %p244, %p245
      %p247 = pneg %p246
      // Predicated region
      $region33: #{tpu_custom_call.1} parent=5 // pred_check
        _
      $region34: #{tpu_custom_call.1} parent=5 // pred_check_branch
        %249 = sbr.rel (%p246) target = $region36
      $region35: #{tpu_custom_call.1} parent=5 // pred_region
        %s250 = ssub.s32 %s20, 1
        %s251 = sand.u32 %s33, 1
        %s252 = scalar_lea.sflag [#allocation3], %s251
        %s253 = sand.u32 %s33, 1
        %s254 = smul.addr %s253, 64
        %s255 = scalar_lea.vmem [#allocation2], %s254
        // Predicated region
        $region37: #{tpu_custom_call.1} parent=35 // pred_check
          %p256 = pneg %p46
        $region38: #{tpu_custom_call.1} parent=35 // pred_check_branch
          %258 = sbr.rel (%p256) target = $region40
        $region39: #{tpu_custom_call.1} parent=35 // pred_region
          %259 = dma.done %s252, 1024
        $region40: #{tpu_custom_call.1} parent=35 // pred_fallthru
          _
        // Predicated region
        $region41: #{tpu_custom_call.1} parent=35 // pred_check
          %p260 = pneg %p109
        $region42: #{tpu_custom_call.1} parent=35 // pred_check_branch
          %262 = sbr.rel (%p260) target = $region44
        $region43: #{tpu_custom_call.1} parent=35 // pred_region
          %263 = dma.done [#allocation5], 128
        $region44: #{tpu_custom_call.1} parent=35 // pred_fallthru
          _
        %264 = sfence
        %s265 = sand.u32 %s33, 1
        %s266 = scalar_lea.sflag [#allocation3], %s265
        %s267 = sand.u32 %s33, 1
        %s268 = smul.addr %s267, 64
        %s269 = scalar_lea.vmem [#allocation2], %s268
        %p270 = pneg %p46
        %p271 = pneg %p43
        %p272 = pneg %p67
        %p273 = pneg %p64
        %p274 = pneg %p88
        %p275 = pneg %p85
        %p276 = pneg %p109
        %p277 = pneg %p106
        %p278 = pneg %p135
        %p279 = pneg %p132
        %s280 = sand.u32 %s122, 1
        %s281 = scalar_lea.sflag [#allocation4], %s280
        %s282 = sand.u32 %s122, 1
        %s283 = smul.addr %s282, 256
        %s284 = scalar_lea.vmem [#allocation7], %s283
        %p285 = pneg %p161
        %p286 = pneg %p158
        %p287 = scmp.lt.s32.totalorder %s25, 1
        %s288 = scalar_select %p287, %s25, 1
        %s289 = smul.addr %s288, 8
        %s290 = scalar_lea.vmem %s5, %s289
        %p291 = pneg %p187
        %p292 = pneg %p184
        %p293 = scmp.lt.s32.totalorder %s25, 1
        %s294 = scalar_select %p293, %s25, 1
        %s295 = smul.addr %s294, 8
        %s296 = scalar_lea.vmem %s6, %s295
        %p297 = scmp.lt.s32.totalorder %s25, 1
        %s298 = scalar_select %p297, %s25, 1
        %s299 = smul.addr %s298, 8
        %s300 = scalar_lea.vmem %s5, %s299
        %p301 = scmp.lt.s32.totalorder %s25, 1
        %s302 = scalar_select %p301, %s25, 1
        %s303 = smul.addr %s302, 8
        %s304 = scalar_lea.vmem %s6, %s303
        %v305 = vld [vmem:[%s255] sm:$0xff]
        %v306 = vld [vmem:[%s255 + $0x8] sm:$0xff]
        %v307 = vld [vmem:[%s255 + $0x10] sm:$0xff]
        %v308 = vld [vmem:[%s255 + $0x18] sm:$0xff]
        %v309 = vld [vmem:[%s255 + $0x20] sm:$0xff]
        %v310 = vld [vmem:[%s255 + $0x28] sm:$0xff]
        %v311 = vld [vmem:[%s255 + $0x30] sm:$0xff]
        %v312 = vld [vmem:[%s255 + $0x38] sm:$0xff]
        %v313 = vld [vmem:[%s1] sm:$0xff]
        %v314 = vld [vmem:[%s1 + $0x8] sm:$0xff]
        %v315 = vld [vmem:[%s1 + $0x10] sm:$0xff]
        %v316 = vld [vmem:[%s1 + $0x18] sm:$0xff]
        %v317 = vld [vmem:[%s2] sm:$0xff]
        %v318 = vld [vmem:[%s2 + $0x8] sm:$0xff]
        %vm319 = vcmask 130048
        %v321 = vsel %vm319, %v305, 0
        %v324 = vsel %vm319, %v306, 0
        %v327 = vsel %vm319, %v307, 0
        %v330 = vsel %vm319, %v308, 0
        %v333 = vsel %vm319, %v309, 0
        %v336 = vsel %vm319, %v310, 0
        %v339 = vsel %vm319, %v311, 0
        %v342 = vsel %vm319, %v312, 0
        %344 = vmatprep.subr.mxu0 0.0
        %345 = vmatpush1.msra.mxu0 %v317
        %346 = vmatprep.subr.mxu0 0.0
        %347 = vmatpush1.msra.mxu0 %v318
        %348 = vmatprep.subr.mxu0 0.0
        %349 = vmatpush1.msra.mxu0 0.0
        %350 = vmatprep.subr.mxu0 0.0
        %351 = vmatpush1.msra.mxu0 0.0
        %352 = vmatprep.subr.mxu0 0.0
        %353 = vmatpush1.msra.mxu0 0.0
        %354 = vmatprep.subr.mxu0 0.0
        %355 = vmatpush1.msra.mxu0 0.0
        %356 = vmatprep.subr.mxu0 0.0
        %357 = vmatpush1.msra.mxu0 0.0
        %358 = vmatprep.subr.mxu0 0.0
        %359 = vmatpush1.msra.mxu0 0.0
        %360 = vmatprep.subr.mxu0 0.0
        %361 = vmatpush1.msra.mxu0 0.0
        %362 = vmatprep.subr.mxu0 0.0
        %363 = vmatpush1.msra.mxu0 0.0
        %364 = vmatprep.subr.mxu0 0.0
        %365 = vmatpush1.msra.mxu0 0.0
        %366 = vmatprep.subr.mxu0 0.0
        %367 = vmatpush1.msra.mxu0 0.0
        %368 = vmatprep.subr.mxu0 0.0
        %369 = vmatpush1.msra.mxu0 0.0
        %370 = vmatprep.subr.mxu0 0.0
        %371 = vmatpush1.msra.mxu0 0.0
        %372 = vmatprep.subr.mxu0 0.0
        %373 = vmatpush1.msra.mxu0 0.0
        %374 = vmatprep.subr.mxu0 0.0
        %375 = vmatpush1.msra.mxu0 0.0
        %376 = vmatprep.subr.mxu0 0.0
        %377 = vmatpush1.msra.mxu0 0.0
        %378 = vmatprep.subr.mxu0 0.0
        %379 = vmatpush1.msra.mxu0 0.0
        %380 = vmatprep.subr.mxu0 0.0
        %381 = vmatpush1.msra.mxu0 0.0
        %382 = vmatprep.subr.mxu0 0.0
        %383 = vmatpush1.msra.mxu0 0.0
        %384 = vmatprep.subr.mxu0 0.0
        %385 = vmatpush1.msra.mxu0 0.0
        %386 = vmatprep.subr.mxu0 0.0
        %387 = vmatpush1.msra.mxu0 0.0
        %388 = vmatprep.subr.mxu0 0.0
        %389 = vmatpush1.msra.mxu0 0.0
        %390 = vmatprep.subr.mxu0 0.0
        %391 = vmatpush1.msra.mxu0 0.0
        %392 = vmatprep.subr.mxu0 0.0
        %393 = vmatpush1.msra.mxu0 0.0
        %394 = vmatprep.subr.mxu0 0.0
        %395 = vmatpush1.msra.mxu0 0.0
        %396 = vmatprep.subr.mxu0 0.0
        %397 = vmatpush1.msra.mxu0 0.0
        %398 = vmatprep.subr.mxu0 0.0
        %399 = vmatpush1.msra.mxu0 0.0
        %400 = vmatprep.subr.mxu0 0.0
        %401 = vmatpush1.msra.mxu0 0.0
        %402 = vmatprep.subr.mxu0 0.0
        %403 = vmatpush1.msra.mxu0 0.0
        %404 = vmatprep.subr.mxu0 0.0
        %405 = vmatpush1.msra.mxu0 0.0
        %406 = vmatprep.subr.mxu0 0.0
        %407 = vmatpush1.msra.mxu0 0.0
        %408 = vmatprep.mubr.f32.mxu0 0.0
        %409 = vmatmul.mubr.f32.gmra.mrb[0].mxu0 %v321
        %v410 = vpop.f32.mrb[0].mxu0
        %v411 = vadd.f32 0.0, %v410
        %v412 = vpop.f32.mrb[0].mxu0
        %413 = vmatprep.mubr.f32.mxu0 0.0
        %414 = vmatmul.mubr.f32.gmra.mrb[0].mxu0 %v324
        %v415 = vpop.f32.mrb[0].mxu0
        %v416 = vadd.f32 0.0, %v415
        %v417 = vpop.f32.mrb[0].mxu0
        %418 = vmatprep.mubr.f32.mxu0 0.0
        %419 = vmatmul.mubr.f32.gmra.mrb[0].mxu0 %v327
        %v420 = vpop.f32.mrb[0].mxu0
        %v421 = vadd.f32 0.0, %v420
        %v422 = vpop.f32.mrb[0].mxu0
        %423 = vmatprep.mubr.f32.mxu0 0.0
        %424 = vmatmul.mubr.f32.gmra.mrb[0].mxu0 %v330
        %v425 = vpop.f32.mrb[0].mxu0
        %v426 = vadd.f32 0.0, %v425
        %v427 = vpop.f32.mrb[0].mxu0
        %428 = vmatprep.mubr.f32.mxu0 0.0
        %429 = vmatmul.mubr.f32.gmra.mrb[0].mxu0 %v333
        %v430 = vpop.f32.mrb[0].mxu0
        %v431 = vadd.f32 0.0, %v430
        %v432 = vpop.f32.mrb[0].mxu0
        %433 = vmatprep.mubr.f32.mxu0 0.0
        %434 = vmatmul.mubr.f32.gmra.mrb[0].mxu0 %v336
        %v435 = vpop.f32.mrb[0].mxu0
        %v436 = vadd.f32 0.0, %v435
        %v437 = vpop.f32.mrb[0].mxu0
        %438 = vmatprep.mubr.f32.mxu0 0.0
        %439 = vmatmul.mubr.f32.gmra.mrb[0].mxu0 %v339
        %v440 = vpop.f32.mrb[0].mxu0
        %v441 = vadd.f32 0.0, %v440
        %v442 = vpop.f32.mrb[0].mxu0
        %443 = vmatprep.mubr.f32.mxu0 0.0
        %444 = vmatmul.mubr.f32.gmra.mrb[0].mxu0 %v342
        %v445 = vpop.f32.mrb[0].mxu0
        %v446 = vadd.f32 0.0, %v445
        %v447 = vpop.f32.mrb[0].mxu0
        %448 = vdwg.mxu0
        %s449 = scalar_lea.vmem %s2, 16
        %v450 = vld [vmem:[%s449] sm:$0xff]
        %v451 = vld [vmem:[%s449 + $0x8] sm:$0xff]
        %452 = vmatprep.subr.mxu0 0.0
        %453 = vmatpush1.msra.mxu0 %v450
        %454 = vmatprep.subr.mxu0 0.0
        %455 = vmatpush1.msra.mxu0 %v451
        %456 = vmatprep.subr.mxu0 0.0
        %457 = vmatpush1.msra.mxu0 0.0
        %458 = vmatprep.subr.mxu0 0.0
        %459 = vmatpush1.msra.mxu0 0.0
        %460 = vmatprep.subr.mxu0 0.0
        %461 = vmatpush1.msra.mxu0 0.0
        %462 = vmatprep.subr.mxu0 0.0
        %463 = vmatpush1.msra.mxu0 0.0
        %464 = vmatprep.subr.mxu0 0.0
        %465 = vmatpush1.msra.mxu0 0.0
        %466 = vmatprep.subr.mxu0 0.0
        %467 = vmatpush1.msra.mxu0 0.0
        %468 = vmatprep.subr.mxu0 0.0
        %469 = vmatpush1.msra.mxu0 0.0
        %470 = vmatprep.subr.mxu0 0.0
        %471 = vmatpush1.msra.mxu0 0.0
        %472 = vmatprep.subr.mxu0 0.0
        %473 = vmatpush1.msra.mxu0 0.0
        %474 = vmatprep.subr.mxu0 0.0
        %475 = vmatpush1.msra.mxu0 0.0
        %476 = vmatprep.subr.mxu0 0.0
        %477 = vmatpush1.msra.mxu0 0.0
        %478 = vmatprep.subr.mxu0 0.0
        %479 = vmatpush1.msra.mxu0 0.0
        %480 = vmatprep.subr.mxu0 0.0
        %481 = vmatpush1.msra.mxu0 0.0
        %482 = vmatprep.subr.mxu0 0.0
        %483 = vmatpush1.msra.mxu0 0.0
        %484 = vmatprep.subr.mxu0 0.0
        %485 = vmatpush1.msra.mxu0 0.0
        %486 = vmatprep.subr.mxu0 0.0
        %487 = vmatpush1.msra.mxu0 0.0
        %488 = vmatprep.subr.mxu0 0.0
        %489 = vmatpush1.msra.mxu0 0.0
        %490 = vmatprep.subr.mxu0 0.0
        %491 = vmatpush1.msra.mxu0 0.0
        %492 = vmatprep.subr.mxu0 0.0
        %493 = vmatpush1.msra.mxu0 0.0
        %494 = vmatprep.subr.mxu0 0.0
        %495 = vmatpush1.msra.mxu0 0.0
        %496 = vmatprep.subr.mxu0 0.0
        %497 = vmatpush1.msra.mxu0 0.0
        %498 = vmatprep.subr.mxu0 0.0
        %499 = vmatpush1.msra.mxu0 0.0
        %500 = vmatprep.subr.mxu0 0.0
        %501 = vmatpush1.msra.mxu0 0.0
        %502 = vmatprep.subr.mxu0 0.0
        %503 = vmatpush1.msra.mxu0 0.0
        %504 = vmatprep.subr.mxu0 0.0
        %505 = vmatpush1.msra.mxu0 0.0
        %506 = vmatprep.subr.mxu0 0.0
        %507 = vmatpush1.msra.mxu0 0.0
        %508 = vmatprep.subr.mxu0 0.0
        %509 = vmatpush1.msra.mxu0 0.0
        %510 = vmatprep.subr.mxu0 0.0
        %511 = vmatpush1.msra.mxu0 0.0
        %512 = vmatprep.subr.mxu0 0.0
        %513 = vmatpush1.msra.mxu0 0.0
        %514 = vmatprep.subr.mxu0 0.0
        %515 = vmatpush1.msra.mxu0 0.0
        %516 = vmatprep.mubr.f32.mxu0 0.0
        %517 = vmatmul.mubr.f32.gmra.mrb[0].mxu0 %v321
        %v518 = vpop.f32.mrb[0].mxu0
        %v519 = vadd.f32 0.0, %v518
        %v520 = vpop.f32.mrb[0].mxu0
        %521 = vmatprep.mubr.f32.mxu0 0.0
        %522 = vmatmul.mubr.f32.gmra.mrb[0].mxu0 %v324
        %v523 = vpop.f32.mrb[0].mxu0
        %v524 = vadd.f32 0.0, %v523
        %v525 = vpop.f32.mrb[0].mxu0
        %526 = vmatprep.mubr.f32.mxu0 0.0
        %527 = vmatmul.mubr.f32.gmra.mrb[0].mxu0 %v327
        %v528 = vpop.f32.mrb[0].mxu0
        %v529 = vadd.f32 0.0, %v528
        %v530 = vpop.f32.mrb[0].mxu0
        %531 = vmatprep.mubr.f32.mxu0 0.0
        %532 = vmatmul.mubr.f32.gmra.mrb[0].mxu0 %v330
        %v533 = vpop.f32.mrb[0].mxu0
        %v534 = vadd.f32 0.0, %v533
        %v535 = vpop.f32.mrb[0].mxu0
        %536 = vmatprep.mubr.f32.mxu0 0.0
        %537 = vmatmul.mubr.f32.gmra.mrb[0].mxu0 %v333
        %v538 = vpop.f32.mrb[0].mxu0
        %v539 = vadd.f32 0.0, %v538
        %v540 = vpop.f32.mrb[0].mxu0
        %541 = vmatprep.mubr.f32.mxu0 0.0
        %542 = vmatmul.mubr.f32.gmra.mrb[0].mxu0 %v336
        %v543 = vpop.f32.mrb[0].mxu0
        %v544 = vadd.f32 0.0, %v543
        %v545 = vpop.f32.mrb[0].mxu0
        %546 = vmatprep.mubr.f32.mxu0 0.0
        %547 = vmatmul.mubr.f32.gmra.mrb[0].mxu0 %v339
        %v548 = vpop.f32.mrb[0].mxu0
        %v549 = vadd.f32 0.0, %v548
        %v550 = vpop.f32.mrb[0].mxu0
        %551 = vmatprep.mubr.f32.mxu0 0.0
        %552 = vmatmul.mubr.f32.gmra.mrb[0].mxu0 %v342
        %v553 = vpop.f32.mrb[0].mxu0
        %v554 = vadd.f32 0.0, %v553
        %v555 = vpop.f32.mrb[0].mxu0
        %556 = vdwg.mxu0
        %s557 = scalar_lea.vmem %s2, 32
        %v558 = vld [vmem:[%s557] sm:$0xff]
        %v559 = vld [vmem:[%s557 + $0x8] sm:$0xff]
        %560 = vmatprep.subr.mxu0 0.0
        %561 = vmatpush1.msra.mxu0 %v558
        %562 = vmatprep.subr.mxu0 0.0
        %563 = vmatpush1.msra.mxu0 %v559
        %564 = vmatprep.subr.mxu0 0.0
        %565 = vmatpush1.msra.mxu0 0.0
        %566 = vmatprep.subr.mxu0 0.0
        %567 = vmatpush1.msra.mxu0 0.0
        %568 = vmatprep.subr.mxu0 0.0
        %569 = vmatpush1.msra.mxu0 0.0
        %570 = vmatprep.subr.mxu0 0.0
        %571 = vmatpush1.msra.mxu0 0.0
        %572 = vmatprep.subr.mxu0 0.0
        %573 = vmatpush1.msra.mxu0 0.0
        %574 = vmatprep.subr.mxu0 0.0
        %575 = vmatpush1.msra.mxu0 0.0
        %576 = vmatprep.subr.mxu0 0.0
        %577 = vmatpush1.msra.mxu0 0.0
        %578 = vmatprep.subr.mxu0 0.0
        %579 = vmatpush1.msra.mxu0 0.0
        %580 = vmatprep.subr.mxu0 0.0
        %581 = vmatpush1.msra.mxu0 0.0
        %582 = vmatprep.subr.mxu0 0.0
        %583 = vmatpush1.msra.mxu0 0.0
        %584 = vmatprep.subr.mxu0 0.0
        %585 = vmatpush1.msra.mxu0 0.0
        %586 = vmatprep.subr.mxu0 0.0
        %587 = vmatpush1.msra.mxu0 0.0
        %588 = vmatprep.subr.mxu0 0.0
        %589 = vmatpush1.msra.mxu0 0.0
        %590 = vmatprep.subr.mxu0 0.0
        %591 = vmatpush1.msra.mxu0 0.0
        %592 = vmatprep.subr.mxu0 0.0
        %593 = vmatpush1.msra.mxu0 0.0
        %594 = vmatprep.subr.mxu0 0.0
        %595 = vmatpush1.msra.mxu0 0.0
        %596 = vmatprep.subr.mxu0 0.0
        %597 = vmatpush1.msra.mxu0 0.0
        %598 = vmatprep.subr.mxu0 0.0
        %599 = vmatpush1.msra.mxu0 0.0
        %600 = vmatprep.subr.mxu0 0.0
        %601 = vmatpush1.msra.mxu0 0.0
        %602 = vmatprep.subr.mxu0 0.0
        %603 = vmatpush1.msra.mxu0 0.0
        %604 = vmatprep.subr.mxu0 0.0
        %605 = vmatpush1.msra.mxu0 0.0
        %606 = vmatprep.subr.mxu0 0.0
        %607 = vmatpush1.msra.mxu0 0.0
        %608 = vmatprep.subr.mxu0 0.0
        %609 = vmatpush1.msra.mxu0 0.0
        %610 = vmatprep.subr.mxu0 0.0
        %611 = vmatpush1.msra.mxu0 0.0
        %612 = vmatprep.subr.mxu0 0.0
        %613 = vmatpush1.msra.mxu0 0.0
        %614 = vmatprep.subr.mxu0 0.0
        %615 = vmatpush1.msra.mxu0 0.0
        %616 = vmatprep.subr.mxu0 0.0
        %617 = vmatpush1.msra.mxu0 0.0
        %618 = vmatprep.subr.mxu0 0.0
        %619 = vmatpush1.msra.mxu0 0.0
        %620 = vmatprep.subr.mxu0 0.0
        %621 = vmatpush1.msra.mxu0 0.0
        %622 = vmatprep.subr.mxu0 0.0
        %623 = vmatpush1.msra.mxu0 0.0
        %624 = vmatprep.mubr.f32.mxu0 0.0
        %625 = vmatmul.mubr.f32.gmra.mrb[0].mxu0 %v321
        %v626 = vpop.f32.mrb[0].mxu0
        %v627 = vadd.f32 0.0, %v626
        %v628 = vpop.f32.mrb[0].mxu0
        %629 = vmatprep.mubr.f32.mxu0 0.0
        %630 = vmatmul.mubr.f32.gmra.mrb[0].mxu0 %v324
        %v631 = vpop.f32.mrb[0].mxu0
        %v632 = vadd.f32 0.0, %v631
        %v633 = vpop.f32.mrb[0].mxu0
        %634 = vmatprep.mubr.f32.mxu0 0.0
        %635 = vmatmul.mubr.f32.gmra.mrb[0].mxu0 %v327
        %v636 = vpop.f32.mrb[0].mxu0
        %v637 = vadd.f32 0.0, %v636
        %v638 = vpop.f32.mrb[0].mxu0
        %639 = vmatprep.mubr.f32.mxu0 0.0
        %640 = vmatmul.mubr.f32.gmra.mrb[0].mxu0 %v330
        %v641 = vpop.f32.mrb[0].mxu0
        %v642 = vadd.f32 0.0, %v641
        %v643 = vpop.f32.mrb[0].mxu0
        %644 = vmatprep.mubr.f32.mxu0 0.0
        %645 = vmatmul.mubr.f32.gmra.mrb[0].mxu0 %v333
        %v646 = vpop.f32.mrb[0].mxu0
        %v647 = vadd.f32 0.0, %v646
        %v648 = vpop.f32.mrb[0].mxu0
        %649 = vmatprep.mubr.f32.mxu0 0.0
        %650 = vmatmul.mubr.f32.gmra.mrb[0].mxu0 %v336
        %v651 = vpop.f32.mrb[0].mxu0
        %v652 = vadd.f32 0.0, %v651
        %v653 = vpop.f32.mrb[0].mxu0
        %654 = vmatprep.mubr.f32.mxu0 0.0
        %655 = vmatmul.mubr.f32.gmra.mrb[0].mxu0 %v339
        %v656 = vpop.f32.mrb[0].mxu0
        %v657 = vadd.f32 0.0, %v656
        %v658 = vpop.f32.mrb[0].mxu0
        %659 = vmatprep.mubr.f32.mxu0 0.0
        %660 = vmatmul.mubr.f32.gmra.mrb[0].mxu0 %v342
        %v661 = vpop.f32.mrb[0].mxu0
        %v662 = vadd.f32 0.0, %v661
        %v663 = vpop.f32.mrb[0].mxu0
        %664 = vdwg.mxu0
        %v666 = vsel %vm319, %v313, 0
        %v669 = vsel %vm319, %v314, 0
        %v672 = vsel %vm319, %v315, 0
        %v675 = vsel %vm319, %v316, 0
        %677 = vmatprep.subr.mxu0 0.0
        %678 = vmatpush1.msra.mxu0 %v411
        %679 = vmatprep.subr.mxu0 0.0
        %680 = vmatpush1.msra.mxu0 %v416
        %681 = vmatprep.subr.mxu0 0.0
        %682 = vmatpush1.msra.mxu0 0.0
        %683 = vmatprep.subr.mxu0 0.0
        %684 = vmatpush1.msra.mxu0 0.0
        %685 = vmatprep.subr.mxu0 0.0
        %686 = vmatpush1.msra.mxu0 0.0
        %687 = vmatprep.subr.mxu0 0.0
        %688 = vmatpush1.msra.mxu0 0.0
        %689 = vmatprep.subr.mxu0 0.0
        %690 = vmatpush1.msra.mxu0 0.0
        %691 = vmatprep.subr.mxu0 0.0
        %692 = vmatpush1.msra.mxu0 0.0
        %693 = vmatprep.subr.mxu0 0.0
        %694 = vmatpush1.msra.mxu0 0.0
        %695 = vmatprep.subr.mxu0 0.0
        %696 = vmatpush1.msra.mxu0 0.0
        %697 = vmatprep.subr.mxu0 0.0
        %698 = vmatpush1.msra.mxu0 0.0
        %699 = vmatprep.subr.mxu0 0.0
        %700 = vmatpush1.msra.mxu0 0.0
        %701 = vmatprep.subr.mxu0 0.0
        %702 = vmatpush1.msra.mxu0 0.0
        %703 = vmatprep.subr.mxu0 0.0
        %704 = vmatpush1.msra.mxu0 0.0
        %705 = vmatprep.subr.mxu0 0.0
        %706 = vmatpush1.msra.mxu0 0.0
        %707 = vmatprep.subr.mxu0 0.0
        %708 = vmatpush1.msra.mxu0 0.0
        %709 = vmatprep.subr.mxu0 0.0
        %710 = vmatpush1.msra.mxu0 0.0
        %711 = vmatprep.subr.mxu0 0.0
        %712 = vmatpush1.msra.mxu0 0.0
        %713 = vmatprep.subr.mxu0 0.0
        %714 = vmatpush1.msra.mxu0 0.0
        %715 = vmatprep.subr.mxu0 0.0
        %716 = vmatpush1.msra.mxu0 0.0
        %717 = vmatprep.subr.mxu0 0.0
        %718 = vmatpush1.msra.mxu0 0.0
        %719 = vmatprep.subr.mxu0 0.0
        %720 = vmatpush1.msra.mxu0 0.0
        %721 = vmatprep.subr.mxu0 0.0
        %722 = vmatpush1.msra.mxu0 0.0
        %723 = vmatprep.subr.mxu0 0.0
        %724 = vmatpush1.msra.mxu0 0.0
        %725 = vmatprep.subr.mxu0 0.0
        %726 = vmatpush1.msra.mxu0 0.0
        %727 = vmatprep.subr.mxu0 0.0
        %728 = vmatpush1.msra.mxu0 0.0
        %729 = vmatprep.subr.mxu0 0.0
        %730 = vmatpush1.msra.mxu0 0.0
        %731 = vmatprep.subr.mxu0 0.0
        %732 = vmatpush1.msra.mxu0 0.0
        %733 = vmatprep.subr.mxu0 0.0
        %734 = vmatpush1.msra.mxu0 0.0
        %735 = vmatprep.subr.mxu0 0.0
        %736 = vmatpush1.msra.mxu0 0.0
        %737 = vmatprep.subr.mxu0 0.0
        %738 = vmatpush1.msra.mxu0 0.0
        %739 = vmatprep.subr.mxu0 0.0
        %740 = vmatpush1.msra.mxu0 0.0
        %741 = vmatprep.mubr.f32.mxu0 0.0
        %742 = vmatmul.mubr.f32.gmra.mrb[0].mxu0 %v666
        %v743 = vpop.f32.mrb[0].mxu0
        %v744 = vadd.f32 0.0, %v743
        %v745 = vpop.f32.mrb[0].mxu0
        %746 = vmatprep.mubr.f32.mxu0 0.0
        %747 = vmatmul.mubr.f32.gmra.mrb[0].mxu0 %v669
        %v748 = vpop.f32.mrb[0].mxu0
        %v749 = vadd.f32 0.0, %v748
        %v750 = vpop.f32.mrb[0].mxu0
        %751 = vmatprep.mubr.f32.mxu0 0.0
        %752 = vmatmul.mubr.f32.gmra.mrb[0].mxu0 %v672
        %v753 = vpop.f32.mrb[0].mxu0
        %v754 = vadd.f32 0.0, %v753
        %v755 = vpop.f32.mrb[0].mxu0
        %756 = vmatprep.mubr.f32.mxu0 0.0
        %757 = vmatmul.mubr.f32.gmra.mrb[0].mxu0 %v675
        %v758 = vpop.f32.mrb[0].mxu0
        %v759 = vadd.f32 0.0, %v758
        %v760 = vpop.f32.mrb[0].mxu0
        %761 = vdwg.mxu0
        %vm766 = vcmask 1040384
        %v767 = vrot.slane %v744, 7
        %v768 = vrot.slane %v749, 7
        %v769 = vsel %vm766, %v767, %v768
        %v770 = vrot.slane %v754, 7
        %v771 = vsel %vm766, %v768, %v770
        %v772 = vrot.slane %v759, 7
        %v773 = vsel %vm766, %v770, %v772
        %v778 = vsel %vm766, 0.0, %v767
        %vm779 = vcmask 1046528
        %v780 = vrot.slane %v744, 1
        %v781 = vrot.slane %v749, 1
        %v782 = vsel %vm779, %v780, %v781
        %v783 = vrot.slane %v754, 1
        %v784 = vsel %vm779, %v781, %v783
        %v785 = vrot.slane %v759, 1
        %v786 = vsel %vm779, %v783, %v785
        %v791 = vsel %vm779, %v785, 0.0
        %s792 = sld [smem:[#allocation6]]
        %v793 = vstv %s792
        %v794 = vmul.f32 %v793, %v778
        %v795 = vmul.f32 %v793, %v769
        %v796 = vmul.f32 %v793, %v771
        %v797 = vmul.f32 %v793, %v773
        %v798 = vadd.f32 %v794, 0.0
        %v799 = vadd.f32 %v795, 0.0
        %v800 = vadd.f32 %v796, 0.0
        %v801 = vadd.f32 %v797, 0.0
        %s802 = sld [smem:[#allocation6 + $0x80]]
        %v803 = vstv %s802
        %v804 = vmul.f32 %v803, %v778
        %v805 = vmul.f32 %v803, %v769
        %v806 = vmul.f32 %v803, %v771
        %v807 = vmul.f32 %v803, %v773
        %v808 = vadd.f32 %v804, 0.0
        %v809 = vadd.f32 %v805, 0.0
        %v810 = vadd.f32 %v806, 0.0
        %v811 = vadd.f32 %v807, 0.0
        %s812 = sld [smem:[#allocation6 + $0x100]]
        %v813 = vstv %s812
        %v814 = vmul.f32 %v813, %v778
        %v815 = vmul.f32 %v813, %v769
        %v816 = vmul.f32 %v813, %v771
        %v817 = vmul.f32 %v813, %v773
        %v818 = vadd.f32 %v814, 0.0
        %v819 = vadd.f32 %v815, 0.0
        %v820 = vadd.f32 %v816, 0.0
        %v821 = vadd.f32 %v817, 0.0
        %s822 = sld [smem:[#allocation6 + $0x180]]
        %v823 = vstv %s822
        %v824 = vmul.f32 %v823, %v778
        %v825 = vmul.f32 %v823, %v769
        %v826 = vmul.f32 %v823, %v771
        %v827 = vmul.f32 %v823, %v773
        %v828 = vadd.f32 %v824, 0.0
        %v829 = vadd.f32 %v825, 0.0
        %v830 = vadd.f32 %v826, 0.0
        %v831 = vadd.f32 %v827, 0.0
        %s832 = sld [smem:[#allocation6 + $0x200]]
        %v833 = vstv %s832
        %v834 = vmul.f32 %v833, %v778
        %v835 = vmul.f32 %v833, %v769
        %v836 = vmul.f32 %v833, %v771
        %v837 = vmul.f32 %v833, %v773
        %v838 = vadd.f32 %v834, 0.0
        %v839 = vadd.f32 %v835, 0.0
        %v840 = vadd.f32 %v836, 0.0
        %v841 = vadd.f32 %v837, 0.0
        %s842 = sld [smem:[#allocation6 + $0x280]]
        %v843 = vstv %s842
        %v844 = vmul.f32 %v843, %v778
        %v845 = vmul.f32 %v843, %v769
        %v846 = vmul.f32 %v843, %v771
        %v847 = vmul.f32 %v843, %v773
        %v848 = vadd.f32 %v844, 0.0
        %v849 = vadd.f32 %v845, 0.0
        %v850 = vadd.f32 %v846, 0.0
        %v851 = vadd.f32 %v847, 0.0
        %s852 = sld [smem:[#allocation6 + $0x300]]
        %v853 = vstv %s852
        %v854 = vmul.f32 %v853, %v778
        %v855 = vmul.f32 %v853, %v769
        %v856 = vmul.f32 %v853, %v771
        %v857 = vmul.f32 %v853, %v773
        %v858 = vadd.f32 %v854, 0.0
        %v859 = vadd.f32 %v855, 0.0
        %v860 = vadd.f32 %v856, 0.0
        %v861 = vadd.f32 %v857, 0.0
        %s862 = sld [smem:[#allocation6 + $0x380]]
        %v863 = vstv %s862
        %v864 = vmul.f32 %v863, %v778
        %v865 = vmul.f32 %v863, %v769
        %v866 = vmul.f32 %v863, %v771
        %v867 = vmul.f32 %v863, %v773
        %v868 = vadd.f32 %v864, 0.0
        %v869 = vadd.f32 %v865, 0.0
        %v870 = vadd.f32 %v866, 0.0
        %v871 = vadd.f32 %v867, 0.0
        %s872 = sld [smem:[#allocation6 + $0x3]]
        %v873 = vstv %s872
        %v874 = vmul.f32 %v873, %v744
        %v875 = vmul.f32 %v873, %v749
        %v876 = vmul.f32 %v873, %v754
        %v877 = vmul.f32 %v873, %v759
        %v878 = vadd.f32 %v798, %v874
        %v879 = vadd.f32 %v799, %v875
        %v880 = vadd.f32 %v800, %v876
        %v881 = vadd.f32 %v801, %v877
        %s882 = sld [smem:[#allocation6 + $0x83]]
        %v883 = vstv %s882
        %v884 = vmul.f32 %v883, %v744
        %v885 = vmul.f32 %v883, %v749
        %v886 = vmul.f32 %v883, %v754
        %v887 = vmul.f32 %v883, %v759
        %v888 = vadd.f32 %v808, %v884
        %v889 = vadd.f32 %v809, %v885
        %v890 = vadd.f32 %v810, %v886
        %v891 = vadd.f32 %v811, %v887
        %s892 = sld [smem:[#allocation6 + $0x103]]
        %v893 = vstv %s892
        %v894 = vmul.f32 %v893, %v744
        %v895 = vmul.f32 %v893, %v749
        %v896 = vmul.f32 %v893, %v754
        %v897 = vmul.f32 %v893, %v759
        %v898 = vadd.f32 %v818, %v894
        %v899 = vadd.f32 %v819, %v895
        %v900 = vadd.f32 %v820, %v896
        %v901 = vadd.f32 %v821, %v897
        %s902 = sld [smem:[#allocation6 + $0x183]]
        %v903 = vstv %s902
        %v904 = vmul.f32 %v903, %v744
        %v905 = vmul.f32 %v903, %v749
        %v906 = vmul.f32 %v903, %v754
        %v907 = vmul.f32 %v903, %v759
        %v908 = vadd.f32 %v828, %v904
        %v909 = vadd.f32 %v829, %v905
        %v910 = vadd.f32 %v830, %v906
        %v911 = vadd.f32 %v831, %v907
        %s912 = sld [smem:[#allocation6 + $0x203]]
        %v913 = vstv %s912
        %v914 = vmul.f32 %v913, %v744
        %v915 = vmul.f32 %v913, %v749
        %v916 = vmul.f32 %v913, %v754
        %v917 = vmul.f32 %v913, %v759
        %v918 = vadd.f32 %v838, %v914
        %v919 = vadd.f32 %v839, %v915
        %v920 = vadd.f32 %v840, %v916
        %v921 = vadd.f32 %v841, %v917
        %s922 = sld [smem:[#allocation6 + $0x283]]
        %v923 = vstv %s922
        %v924 = vmul.f32 %v923, %v744
        %v925 = vmul.f32 %v923, %v749
        %v926 = vmul.f32 %v923, %v754
        %v927 = vmul.f32 %v923, %v759
        %v928 = vadd.f32 %v848, %v924
        %v929 = vadd.f32 %v849, %v925
        %v930 = vadd.f32 %v850, %v926
        %v931 = vadd.f32 %v851, %v927
        %s932 = sld [smem:[#allocation6 + $0x303]]
        %v933 = vstv %s932
        %v934 = vmul.f32 %v933, %v744
        %v935 = vmul.f32 %v933, %v749
        %v936 = vmul.f32 %v933, %v754
        %v937 = vmul.f32 %v933, %v759
        %v938 = vadd.f32 %v858, %v934
        %v939 = vadd.f32 %v859, %v935
        %v940 = vadd.f32 %v860, %v936
        %v941 = vadd.f32 %v861, %v937
        %s942 = sld [smem:[#allocation6 + $0x383]]
        %v943 = vstv %s942
        %v944 = vmul.f32 %v943, %v744
        %v945 = vmul.f32 %v943, %v749
        %v946 = vmul.f32 %v943, %v754
        %v947 = vmul.f32 %v943, %v759
        %v948 = vadd.f32 %v868, %v944
        %v949 = vadd.f32 %v869, %v945
        %v950 = vadd.f32 %v870, %v946
        %v951 = vadd.f32 %v871, %v947
        %s952 = sld [smem:[#allocation6 + $0x6]]
        %v953 = vstv %s952
        %v954 = vmul.f32 %v953, %v782
        %v955 = vmul.f32 %v953, %v784
        %v956 = vmul.f32 %v953, %v786
        %v957 = vmul.f32 %v953, %v791
        %v958 = vadd.f32 %v878, %v954
        %v959 = vadd.f32 %v879, %v955
        %v960 = vadd.f32 %v880, %v956
        %v961 = vadd.f32 %v881, %v957
        %s962 = sld [smem:[#allocation6 + $0x86]]
        %v963 = vstv %s962
        %v964 = vmul.f32 %v963, %v782
        %v965 = vmul.f32 %v963, %v784
        %v966 = vmul.f32 %v963, %v786
        %v967 = vmul.f32 %v963, %v791
        %v968 = vadd.f32 %v888, %v964
        %v969 = vadd.f32 %v889, %v965
        %v970 = vadd.f32 %v890, %v966
        %v971 = vadd.f32 %v891, %v967
        %s972 = sld [smem:[#allocation6 + $0x106]]
        %v973 = vstv %s972
        %v974 = vmul.f32 %v973, %v782
        %v975 = vmul.f32 %v973, %v784
        %v976 = vmul.f32 %v973, %v786
        %v977 = vmul.f32 %v973, %v791
        %v978 = vadd.f32 %v898, %v974
        %v979 = vadd.f32 %v899, %v975
        %v980 = vadd.f32 %v900, %v976
        %v981 = vadd.f32 %v901, %v977
        %s982 = sld [smem:[#allocation6 + $0x186]]
        %v983 = vstv %s982
        %v984 = vmul.f32 %v983, %v782
        %v985 = vmul.f32 %v983, %v784
        %v986 = vmul.f32 %v983, %v786
        %v987 = vmul.f32 %v983, %v791
        %v988 = vadd.f32 %v908, %v984
        %v989 = vadd.f32 %v909, %v985
        %v990 = vadd.f32 %v910, %v986
        %v991 = vadd.f32 %v911, %v987
        %s992 = sld [smem:[#allocation6 + $0x206]]
        %v993 = vstv %s992
        %v994 = vmul.f32 %v993, %v782
        %v995 = vmul.f32 %v993, %v784
        %v996 = vmul.f32 %v993, %v786
        %v997 = vmul.f32 %v993, %v791
        %v998 = vadd.f32 %v918, %v994
        %v999 = vadd.f32 %v919, %v995
        %v1000 = vadd.f32 %v920, %v996
        %v1001 = vadd.f32 %v921, %v997
        %s1002 = sld [smem:[#allocation6 + $0x286]]
        %v1003 = vstv %s1002
        %v1004 = vmul.f32 %v1003, %v782
        %v1005 = vmul.f32 %v1003, %v784
        %v1006 = vmul.f32 %v1003, %v786
        %v1007 = vmul.f32 %v1003, %v791
        %v1008 = vadd.f32 %v928, %v1004
        %v1009 = vadd.f32 %v929, %v1005
        %v1010 = vadd.f32 %v930, %v1006
        %v1011 = vadd.f32 %v931, %v1007
        %s1012 = sld [smem:[#allocation6 + $0x306]]
        %v1013 = vstv %s1012
        %v1014 = vmul.f32 %v1013, %v782
        %v1015 = vmul.f32 %v1013, %v784
        %v1016 = vmul.f32 %v1013, %v786
        %v1017 = vmul.f32 %v1013, %v791
        %v1018 = vadd.f32 %v938, %v1014
        %v1019 = vadd.f32 %v939, %v1015
        %v1020 = vadd.f32 %v940, %v1016
        %v1021 = vadd.f32 %v941, %v1017
        %s1022 = sld [smem:[#allocation6 + $0x386]]
        %v1023 = vstv %s1022
        %v1024 = vmul.f32 %v1023, %v782
        %v1025 = vmul.f32 %v1023, %v784
        %v1026 = vmul.f32 %v1023, %v786
        %v1027 = vmul.f32 %v1023, %v791
        %v1028 = vadd.f32 %v948, %v1024
        %v1029 = vadd.f32 %v949, %v1025
        %v1030 = vadd.f32 %v950, %v1026
        %v1031 = vadd.f32 %v951, %v1027
        %1032 = vmatprep.subr.mxu0 0.0
        %1033 = vmatpush1.msra.mxu0 %v519
        %1034 = vmatprep.subr.mxu0 0.0
        %1035 = vmatpush1.msra.mxu0 %v524
        %1036 = vmatprep.subr.mxu0 0.0
        %1037 = vmatpush1.msra.mxu0 0.0
        %1038 = vmatprep.subr.mxu0 0.0
        %1039 = vmatpush1.msra.mxu0 0.0
        %1040 = vmatprep.subr.mxu0 0.0
        %1041 = vmatpush1.msra.mxu0 0.0
        %1042 = vmatprep.subr.mxu0 0.0
        %1043 = vmatpush1.msra.mxu0 0.0
        %1044 = vmatprep.subr.mxu0 0.0
        %1045 = vmatpush1.msra.mxu0 0.0
        %1046 = vmatprep.subr.mxu0 0.0
        %1047 = vmatpush1.msra.mxu0 0.0
        %1048 = vmatprep.subr.mxu0 0.0
        %1049 = vmatpush1.msra.mxu0 0.0
        %1050 = vmatprep.subr.mxu0 0.0
        %1051 = vmatpush1.msra.mxu0 0.0
        %1052 = vmatprep.subr.mxu0 0.0
        %1053 = vmatpush1.msra.mxu0 0.0
        %1054 = vmatprep.subr.mxu0 0.0
        %1055 = vmatpush1.msra.mxu0 0.0
        %1056 = vmatprep.subr.mxu0 0.0
        %1057 = vmatpush1.msra.mxu0 0.0
        %1058 = vmatprep.subr.mxu0 0.0
        %1059 = vmatpush1.msra.mxu0 0.0
        %1060 = vmatprep.subr.mxu0 0.0
        %1061 = vmatpush1.msra.mxu0 0.0
        %1062 = vmatprep.subr.mxu0 0.0
        %1063 = vmatpush1.msra.mxu0 0.0
        %1064 = vmatprep.subr.mxu0 0.0
        %1065 = vmatpush1.msra.mxu0 0.0
        %1066 = vmatprep.subr.mxu0 0.0
        %1067 = vmatpush1.msra.mxu0 0.0
        %1068 = vmatprep.subr.mxu0 0.0
        %1069 = vmatpush1.msra.mxu0 0.0
        %1070 = vmatprep.subr.mxu0 0.0
        %1071 = vmatpush1.msra.mxu0 0.0
        %1072 = vmatprep.subr.mxu0 0.0
        %1073 = vmatpush1.msra.mxu0 0.0
        %1074 = vmatprep.subr.mxu0 0.0
        %1075 = vmatpush1.msra.mxu0 0.0
        %1076 = vmatprep.subr.mxu0 0.0
        %1077 = vmatpush1.msra.mxu0 0.0
        %1078 = vmatprep.subr.mxu0 0.0
        %1079 = vmatpush1.msra.mxu0 0.0
        %1080 = vmatprep.subr.mxu0 0.0
        %1081 = vmatpush1.msra.mxu0 0.0
        %1082 = vmatprep.subr.mxu0 0.0
        %1083 = vmatpush1.msra.mxu0 0.0
        %1084 = vmatprep.subr.mxu0 0.0
        %1085 = vmatpush1.msra.mxu0 0.0
        %1086 = vmatprep.subr.mxu0 0.0
        %1087 = vmatpush1.msra.mxu0 0.0
        %1088 = vmatprep.subr.mxu0 0.0
        %1089 = vmatpush1.msra.mxu0 0.0
        %1090 = vmatprep.subr.mxu0 0.0
        %1091 = vmatpush1.msra.mxu0 0.0
        %1092 = vmatprep.subr.mxu0 0.0
        %1093 = vmatpush1.msra.mxu0 0.0
        %1094 = vmatprep.subr.mxu0 0.0
        %1095 = vmatpush1.msra.mxu0 0.0
        %1096 = vmatprep.mubr.f32.mxu0 0.0
        %1097 = vmatmul.mubr.f32.gmra.mrb[0].mxu0 %v666
        %v1098 = vpop.f32.mrb[0].mxu0
        %v1099 = vadd.f32 0.0, %v1098
        %v1100 = vpop.f32.mrb[0].mxu0
        %1101 = vmatprep.mubr.f32.mxu0 0.0
        %1102 = vmatmul.mubr.f32.gmra.mrb[0].mxu0 %v669
        %v1103 = vpop.f32.mrb[0].mxu0
        %v1104 = vadd.f32 0.0, %v1103
        %v1105 = vpop.f32.mrb[0].mxu0
        %1106 = vmatprep.mubr.f32.mxu0 0.0
        %1107 = vmatmul.mubr.f32.gmra.mrb[0].mxu0 %v672
        %v1108 = vpop.f32.mrb[0].mxu0
        %v1109 = vadd.f32 0.0, %v1108
        %v1110 = vpop.f32.mrb[0].mxu0
        %1111 = vmatprep.mubr.f32.mxu0 0.0
        %1112 = vmatmul.mubr.f32.gmra.mrb[0].mxu0 %v675
        %v1113 = vpop.f32.mrb[0].mxu0
        %v1114 = vadd.f32 0.0, %v1113
        %v1115 = vpop.f32.mrb[0].mxu0
        %1116 = vdwg.mxu0
        %v1121 = vrot.slane %v1099, 7
        %v1122 = vrot.slane %v1104, 7
        %v1123 = vsel %vm766, %v1121, %v1122
        %v1124 = vrot.slane %v1109, 7
        %v1125 = vsel %vm766, %v1122, %v1124
        %v1126 = vrot.slane %v1114, 7
        %v1127 = vsel %vm766, %v1124, %v1126
        %v1132 = vsel %vm766, 0.0, %v1121
        %v1133 = vrot.slane %v1099, 1
        %v1134 = vrot.slane %v1104, 1
        %v1135 = vsel %vm779, %v1133, %v1134
        %v1136 = vrot.slane %v1109, 1
        %v1137 = vsel %vm779, %v1134, %v1136
        %v1138 = vrot.slane %v1114, 1
        %v1139 = vsel %vm779, %v1136, %v1138
        %v1144 = vsel %vm779, %v1138, 0.0
        %s1145 = sld [smem:[#allocation6 + $0x1]]
        %v1146 = vstv %s1145
        %v1147 = vmul.f32 %v1146, %v1132
        %v1148 = vmul.f32 %v1146, %v1123
        %v1149 = vmul.f32 %v1146, %v1125
        %v1150 = vmul.f32 %v1146, %v1127
        %v1151 = vadd.f32 %v958, %v1147
        %v1152 = vadd.f32 %v959, %v1148
        %v1153 = vadd.f32 %v960, %v1149
        %v1154 = vadd.f32 %v961, %v1150
        %s1155 = sld [smem:[#allocation6 + $0x81]]
        %v1156 = vstv %s1155
        %v1157 = vmul.f32 %v1156, %v1132
        %v1158 = vmul.f32 %v1156, %v1123
        %v1159 = vmul.f32 %v1156, %v1125
        %v1160 = vmul.f32 %v1156, %v1127
        %v1161 = vadd.f32 %v968, %v1157
        %v1162 = vadd.f32 %v969, %v1158
        %v1163 = vadd.f32 %v970, %v1159
        %v1164 = vadd.f32 %v971, %v1160
        %s1165 = sld [smem:[#allocation6 + $0x101]]
        %v1166 = vstv %s1165
        %v1167 = vmul.f32 %v1166, %v1132
        %v1168 = vmul.f32 %v1166, %v1123
        %v1169 = vmul.f32 %v1166, %v1125
        %v1170 = vmul.f32 %v1166, %v1127
        %v1171 = vadd.f32 %v978, %v1167
        %v1172 = vadd.f32 %v979, %v1168
        %v1173 = vadd.f32 %v980, %v1169
        %v1174 = vadd.f32 %v981, %v1170
        %s1175 = sld [smem:[#allocation6 + $0x181]]
        %v1176 = vstv %s1175
        %v1177 = vmul.f32 %v1176, %v1132
        %v1178 = vmul.f32 %v1176, %v1123
        %v1179 = vmul.f32 %v1176, %v1125
        %v1180 = vmul.f32 %v1176, %v1127
        %v1181 = vadd.f32 %v988, %v1177
        %v1182 = vadd.f32 %v989, %v1178
        %v1183 = vadd.f32 %v990, %v1179
        %v1184 = vadd.f32 %v991, %v1180
        %s1185 = sld [smem:[#allocation6 + $0x201]]
        %v1186 = vstv %s1185
        %v1187 = vmul.f32 %v1186, %v1132
        %v1188 = vmul.f32 %v1186, %v1123
        %v1189 = vmul.f32 %v1186, %v1125
        %v1190 = vmul.f32 %v1186, %v1127
        %v1191 = vadd.f32 %v998, %v1187
        %v1192 = vadd.f32 %v999, %v1188
        %v1193 = vadd.f32 %v1000, %v1189
        %v1194 = vadd.f32 %v1001, %v1190
        %s1195 = sld [smem:[#allocation6 + $0x281]]
        %v1196 = vstv %s1195
        %v1197 = vmul.f32 %v1196, %v1132
        %v1198 = vmul.f32 %v1196, %v1123
        %v1199 = vmul.f32 %v1196, %v1125
        %v1200 = vmul.f32 %v1196, %v1127
        %v1201 = vadd.f32 %v1008, %v1197
        %v1202 = vadd.f32 %v1009, %v1198
        %v1203 = vadd.f32 %v1010, %v1199
        %v1204 = vadd.f32 %v1011, %v1200
        %s1205 = sld [smem:[#allocation6 + $0x301]]
        %v1206 = vstv %s1205
        %v1207 = vmul.f32 %v1206, %v1132
        %v1208 = vmul.f32 %v1206, %v1123
        %v1209 = vmul.f32 %v1206, %v1125
        %v1210 = vmul.f32 %v1206, %v1127
        %v1211 = vadd.f32 %v1018, %v1207
        %v1212 = vadd.f32 %v1019, %v1208
        %v1213 = vadd.f32 %v1020, %v1209
        %v1214 = vadd.f32 %v1021, %v1210
        %s1215 = sld [smem:[#allocation6 + $0x381]]
        %v1216 = vstv %s1215
        %v1217 = vmul.f32 %v1216, %v1132
        %v1218 = vmul.f32 %v1216, %v1123
        %v1219 = vmul.f32 %v1216, %v1125
        %v1220 = vmul.f32 %v1216, %v1127
        %v1221 = vadd.f32 %v1028, %v1217
        %v1222 = vadd.f32 %v1029, %v1218
        %v1223 = vadd.f32 %v1030, %v1219
        %v1224 = vadd.f32 %v1031, %v1220
        %s1225 = sld [smem:[#allocation6 + $0x4]]
        %v1226 = vstv %s1225
        %v1227 = vmul.f32 %v1226, %v1099
        %v1228 = vmul.f32 %v1226, %v1104
        %v1229 = vmul.f32 %v1226, %v1109
        %v1230 = vmul.f32 %v1226, %v1114
        %v1231 = vadd.f32 %v1151, %v1227
        %v1232 = vadd.f32 %v1152, %v1228
        %v1233 = vadd.f32 %v1153, %v1229
        %v1234 = vadd.f32 %v1154, %v1230
        %s1235 = sld [smem:[#allocation6 + $0x84]]
        %v1236 = vstv %s1235
        %v1237 = vmul.f32 %v1236, %v1099
        %v1238 = vmul.f32 %v1236, %v1104
        %v1239 = vmul.f32 %v1236, %v1109
        %v1240 = vmul.f32 %v1236, %v1114
        %v1241 = vadd.f32 %v1161, %v1237
        %v1242 = vadd.f32 %v1162, %v1238
        %v1243 = vadd.f32 %v1163, %v1239
        %v1244 = vadd.f32 %v1164, %v1240
        %s1245 = sld [smem:[#allocation6 + $0x104]]
        %v1246 = vstv %s1245
        %v1247 = vmul.f32 %v1246, %v1099
        %v1248 = vmul.f32 %v1246, %v1104
        %v1249 = vmul.f32 %v1246, %v1109
        %v1250 = vmul.f32 %v1246, %v1114
        %v1251 = vadd.f32 %v1171, %v1247
        %v1252 = vadd.f32 %v1172, %v1248
        %v1253 = vadd.f32 %v1173, %v1249
        %v1254 = vadd.f32 %v1174, %v1250
        %s1255 = sld [smem:[#allocation6 + $0x184]]
        %v1256 = vstv %s1255
        %v1257 = vmul.f32 %v1256, %v1099
        %v1258 = vmul.f32 %v1256, %v1104
        %v1259 = vmul.f32 %v1256, %v1109
        %v1260 = vmul.f32 %v1256, %v1114
        %v1261 = vadd.f32 %v1181, %v1257
        %v1262 = vadd.f32 %v1182, %v1258
        %v1263 = vadd.f32 %v1183, %v1259
        %v1264 = vadd.f32 %v1184, %v1260
        %s1265 = sld [smem:[#allocation6 + $0x204]]
        %v1266 = vstv %s1265
        %v1267 = vmul.f32 %v1266, %v1099
        %v1268 = vmul.f32 %v1266, %v1104
        %v1269 = vmul.f32 %v1266, %v1109
        %v1270 = vmul.f32 %v1266, %v1114
        %v1271 = vadd.f32 %v1191, %v1267
        %v1272 = vadd.f32 %v1192, %v1268
        %v1273 = vadd.f32 %v1193, %v1269
        %v1274 = vadd.f32 %v1194, %v1270
        %s1275 = sld [smem:[#allocation6 + $0x284]]
        %v1276 = vstv %s1275
        %v1277 = vmul.f32 %v1276, %v1099
        %v1278 = vmul.f32 %v1276, %v1104
        %v1279 = vmul.f32 %v1276, %v1109
        %v1280 = vmul.f32 %v1276, %v1114
        %v1281 = vadd.f32 %v1201, %v1277
        %v1282 = vadd.f32 %v1202, %v1278
        %v1283 = vadd.f32 %v1203, %v1279
        %v1284 = vadd.f32 %v1204, %v1280
        %s1285 = sld [smem:[#allocation6 + $0x304]]
        %v1286 = vstv %s1285
        %v1287 = vmul.f32 %v1286, %v1099
        %v1288 = vmul.f32 %v1286, %v1104
        %v1289 = vmul.f32 %v1286, %v1109
        %v1290 = vmul.f32 %v1286, %v1114
        %v1291 = vadd.f32 %v1211, %v1287
        %v1292 = vadd.f32 %v1212, %v1288
        %v1293 = vadd.f32 %v1213, %v1289
        %v1294 = vadd.f32 %v1214, %v1290
        %s1295 = sld [smem:[#allocation6 + $0x384]]
        %v1296 = vstv %s1295
        %v1297 = vmul.f32 %v1296, %v1099
        %v1298 = vmul.f32 %v1296, %v1104
        %v1299 = vmul.f32 %v1296, %v1109
        %v1300 = vmul.f32 %v1296, %v1114
        %v1301 = vadd.f32 %v1221, %v1297
        %v1302 = vadd.f32 %v1222, %v1298
        %v1303 = vadd.f32 %v1223, %v1299
        %v1304 = vadd.f32 %v1224, %v1300
        %s1305 = sld [smem:[#allocation6 + $0x7]]
        %v1306 = vstv %s1305
        %v1307 = vmul.f32 %v1306, %v1135
        %v1308 = vmul.f32 %v1306, %v1137
        %v1309 = vmul.f32 %v1306, %v1139
        %v1310 = vmul.f32 %v1306, %v1144
        %v1311 = vadd.f32 %v1231, %v1307
        %v1312 = vadd.f32 %v1232, %v1308
        %v1313 = vadd.f32 %v1233, %v1309
        %v1314 = vadd.f32 %v1234, %v1310
        %s1315 = sld [smem:[#allocation6 + $0x87]]
        %v1316 = vstv %s1315
        %v1317 = vmul.f32 %v1316, %v1135
        %v1318 = vmul.f32 %v1316, %v1137
        %v1319 = vmul.f32 %v1316, %v1139
        %v1320 = vmul.f32 %v1316, %v1144
        %v1321 = vadd.f32 %v1241, %v1317
        %v1322 = vadd.f32 %v1242, %v1318
        %v1323 = vadd.f32 %v1243, %v1319
        %v1324 = vadd.f32 %v1244, %v1320
        %s1325 = sld [smem:[#allocation6 + $0x107]]
        %v1326 = vstv %s1325
        %v1327 = vmul.f32 %v1326, %v1135
        %v1328 = vmul.f32 %v1326, %v1137
        %v1329 = vmul.f32 %v1326, %v1139
        %v1330 = vmul.f32 %v1326, %v1144
        %v1331 = vadd.f32 %v1251, %v1327
        %v1332 = vadd.f32 %v1252, %v1328
        %v1333 = vadd.f32 %v1253, %v1329
        %v1334 = vadd.f32 %v1254, %v1330
        %s1335 = sld [smem:[#allocation6 + $0x187]]
        %v1336 = vstv %s1335
        %v1337 = vmul.f32 %v1336, %v1135
        %v1338 = vmul.f32 %v1336, %v1137
        %v1339 = vmul.f32 %v1336, %v1139
        %v1340 = vmul.f32 %v1336, %v1144
        %v1341 = vadd.f32 %v1261, %v1337
        %v1342 = vadd.f32 %v1262, %v1338
        %v1343 = vadd.f32 %v1263, %v1339
        %v1344 = vadd.f32 %v1264, %v1340
        %s1345 = sld [smem:[#allocation6 + $0x207]]
        %v1346 = vstv %s1345
        %v1347 = vmul.f32 %v1346, %v1135
        %v1348 = vmul.f32 %v1346, %v1137
        %v1349 = vmul.f32 %v1346, %v1139
        %v1350 = vmul.f32 %v1346, %v1144
        %v1351 = vadd.f32 %v1271, %v1347
        %v1352 = vadd.f32 %v1272, %v1348
        %v1353 = vadd.f32 %v1273, %v1349
        %v1354 = vadd.f32 %v1274, %v1350
        %s1355 = sld [smem:[#allocation6 + $0x287]]
        %v1356 = vstv %s1355
        %v1357 = vmul.f32 %v1356, %v1135
        %v1358 = vmul.f32 %v1356, %v1137
        %v1359 = vmul.f32 %v1356, %v1139
        %v1360 = vmul.f32 %v1356, %v1144
        %v1361 = vadd.f32 %v1281, %v1357
        %v1362 = vadd.f32 %v1282, %v1358
        %v1363 = vadd.f32 %v1283, %v1359
        %v1364 = vadd.f32 %v1284, %v1360
        %s1365 = sld [smem:[#allocation6 + $0x307]]
        %v1366 = vstv %s1365
        %v1367 = vmul.f32 %v1366, %v1135
        %v1368 = vmul.f32 %v1366, %v1137
        %v1369 = vmul.f32 %v1366, %v1139
        %v1370 = vmul.f32 %v1366, %v1144
        %v1371 = vadd.f32 %v1291, %v1367
        %v1372 = vadd.f32 %v1292, %v1368
        %v1373 = vadd.f32 %v1293, %v1369
        %v1374 = vadd.f32 %v1294, %v1370
        %s1375 = sld [smem:[#allocation6 + $0x387]]
        %v1376 = vstv %s1375
        %v1377 = vmul.f32 %v1376, %v1135
        %v1378 = vmul.f32 %v1376, %v1137
        %v1379 = vmul.f32 %v1376, %v1139
        %v1380 = vmul.f32 %v1376, %v1144
        %v1381 = vadd.f32 %v1301, %v1377
        %v1382 = vadd.f32 %v1302, %v1378
        %v1383 = vadd.f32 %v1303, %v1379
        %v1384 = vadd.f32 %v1304, %v1380
        %1385 = vmatprep.subr.mxu0 0.0
        %1386 = vmatpush1.msra.mxu0 %v627
        %1387 = vmatprep.subr.mxu0 0.0
        %1388 = vmatpush1.msra.mxu0 %v632
        %1389 = vmatprep.subr.mxu0 0.0
        %1390 = vmatpush1.msra.mxu0 0.0
        %1391 = vmatprep.subr.mxu0 0.0
        %1392 = vmatpush1.msra.mxu0 0.0
        %1393 = vmatprep.subr.mxu0 0.0
        %1394 = vmatpush1.msra.mxu0 0.0
        %1395 = vmatprep.subr.mxu0 0.0
        %1396 = vmatpush1.msra.mxu0 0.0
        %1397 = vmatprep.subr.mxu0 0.0
        %1398 = vmatpush1.msra.mxu0 0.0
        %1399 = vmatprep.subr.mxu0 0.0
        %1400 = vmatpush1.msra.mxu0 0.0
        %1401 = vmatprep.subr.mxu0 0.0
        %1402 = vmatpush1.msra.mxu0 0.0
        %1403 = vmatprep.subr.mxu0 0.0
        %1404 = vmatpush1.msra.mxu0 0.0
        %1405 = vmatprep.subr.mxu0 0.0
        %1406 = vmatpush1.msra.mxu0 0.0
        %1407 = vmatprep.subr.mxu0 0.0
        %1408 = vmatpush1.msra.mxu0 0.0
        %1409 = vmatprep.subr.mxu0 0.0
        %1410 = vmatpush1.msra.mxu0 0.0
        %1411 = vmatprep.subr.mxu0 0.0
        %1412 = vmatpush1.msra.mxu0 0.0
        %1413 = vmatprep.subr.mxu0 0.0
        %1414 = vmatpush1.msra.mxu0 0.0
        %1415 = vmatprep.subr.mxu0 0.0
        %1416 = vmatpush1.msra.mxu0 0.0
        %1417 = vmatprep.subr.mxu0 0.0
        %1418 = vmatpush1.msra.mxu0 0.0
        %1419 = vmatprep.subr.mxu0 0.0
        %1420 = vmatpush1.msra.mxu0 0.0
        %1421 = vmatprep.subr.mxu0 0.0
        %1422 = vmatpush1.msra.mxu0 0.0
        %1423 = vmatprep.subr.mxu0 0.0
        %1424 = vmatpush1.msra.mxu0 0.0
        %1425 = vmatprep.subr.mxu0 0.0
        %1426 = vmatpush1.msra.mxu0 0.0
        %1427 = vmatprep.subr.mxu0 0.0
        %1428 = vmatpush1.msra.mxu0 0.0
        %1429 = vmatprep.subr.mxu0 0.0
        %1430 = vmatpush1.msra.mxu0 0.0
        %1431 = vmatprep.subr.mxu0 0.0
        %1432 = vmatpush1.msra.mxu0 0.0
        %1433 = vmatprep.subr.mxu0 0.0
        %1434 = vmatpush1.msra.mxu0 0.0
        %1435 = vmatprep.subr.mxu0 0.0
        %1436 = vmatpush1.msra.mxu0 0.0
        %1437 = vmatprep.subr.mxu0 0.0
        %1438 = vmatpush1.msra.mxu0 0.0
        %1439 = vmatprep.subr.mxu0 0.0
        %1440 = vmatpush1.msra.mxu0 0.0
        %1441 = vmatprep.subr.mxu0 0.0
        %1442 = vmatpush1.msra.mxu0 0.0
        %1443 = vmatprep.subr.mxu0 0.0
        %1444 = vmatpush1.msra.mxu0 0.0
        %1445 = vmatprep.subr.mxu0 0.0
        %1446 = vmatpush1.msra.mxu0 0.0
        %1447 = vmatprep.subr.mxu0 0.0
        %1448 = vmatpush1.msra.mxu0 0.0
        %1449 = vmatprep.mubr.f32.mxu0 0.0
        %1450 = vmatmul.mubr.f32.gmra.mrb[0].mxu0 %v666
        %v1451 = vpop.f32.mrb[0].mxu0
        %v1452 = vadd.f32 0.0, %v1451
        %v1453 = vpop.f32.mrb[0].mxu0
        %1454 = vmatprep.mubr.f32.mxu0 0.0
        %1455 = vmatmul.mubr.f32.gmra.mrb[0].mxu0 %v669
        %v1456 = vpop.f32.mrb[0].mxu0
        %v1457 = vadd.f32 0.0, %v1456
        %v1458 = vpop.f32.mrb[0].mxu0
        %1459 = vmatprep.mubr.f32.mxu0 0.0
        %1460 = vmatmul.mubr.f32.gmra.mrb[0].mxu0 %v672
        %v1461 = vpop.f32.mrb[0].mxu0
        %v1462 = vadd.f32 0.0, %v1461
        %v1463 = vpop.f32.mrb[0].mxu0
        %1464 = vmatprep.mubr.f32.mxu0 0.0
        %1465 = vmatmul.mubr.f32.gmra.mrb[0].mxu0 %v675
        %v1466 = vpop.f32.mrb[0].mxu0
        %v1467 = vadd.f32 0.0, %v1466
        %v1468 = vpop.f32.mrb[0].mxu0
        %1469 = vdwg.mxu0
        %v1474 = vrot.slane %v1452, 7
        %v1475 = vrot.slane %v1457, 7
        %v1476 = vsel %vm766, %v1474, %v1475
        %v1477 = vrot.slane %v1462, 7
        %v1478 = vsel %vm766, %v1475, %v1477
        %v1479 = vrot.slane %v1467, 7
        %v1480 = vsel %vm766, %v1477, %v1479
        %v1485 = vsel %vm766, 0.0, %v1474
        %v1486 = vrot.slane %v1452, 1
        %v1487 = vrot.slane %v1457, 1
        %v1488 = vsel %vm779, %v1486, %v1487
        %v1489 = vrot.slane %v1462, 1
        %v1490 = vsel %vm779, %v1487, %v1489
        %v1491 = vrot.slane %v1467, 1
        %v1492 = vsel %vm779, %v1489, %v1491
        %v1497 = vsel %vm779, %v1491, 0.0
        %s1498 = sld [smem:[#allocation6 + $0x2]]
        %v1499 = vstv %s1498
        %v1500 = vmul.f32 %v1499, %v1485
        %v1501 = vmul.f32 %v1499, %v1476
        %v1502 = vmul.f32 %v1499, %v1478
        %v1503 = vmul.f32 %v1499, %v1480
        %v1504 = vadd.f32 %v1311, %v1500
        %v1505 = vadd.f32 %v1312, %v1501
        %v1506 = vadd.f32 %v1313, %v1502
        %v1507 = vadd.f32 %v1314, %v1503
        %s1508 = sld [smem:[#allocation6 + $0x82]]
        %v1509 = vstv %s1508
        %v1510 = vmul.f32 %v1509, %v1485
        %v1511 = vmul.f32 %v1509, %v1476
        %v1512 = vmul.f32 %v1509, %v1478
        %v1513 = vmul.f32 %v1509, %v1480
        %v1514 = vadd.f32 %v1321, %v1510
        %v1515 = vadd.f32 %v1322, %v1511
        %v1516 = vadd.f32 %v1323, %v1512
        %v1517 = vadd.f32 %v1324, %v1513
        %s1518 = sld [smem:[#allocation6 + $0x102]]
        %v1519 = vstv %s1518
        %v1520 = vmul.f32 %v1519, %v1485
        %v1521 = vmul.f32 %v1519, %v1476
        %v1522 = vmul.f32 %v1519, %v1478
        %v1523 = vmul.f32 %v1519, %v1480
        %v1524 = vadd.f32 %v1331, %v1520
        %v1525 = vadd.f32 %v1332, %v1521
        %v1526 = vadd.f32 %v1333, %v1522
        %v1527 = vadd.f32 %v1334, %v1523
        %s1528 = sld [smem:[#allocation6 + $0x182]]
        %v1529 = vstv %s1528
        %v1530 = vmul.f32 %v1529, %v1485
        %v1531 = vmul.f32 %v1529, %v1476
        %v1532 = vmul.f32 %v1529, %v1478
        %v1533 = vmul.f32 %v1529, %v1480
        %v1534 = vadd.f32 %v1341, %v1530
        %v1535 = vadd.f32 %v1342, %v1531
        %v1536 = vadd.f32 %v1343, %v1532
        %v1537 = vadd.f32 %v1344, %v1533
        %s1538 = sld [smem:[#allocation6 + $0x202]]
        %v1539 = vstv %s1538
        %v1540 = vmul.f32 %v1539, %v1485
        %v1541 = vmul.f32 %v1539, %v1476
        %v1542 = vmul.f32 %v1539, %v1478
        %v1543 = vmul.f32 %v1539, %v1480
        %v1544 = vadd.f32 %v1351, %v1540
        %v1545 = vadd.f32 %v1352, %v1541
        %v1546 = vadd.f32 %v1353, %v1542
        %v1547 = vadd.f32 %v1354, %v1543
        %s1548 = sld [smem:[#allocation6 + $0x282]]
        %v1549 = vstv %s1548
        %v1550 = vmul.f32 %v1549, %v1485
        %v1551 = vmul.f32 %v1549, %v1476
        %v1552 = vmul.f32 %v1549, %v1478
        %v1553 = vmul.f32 %v1549, %v1480
        %v1554 = vadd.f32 %v1361, %v1550
        %v1555 = vadd.f32 %v1362, %v1551
        %v1556 = vadd.f32 %v1363, %v1552
        %v1557 = vadd.f32 %v1364, %v1553
        %s1558 = sld [smem:[#allocation6 + $0x302]]
        %v1559 = vstv %s1558
        %v1560 = vmul.f32 %v1559, %v1485
        %v1561 = vmul.f32 %v1559, %v1476
        %v1562 = vmul.f32 %v1559, %v1478
        %v1563 = vmul.f32 %v1559, %v1480
        %v1564 = vadd.f32 %v1371, %v1560
        %v1565 = vadd.f32 %v1372, %v1561
        %v1566 = vadd.f32 %v1373, %v1562
        %v1567 = vadd.f32 %v1374, %v1563
        %s1568 = sld [smem:[#allocation6 + $0x382]]
        %v1569 = vstv %s1568
        %v1570 = vmul.f32 %v1569, %v1485
        %v1571 = vmul.f32 %v1569, %v1476
        %v1572 = vmul.f32 %v1569, %v1478
        %v1573 = vmul.f32 %v1569, %v1480
        %v1574 = vadd.f32 %v1381, %v1570
        %v1575 = vadd.f32 %v1382, %v1571
        %v1576 = vadd.f32 %v1383, %v1572
        %v1577 = vadd.f32 %v1384, %v1573
        %s1578 = sld [smem:[#allocation6 + $0x5]]
        %v1579 = vstv %s1578
        %v1580 = vmul.f32 %v1579, %v1452
        %v1581 = vmul.f32 %v1579, %v1457
        %v1582 = vmul.f32 %v1579, %v1462
        %v1583 = vmul.f32 %v1579, %v1467
        %v1584 = vadd.f32 %v1504, %v1580
        %v1585 = vadd.f32 %v1505, %v1581
        %v1586 = vadd.f32 %v1506, %v1582
        %v1587 = vadd.f32 %v1507, %v1583
        %s1588 = sld [smem:[#allocation6 + $0x85]]
        %v1589 = vstv %s1588
        %v1590 = vmul.f32 %v1589, %v1452
        %v1591 = vmul.f32 %v1589, %v1457
        %v1592 = vmul.f32 %v1589, %v1462
        %v1593 = vmul.f32 %v1589, %v1467
        %v1594 = vadd.f32 %v1514, %v1590
        %v1595 = vadd.f32 %v1515, %v1591
        %v1596 = vadd.f32 %v1516, %v1592
        %v1597 = vadd.f32 %v1517, %v1593
        %s1598 = sld [smem:[#allocation6 + $0x105]]
        %v1599 = vstv %s1598
        %v1600 = vmul.f32 %v1599, %v1452
        %v1601 = vmul.f32 %v1599, %v1457
        %v1602 = vmul.f32 %v1599, %v1462
        %v1603 = vmul.f32 %v1599, %v1467
        %v1604 = vadd.f32 %v1524, %v1600
        %v1605 = vadd.f32 %v1525, %v1601
        %v1606 = vadd.f32 %v1526, %v1602
        %v1607 = vadd.f32 %v1527, %v1603
        %s1608 = sld [smem:[#allocation6 + $0x185]]
        %v1609 = vstv %s1608
        %v1610 = vmul.f32 %v1609, %v1452
        %v1611 = vmul.f32 %v1609, %v1457
        %v1612 = vmul.f32 %v1609, %v1462
        %v1613 = vmul.f32 %v1609, %v1467
        %v1614 = vadd.f32 %v1534, %v1610
        %v1615 = vadd.f32 %v1535, %v1611
        %v1616 = vadd.f32 %v1536, %v1612
        %v1617 = vadd.f32 %v1537, %v1613
        %s1618 = sld [smem:[#allocation6 + $0x205]]
        %v1619 = vstv %s1618
        %v1620 = vmul.f32 %v1619, %v1452
        %v1621 = vmul.f32 %v1619, %v1457
        %v1622 = vmul.f32 %v1619, %v1462
        %v1623 = vmul.f32 %v1619, %v1467
        %v1624 = vadd.f32 %v1544, %v1620
        %v1625 = vadd.f32 %v1545, %v1621
        %v1626 = vadd.f32 %v1546, %v1622
        %v1627 = vadd.f32 %v1547, %v1623
        %s1628 = sld [smem:[#allocation6 + $0x285]]
        %v1629 = vstv %s1628
        %v1630 = vmul.f32 %v1629, %v1452
        %v1631 = vmul.f32 %v1629, %v1457
        %v1632 = vmul.f32 %v1629, %v1462
        %v1633 = vmul.f32 %v1629, %v1467
        %v1634 = vadd.f32 %v1554, %v1630
        %v1635 = vadd.f32 %v1555, %v1631
        %v1636 = vadd.f32 %v1556, %v1632
        %v1637 = vadd.f32 %v1557, %v1633
        %s1638 = sld [smem:[#allocation6 + $0x305]]
        %v1639 = vstv %s1638
        %v1640 = vmul.f32 %v1639, %v1452
        %v1641 = vmul.f32 %v1639, %v1457
        %v1642 = vmul.f32 %v1639, %v1462
        %v1643 = vmul.f32 %v1639, %v1467
        %v1644 = vadd.f32 %v1564, %v1640
        %v1645 = vadd.f32 %v1565, %v1641
        %v1646 = vadd.f32 %v1566, %v1642
        %v1647 = vadd.f32 %v1567, %v1643
        %s1648 = sld [smem:[#allocation6 + $0x385]]
        %v1649 = vstv %s1648
        %v1650 = vmul.f32 %v1649, %v1452
        %v1651 = vmul.f32 %v1649, %v1457
        %v1652 = vmul.f32 %v1649, %v1462
        %v1653 = vmul.f32 %v1649, %v1467
        %v1654 = vadd.f32 %v1574, %v1650
        %v1655 = vadd.f32 %v1575, %v1651
        %v1656 = vadd.f32 %v1576, %v1652
        %v1657 = vadd.f32 %v1577, %v1653
        %s1658 = sld [smem:[#allocation6 + $0x8]]
        %v1659 = vstv %s1658
        %v1660 = vmul.f32 %v1659, %v1488
        %v1661 = vmul.f32 %v1659, %v1490
        %v1662 = vmul.f32 %v1659, %v1492
        %v1663 = vmul.f32 %v1659, %v1497
        %v1664 = vadd.f32 %v1584, %v1660
        %v1665 = vadd.f32 %v1585, %v1661
        %v1666 = vadd.f32 %v1586, %v1662
        %v1667 = vadd.f32 %v1587, %v1663
        %s1668 = sld [smem:[#allocation6 + $0x88]]
        %v1669 = vstv %s1668
        %v1670 = vmul.f32 %v1669, %v1488
        %v1671 = vmul.f32 %v1669, %v1490
        %v1672 = vmul.f32 %v1669, %v1492
        %v1673 = vmul.f32 %v1669, %v1497
        %v1674 = vadd.f32 %v1594, %v1670
        %v1675 = vadd.f32 %v1595, %v1671
        %v1676 = vadd.f32 %v1596, %v1672
        %v1677 = vadd.f32 %v1597, %v1673
        %s1678 = sld [smem:[#allocation6 + $0x108]]
        %v1679 = vstv %s1678
        %v1680 = vmul.f32 %v1679, %v1488
        %v1681 = vmul.f32 %v1679, %v1490
        %v1682 = vmul.f32 %v1679, %v1492
        %v1683 = vmul.f32 %v1679, %v1497
        %v1684 = vadd.f32 %v1604, %v1680
        %v1685 = vadd.f32 %v1605, %v1681
        %v1686 = vadd.f32 %v1606, %v1682
        %v1687 = vadd.f32 %v1607, %v1683
        %s1688 = sld [smem:[#allocation6 + $0x188]]
        %v1689 = vstv %s1688
        %v1690 = vmul.f32 %v1689, %v1488
        %v1691 = vmul.f32 %v1689, %v1490
        %v1692 = vmul.f32 %v1689, %v1492
        %v1693 = vmul.f32 %v1689, %v1497
        %v1694 = vadd.f32 %v1614, %v1690
        %v1695 = vadd.f32 %v1615, %v1691
        %v1696 = vadd.f32 %v1616, %v1692
        %v1697 = vadd.f32 %v1617, %v1693
        %s1698 = sld [smem:[#allocation6 + $0x208]]
        %v1699 = vstv %s1698
        %v1700 = vmul.f32 %v1699, %v1488
        %v1701 = vmul.f32 %v1699, %v1490
        %v1702 = vmul.f32 %v1699, %v1492
        %v1703 = vmul.f32 %v1699, %v1497
        %v1704 = vadd.f32 %v1624, %v1700
        %v1705 = vadd.f32 %v1625, %v1701
        %v1706 = vadd.f32 %v1626, %v1702
        %v1707 = vadd.f32 %v1627, %v1703
        %s1708 = sld [smem:[#allocation6 + $0x288]]
        %v1709 = vstv %s1708
        %v1710 = vmul.f32 %v1709, %v1488
        %v1711 = vmul.f32 %v1709, %v1490
        %v1712 = vmul.f32 %v1709, %v1492
        %v1713 = vmul.f32 %v1709, %v1497
        %v1714 = vadd.f32 %v1634, %v1710
        %v1715 = vadd.f32 %v1635, %v1711
        %v1716 = vadd.f32 %v1636, %v1712
        %v1717 = vadd.f32 %v1637, %v1713
        %s1718 = sld [smem:[#allocation6 + $0x308]]
        %v1719 = vstv %s1718
        %v1720 = vmul.f32 %v1719, %v1488
        %v1721 = vmul.f32 %v1719, %v1490
        %v1722 = vmul.f32 %v1719, %v1492
        %v1723 = vmul.f32 %v1719, %v1497
        %v1724 = vadd.f32 %v1644, %v1720
        %v1725 = vadd.f32 %v1645, %v1721
        %v1726 = vadd.f32 %v1646, %v1722
        %v1727 = vadd.f32 %v1647, %v1723
        %s1728 = sld [smem:[#allocation6 + $0x388]]
        %v1729 = vstv %s1728
        %v1730 = vmul.f32 %v1729, %v1488
        %v1731 = vmul.f32 %v1729, %v1490
        %v1732 = vmul.f32 %v1729, %v1492
        %v1733 = vmul.f32 %v1729, %v1497
        %v1734 = vadd.f32 %v1654, %v1730
        %v1735 = vadd.f32 %v1655, %v1731
        %v1736 = vadd.f32 %v1656, %v1732
        %v1737 = vadd.f32 %v1657, %v1733
        %1738 = vmatprep.subr.mxu0 0.0
        %1739 = vmatpush1.msra.mxu0 %v421
        %1740 = vmatprep.subr.mxu0 0.0
        %1741 = vmatpush1.msra.mxu0 %v426
        %1742 = vmatprep.subr.mxu0 0.0
        %1743 = vmatpush1.msra.mxu0 0.0
        %1744 = vmatprep.subr.mxu0 0.0
        %1745 = vmatpush1.msra.mxu0 0.0
        %1746 = vmatprep.subr.mxu0 0.0
        %1747 = vmatpush1.msra.mxu0 0.0
        %1748 = vmatprep.subr.mxu0 0.0
        %1749 = vmatpush1.msra.mxu0 0.0
        %1750 = vmatprep.subr.mxu0 0.0
        %1751 = vmatpush1.msra.mxu0 0.0
        %1752 = vmatprep.subr.mxu0 0.0
        %1753 = vmatpush1.msra.mxu0 0.0
        %1754 = vmatprep.subr.mxu0 0.0
        %1755 = vmatpush1.msra.mxu0 0.0
        %1756 = vmatprep.subr.mxu0 0.0
        %1757 = vmatpush1.msra.mxu0 0.0
        %1758 = vmatprep.subr.mxu0 0.0
        %1759 = vmatpush1.msra.mxu0 0.0
        %1760 = vmatprep.subr.mxu0 0.0
        %1761 = vmatpush1.msra.mxu0 0.0
        %1762 = vmatprep.subr.mxu0 0.0
        %1763 = vmatpush1.msra.mxu0 0.0
        %1764 = vmatprep.subr.mxu0 0.0
        %1765 = vmatpush1.msra.mxu0 0.0
        %1766 = vmatprep.subr.mxu0 0.0
        %1767 = vmatpush1.msra.mxu0 0.0
        %1768 = vmatprep.subr.mxu0 0.0
        %1769 = vmatpush1.msra.mxu0 0.0
        %1770 = vmatprep.subr.mxu0 0.0
        %1771 = vmatpush1.msra.mxu0 0.0
        %1772 = vmatprep.subr.mxu0 0.0
        %1773 = vmatpush1.msra.mxu0 0.0
        %1774 = vmatprep.subr.mxu0 0.0
        %1775 = vmatpush1.msra.mxu0 0.0
        %1776 = vmatprep.subr.mxu0 0.0
        %1777 = vmatpush1.msra.mxu0 0.0
        %1778 = vmatprep.subr.mxu0 0.0
        %1779 = vmatpush1.msra.mxu0 0.0
        %1780 = vmatprep.subr.mxu0 0.0
        %1781 = vmatpush1.msra.mxu0 0.0
        %1782 = vmatprep.subr.mxu0 0.0
        %1783 = vmatpush1.msra.mxu0 0.0
        %1784 = vmatprep.subr.mxu0 0.0
        %1785 = vmatpush1.msra.mxu0 0.0
        %1786 = vmatprep.subr.mxu0 0.0
        %1787 = vmatpush1.msra.mxu0 0.0
        %1788 = vmatprep.subr.mxu0 0.0
        %1789 = vmatpush1.msra.mxu0 0.0
        %1790 = vmatprep.subr.mxu0 0.0
        %1791 = vmatpush1.msra.mxu0 0.0
        %1792 = vmatprep.subr.mxu0 0.0
        %1793 = vmatpush1.msra.mxu0 0.0
        %1794 = vmatprep.subr.mxu0 0.0
        %1795 = vmatpush1.msra.mxu0 0.0
        %1796 = vmatprep.subr.mxu0 0.0
        %1797 = vmatpush1.msra.mxu0 0.0
        %1798 = vmatprep.subr.mxu0 0.0
        %1799 = vmatpush1.msra.mxu0 0.0
        %1800 = vmatprep.subr.mxu0 0.0
        %1801 = vmatpush1.msra.mxu0 0.0
        %1802 = vmatprep.mubr.f32.mxu0 0.0
        %1803 = vmatmul.mubr.f32.gmra.mrb[0].mxu0 %v666
        %v1804 = vpop.f32.mrb[0].mxu0
        %v1805 = vadd.f32 0.0, %v1804
        %v1806 = vpop.f32.mrb[0].mxu0
        %1807 = vmatprep.mubr.f32.mxu0 0.0
        %1808 = vmatmul.mubr.f32.gmra.mrb[0].mxu0 %v669
        %v1809 = vpop.f32.mrb[0].mxu0
        %v1810 = vadd.f32 0.0, %v1809
        %v1811 = vpop.f32.mrb[0].mxu0
        %1812 = vmatprep.mubr.f32.mxu0 0.0
        %1813 = vmatmul.mubr.f32.gmra.mrb[0].mxu0 %v672
        %v1814 = vpop.f32.mrb[0].mxu0
        %v1815 = vadd.f32 0.0, %v1814
        %v1816 = vpop.f32.mrb[0].mxu0
        %1817 = vmatprep.mubr.f32.mxu0 0.0
        %1818 = vmatmul.mubr.f32.gmra.mrb[0].mxu0 %v675
        %v1819 = vpop.f32.mrb[0].mxu0
        %v1820 = vadd.f32 0.0, %v1819
        %v1821 = vpop.f32.mrb[0].mxu0
        %1822 = vdwg.mxu0
        %v1827 = vrot.slane %v1805, 7
        %v1828 = vrot.slane %v1810, 7
        %v1829 = vsel %vm766, %v1827, %v1828
        %v1830 = vrot.slane %v1815, 7
        %v1831 = vsel %vm766, %v1828, %v1830
        %v1832 = vrot.slane %v1820, 7
        %v1833 = vsel %vm766, %v1830, %v1832
        %v1838 = vsel %vm766, 0.0, %v1827
        %v1839 = vrot.slane %v1805, 1
        %v1840 = vrot.slane %v1810, 1
        %v1841 = vsel %vm779, %v1839, %v1840
        %v1842 = vrot.slane %v1815, 1
        %v1843 = vsel %vm779, %v1840, %v1842
        %v1844 = vrot.slane %v1820, 1
        %v1845 = vsel %vm779, %v1842, %v1844
        %v1850 = vsel %vm779, %v1844, 0.0
        %s1851 = sld [smem:[#allocation6 + $0x9]]
        %v1852 = vstv %s1851
        %v1853 = vmul.f32 %v1852, %v1838
        %v1854 = vmul.f32 %v1852, %v1829
        %v1855 = vmul.f32 %v1852, %v1831
        %v1856 = vmul.f32 %v1852, %v1833
        %v1857 = vadd.f32 %v1664, %v1853
        %v1858 = vadd.f32 %v1665, %v1854
        %v1859 = vadd.f32 %v1666, %v1855
        %v1860 = vadd.f32 %v1667, %v1856
        %s1861 = sld [smem:[#allocation6 + $0x89]]
        %v1862 = vstv %s1861
        %v1863 = vmul.f32 %v1862, %v1838
        %v1864 = vmul.f32 %v1862, %v1829
        %v1865 = vmul.f32 %v1862, %v1831
        %v1866 = vmul.f32 %v1862, %v1833
        %v1867 = vadd.f32 %v1674, %v1863
        %v1868 = vadd.f32 %v1675, %v1864
        %v1869 = vadd.f32 %v1676, %v1865
        %v1870 = vadd.f32 %v1677, %v1866
        %s1871 = sld [smem:[#allocation6 + $0x109]]
        %v1872 = vstv %s1871
        %v1873 = vmul.f32 %v1872, %v1838
        %v1874 = vmul.f32 %v1872, %v1829
        %v1875 = vmul.f32 %v1872, %v1831
        %v1876 = vmul.f32 %v1872, %v1833
        %v1877 = vadd.f32 %v1684, %v1873
        %v1878 = vadd.f32 %v1685, %v1874
        %v1879 = vadd.f32 %v1686, %v1875
        %v1880 = vadd.f32 %v1687, %v1876
        %s1881 = sld [smem:[#allocation6 + $0x189]]
        %v1882 = vstv %s1881
        %v1883 = vmul.f32 %v1882, %v1838
        %v1884 = vmul.f32 %v1882, %v1829
        %v1885 = vmul.f32 %v1882, %v1831
        %v1886 = vmul.f32 %v1882, %v1833
        %v1887 = vadd.f32 %v1694, %v1883
        %v1888 = vadd.f32 %v1695, %v1884
        %v1889 = vadd.f32 %v1696, %v1885
        %v1890 = vadd.f32 %v1697, %v1886
        %s1891 = sld [smem:[#allocation6 + $0x209]]
        %v1892 = vstv %s1891
        %v1893 = vmul.f32 %v1892, %v1838
        %v1894 = vmul.f32 %v1892, %v1829
        %v1895 = vmul.f32 %v1892, %v1831
        %v1896 = vmul.f32 %v1892, %v1833
        %v1897 = vadd.f32 %v1704, %v1893
        %v1898 = vadd.f32 %v1705, %v1894
        %v1899 = vadd.f32 %v1706, %v1895
        %v1900 = vadd.f32 %v1707, %v1896
        %s1901 = sld [smem:[#allocation6 + $0x289]]
        %v1902 = vstv %s1901
        %v1903 = vmul.f32 %v1902, %v1838
        %v1904 = vmul.f32 %v1902, %v1829
        %v1905 = vmul.f32 %v1902, %v1831
        %v1906 = vmul.f32 %v1902, %v1833
        %v1907 = vadd.f32 %v1714, %v1903
        %v1908 = vadd.f32 %v1715, %v1904
        %v1909 = vadd.f32 %v1716, %v1905
        %v1910 = vadd.f32 %v1717, %v1906
        %s1911 = sld [smem:[#allocation6 + $0x309]]
        %v1912 = vstv %s1911
        %v1913 = vmul.f32 %v1912, %v1838
        %v1914 = vmul.f32 %v1912, %v1829
        %v1915 = vmul.f32 %v1912, %v1831
        %v1916 = vmul.f32 %v1912, %v1833
        %v1917 = vadd.f32 %v1724, %v1913
        %v1918 = vadd.f32 %v1725, %v1914
        %v1919 = vadd.f32 %v1726, %v1915
        %v1920 = vadd.f32 %v1727, %v1916
        %s1921 = sld [smem:[#allocation6 + $0x389]]
        %v1922 = vstv %s1921
        %v1923 = vmul.f32 %v1922, %v1838
        %v1924 = vmul.f32 %v1922, %v1829
        %v1925 = vmul.f32 %v1922, %v1831
        %v1926 = vmul.f32 %v1922, %v1833
        %v1927 = vadd.f32 %v1734, %v1923
        %v1928 = vadd.f32 %v1735, %v1924
        %v1929 = vadd.f32 %v1736, %v1925
        %v1930 = vadd.f32 %v1737, %v1926
        %s1931 = sld [smem:[#allocation6 + $0xc]]
        %v1932 = vstv %s1931
        %v1933 = vmul.f32 %v1932, %v1805
        %v1934 = vmul.f32 %v1932, %v1810
        %v1935 = vmul.f32 %v1932, %v1815
        %v1936 = vmul.f32 %v1932, %v1820
        %v1937 = vadd.f32 %v1857, %v1933
        %v1938 = vadd.f32 %v1858, %v1934
        %v1939 = vadd.f32 %v1859, %v1935
        %v1940 = vadd.f32 %v1860, %v1936
        %s1941 = sld [smem:[#allocation6 + $0x8c]]
        %v1942 = vstv %s1941
        %v1943 = vmul.f32 %v1942, %v1805
        %v1944 = vmul.f32 %v1942, %v1810
        %v1945 = vmul.f32 %v1942, %v1815
        %v1946 = vmul.f32 %v1942, %v1820
        %v1947 = vadd.f32 %v1867, %v1943
        %v1948 = vadd.f32 %v1868, %v1944
        %v1949 = vadd.f32 %v1869, %v1945
        %v1950 = vadd.f32 %v1870, %v1946
        %s1951 = sld [smem:[#allocation6 + $0x10c]]
        %v1952 = vstv %s1951
        %v1953 = vmul.f32 %v1952, %v1805
        %v1954 = vmul.f32 %v1952, %v1810
        %v1955 = vmul.f32 %v1952, %v1815
        %v1956 = vmul.f32 %v1952, %v1820
        %v1957 = vadd.f32 %v1877, %v1953
        %v1958 = vadd.f32 %v1878, %v1954
        %v1959 = vadd.f32 %v1879, %v1955
        %v1960 = vadd.f32 %v1880, %v1956
        %s1961 = sld [smem:[#allocation6 + $0x18c]]
        %v1962 = vstv %s1961
        %v1963 = vmul.f32 %v1962, %v1805
        %v1964 = vmul.f32 %v1962, %v1810
        %v1965 = vmul.f32 %v1962, %v1815
        %v1966 = vmul.f32 %v1962, %v1820
        %v1967 = vadd.f32 %v1887, %v1963
        %v1968 = vadd.f32 %v1888, %v1964
        %v1969 = vadd.f32 %v1889, %v1965
        %v1970 = vadd.f32 %v1890, %v1966
        %s1971 = sld [smem:[#allocation6 + $0x20c]]
        %v1972 = vstv %s1971
        %v1973 = vmul.f32 %v1972, %v1805
        %v1974 = vmul.f32 %v1972, %v1810
        %v1975 = vmul.f32 %v1972, %v1815
        %v1976 = vmul.f32 %v1972, %v1820
        %v1977 = vadd.f32 %v1897, %v1973
        %v1978 = vadd.f32 %v1898, %v1974
        %v1979 = vadd.f32 %v1899, %v1975
        %v1980 = vadd.f32 %v1900, %v1976
        %s1981 = sld [smem:[#allocation6 + $0x28c]]
        %v1982 = vstv %s1981
        %v1983 = vmul.f32 %v1982, %v1805
        %v1984 = vmul.f32 %v1982, %v1810
        %v1985 = vmul.f32 %v1982, %v1815
        %v1986 = vmul.f32 %v1982, %v1820
        %v1987 = vadd.f32 %v1907, %v1983
        %v1988 = vadd.f32 %v1908, %v1984
        %v1989 = vadd.f32 %v1909, %v1985
        %v1990 = vadd.f32 %v1910, %v1986
        %s1991 = sld [smem:[#allocation6 + $0x30c]]
        %v1992 = vstv %s1991
        %v1993 = vmul.f32 %v1992, %v1805
        %v1994 = vmul.f32 %v1992, %v1810
        %v1995 = vmul.f32 %v1992, %v1815
        %v1996 = vmul.f32 %v1992, %v1820
        %v1997 = vadd.f32 %v1917, %v1993
        %v1998 = vadd.f32 %v1918, %v1994
        %v1999 = vadd.f32 %v1919, %v1995
        %v2000 = vadd.f32 %v1920, %v1996
        %s2001 = sld [smem:[#allocation6 + $0x38c]]
        %v2002 = vstv %s2001
        %v2003 = vmul.f32 %v2002, %v1805
        %v2004 = vmul.f32 %v2002, %v1810
        %v2005 = vmul.f32 %v2002, %v1815
        %v2006 = vmul.f32 %v2002, %v1820
        %v2007 = vadd.f32 %v1927, %v2003
        %v2008 = vadd.f32 %v1928, %v2004
        %v2009 = vadd.f32 %v1929, %v2005
        %v2010 = vadd.f32 %v1930, %v2006
        %s2011 = sld [smem:[#allocation6 + $0xf]]
        %v2012 = vstv %s2011
        %v2013 = vmul.f32 %v2012, %v1841
        %v2014 = vmul.f32 %v2012, %v1843
        %v2015 = vmul.f32 %v2012, %v1845
        %v2016 = vmul.f32 %v2012, %v1850
        %v2017 = vadd.f32 %v1937, %v2013
        %v2018 = vadd.f32 %v1938, %v2014
        %v2019 = vadd.f32 %v1939, %v2015
        %v2020 = vadd.f32 %v1940, %v2016
        %s2021 = sld [smem:[#allocation6 + $0x8f]]
        %v2022 = vstv %s2021
        %v2023 = vmul.f32 %v2022, %v1841
        %v2024 = vmul.f32 %v2022, %v1843
        %v2025 = vmul.f32 %v2022, %v1845
        %v2026 = vmul.f32 %v2022, %v1850
        %v2027 = vadd.f32 %v1947, %v2023
        %v2028 = vadd.f32 %v1948, %v2024
        %v2029 = vadd.f32 %v1949, %v2025
        %v2030 = vadd.f32 %v1950, %v2026
        %s2031 = sld [smem:[#allocation6 + $0x10f]]
        %v2032 = vstv %s2031
        %v2033 = vmul.f32 %v2032, %v1841
        %v2034 = vmul.f32 %v2032, %v1843
        %v2035 = vmul.f32 %v2032, %v1845
        %v2036 = vmul.f32 %v2032, %v1850
        %v2037 = vadd.f32 %v1957, %v2033
        %v2038 = vadd.f32 %v1958, %v2034
        %v2039 = vadd.f32 %v1959, %v2035
        %v2040 = vadd.f32 %v1960, %v2036
        %s2041 = sld [smem:[#allocation6 + $0x18f]]
        %v2042 = vstv %s2041
        %v2043 = vmul.f32 %v2042, %v1841
        %v2044 = vmul.f32 %v2042, %v1843
        %v2045 = vmul.f32 %v2042, %v1845
        %v2046 = vmul.f32 %v2042, %v1850
        %v2047 = vadd.f32 %v1967, %v2043
        %v2048 = vadd.f32 %v1968, %v2044
        %v2049 = vadd.f32 %v1969, %v2045
        %v2050 = vadd.f32 %v1970, %v2046
        %s2051 = sld [smem:[#allocation6 + $0x20f]]
        %v2052 = vstv %s2051
        %v2053 = vmul.f32 %v2052, %v1841
        %v2054 = vmul.f32 %v2052, %v1843
        %v2055 = vmul.f32 %v2052, %v1845
        %v2056 = vmul.f32 %v2052, %v1850
        %v2057 = vadd.f32 %v1977, %v2053
        %v2058 = vadd.f32 %v1978, %v2054
        %v2059 = vadd.f32 %v1979, %v2055
        %v2060 = vadd.f32 %v1980, %v2056
        %s2061 = sld [smem:[#allocation6 + $0x28f]]
        %v2062 = vstv %s2061
        %v2063 = vmul.f32 %v2062, %v1841
        %v2064 = vmul.f32 %v2062, %v1843
        %v2065 = vmul.f32 %v2062, %v1845
        %v2066 = vmul.f32 %v2062, %v1850
        %v2067 = vadd.f32 %v1987, %v2063
        %v2068 = vadd.f32 %v1988, %v2064
        %v2069 = vadd.f32 %v1989, %v2065
        %v2070 = vadd.f32 %v1990, %v2066
        %s2071 = sld [smem:[#allocation6 + $0x30f]]
        %v2072 = vstv %s2071
        %v2073 = vmul.f32 %v2072, %v1841
        %v2074 = vmul.f32 %v2072, %v1843
        %v2075 = vmul.f32 %v2072, %v1845
        %v2076 = vmul.f32 %v2072, %v1850
        %v2077 = vadd.f32 %v1997, %v2073
        %v2078 = vadd.f32 %v1998, %v2074
        %v2079 = vadd.f32 %v1999, %v2075
        %v2080 = vadd.f32 %v2000, %v2076
        %s2081 = sld [smem:[#allocation6 + $0x38f]]
        %v2082 = vstv %s2081
        %v2083 = vmul.f32 %v2082, %v1841
        %v2084 = vmul.f32 %v2082, %v1843
        %v2085 = vmul.f32 %v2082, %v1845
        %v2086 = vmul.f32 %v2082, %v1850
        %v2087 = vadd.f32 %v2007, %v2083
        %v2088 = vadd.f32 %v2008, %v2084
        %v2089 = vadd.f32 %v2009, %v2085
        %v2090 = vadd.f32 %v2010, %v2086
        %2091 = vmatprep.subr.mxu0 0.0
        %2092 = vmatpush1.msra.mxu0 %v529
        %2093 = vmatprep.subr.mxu0 0.0
        %2094 = vmatpush1.msra.mxu0 %v534
        %2095 = vmatprep.subr.mxu0 0.0
        %2096 = vmatpush1.msra.mxu0 0.0
        %2097 = vmatprep.subr.mxu0 0.0
        %2098 = vmatpush1.msra.mxu0 0.0
        %2099 = vmatprep.subr.mxu0 0.0
        %2100 = vmatpush1.msra.mxu0 0.0
        %2101 = vmatprep.subr.mxu0 0.0
        %2102 = vmatpush1.msra.mxu0 0.0
        %2103 = vmatprep.subr.mxu0 0.0
        %2104 = vmatpush1.msra.mxu0 0.0
        %2105 = vmatprep.subr.mxu0 0.0
        %2106 = vmatpush1.msra.mxu0 0.0
        %2107 = vmatprep.subr.mxu0 0.0
        %2108 = vmatpush1.msra.mxu0 0.0
        %2109 = vmatprep.subr.mxu0 0.0
        %2110 = vmatpush1.msra.mxu0 0.0
        %2111 = vmatprep.subr.mxu0 0.0
        %2112 = vmatpush1.msra.mxu0 0.0
        %2113 = vmatprep.subr.mxu0 0.0
        %2114 = vmatpush1.msra.mxu0 0.0
        %2115 = vmatprep.subr.mxu0 0.0
        %2116 = vmatpush1.msra.mxu0 0.0
        %2117 = vmatprep.subr.mxu0 0.0
        %2118 = vmatpush1.msra.mxu0 0.0
        %2119 = vmatprep.subr.mxu0 0.0
        %2120 = vmatpush1.msra.mxu0 0.0
        %2121 = vmatprep.subr.mxu0 0.0
        %2122 = vmatpush1.msra.mxu0 0.0
        %2123 = vmatprep.subr.mxu0 0.0
        %2124 = vmatpush1.msra.mxu0 0.0
        %2125 = vmatprep.subr.mxu0 0.0
        %2126 = vmatpush1.msra.mxu0 0.0
        %2127 = vmatprep.subr.mxu0 0.0
        %2128 = vmatpush1.msra.mxu0 0.0
        %2129 = vmatprep.subr.mxu0 0.0
        %2130 = vmatpush1.msra.mxu0 0.0
        %2131 = vmatprep.subr.mxu0 0.0
        %2132 = vmatpush1.msra.mxu0 0.0
        %2133 = vmatprep.subr.mxu0 0.0
        %2134 = vmatpush1.msra.mxu0 0.0
        %2135 = vmatprep.subr.mxu0 0.0
        %2136 = vmatpush1.msra.mxu0 0.0
        %2137 = vmatprep.subr.mxu0 0.0
        %2138 = vmatpush1.msra.mxu0 0.0
        %2139 = vmatprep.subr.mxu0 0.0
        %2140 = vmatpush1.msra.mxu0 0.0
        %2141 = vmatprep.subr.mxu0 0.0
        %2142 = vmatpush1.msra.mxu0 0.0
        %2143 = vmatprep.subr.mxu0 0.0
        %2144 = vmatpush1.msra.mxu0 0.0
        %2145 = vmatprep.subr.mxu0 0.0
        %2146 = vmatpush1.msra.mxu0 0.0
        %2147 = vmatprep.subr.mxu0 0.0
        %2148 = vmatpush1.msra.mxu0 0.0
        %2149 = vmatprep.subr.mxu0 0.0
        %2150 = vmatpush1.msra.mxu0 0.0
        %2151 = vmatprep.subr.mxu0 0.0
        %2152 = vmatpush1.msra.mxu0 0.0
        %2153 = vmatprep.subr.mxu0 0.0
        %2154 = vmatpush1.msra.mxu0 0.0
        %2155 = vmatprep.mubr.f32.mxu0 0.0
        %2156 = vmatmul.mubr.f32.gmra.mrb[0].mxu0 %v666
        %v2157 = vpop.f32.mrb[0].mxu0
        %v2158 = vadd.f32 0.0, %v2157
        %v2159 = vpop.f32.mrb[0].mxu0
        %2160 = vmatprep.mubr.f32.mxu0 0.0
        %2161 = vmatmul.mubr.f32.gmra.mrb[0].mxu0 %v669
        %v2162 = vpop.f32.mrb[0].mxu0
        %v2163 = vadd.f32 0.0, %v2162
        %v2164 = vpop.f32.mrb[0].mxu0
        %2165 = vmatprep.mubr.f32.mxu0 0.0
        %2166 = vmatmul.mubr.f32.gmra.mrb[0].mxu0 %v672
        %v2167 = vpop.f32.mrb[0].mxu0
        %v2168 = vadd.f32 0.0, %v2167
        %v2169 = vpop.f32.mrb[0].mxu0
        %2170 = vmatprep.mubr.f32.mxu0 0.0
        %2171 = vmatmul.mubr.f32.gmra.mrb[0].mxu0 %v675
        %v2172 = vpop.f32.mrb[0].mxu0
        %v2173 = vadd.f32 0.0, %v2172
        %v2174 = vpop.f32.mrb[0].mxu0
        %2175 = vdwg.mxu0
        %v2180 = vrot.slane %v2158, 7
        %v2181 = vrot.slane %v2163, 7
        %v2182 = vsel %vm766, %v2180, %v2181
        %v2183 = vrot.slane %v2168, 7
        %v2184 = vsel %vm766, %v2181, %v2183
        %v2185 = vrot.slane %v2173, 7
        %v2186 = vsel %vm766, %v2183, %v2185
        %v2191 = vsel %vm766, 0.0, %v2180
        %v2192 = vrot.slane %v2158, 1
        %v2193 = vrot.slane %v2163, 1
        %v2194 = vsel %vm779, %v2192, %v2193
        %v2195 = vrot.slane %v2168, 1
        %v2196 = vsel %vm779, %v2193, %v2195
        %v2197 = vrot.slane %v2173, 1
        %v2198 = vsel %vm779, %v2195, %v2197
        %v2203 = vsel %vm779, %v2197, 0.0
        %s2204 = sld [smem:[#allocation6 + $0xa]]
        %v2205 = vstv %s2204
        %v2206 = vmul.f32 %v2205, %v2191
        %v2207 = vmul.f32 %v2205, %v2182
        %v2208 = vmul.f32 %v2205, %v2184
        %v2209 = vmul.f32 %v2205, %v2186
        %v2210 = vadd.f32 %v2017, %v2206
        %v2211 = vadd.f32 %v2018, %v2207
        %v2212 = vadd.f32 %v2019, %v2208
        %v2213 = vadd.f32 %v2020, %v2209
        %s2214 = sld [smem:[#allocation6 + $0x8a]]
        %v2215 = vstv %s2214
        %v2216 = vmul.f32 %v2215, %v2191
        %v2217 = vmul.f32 %v2215, %v2182
        %v2218 = vmul.f32 %v2215, %v2184
        %v2219 = vmul.f32 %v2215, %v2186
        %v2220 = vadd.f32 %v2027, %v2216
        %v2221 = vadd.f32 %v2028, %v2217
        %v2222 = vadd.f32 %v2029, %v2218
        %v2223 = vadd.f32 %v2030, %v2219
        %s2224 = sld [smem:[#allocation6 + $0x10a]]
        %v2225 = vstv %s2224
        %v2226 = vmul.f32 %v2225, %v2191
        %v2227 = vmul.f32 %v2225, %v2182
        %v2228 = vmul.f32 %v2225, %v2184
        %v2229 = vmul.f32 %v2225, %v2186
        %v2230 = vadd.f32 %v2037, %v2226
        %v2231 = vadd.f32 %v2038, %v2227
        %v2232 = vadd.f32 %v2039, %v2228
        %v2233 = vadd.f32 %v2040, %v2229
        %s2234 = sld [smem:[#allocation6 + $0x18a]]
        %v2235 = vstv %s2234
        %v2236 = vmul.f32 %v2235, %v2191
        %v2237 = vmul.f32 %v2235, %v2182
        %v2238 = vmul.f32 %v2235, %v2184
        %v2239 = vmul.f32 %v2235, %v2186
        %v2240 = vadd.f32 %v2047, %v2236
        %v2241 = vadd.f32 %v2048, %v2237
        %v2242 = vadd.f32 %v2049, %v2238
        %v2243 = vadd.f32 %v2050, %v2239
        %s2244 = sld [smem:[#allocation6 + $0x20a]]
        %v2245 = vstv %s2244
        %v2246 = vmul.f32 %v2245, %v2191
        %v2247 = vmul.f32 %v2245, %v2182
        %v2248 = vmul.f32 %v2245, %v2184
        %v2249 = vmul.f32 %v2245, %v2186
        %v2250 = vadd.f32 %v2057, %v2246
        %v2251 = vadd.f32 %v2058, %v2247
        %v2252 = vadd.f32 %v2059, %v2248
        %v2253 = vadd.f32 %v2060, %v2249
        %s2254 = sld [smem:[#allocation6 + $0x28a]]
        %v2255 = vstv %s2254
        %v2256 = vmul.f32 %v2255, %v2191
        %v2257 = vmul.f32 %v2255, %v2182
        %v2258 = vmul.f32 %v2255, %v2184
        %v2259 = vmul.f32 %v2255, %v2186
        %v2260 = vadd.f32 %v2067, %v2256
        %v2261 = vadd.f32 %v2068, %v2257
        %v2262 = vadd.f32 %v2069, %v2258
        %v2263 = vadd.f32 %v2070, %v2259
        %s2264 = sld [smem:[#allocation6 + $0x30a]]
        %v2265 = vstv %s2264
        %v2266 = vmul.f32 %v2265, %v2191
        %v2267 = vmul.f32 %v2265, %v2182
        %v2268 = vmul.f32 %v2265, %v2184
        %v2269 = vmul.f32 %v2265, %v2186
        %v2270 = vadd.f32 %v2077, %v2266
        %v2271 = vadd.f32 %v2078, %v2267
        %v2272 = vadd.f32 %v2079, %v2268
        %v2273 = vadd.f32 %v2080, %v2269
        %s2274 = sld [smem:[#allocation6 + $0x38a]]
        %v2275 = vstv %s2274
        %v2276 = vmul.f32 %v2275, %v2191
        %v2277 = vmul.f32 %v2275, %v2182
        %v2278 = vmul.f32 %v2275, %v2184
        %v2279 = vmul.f32 %v2275, %v2186
        %v2280 = vadd.f32 %v2087, %v2276
        %v2281 = vadd.f32 %v2088, %v2277
        %v2282 = vadd.f32 %v2089, %v2278
        %v2283 = vadd.f32 %v2090, %v2279
        %s2284 = sld [smem:[#allocation6 + $0xd]]
        %v2285 = vstv %s2284
        %v2286 = vmul.f32 %v2285, %v2158
        %v2287 = vmul.f32 %v2285, %v2163
        %v2288 = vmul.f32 %v2285, %v2168
        %v2289 = vmul.f32 %v2285, %v2173
        %v2290 = vadd.f32 %v2210, %v2286
        %v2291 = vadd.f32 %v2211, %v2287
        %v2292 = vadd.f32 %v2212, %v2288
        %v2293 = vadd.f32 %v2213, %v2289
        %s2294 = sld [smem:[#allocation6 + $0x8d]]
        %v2295 = vstv %s2294
        %v2296 = vmul.f32 %v2295, %v2158
        %v2297 = vmul.f32 %v2295, %v2163
        %v2298 = vmul.f32 %v2295, %v2168
        %v2299 = vmul.f32 %v2295, %v2173
        %v2300 = vadd.f32 %v2220, %v2296
        %v2301 = vadd.f32 %v2221, %v2297
        %v2302 = vadd.f32 %v2222, %v2298
        %v2303 = vadd.f32 %v2223, %v2299
        %s2304 = sld [smem:[#allocation6 + $0x10d]]
        %v2305 = vstv %s2304
        %v2306 = vmul.f32 %v2305, %v2158
        %v2307 = vmul.f32 %v2305, %v2163
        %v2308 = vmul.f32 %v2305, %v2168
        %v2309 = vmul.f32 %v2305, %v2173
        %v2310 = vadd.f32 %v2230, %v2306
        %v2311 = vadd.f32 %v2231, %v2307
        %v2312 = vadd.f32 %v2232, %v2308
        %v2313 = vadd.f32 %v2233, %v2309
        %s2314 = sld [smem:[#allocation6 + $0x18d]]
        %v2315 = vstv %s2314
        %v2316 = vmul.f32 %v2315, %v2158
        %v2317 = vmul.f32 %v2315, %v2163
        %v2318 = vmul.f32 %v2315, %v2168
        %v2319 = vmul.f32 %v2315, %v2173
        %v2320 = vadd.f32 %v2240, %v2316
        %v2321 = vadd.f32 %v2241, %v2317
        %v2322 = vadd.f32 %v2242, %v2318
        %v2323 = vadd.f32 %v2243, %v2319
        %s2324 = sld [smem:[#allocation6 + $0x20d]]
        %v2325 = vstv %s2324
        %v2326 = vmul.f32 %v2325, %v2158
        %v2327 = vmul.f32 %v2325, %v2163
        %v2328 = vmul.f32 %v2325, %v2168
        %v2329 = vmul.f32 %v2325, %v2173
        %v2330 = vadd.f32 %v2250, %v2326
        %v2331 = vadd.f32 %v2251, %v2327
        %v2332 = vadd.f32 %v2252, %v2328
        %v2333 = vadd.f32 %v2253, %v2329
        %s2334 = sld [smem:[#allocation6 + $0x28d]]
        %v2335 = vstv %s2334
        %v2336 = vmul.f32 %v2335, %v2158
        %v2337 = vmul.f32 %v2335, %v2163
        %v2338 = vmul.f32 %v2335, %v2168
        %v2339 = vmul.f32 %v2335, %v2173
        %v2340 = vadd.f32 %v2260, %v2336
        %v2341 = vadd.f32 %v2261, %v2337
        %v2342 = vadd.f32 %v2262, %v2338
        %v2343 = vadd.f32 %v2263, %v2339
        %s2344 = sld [smem:[#allocation6 + $0x30d]]
        %v2345 = vstv %s2344
        %v2346 = vmul.f32 %v2345, %v2158
        %v2347 = vmul.f32 %v2345, %v2163
        %v2348 = vmul.f32 %v2345, %v2168
        %v2349 = vmul.f32 %v2345, %v2173
        %v2350 = vadd.f32 %v2270, %v2346
        %v2351 = vadd.f32 %v2271, %v2347
        %v2352 = vadd.f32 %v2272, %v2348
        %v2353 = vadd.f32 %v2273, %v2349
        %s2354 = sld [smem:[#allocation6 + $0x38d]]
        %v2355 = vstv %s2354
        %v2356 = vmul.f32 %v2355, %v2158
        %v2357 = vmul.f32 %v2355, %v2163
        %v2358 = vmul.f32 %v2355, %v2168
        %v2359 = vmul.f32 %v2355, %v2173
        %v2360 = vadd.f32 %v2280, %v2356
        %v2361 = vadd.f32 %v2281, %v2357
        %v2362 = vadd.f32 %v2282, %v2358
        %v2363 = vadd.f32 %v2283, %v2359
        %s2364 = sld [smem:[#allocation6 + $0x10]]
        %v2365 = vstv %s2364
        %v2366 = vmul.f32 %v2365, %v2194
        %v2367 = vmul.f32 %v2365, %v2196
        %v2368 = vmul.f32 %v2365, %v2198
        %v2369 = vmul.f32 %v2365, %v2203
        %v2370 = vadd.f32 %v2290, %v2366
        %v2371 = vadd.f32 %v2291, %v2367
        %v2372 = vadd.f32 %v2292, %v2368
        %v2373 = vadd.f32 %v2293, %v2369
        %s2374 = sld [smem:[#allocation6 + $0x90]]
        %v2375 = vstv %s2374
        %v2376 = vmul.f32 %v2375, %v2194
        %v2377 = vmul.f32 %v2375, %v2196
        %v2378 = vmul.f32 %v2375, %v2198
        %v2379 = vmul.f32 %v2375, %v2203
        %v2380 = vadd.f32 %v2300, %v2376
        %v2381 = vadd.f32 %v2301, %v2377
        %v2382 = vadd.f32 %v2302, %v2378
        %v2383 = vadd.f32 %v2303, %v2379
        %s2384 = sld [smem:[#allocation6 + $0x110]]
        %v2385 = vstv %s2384
        %v2386 = vmul.f32 %v2385, %v2194
        %v2387 = vmul.f32 %v2385, %v2196
        %v2388 = vmul.f32 %v2385, %v2198
        %v2389 = vmul.f32 %v2385, %v2203
        %v2390 = vadd.f32 %v2310, %v2386
        %v2391 = vadd.f32 %v2311, %v2387
        %v2392 = vadd.f32 %v2312, %v2388
        %v2393 = vadd.f32 %v2313, %v2389
        %s2394 = sld [smem:[#allocation6 + $0x190]]
        %v2395 = vstv %s2394
        %v2396 = vmul.f32 %v2395, %v2194
        %v2397 = vmul.f32 %v2395, %v2196
        %v2398 = vmul.f32 %v2395, %v2198
        %v2399 = vmul.f32 %v2395, %v2203
        %v2400 = vadd.f32 %v2320, %v2396
        %v2401 = vadd.f32 %v2321, %v2397
        %v2402 = vadd.f32 %v2322, %v2398
        %v2403 = vadd.f32 %v2323, %v2399
        %s2404 = sld [smem:[#allocation6 + $0x210]]
        %v2405 = vstv %s2404
        %v2406 = vmul.f32 %v2405, %v2194
        %v2407 = vmul.f32 %v2405, %v2196
        %v2408 = vmul.f32 %v2405, %v2198
        %v2409 = vmul.f32 %v2405, %v2203
        %v2410 = vadd.f32 %v2330, %v2406
        %v2411 = vadd.f32 %v2331, %v2407
        %v2412 = vadd.f32 %v2332, %v2408
        %v2413 = vadd.f32 %v2333, %v2409
        %s2414 = sld [smem:[#allocation6 + $0x290]]
        %v2415 = vstv %s2414
        %v2416 = vmul.f32 %v2415, %v2194
        %v2417 = vmul.f32 %v2415, %v2196
        %v2418 = vmul.f32 %v2415, %v2198
        %v2419 = vmul.f32 %v2415, %v2203
        %v2420 = vadd.f32 %v2340, %v2416
        %v2421 = vadd.f32 %v2341, %v2417
        %v2422 = vadd.f32 %v2342, %v2418
        %v2423 = vadd.f32 %v2343, %v2419
        %s2424 = sld [smem:[#allocation6 + $0x310]]
        %v2425 = vstv %s2424
        %v2426 = vmul.f32 %v2425, %v2194
        %v2427 = vmul.f32 %v2425, %v2196
        %v2428 = vmul.f32 %v2425, %v2198
        %v2429 = vmul.f32 %v2425, %v2203
        %v2430 = vadd.f32 %v2350, %v2426
        %v2431 = vadd.f32 %v2351, %v2427
        %v2432 = vadd.f32 %v2352, %v2428
        %v2433 = vadd.f32 %v2353, %v2429
        %s2434 = sld [smem:[#allocation6 + $0x390]]
        %v2435 = vstv %s2434
        %v2436 = vmul.f32 %v2435, %v2194
        %v2437 = vmul.f32 %v2435, %v2196
        %v2438 = vmul.f32 %v2435, %v2198
        %v2439 = vmul.f32 %v2435, %v2203
        %v2440 = vadd.f32 %v2360, %v2436
        %v2441 = vadd.f32 %v2361, %v2437
        %v2442 = vadd.f32 %v2362, %v2438
        %v2443 = vadd.f32 %v2363, %v2439
        %2444 = vmatprep.subr.mxu0 0.0
        %2445 = vmatpush1.msra.mxu0 %v637
        %2446 = vmatprep.subr.mxu0 0.0
        %2447 = vmatpush1.msra.mxu0 %v642
        %2448 = vmatprep.subr.mxu0 0.0
        %2449 = vmatpush1.msra.mxu0 0.0
        %2450 = vmatprep.subr.mxu0 0.0
        %2451 = vmatpush1.msra.mxu0 0.0
        %2452 = vmatprep.subr.mxu0 0.0
        %2453 = vmatpush1.msra.mxu0 0.0
        %2454 = vmatprep.subr.mxu0 0.0
        %2455 = vmatpush1.msra.mxu0 0.0
        %2456 = vmatprep.subr.mxu0 0.0
        %2457 = vmatpush1.msra.mxu0 0.0
        %2458 = vmatprep.subr.mxu0 0.0
        %2459 = vmatpush1.msra.mxu0 0.0
        %2460 = vmatprep.subr.mxu0 0.0
        %2461 = vmatpush1.msra.mxu0 0.0
        %2462 = vmatprep.subr.mxu0 0.0
        %2463 = vmatpush1.msra.mxu0 0.0
        %2464 = vmatprep.subr.mxu0 0.0
        %2465 = vmatpush1.msra.mxu0 0.0
        %2466 = vmatprep.subr.mxu0 0.0
        %2467 = vmatpush1.msra.mxu0 0.0
        %2468 = vmatprep.subr.mxu0 0.0
        %2469 = vmatpush1.msra.mxu0 0.0
        %2470 = vmatprep.subr.mxu0 0.0
        %2471 = vmatpush1.msra.mxu0 0.0
        %2472 = vmatprep.subr.mxu0 0.0
        %2473 = vmatpush1.msra.mxu0 0.0
        %2474 = vmatprep.subr.mxu0 0.0
        %2475 = vmatpush1.msra.mxu0 0.0
        %2476 = vmatprep.subr.mxu0 0.0
        %2477 = vmatpush1.msra.mxu0 0.0
        %2478 = vmatprep.subr.mxu0 0.0
        %2479 = vmatpush1.msra.mxu0 0.0
        %2480 = vmatprep.subr.mxu0 0.0
        %2481 = vmatpush1.msra.mxu0 0.0
        %2482 = vmatprep.subr.mxu0 0.0
        %2483 = vmatpush1.msra.mxu0 0.0
        %2484 = vmatprep.subr.mxu0 0.0
        %2485 = vmatpush1.msra.mxu0 0.0
        %2486 = vmatprep.subr.mxu0 0.0
        %2487 = vmatpush1.msra.mxu0 0.0
        %2488 = vmatprep.subr.mxu0 0.0
        %2489 = vmatpush1.msra.mxu0 0.0
        %2490 = vmatprep.subr.mxu0 0.0
        %2491 = vmatpush1.msra.mxu0 0.0
        %2492 = vmatprep.subr.mxu0 0.0
        %2493 = vmatpush1.msra.mxu0 0.0
        %2494 = vmatprep.subr.mxu0 0.0
        %2495 = vmatpush1.msra.mxu0 0.0
        %2496 = vmatprep.subr.mxu0 0.0
        %2497 = vmatpush1.msra.mxu0 0.0
        %2498 = vmatprep.subr.mxu0 0.0
        %2499 = vmatpush1.msra.mxu0 0.0
        %2500 = vmatprep.subr.mxu0 0.0
        %2501 = vmatpush1.msra.mxu0 0.0
        %2502 = vmatprep.subr.mxu0 0.0
        %2503 = vmatpush1.msra.mxu0 0.0
        %2504 = vmatprep.subr.mxu0 0.0
        %2505 = vmatpush1.msra.mxu0 0.0
        %2506 = vmatprep.subr.mxu0 0.0
        %2507 = vmatpush1.msra.mxu0 0.0
        %2508 = vmatprep.mubr.f32.mxu0 0.0
        %2509 = vmatmul.mubr.f32.gmra.mrb[0].mxu0 %v666
        %v2510 = vpop.f32.mrb[0].mxu0
        %v2511 = vadd.f32 0.0, %v2510
        %v2512 = vpop.f32.mrb[0].mxu0
        %2513 = vmatprep.mubr.f32.mxu0 0.0
        %2514 = vmatmul.mubr.f32.gmra.mrb[0].mxu0 %v669
        %v2515 = vpop.f32.mrb[0].mxu0
        %v2516 = vadd.f32 0.0, %v2515
        %v2517 = vpop.f32.mrb[0].mxu0
        %2518 = vmatprep.mubr.f32.mxu0 0.0
        %2519 = vmatmul.mubr.f32.gmra.mrb[0].mxu0 %v672
        %v2520 = vpop.f32.mrb[0].mxu0
        %v2521 = vadd.f32 0.0, %v2520
        %v2522 = vpop.f32.mrb[0].mxu0
        %2523 = vmatprep.mubr.f32.mxu0 0.0
        %2524 = vmatmul.mubr.f32.gmra.mrb[0].mxu0 %v675
        %v2525 = vpop.f32.mrb[0].mxu0
        %v2526 = vadd.f32 0.0, %v2525
        %v2527 = vpop.f32.mrb[0].mxu0
        %2528 = vdwg.mxu0
        %v2533 = vrot.slane %v2511, 7
        %v2534 = vrot.slane %v2516, 7
        %v2535 = vsel %vm766, %v2533, %v2534
        %v2536 = vrot.slane %v2521, 7
        %v2537 = vsel %vm766, %v2534, %v2536
        %v2538 = vrot.slane %v2526, 7
        %v2539 = vsel %vm766, %v2536, %v2538
        %v2544 = vsel %vm766, 0.0, %v2533
        %v2545 = vrot.slane %v2511, 1
        %v2546 = vrot.slane %v2516, 1
        %v2547 = vsel %vm779, %v2545, %v2546
        %v2548 = vrot.slane %v2521, 1
        %v2549 = vsel %vm779, %v2546, %v2548
        %v2550 = vrot.slane %v2526, 1
        %v2551 = vsel %vm779, %v2548, %v2550
        %v2556 = vsel %vm779, %v2550, 0.0
        %s2557 = sld [smem:[#allocation6 + $0xb]]
        %v2558 = vstv %s2557
        %v2559 = vmul.f32 %v2558, %v2544
        %v2560 = vmul.f32 %v2558, %v2535
        %v2561 = vmul.f32 %v2558, %v2537
        %v2562 = vmul.f32 %v2558, %v2539
        %v2563 = vadd.f32 %v2370, %v2559
        %v2564 = vadd.f32 %v2371, %v2560
        %v2565 = vadd.f32 %v2372, %v2561
        %v2566 = vadd.f32 %v2373, %v2562
        %s2567 = sld [smem:[#allocation6 + $0x8b]]
        %v2568 = vstv %s2567
        %v2569 = vmul.f32 %v2568, %v2544
        %v2570 = vmul.f32 %v2568, %v2535
        %v2571 = vmul.f32 %v2568, %v2537
        %v2572 = vmul.f32 %v2568, %v2539
        %v2573 = vadd.f32 %v2380, %v2569
        %v2574 = vadd.f32 %v2381, %v2570
        %v2575 = vadd.f32 %v2382, %v2571
        %v2576 = vadd.f32 %v2383, %v2572
        %s2577 = sld [smem:[#allocation6 + $0x10b]]
        %v2578 = vstv %s2577
        %v2579 = vmul.f32 %v2578, %v2544
        %v2580 = vmul.f32 %v2578, %v2535
        %v2581 = vmul.f32 %v2578, %v2537
        %v2582 = vmul.f32 %v2578, %v2539
        %v2583 = vadd.f32 %v2390, %v2579
        %v2584 = vadd.f32 %v2391, %v2580
        %v2585 = vadd.f32 %v2392, %v2581
        %v2586 = vadd.f32 %v2393, %v2582
        %s2587 = sld [smem:[#allocation6 + $0x18b]]
        %v2588 = vstv %s2587
        %v2589 = vmul.f32 %v2588, %v2544
        %v2590 = vmul.f32 %v2588, %v2535
        %v2591 = vmul.f32 %v2588, %v2537
        %v2592 = vmul.f32 %v2588, %v2539
        %v2593 = vadd.f32 %v2400, %v2589
        %v2594 = vadd.f32 %v2401, %v2590
        %v2595 = vadd.f32 %v2402, %v2591
        %v2596 = vadd.f32 %v2403, %v2592
        %s2597 = sld [smem:[#allocation6 + $0x20b]]
        %v2598 = vstv %s2597
        %v2599 = vmul.f32 %v2598, %v2544
        %v2600 = vmul.f32 %v2598, %v2535
        %v2601 = vmul.f32 %v2598, %v2537
        %v2602 = vmul.f32 %v2598, %v2539
        %v2603 = vadd.f32 %v2410, %v2599
        %v2604 = vadd.f32 %v2411, %v2600
        %v2605 = vadd.f32 %v2412, %v2601
        %v2606 = vadd.f32 %v2413, %v2602
        %s2607 = sld [smem:[#allocation6 + $0x28b]]
        %v2608 = vstv %s2607
        %v2609 = vmul.f32 %v2608, %v2544
        %v2610 = vmul.f32 %v2608, %v2535
        %v2611 = vmul.f32 %v2608, %v2537
        %v2612 = vmul.f32 %v2608, %v2539
        %v2613 = vadd.f32 %v2420, %v2609
        %v2614 = vadd.f32 %v2421, %v2610
        %v2615 = vadd.f32 %v2422, %v2611
        %v2616 = vadd.f32 %v2423, %v2612
        %s2617 = sld [smem:[#allocation6 + $0x30b]]
        %v2618 = vstv %s2617
        %v2619 = vmul.f32 %v2618, %v2544
        %v2620 = vmul.f32 %v2618, %v2535
        %v2621 = vmul.f32 %v2618, %v2537
        %v2622 = vmul.f32 %v2618, %v2539
        %v2623 = vadd.f32 %v2430, %v2619
        %v2624 = vadd.f32 %v2431, %v2620
        %v2625 = vadd.f32 %v2432, %v2621
        %v2626 = vadd.f32 %v2433, %v2622
        %s2627 = sld [smem:[#allocation6 + $0x38b]]
        %v2628 = vstv %s2627
        %v2629 = vmul.f32 %v2628, %v2544
        %v2630 = vmul.f32 %v2628, %v2535
        %v2631 = vmul.f32 %v2628, %v2537
        %v2632 = vmul.f32 %v2628, %v2539
        %v2633 = vadd.f32 %v2440, %v2629
        %v2634 = vadd.f32 %v2441, %v2630
        %v2635 = vadd.f32 %v2442, %v2631
        %v2636 = vadd.f32 %v2443, %v2632
        %s2637 = sld [smem:[#allocation6 + $0xe]]
        %v2638 = vstv %s2637
        %v2639 = vmul.f32 %v2638, %v2511
        %v2640 = vmul.f32 %v2638, %v2516
        %v2641 = vmul.f32 %v2638, %v2521
        %v2642 = vmul.f32 %v2638, %v2526
        %v2643 = vadd.f32 %v2563, %v2639
        %v2644 = vadd.f32 %v2564, %v2640
        %v2645 = vadd.f32 %v2565, %v2641
        %v2646 = vadd.f32 %v2566, %v2642
        %s2647 = sld [smem:[#allocation6 + $0x8e]]
        %v2648 = vstv %s2647
        %v2649 = vmul.f32 %v2648, %v2511
        %v2650 = vmul.f32 %v2648, %v2516
        %v2651 = vmul.f32 %v2648, %v2521
        %v2652 = vmul.f32 %v2648, %v2526
        %v2653 = vadd.f32 %v2573, %v2649
        %v2654 = vadd.f32 %v2574, %v2650
        %v2655 = vadd.f32 %v2575, %v2651
        %v2656 = vadd.f32 %v2576, %v2652
        %s2657 = sld [smem:[#allocation6 + $0x10e]]
        %v2658 = vstv %s2657
        %v2659 = vmul.f32 %v2658, %v2511
        %v2660 = vmul.f32 %v2658, %v2516
        %v2661 = vmul.f32 %v2658, %v2521
        %v2662 = vmul.f32 %v2658, %v2526
        %v2663 = vadd.f32 %v2583, %v2659
        %v2664 = vadd.f32 %v2584, %v2660
        %v2665 = vadd.f32 %v2585, %v2661
        %v2666 = vadd.f32 %v2586, %v2662
        %s2667 = sld [smem:[#allocation6 + $0x18e]]
        %v2668 = vstv %s2667
        %v2669 = vmul.f32 %v2668, %v2511
        %v2670 = vmul.f32 %v2668, %v2516
        %v2671 = vmul.f32 %v2668, %v2521
        %v2672 = vmul.f32 %v2668, %v2526
        %v2673 = vadd.f32 %v2593, %v2669
        %v2674 = vadd.f32 %v2594, %v2670
        %v2675 = vadd.f32 %v2595, %v2671
        %v2676 = vadd.f32 %v2596, %v2672
        %s2677 = sld [smem:[#allocation6 + $0x20e]]
        %v2678 = vstv %s2677
        %v2679 = vmul.f32 %v2678, %v2511
        %v2680 = vmul.f32 %v2678, %v2516
        %v2681 = vmul.f32 %v2678, %v2521
        %v2682 = vmul.f32 %v2678, %v2526
        %v2683 = vadd.f32 %v2603, %v2679
        %v2684 = vadd.f32 %v2604, %v2680
        %v2685 = vadd.f32 %v2605, %v2681
        %v2686 = vadd.f32 %v2606, %v2682
        %s2687 = sld [smem:[#allocation6 + $0x28e]]
        %v2688 = vstv %s2687
        %v2689 = vmul.f32 %v2688, %v2511
        %v2690 = vmul.f32 %v2688, %v2516
        %v2691 = vmul.f32 %v2688, %v2521
        %v2692 = vmul.f32 %v2688, %v2526
        %v2693 = vadd.f32 %v2613, %v2689
        %v2694 = vadd.f32 %v2614, %v2690
        %v2695 = vadd.f32 %v2615, %v2691
        %v2696 = vadd.f32 %v2616, %v2692
        %s2697 = sld [smem:[#allocation6 + $0x30e]]
        %v2698 = vstv %s2697
        %v2699 = vmul.f32 %v2698, %v2511
        %v2700 = vmul.f32 %v2698, %v2516
        %v2701 = vmul.f32 %v2698, %v2521
        %v2702 = vmul.f32 %v2698, %v2526
        %v2703 = vadd.f32 %v2623, %v2699
        %v2704 = vadd.f32 %v2624, %v2700
        %v2705 = vadd.f32 %v2625, %v2701
        %v2706 = vadd.f32 %v2626, %v2702
        %s2707 = sld [smem:[#allocation6 + $0x38e]]
        %v2708 = vstv %s2707
        %v2709 = vmul.f32 %v2708, %v2511
        %v2710 = vmul.f32 %v2708, %v2516
        %v2711 = vmul.f32 %v2708, %v2521
        %v2712 = vmul.f32 %v2708, %v2526
        %v2713 = vadd.f32 %v2633, %v2709
        %v2714 = vadd.f32 %v2634, %v2710
        %v2715 = vadd.f32 %v2635, %v2711
        %v2716 = vadd.f32 %v2636, %v2712
        %s2717 = sld [smem:[#allocation6 + $0x11]]
        %v2718 = vstv %s2717
        %v2719 = vmul.f32 %v2718, %v2547
        %v2720 = vmul.f32 %v2718, %v2549
        %v2721 = vmul.f32 %v2718, %v2551
        %v2722 = vmul.f32 %v2718, %v2556
        %v2723 = vadd.f32 %v2643, %v2719
        %v2724 = vadd.f32 %v2644, %v2720
        %v2725 = vadd.f32 %v2645, %v2721
        %v2726 = vadd.f32 %v2646, %v2722
        %s2727 = sld [smem:[#allocation6 + $0x91]]
        %v2728 = vstv %s2727
        %v2729 = vmul.f32 %v2728, %v2547
        %v2730 = vmul.f32 %v2728, %v2549
        %v2731 = vmul.f32 %v2728, %v2551
        %v2732 = vmul.f32 %v2728, %v2556
        %v2733 = vadd.f32 %v2653, %v2729
        %v2734 = vadd.f32 %v2654, %v2730
        %v2735 = vadd.f32 %v2655, %v2731
        %v2736 = vadd.f32 %v2656, %v2732
        %s2737 = sld [smem:[#allocation6 + $0x111]]
        %v2738 = vstv %s2737
        %v2739 = vmul.f32 %v2738, %v2547
        %v2740 = vmul.f32 %v2738, %v2549
        %v2741 = vmul.f32 %v2738, %v2551
        %v2742 = vmul.f32 %v2738, %v2556
        %v2743 = vadd.f32 %v2663, %v2739
        %v2744 = vadd.f32 %v2664, %v2740
        %v2745 = vadd.f32 %v2665, %v2741
        %v2746 = vadd.f32 %v2666, %v2742
        %s2747 = sld [smem:[#allocation6 + $0x191]]
        %v2748 = vstv %s2747
        %v2749 = vmul.f32 %v2748, %v2547
        %v2750 = vmul.f32 %v2748, %v2549
        %v2751 = vmul.f32 %v2748, %v2551
        %v2752 = vmul.f32 %v2748, %v2556
        %v2753 = vadd.f32 %v2673, %v2749
        %v2754 = vadd.f32 %v2674, %v2750
        %v2755 = vadd.f32 %v2675, %v2751
        %v2756 = vadd.f32 %v2676, %v2752
        %s2757 = sld [smem:[#allocation6 + $0x211]]
        %v2758 = vstv %s2757
        %v2759 = vmul.f32 %v2758, %v2547
        %v2760 = vmul.f32 %v2758, %v2549
        %v2761 = vmul.f32 %v2758, %v2551
        %v2762 = vmul.f32 %v2758, %v2556
        %v2763 = vadd.f32 %v2683, %v2759
        %v2764 = vadd.f32 %v2684, %v2760
        %v2765 = vadd.f32 %v2685, %v2761
        %v2766 = vadd.f32 %v2686, %v2762
        %s2767 = sld [smem:[#allocation6 + $0x291]]
        %v2768 = vstv %s2767
        %v2769 = vmul.f32 %v2768, %v2547
        %v2770 = vmul.f32 %v2768, %v2549
        %v2771 = vmul.f32 %v2768, %v2551
        %v2772 = vmul.f32 %v2768, %v2556
        %v2773 = vadd.f32 %v2693, %v2769
        %v2774 = vadd.f32 %v2694, %v2770
        %v2775 = vadd.f32 %v2695, %v2771
        %v2776 = vadd.f32 %v2696, %v2772
        %s2777 = sld [smem:[#allocation6 + $0x311]]
        %v2778 = vstv %s2777
        %v2779 = vmul.f32 %v2778, %v2547
        %v2780 = vmul.f32 %v2778, %v2549
        %v2781 = vmul.f32 %v2778, %v2551
        %v2782 = vmul.f32 %v2778, %v2556
        %v2783 = vadd.f32 %v2703, %v2779
        %v2784 = vadd.f32 %v2704, %v2780
        %v2785 = vadd.f32 %v2705, %v2781
        %v2786 = vadd.f32 %v2706, %v2782
        %s2787 = sld [smem:[#allocation6 + $0x391]]
        %v2788 = vstv %s2787
        %v2789 = vmul.f32 %v2788, %v2547
        %v2790 = vmul.f32 %v2788, %v2549
        %v2791 = vmul.f32 %v2788, %v2551
        %v2792 = vmul.f32 %v2788, %v2556
        %v2793 = vadd.f32 %v2713, %v2789
        %v2794 = vadd.f32 %v2714, %v2790
        %v2795 = vadd.f32 %v2715, %v2791
        %v2796 = vadd.f32 %v2716, %v2792
        %2797 = vmatprep.subr.mxu0 0.0
        %2798 = vmatpush1.msra.mxu0 %v431
        %2799 = vmatprep.subr.mxu0 0.0
        %2800 = vmatpush1.msra.mxu0 %v436
        %2801 = vmatprep.subr.mxu0 0.0
        %2802 = vmatpush1.msra.mxu0 0.0
        %2803 = vmatprep.subr.mxu0 0.0
        %2804 = vmatpush1.msra.mxu0 0.0
        %2805 = vmatprep.subr.mxu0 0.0
        %2806 = vmatpush1.msra.mxu0 0.0
        %2807 = vmatprep.subr.mxu0 0.0
        %2808 = vmatpush1.msra.mxu0 0.0
        %2809 = vmatprep.subr.mxu0 0.0
        %2810 = vmatpush1.msra.mxu0 0.0
        %2811 = vmatprep.subr.mxu0 0.0
        %2812 = vmatpush1.msra.mxu0 0.0
        %2813 = vmatprep.subr.mxu0 0.0
        %2814 = vmatpush1.msra.mxu0 0.0
        %2815 = vmatprep.subr.mxu0 0.0
        %2816 = vmatpush1.msra.mxu0 0.0
        %2817 = vmatprep.subr.mxu0 0.0
        %2818 = vmatpush1.msra.mxu0 0.0
        %2819 = vmatprep.subr.mxu0 0.0
        %2820 = vmatpush1.msra.mxu0 0.0
        %2821 = vmatprep.subr.mxu0 0.0
        %2822 = vmatpush1.msra.mxu0 0.0
        %2823 = vmatprep.subr.mxu0 0.0
        %2824 = vmatpush1.msra.mxu0 0.0
        %2825 = vmatprep.subr.mxu0 0.0
        %2826 = vmatpush1.msra.mxu0 0.0
        %2827 = vmatprep.subr.mxu0 0.0
        %2828 = vmatpush1.msra.mxu0 0.0
        %2829 = vmatprep.subr.mxu0 0.0
        %2830 = vmatpush1.msra.mxu0 0.0
        %2831 = vmatprep.subr.mxu0 0.0
        %2832 = vmatpush1.msra.mxu0 0.0
        %2833 = vmatprep.subr.mxu0 0.0
        %2834 = vmatpush1.msra.mxu0 0.0
        %2835 = vmatprep.subr.mxu0 0.0
        %2836 = vmatpush1.msra.mxu0 0.0
        %2837 = vmatprep.subr.mxu0 0.0
        %2838 = vmatpush1.msra.mxu0 0.0
        %2839 = vmatprep.subr.mxu0 0.0
        %2840 = vmatpush1.msra.mxu0 0.0
        %2841 = vmatprep.subr.mxu0 0.0
        %2842 = vmatpush1.msra.mxu0 0.0
        %2843 = vmatprep.subr.mxu0 0.0
        %2844 = vmatpush1.msra.mxu0 0.0
        %2845 = vmatprep.subr.mxu0 0.0
        %2846 = vmatpush1.msra.mxu0 0.0
        %2847 = vmatprep.subr.mxu0 0.0
        %2848 = vmatpush1.msra.mxu0 0.0
        %2849 = vmatprep.subr.mxu0 0.0
        %2850 = vmatpush1.msra.mxu0 0.0
        %2851 = vmatprep.subr.mxu0 0.0
        %2852 = vmatpush1.msra.mxu0 0.0
        %2853 = vmatprep.subr.mxu0 0.0
        %2854 = vmatpush1.msra.mxu0 0.0
        %2855 = vmatprep.subr.mxu0 0.0
        %2856 = vmatpush1.msra.mxu0 0.0
        %2857 = vmatprep.subr.mxu0 0.0
        %2858 = vmatpush1.msra.mxu0 0.0
        %2859 = vmatprep.subr.mxu0 0.0
        %2860 = vmatpush1.msra.mxu0 0.0
        %2861 = vmatprep.mubr.f32.mxu0 0.0
        %2862 = vmatmul.mubr.f32.gmra.mrb[0].mxu0 %v666
        %v2863 = vpop.f32.mrb[0].mxu0
        %v2864 = vadd.f32 0.0, %v2863
        %v2865 = vpop.f32.mrb[0].mxu0
        %2866 = vmatprep.mubr.f32.mxu0 0.0
        %2867 = vmatmul.mubr.f32.gmra.mrb[0].mxu0 %v669
        %v2868 = vpop.f32.mrb[0].mxu0
        %v2869 = vadd.f32 0.0, %v2868
        %v2870 = vpop.f32.mrb[0].mxu0
        %2871 = vmatprep.mubr.f32.mxu0 0.0
        %2872 = vmatmul.mubr.f32.gmra.mrb[0].mxu0 %v672
        %v2873 = vpop.f32.mrb[0].mxu0
        %v2874 = vadd.f32 0.0, %v2873
        %v2875 = vpop.f32.mrb[0].mxu0
        %2876 = vmatprep.mubr.f32.mxu0 0.0
        %2877 = vmatmul.mubr.f32.gmra.mrb[0].mxu0 %v675
        %v2878 = vpop.f32.mrb[0].mxu0
        %v2879 = vadd.f32 0.0, %v2878
        %v2880 = vpop.f32.mrb[0].mxu0
        %2881 = vdwg.mxu0
        %v2886 = vrot.slane %v2864, 7
        %v2887 = vrot.slane %v2869, 7
        %v2888 = vsel %vm766, %v2886, %v2887
        %v2889 = vrot.slane %v2874, 7
        %v2890 = vsel %vm766, %v2887, %v2889
        %v2891 = vrot.slane %v2879, 7
        %v2892 = vsel %vm766, %v2889, %v2891
        %v2897 = vsel %vm766, 0.0, %v2886
        %v2898 = vrot.slane %v2864, 1
        %v2899 = vrot.slane %v2869, 1
        %v2900 = vsel %vm779, %v2898, %v2899
        %v2901 = vrot.slane %v2874, 1
        %v2902 = vsel %vm779, %v2899, %v2901
        %v2903 = vrot.slane %v2879, 1
        %v2904 = vsel %vm779, %v2901, %v2903
        %v2909 = vsel %vm779, %v2903, 0.0
        %s2910 = sld [smem:[#allocation6 + $0x12]]
        %v2911 = vstv %s2910
        %v2912 = vmul.f32 %v2911, %v2897
        %v2913 = vmul.f32 %v2911, %v2888
        %v2914 = vmul.f32 %v2911, %v2890
        %v2915 = vmul.f32 %v2911, %v2892
        %v2916 = vadd.f32 %v2723, %v2912
        %v2917 = vadd.f32 %v2724, %v2913
        %v2918 = vadd.f32 %v2725, %v2914
        %v2919 = vadd.f32 %v2726, %v2915
        %s2920 = sld [smem:[#allocation6 + $0x92]]
        %v2921 = vstv %s2920
        %v2922 = vmul.f32 %v2921, %v2897
        %v2923 = vmul.f32 %v2921, %v2888
        %v2924 = vmul.f32 %v2921, %v2890
        %v2925 = vmul.f32 %v2921, %v2892
        %v2926 = vadd.f32 %v2733, %v2922
        %v2927 = vadd.f32 %v2734, %v2923
        %v2928 = vadd.f32 %v2735, %v2924
        %v2929 = vadd.f32 %v2736, %v2925
        %s2930 = sld [smem:[#allocation6 + $0x112]]
        %v2931 = vstv %s2930
        %v2932 = vmul.f32 %v2931, %v2897
        %v2933 = vmul.f32 %v2931, %v2888
        %v2934 = vmul.f32 %v2931, %v2890
        %v2935 = vmul.f32 %v2931, %v2892
        %v2936 = vadd.f32 %v2743, %v2932
        %v2937 = vadd.f32 %v2744, %v2933
        %v2938 = vadd.f32 %v2745, %v2934
        %v2939 = vadd.f32 %v2746, %v2935
        %s2940 = sld [smem:[#allocation6 + $0x192]]
        %v2941 = vstv %s2940
        %v2942 = vmul.f32 %v2941, %v2897
        %v2943 = vmul.f32 %v2941, %v2888
        %v2944 = vmul.f32 %v2941, %v2890
        %v2945 = vmul.f32 %v2941, %v2892
        %v2946 = vadd.f32 %v2753, %v2942
        %v2947 = vadd.f32 %v2754, %v2943
        %v2948 = vadd.f32 %v2755, %v2944
        %v2949 = vadd.f32 %v2756, %v2945
        %s2950 = sld [smem:[#allocation6 + $0x212]]
        %v2951 = vstv %s2950
        %v2952 = vmul.f32 %v2951, %v2897
        %v2953 = vmul.f32 %v2951, %v2888
        %v2954 = vmul.f32 %v2951, %v2890
        %v2955 = vmul.f32 %v2951, %v2892
        %v2956 = vadd.f32 %v2763, %v2952
        %v2957 = vadd.f32 %v2764, %v2953
        %v2958 = vadd.f32 %v2765, %v2954
        %v2959 = vadd.f32 %v2766, %v2955
        %s2960 = sld [smem:[#allocation6 + $0x292]]
        %v2961 = vstv %s2960
        %v2962 = vmul.f32 %v2961, %v2897
        %v2963 = vmul.f32 %v2961, %v2888
        %v2964 = vmul.f32 %v2961, %v2890
        %v2965 = vmul.f32 %v2961, %v2892
        %v2966 = vadd.f32 %v2773, %v2962
        %v2967 = vadd.f32 %v2774, %v2963
        %v2968 = vadd.f32 %v2775, %v2964
        %v2969 = vadd.f32 %v2776, %v2965
        %s2970 = sld [smem:[#allocation6 + $0x312]]
        %v2971 = vstv %s2970
        %v2972 = vmul.f32 %v2971, %v2897
        %v2973 = vmul.f32 %v2971, %v2888
        %v2974 = vmul.f32 %v2971, %v2890
        %v2975 = vmul.f32 %v2971, %v2892
        %v2976 = vadd.f32 %v2783, %v2972
        %v2977 = vadd.f32 %v2784, %v2973
        %v2978 = vadd.f32 %v2785, %v2974
        %v2979 = vadd.f32 %v2786, %v2975
        %s2980 = sld [smem:[#allocation6 + $0x392]]
        %v2981 = vstv %s2980
        %v2982 = vmul.f32 %v2981, %v2897
        %v2983 = vmul.f32 %v2981, %v2888
        %v2984 = vmul.f32 %v2981, %v2890
        %v2985 = vmul.f32 %v2981, %v2892
        %v2986 = vadd.f32 %v2793, %v2982
        %v2987 = vadd.f32 %v2794, %v2983
        %v2988 = vadd.f32 %v2795, %v2984
        %v2989 = vadd.f32 %v2796, %v2985
        %s2990 = sld [smem:[#allocation6 + $0x15]]
        %v2991 = vstv %s2990
        %v2992 = vmul.f32 %v2991, %v2864
        %v2993 = vmul.f32 %v2991, %v2869
        %v2994 = vmul.f32 %v2991, %v2874
        %v2995 = vmul.f32 %v2991, %v2879
        %v2996 = vadd.f32 %v2916, %v2992
        %v2997 = vadd.f32 %v2917, %v2993
        %v2998 = vadd.f32 %v2918, %v2994
        %v2999 = vadd.f32 %v2919, %v2995
        %s3000 = sld [smem:[#allocation6 + $0x95]]
        %v3001 = vstv %s3000
        %v3002 = vmul.f32 %v3001, %v2864
        %v3003 = vmul.f32 %v3001, %v2869
        %v3004 = vmul.f32 %v3001, %v2874
        %v3005 = vmul.f32 %v3001, %v2879
        %v3006 = vadd.f32 %v2926, %v3002
        %v3007 = vadd.f32 %v2927, %v3003
        %v3008 = vadd.f32 %v2928, %v3004
        %v3009 = vadd.f32 %v2929, %v3005
        %s3010 = sld [smem:[#allocation6 + $0x115]]
        %v3011 = vstv %s3010
        %v3012 = vmul.f32 %v3011, %v2864
        %v3013 = vmul.f32 %v3011, %v2869
        %v3014 = vmul.f32 %v3011, %v2874
        %v3015 = vmul.f32 %v3011, %v2879
        %v3016 = vadd.f32 %v2936, %v3012
        %v3017 = vadd.f32 %v2937, %v3013
        %v3018 = vadd.f32 %v2938, %v3014
        %v3019 = vadd.f32 %v2939, %v3015
        %s3020 = sld [smem:[#allocation6 + $0x195]]
        %v3021 = vstv %s3020
        %v3022 = vmul.f32 %v3021, %v2864
        %v3023 = vmul.f32 %v3021, %v2869
        %v3024 = vmul.f32 %v3021, %v2874
        %v3025 = vmul.f32 %v3021, %v2879
        %v3026 = vadd.f32 %v2946, %v3022
        %v3027 = vadd.f32 %v2947, %v3023
        %v3028 = vadd.f32 %v2948, %v3024
        %v3029 = vadd.f32 %v2949, %v3025
        %s3030 = sld [smem:[#allocation6 + $0x215]]
        %v3031 = vstv %s3030
        %v3032 = vmul.f32 %v3031, %v2864
        %v3033 = vmul.f32 %v3031, %v2869
        %v3034 = vmul.f32 %v3031, %v2874
        %v3035 = vmul.f32 %v3031, %v2879
        %v3036 = vadd.f32 %v2956, %v3032
        %v3037 = vadd.f32 %v2957, %v3033
        %v3038 = vadd.f32 %v2958, %v3034
        %v3039 = vadd.f32 %v2959, %v3035
        %s3040 = sld [smem:[#allocation6 + $0x295]]
        %v3041 = vstv %s3040
        %v3042 = vmul.f32 %v3041, %v2864
        %v3043 = vmul.f32 %v3041, %v2869
        %v3044 = vmul.f32 %v3041, %v2874
        %v3045 = vmul.f32 %v3041, %v2879
        %v3046 = vadd.f32 %v2966, %v3042
        %v3047 = vadd.f32 %v2967, %v3043
        %v3048 = vadd.f32 %v2968, %v3044
        %v3049 = vadd.f32 %v2969, %v3045
        %s3050 = sld [smem:[#allocation6 + $0x315]]
        %v3051 = vstv %s3050
        %v3052 = vmul.f32 %v3051, %v2864
        %v3053 = vmul.f32 %v3051, %v2869
        %v3054 = vmul.f32 %v3051, %v2874
        %v3055 = vmul.f32 %v3051, %v2879
        %v3056 = vadd.f32 %v2976, %v3052
        %v3057 = vadd.f32 %v2977, %v3053
        %v3058 = vadd.f32 %v2978, %v3054
        %v3059 = vadd.f32 %v2979, %v3055
        %s3060 = sld [smem:[#allocation6 + $0x395]]
        %v3061 = vstv %s3060
        %v3062 = vmul.f32 %v3061, %v2864
        %v3063 = vmul.f32 %v3061, %v2869
        %v3064 = vmul.f32 %v3061, %v2874
        %v3065 = vmul.f32 %v3061, %v2879
        %v3066 = vadd.f32 %v2986, %v3062
        %v3067 = vadd.f32 %v2987, %v3063
        %v3068 = vadd.f32 %v2988, %v3064
        %v3069 = vadd.f32 %v2989, %v3065
        %s3070 = sld [smem:[#allocation6 + $0x18]]
        %v3071 = vstv %s3070
        %v3072 = vmul.f32 %v3071, %v2900
        %v3073 = vmul.f32 %v3071, %v2902
        %v3074 = vmul.f32 %v3071, %v2904
        %v3075 = vmul.f32 %v3071, %v2909
        %v3076 = vadd.f32 %v2996, %v3072
        %v3077 = vadd.f32 %v2997, %v3073
        %v3078 = vadd.f32 %v2998, %v3074
        %v3079 = vadd.f32 %v2999, %v3075
        %s3080 = sld [smem:[#allocation6 + $0x98]]
        %v3081 = vstv %s3080
        %v3082 = vmul.f32 %v3081, %v2900
        %v3083 = vmul.f32 %v3081, %v2902
        %v3084 = vmul.f32 %v3081, %v2904
        %v3085 = vmul.f32 %v3081, %v2909
        %v3086 = vadd.f32 %v3006, %v3082
        %v3087 = vadd.f32 %v3007, %v3083
        %v3088 = vadd.f32 %v3008, %v3084
        %v3089 = vadd.f32 %v3009, %v3085
        %s3090 = sld [smem:[#allocation6 + $0x118]]
        %v3091 = vstv %s3090
        %v3092 = vmul.f32 %v3091, %v2900
        %v3093 = vmul.f32 %v3091, %v2902
        %v3094 = vmul.f32 %v3091, %v2904
        %v3095 = vmul.f32 %v3091, %v2909
        %v3096 = vadd.f32 %v3016, %v3092
        %v3097 = vadd.f32 %v3017, %v3093
        %v3098 = vadd.f32 %v3018, %v3094
        %v3099 = vadd.f32 %v3019, %v3095
        %s3100 = sld [smem:[#allocation6 + $0x198]]
        %v3101 = vstv %s3100
        %v3102 = vmul.f32 %v3101, %v2900
        %v3103 = vmul.f32 %v3101, %v2902
        %v3104 = vmul.f32 %v3101, %v2904
        %v3105 = vmul.f32 %v3101, %v2909
        %v3106 = vadd.f32 %v3026, %v3102
        %v3107 = vadd.f32 %v3027, %v3103
        %v3108 = vadd.f32 %v3028, %v3104
        %v3109 = vadd.f32 %v3029, %v3105
        %s3110 = sld [smem:[#allocation6 + $0x218]]
        %v3111 = vstv %s3110
        %v3112 = vmul.f32 %v3111, %v2900
        %v3113 = vmul.f32 %v3111, %v2902
        %v3114 = vmul.f32 %v3111, %v2904
        %v3115 = vmul.f32 %v3111, %v2909
        %v3116 = vadd.f32 %v3036, %v3112
        %v3117 = vadd.f32 %v3037, %v3113
        %v3118 = vadd.f32 %v3038, %v3114
        %v3119 = vadd.f32 %v3039, %v3115
        %s3120 = sld [smem:[#allocation6 + $0x298]]
        %v3121 = vstv %s3120
        %v3122 = vmul.f32 %v3121, %v2900
        %v3123 = vmul.f32 %v3121, %v2902
        %v3124 = vmul.f32 %v3121, %v2904
        %v3125 = vmul.f32 %v3121, %v2909
        %v3126 = vadd.f32 %v3046, %v3122
        %v3127 = vadd.f32 %v3047, %v3123
        %v3128 = vadd.f32 %v3048, %v3124
        %v3129 = vadd.f32 %v3049, %v3125
        %s3130 = sld [smem:[#allocation6 + $0x318]]
        %v3131 = vstv %s3130
        %v3132 = vmul.f32 %v3131, %v2900
        %v3133 = vmul.f32 %v3131, %v2902
        %v3134 = vmul.f32 %v3131, %v2904
        %v3135 = vmul.f32 %v3131, %v2909
        %v3136 = vadd.f32 %v3056, %v3132
        %v3137 = vadd.f32 %v3057, %v3133
        %v3138 = vadd.f32 %v3058, %v3134
        %v3139 = vadd.f32 %v3059, %v3135
        %s3140 = sld [smem:[#allocation6 + $0x398]]
        %v3141 = vstv %s3140
        %v3142 = vmul.f32 %v3141, %v2900
        %v3143 = vmul.f32 %v3141, %v2902
        %v3144 = vmul.f32 %v3141, %v2904
        %v3145 = vmul.f32 %v3141, %v2909
        %v3146 = vadd.f32 %v3066, %v3142
        %v3147 = vadd.f32 %v3067, %v3143
        %v3148 = vadd.f32 %v3068, %v3144
        %v3149 = vadd.f32 %v3069, %v3145
        %3150 = vmatprep.subr.mxu0 0.0
        %3151 = vmatpush1.msra.mxu0 %v539
        %3152 = vmatprep.subr.mxu0 0.0
        %3153 = vmatpush1.msra.mxu0 %v544
        %3154 = vmatprep.subr.mxu0 0.0
        %3155 = vmatpush1.msra.mxu0 0.0
        %3156 = vmatprep.subr.mxu0 0.0
        %3157 = vmatpush1.msra.mxu0 0.0
        %3158 = vmatprep.subr.mxu0 0.0
        %3159 = vmatpush1.msra.mxu0 0.0
        %3160 = vmatprep.subr.mxu0 0.0
        %3161 = vmatpush1.msra.mxu0 0.0
        %3162 = vmatprep.subr.mxu0 0.0
        %3163 = vmatpush1.msra.mxu0 0.0
        %3164 = vmatprep.subr.mxu0 0.0
        %3165 = vmatpush1.msra.mxu0 0.0
        %3166 = vmatprep.subr.mxu0 0.0
        %3167 = vmatpush1.msra.mxu0 0.0
        %3168 = vmatprep.subr.mxu0 0.0
        %3169 = vmatpush1.msra.mxu0 0.0
        %3170 = vmatprep.subr.mxu0 0.0
        %3171 = vmatpush1.msra.mxu0 0.0
        %3172 = vmatprep.subr.mxu0 0.0
        %3173 = vmatpush1.msra.mxu0 0.0
        %3174 = vmatprep.subr.mxu0 0.0
        %3175 = vmatpush1.msra.mxu0 0.0
        %3176 = vmatprep.subr.mxu0 0.0
        %3177 = vmatpush1.msra.mxu0 0.0
        %3178 = vmatprep.subr.mxu0 0.0
        %3179 = vmatpush1.msra.mxu0 0.0
        %3180 = vmatprep.subr.mxu0 0.0
        %3181 = vmatpush1.msra.mxu0 0.0
        %3182 = vmatprep.subr.mxu0 0.0
        %3183 = vmatpush1.msra.mxu0 0.0
        %3184 = vmatprep.subr.mxu0 0.0
        %3185 = vmatpush1.msra.mxu0 0.0
        %3186 = vmatprep.subr.mxu0 0.0
        %3187 = vmatpush1.msra.mxu0 0.0
        %3188 = vmatprep.subr.mxu0 0.0
        %3189 = vmatpush1.msra.mxu0 0.0
        %3190 = vmatprep.subr.mxu0 0.0
        %3191 = vmatpush1.msra.mxu0 0.0
        %3192 = vmatprep.subr.mxu0 0.0
        %3193 = vmatpush1.msra.mxu0 0.0
        %3194 = vmatprep.subr.mxu0 0.0
        %3195 = vmatpush1.msra.mxu0 0.0
        %3196 = vmatprep.subr.mxu0 0.0
        %3197 = vmatpush1.msra.mxu0 0.0
        %3198 = vmatprep.subr.mxu0 0.0
        %3199 = vmatpush1.msra.mxu0 0.0
        %3200 = vmatprep.subr.mxu0 0.0
        %3201 = vmatpush1.msra.mxu0 0.0
        %3202 = vmatprep.subr.mxu0 0.0
        %3203 = vmatpush1.msra.mxu0 0.0
        %3204 = vmatprep.subr.mxu0 0.0
        %3205 = vmatpush1.msra.mxu0 0.0
        %3206 = vmatprep.subr.mxu0 0.0
        %3207 = vmatpush1.msra.mxu0 0.0
        %3208 = vmatprep.subr.mxu0 0.0
        %3209 = vmatpush1.msra.mxu0 0.0
        %3210 = vmatprep.subr.mxu0 0.0
        %3211 = vmatpush1.msra.mxu0 0.0
        %3212 = vmatprep.subr.mxu0 0.0
        %3213 = vmatpush1.msra.mxu0 0.0
        %3214 = vmatprep.mubr.f32.mxu0 0.0
        %3215 = vmatmul.mubr.f32.gmra.mrb[0].mxu0 %v666
        %v3216 = vpop.f32.mrb[0].mxu0
        %v3217 = vadd.f32 0.0, %v3216
        %v3218 = vpop.f32.mrb[0].mxu0
        %3219 = vmatprep.mubr.f32.mxu0 0.0
        %3220 = vmatmul.mubr.f32.gmra.mrb[0].mxu0 %v669
        %v3221 = vpop.f32.mrb[0].mxu0
        %v3222 = vadd.f32 0.0, %v3221
        %v3223 = vpop.f32.mrb[0].mxu0
        %3224 = vmatprep.mubr.f32.mxu0 0.0
        %3225 = vmatmul.mubr.f32.gmra.mrb[0].mxu0 %v672
        %v3226 = vpop.f32.mrb[0].mxu0
        %v3227 = vadd.f32 0.0, %v3226
        %v3228 = vpop.f32.mrb[0].mxu0
        %3229 = vmatprep.mubr.f32.mxu0 0.0
        %3230 = vmatmul.mubr.f32.gmra.mrb[0].mxu0 %v675
        %v3231 = vpop.f32.mrb[0].mxu0
        %v3232 = vadd.f32 0.0, %v3231
        %v3233 = vpop.f32.mrb[0].mxu0
        %3234 = vdwg.mxu0
        %v3239 = vrot.slane %v3217, 7
        %v3240 = vrot.slane %v3222, 7
        %v3241 = vsel %vm766, %v3239, %v3240
        %v3242 = vrot.slane %v3227, 7
        %v3243 = vsel %vm766, %v3240, %v3242
        %v3244 = vrot.slane %v3232, 7
        %v3245 = vsel %vm766, %v3242, %v3244
        %v3250 = vsel %vm766, 0.0, %v3239
        %v3251 = vrot.slane %v3217, 1
        %v3252 = vrot.slane %v3222, 1
        %v3253 = vsel %vm779, %v3251, %v3252
        %v3254 = vrot.slane %v3227, 1
        %v3255 = vsel %vm779, %v3252, %v3254
        %v3256 = vrot.slane %v3232, 1
        %v3257 = vsel %vm779, %v3254, %v3256
        %v3262 = vsel %vm779, %v3256, 0.0
        %s3263 = sld [smem:[#allocation6 + $0x13]]
        %v3264 = vstv %s3263
        %v3265 = vmul.f32 %v3264, %v3250
        %v3266 = vmul.f32 %v3264, %v3241
        %v3267 = vmul.f32 %v3264, %v3243
        %v3268 = vmul.f32 %v3264, %v3245
        %v3269 = vadd.f32 %v3076, %v3265
        %v3270 = vadd.f32 %v3077, %v3266
        %v3271 = vadd.f32 %v3078, %v3267
        %v3272 = vadd.f32 %v3079, %v3268
        %s3273 = sld [smem:[#allocation6 + $0x93]]
        %v3274 = vstv %s3273
        %v3275 = vmul.f32 %v3274, %v3250
        %v3276 = vmul.f32 %v3274, %v3241
        %v3277 = vmul.f32 %v3274, %v3243
        %v3278 = vmul.f32 %v3274, %v3245
        %v3279 = vadd.f32 %v3086, %v3275
        %v3280 = vadd.f32 %v3087, %v3276
        %v3281 = vadd.f32 %v3088, %v3277
        %v3282 = vadd.f32 %v3089, %v3278
        %s3283 = sld [smem:[#allocation6 + $0x113]]
        %v3284 = vstv %s3283
        %v3285 = vmul.f32 %v3284, %v3250
        %v3286 = vmul.f32 %v3284, %v3241
        %v3287 = vmul.f32 %v3284, %v3243
        %v3288 = vmul.f32 %v3284, %v3245
        %v3289 = vadd.f32 %v3096, %v3285
        %v3290 = vadd.f32 %v3097, %v3286
        %v3291 = vadd.f32 %v3098, %v3287
        %v3292 = vadd.f32 %v3099, %v3288
        %s3293 = sld [smem:[#allocation6 + $0x193]]
        %v3294 = vstv %s3293
        %v3295 = vmul.f32 %v3294, %v3250
        %v3296 = vmul.f32 %v3294, %v3241
        %v3297 = vmul.f32 %v3294, %v3243
        %v3298 = vmul.f32 %v3294, %v3245
        %v3299 = vadd.f32 %v3106, %v3295
        %v3300 = vadd.f32 %v3107, %v3296
        %v3301 = vadd.f32 %v3108, %v3297
        %v3302 = vadd.f32 %v3109, %v3298
        %s3303 = sld [smem:[#allocation6 + $0x213]]
        %v3304 = vstv %s3303
        %v3305 = vmul.f32 %v3304, %v3250
        %v3306 = vmul.f32 %v3304, %v3241
        %v3307 = vmul.f32 %v3304, %v3243
        %v3308 = vmul.f32 %v3304, %v3245
        %v3309 = vadd.f32 %v3116, %v3305
        %v3310 = vadd.f32 %v3117, %v3306
        %v3311 = vadd.f32 %v3118, %v3307
        %v3312 = vadd.f32 %v3119, %v3308
        %s3313 = sld [smem:[#allocation6 + $0x293]]
        %v3314 = vstv %s3313
        %v3315 = vmul.f32 %v3314, %v3250
        %v3316 = vmul.f32 %v3314, %v3241
        %v3317 = vmul.f32 %v3314, %v3243
        %v3318 = vmul.f32 %v3314, %v3245
        %v3319 = vadd.f32 %v3126, %v3315
        %v3320 = vadd.f32 %v3127, %v3316
        %v3321 = vadd.f32 %v3128, %v3317
        %v3322 = vadd.f32 %v3129, %v3318
        %s3323 = sld [smem:[#allocation6 + $0x313]]
        %v3324 = vstv %s3323
        %v3325 = vmul.f32 %v3324, %v3250
        %v3326 = vmul.f32 %v3324, %v3241
        %v3327 = vmul.f32 %v3324, %v3243
        %v3328 = vmul.f32 %v3324, %v3245
        %v3329 = vadd.f32 %v3136, %v3325
        %v3330 = vadd.f32 %v3137, %v3326
        %v3331 = vadd.f32 %v3138, %v3327
        %v3332 = vadd.f32 %v3139, %v3328
        %s3333 = sld [smem:[#allocation6 + $0x393]]
        %v3334 = vstv %s3333
        %v3335 = vmul.f32 %v3334, %v3250
        %v3336 = vmul.f32 %v3334, %v3241
        %v3337 = vmul.f32 %v3334, %v3243
        %v3338 = vmul.f32 %v3334, %v3245
        %v3339 = vadd.f32 %v3146, %v3335
        %v3340 = vadd.f32 %v3147, %v3336
        %v3341 = vadd.f32 %v3148, %v3337
        %v3342 = vadd.f32 %v3149, %v3338
        %s3343 = sld [smem:[#allocation6 + $0x16]]
        %v3344 = vstv %s3343
        %v3345 = vmul.f32 %v3344, %v3217
        %v3346 = vmul.f32 %v3344, %v3222
        %v3347 = vmul.f32 %v3344, %v3227
        %v3348 = vmul.f32 %v3344, %v3232
        %v3349 = vadd.f32 %v3269, %v3345
        %v3350 = vadd.f32 %v3270, %v3346
        %v3351 = vadd.f32 %v3271, %v3347
        %v3352 = vadd.f32 %v3272, %v3348
        %s3353 = sld [smem:[#allocation6 + $0x96]]
        %v3354 = vstv %s3353
        %v3355 = vmul.f32 %v3354, %v3217
        %v3356 = vmul.f32 %v3354, %v3222
        %v3357 = vmul.f32 %v3354, %v3227
        %v3358 = vmul.f32 %v3354, %v3232
        %v3359 = vadd.f32 %v3279, %v3355
        %v3360 = vadd.f32 %v3280, %v3356
        %v3361 = vadd.f32 %v3281, %v3357
        %v3362 = vadd.f32 %v3282, %v3358
        %s3363 = sld [smem:[#allocation6 + $0x116]]
        %v3364 = vstv %s3363
        %v3365 = vmul.f32 %v3364, %v3217
        %v3366 = vmul.f32 %v3364, %v3222
        %v3367 = vmul.f32 %v3364, %v3227
        %v3368 = vmul.f32 %v3364, %v3232
        %v3369 = vadd.f32 %v3289, %v3365
        %v3370 = vadd.f32 %v3290, %v3366
        %v3371 = vadd.f32 %v3291, %v3367
        %v3372 = vadd.f32 %v3292, %v3368
        %s3373 = sld [smem:[#allocation6 + $0x196]]
        %v3374 = vstv %s3373
        %v3375 = vmul.f32 %v3374, %v3217
        %v3376 = vmul.f32 %v3374, %v3222
        %v3377 = vmul.f32 %v3374, %v3227
        %v3378 = vmul.f32 %v3374, %v3232
        %v3379 = vadd.f32 %v3299, %v3375
        %v3380 = vadd.f32 %v3300, %v3376
        %v3381 = vadd.f32 %v3301, %v3377
        %v3382 = vadd.f32 %v3302, %v3378
        %s3383 = sld [smem:[#allocation6 + $0x216]]
        %v3384 = vstv %s3383
        %v3385 = vmul.f32 %v3384, %v3217
        %v3386 = vmul.f32 %v3384, %v3222
        %v3387 = vmul.f32 %v3384, %v3227
        %v3388 = vmul.f32 %v3384, %v3232
        %v3389 = vadd.f32 %v3309, %v3385
        %v3390 = vadd.f32 %v3310, %v3386
        %v3391 = vadd.f32 %v3311, %v3387
        %v3392 = vadd.f32 %v3312, %v3388
        %s3393 = sld [smem:[#allocation6 + $0x296]]
        %v3394 = vstv %s3393
        %v3395 = vmul.f32 %v3394, %v3217
        %v3396 = vmul.f32 %v3394, %v3222
        %v3397 = vmul.f32 %v3394, %v3227
        %v3398 = vmul.f32 %v3394, %v3232
        %v3399 = vadd.f32 %v3319, %v3395
        %v3400 = vadd.f32 %v3320, %v3396
        %v3401 = vadd.f32 %v3321, %v3397
        %v3402 = vadd.f32 %v3322, %v3398
        %s3403 = sld [smem:[#allocation6 + $0x316]]
        %v3404 = vstv %s3403
        %v3405 = vmul.f32 %v3404, %v3217
        %v3406 = vmul.f32 %v3404, %v3222
        %v3407 = vmul.f32 %v3404, %v3227
        %v3408 = vmul.f32 %v3404, %v3232
        %v3409 = vadd.f32 %v3329, %v3405
        %v3410 = vadd.f32 %v3330, %v3406
        %v3411 = vadd.f32 %v3331, %v3407
        %v3412 = vadd.f32 %v3332, %v3408
        %s3413 = sld [smem:[#allocation6 + $0x396]]
        %v3414 = vstv %s3413
        %v3415 = vmul.f32 %v3414, %v3217
        %v3416 = vmul.f32 %v3414, %v3222
        %v3417 = vmul.f32 %v3414, %v3227
        %v3418 = vmul.f32 %v3414, %v3232
        %v3419 = vadd.f32 %v3339, %v3415
        %v3420 = vadd.f32 %v3340, %v3416
        %v3421 = vadd.f32 %v3341, %v3417
        %v3422 = vadd.f32 %v3342, %v3418
        %s3423 = sld [smem:[#allocation6 + $0x19]]
        %v3424 = vstv %s3423
        %v3425 = vmul.f32 %v3424, %v3253
        %v3426 = vmul.f32 %v3424, %v3255
        %v3427 = vmul.f32 %v3424, %v3257
        %v3428 = vmul.f32 %v3424, %v3262
        %v3429 = vadd.f32 %v3349, %v3425
        %v3430 = vadd.f32 %v3350, %v3426
        %v3431 = vadd.f32 %v3351, %v3427
        %v3432 = vadd.f32 %v3352, %v3428
        %s3433 = sld [smem:[#allocation6 + $0x99]]
        %v3434 = vstv %s3433
        %v3435 = vmul.f32 %v3434, %v3253
        %v3436 = vmul.f32 %v3434, %v3255
        %v3437 = vmul.f32 %v3434, %v3257
        %v3438 = vmul.f32 %v3434, %v3262
        %v3439 = vadd.f32 %v3359, %v3435
        %v3440 = vadd.f32 %v3360, %v3436
        %v3441 = vadd.f32 %v3361, %v3437
        %v3442 = vadd.f32 %v3362, %v3438
        %s3443 = sld [smem:[#allocation6 + $0x119]]
        %v3444 = vstv %s3443
        %v3445 = vmul.f32 %v3444, %v3253
        %v3446 = vmul.f32 %v3444, %v3255
        %v3447 = vmul.f32 %v3444, %v3257
        %v3448 = vmul.f32 %v3444, %v3262
        %v3449 = vadd.f32 %v3369, %v3445
        %v3450 = vadd.f32 %v3370, %v3446
        %v3451 = vadd.f32 %v3371, %v3447
        %v3452 = vadd.f32 %v3372, %v3448
        %s3453 = sld [smem:[#allocation6 + $0x199]]
        %v3454 = vstv %s3453
        %v3455 = vmul.f32 %v3454, %v3253
        %v3456 = vmul.f32 %v3454, %v3255
        %v3457 = vmul.f32 %v3454, %v3257
        %v3458 = vmul.f32 %v3454, %v3262
        %v3459 = vadd.f32 %v3379, %v3455
        %v3460 = vadd.f32 %v3380, %v3456
        %v3461 = vadd.f32 %v3381, %v3457
        %v3462 = vadd.f32 %v3382, %v3458
        %s3463 = sld [smem:[#allocation6 + $0x219]]
        %v3464 = vstv %s3463
        %v3465 = vmul.f32 %v3464, %v3253
        %v3466 = vmul.f32 %v3464, %v3255
        %v3467 = vmul.f32 %v3464, %v3257
        %v3468 = vmul.f32 %v3464, %v3262
        %v3469 = vadd.f32 %v3389, %v3465
        %v3470 = vadd.f32 %v3390, %v3466
        %v3471 = vadd.f32 %v3391, %v3467
        %v3472 = vadd.f32 %v3392, %v3468
        %s3473 = sld [smem:[#allocation6 + $0x299]]
        %v3474 = vstv %s3473
        %v3475 = vmul.f32 %v3474, %v3253
        %v3476 = vmul.f32 %v3474, %v3255
        %v3477 = vmul.f32 %v3474, %v3257
        %v3478 = vmul.f32 %v3474, %v3262
        %v3479 = vadd.f32 %v3399, %v3475
        %v3480 = vadd.f32 %v3400, %v3476
        %v3481 = vadd.f32 %v3401, %v3477
        %v3482 = vadd.f32 %v3402, %v3478
        %s3483 = sld [smem:[#allocation6 + $0x319]]
        %v3484 = vstv %s3483
        %v3485 = vmul.f32 %v3484, %v3253
        %v3486 = vmul.f32 %v3484, %v3255
        %v3487 = vmul.f32 %v3484, %v3257
        %v3488 = vmul.f32 %v3484, %v3262
        %v3489 = vadd.f32 %v3409, %v3485
        %v3490 = vadd.f32 %v3410, %v3486
        %v3491 = vadd.f32 %v3411, %v3487
        %v3492 = vadd.f32 %v3412, %v3488
        %s3493 = sld [smem:[#allocation6 + $0x399]]
        %v3494 = vstv %s3493
        %v3495 = vmul.f32 %v3494, %v3253
        %v3496 = vmul.f32 %v3494, %v3255
        %v3497 = vmul.f32 %v3494, %v3257
        %v3498 = vmul.f32 %v3494, %v3262
        %v3499 = vadd.f32 %v3419, %v3495
        %v3500 = vadd.f32 %v3420, %v3496
        %v3501 = vadd.f32 %v3421, %v3497
        %v3502 = vadd.f32 %v3422, %v3498
        %3503 = vmatprep.subr.mxu0 0.0
        %3504 = vmatpush1.msra.mxu0 %v647
        %3505 = vmatprep.subr.mxu0 0.0
        %3506 = vmatpush1.msra.mxu0 %v652
        %3507 = vmatprep.subr.mxu0 0.0
        %3508 = vmatpush1.msra.mxu0 0.0
        %3509 = vmatprep.subr.mxu0 0.0
        %3510 = vmatpush1.msra.mxu0 0.0
        %3511 = vmatprep.subr.mxu0 0.0
        %3512 = vmatpush1.msra.mxu0 0.0
        %3513 = vmatprep.subr.mxu0 0.0
        %3514 = vmatpush1.msra.mxu0 0.0
        %3515 = vmatprep.subr.mxu0 0.0
        %3516 = vmatpush1.msra.mxu0 0.0
        %3517 = vmatprep.subr.mxu0 0.0
        %3518 = vmatpush1.msra.mxu0 0.0
        %3519 = vmatprep.subr.mxu0 0.0
        %3520 = vmatpush1.msra.mxu0 0.0
        %3521 = vmatprep.subr.mxu0 0.0
        %3522 = vmatpush1.msra.mxu0 0.0
        %3523 = vmatprep.subr.mxu0 0.0
        %3524 = vmatpush1.msra.mxu0 0.0
        %3525 = vmatprep.subr.mxu0 0.0
        %3526 = vmatpush1.msra.mxu0 0.0
        %3527 = vmatprep.subr.mxu0 0.0
        %3528 = vmatpush1.msra.mxu0 0.0
        %3529 = vmatprep.subr.mxu0 0.0
        %3530 = vmatpush1.msra.mxu0 0.0
        %3531 = vmatprep.subr.mxu0 0.0
        %3532 = vmatpush1.msra.mxu0 0.0
        %3533 = vmatprep.subr.mxu0 0.0
        %3534 = vmatpush1.msra.mxu0 0.0
        %3535 = vmatprep.subr.mxu0 0.0
        %3536 = vmatpush1.msra.mxu0 0.0
        %3537 = vmatprep.subr.mxu0 0.0
        %3538 = vmatpush1.msra.mxu0 0.0
        %3539 = vmatprep.subr.mxu0 0.0
        %3540 = vmatpush1.msra.mxu0 0.0
        %3541 = vmatprep.subr.mxu0 0.0
        %3542 = vmatpush1.msra.mxu0 0.0
        %3543 = vmatprep.subr.mxu0 0.0
        %3544 = vmatpush1.msra.mxu0 0.0
        %3545 = vmatprep.subr.mxu0 0.0
        %3546 = vmatpush1.msra.mxu0 0.0
        %3547 = vmatprep.subr.mxu0 0.0
        %3548 = vmatpush1.msra.mxu0 0.0
        %3549 = vmatprep.subr.mxu0 0.0
        %3550 = vmatpush1.msra.mxu0 0.0
        %3551 = vmatprep.subr.mxu0 0.0
        %3552 = vmatpush1.msra.mxu0 0.0
        %3553 = vmatprep.subr.mxu0 0.0
        %3554 = vmatpush1.msra.mxu0 0.0
        %3555 = vmatprep.subr.mxu0 0.0
        %3556 = vmatpush1.msra.mxu0 0.0
        %3557 = vmatprep.subr.mxu0 0.0
        %3558 = vmatpush1.msra.mxu0 0.0
        %3559 = vmatprep.subr.mxu0 0.0
        %3560 = vmatpush1.msra.mxu0 0.0
        %3561 = vmatprep.subr.mxu0 0.0
        %3562 = vmatpush1.msra.mxu0 0.0
        %3563 = vmatprep.subr.mxu0 0.0
        %3564 = vmatpush1.msra.mxu0 0.0
        %3565 = vmatprep.subr.mxu0 0.0
        %3566 = vmatpush1.msra.mxu0 0.0
        %3567 = vmatprep.mubr.f32.mxu0 0.0
        %3568 = vmatmul.mubr.f32.gmra.mrb[0].mxu0 %v666
        %v3569 = vpop.f32.mrb[0].mxu0
        %v3570 = vadd.f32 0.0, %v3569
        %v3571 = vpop.f32.mrb[0].mxu0
        %3572 = vmatprep.mubr.f32.mxu0 0.0
        %3573 = vmatmul.mubr.f32.gmra.mrb[0].mxu0 %v669
        %v3574 = vpop.f32.mrb[0].mxu0
        %v3575 = vadd.f32 0.0, %v3574
        %v3576 = vpop.f32.mrb[0].mxu0
        %3577 = vmatprep.mubr.f32.mxu0 0.0
        %3578 = vmatmul.mubr.f32.gmra.mrb[0].mxu0 %v672
        %v3579 = vpop.f32.mrb[0].mxu0
        %v3580 = vadd.f32 0.0, %v3579
        %v3581 = vpop.f32.mrb[0].mxu0
        %3582 = vmatprep.mubr.f32.mxu0 0.0
        %3583 = vmatmul.mubr.f32.gmra.mrb[0].mxu0 %v675
        %v3584 = vpop.f32.mrb[0].mxu0
        %v3585 = vadd.f32 0.0, %v3584
        %v3586 = vpop.f32.mrb[0].mxu0
        %3587 = vdwg.mxu0
        %v3592 = vrot.slane %v3570, 7
        %v3593 = vrot.slane %v3575, 7
        %v3594 = vsel %vm766, %v3592, %v3593
        %v3595 = vrot.slane %v3580, 7
        %v3596 = vsel %vm766, %v3593, %v3595
        %v3597 = vrot.slane %v3585, 7
        %v3598 = vsel %vm766, %v3595, %v3597
        %v3603 = vsel %vm766, 0.0, %v3592
        %v3604 = vrot.slane %v3570, 1
        %v3605 = vrot.slane %v3575, 1
        %v3606 = vsel %vm779, %v3604, %v3605
        %v3607 = vrot.slane %v3580, 1
        %v3608 = vsel %vm779, %v3605, %v3607
        %v3609 = vrot.slane %v3585, 1
        %v3610 = vsel %vm779, %v3607, %v3609
        %v3615 = vsel %vm779, %v3609, 0.0
        %s3616 = sld [smem:[#allocation6 + $0x14]]
        %v3617 = vstv %s3616
        %v3618 = vmul.f32 %v3617, %v3603
        %v3619 = vmul.f32 %v3617, %v3594
        %v3620 = vmul.f32 %v3617, %v3596
        %v3621 = vmul.f32 %v3617, %v3598
        %v3622 = vadd.f32 %v3429, %v3618
        %v3623 = vadd.f32 %v3430, %v3619
        %v3624 = vadd.f32 %v3431, %v3620
        %v3625 = vadd.f32 %v3432, %v3621
        %s3626 = sld [smem:[#allocation6 + $0x94]]
        %v3627 = vstv %s3626
        %v3628 = vmul.f32 %v3627, %v3603
        %v3629 = vmul.f32 %v3627, %v3594
        %v3630 = vmul.f32 %v3627, %v3596
        %v3631 = vmul.f32 %v3627, %v3598
        %v3632 = vadd.f32 %v3439, %v3628
        %v3633 = vadd.f32 %v3440, %v3629
        %v3634 = vadd.f32 %v3441, %v3630
        %v3635 = vadd.f32 %v3442, %v3631
        %s3636 = sld [smem:[#allocation6 + $0x114]]
        %v3637 = vstv %s3636
        %v3638 = vmul.f32 %v3637, %v3603
        %v3639 = vmul.f32 %v3637, %v3594
        %v3640 = vmul.f32 %v3637, %v3596
        %v3641 = vmul.f32 %v3637, %v3598
        %v3642 = vadd.f32 %v3449, %v3638
        %v3643 = vadd.f32 %v3450, %v3639
        %v3644 = vadd.f32 %v3451, %v3640
        %v3645 = vadd.f32 %v3452, %v3641
        %s3646 = sld [smem:[#allocation6 + $0x194]]
        %v3647 = vstv %s3646
        %v3648 = vmul.f32 %v3647, %v3603
        %v3649 = vmul.f32 %v3647, %v3594
        %v3650 = vmul.f32 %v3647, %v3596
        %v3651 = vmul.f32 %v3647, %v3598
        %v3652 = vadd.f32 %v3459, %v3648
        %v3653 = vadd.f32 %v3460, %v3649
        %v3654 = vadd.f32 %v3461, %v3650
        %v3655 = vadd.f32 %v3462, %v3651
        %s3656 = sld [smem:[#allocation6 + $0x214]]
        %v3657 = vstv %s3656
        %v3658 = vmul.f32 %v3657, %v3603
        %v3659 = vmul.f32 %v3657, %v3594
        %v3660 = vmul.f32 %v3657, %v3596
        %v3661 = vmul.f32 %v3657, %v3598
        %v3662 = vadd.f32 %v3469, %v3658
        %v3663 = vadd.f32 %v3470, %v3659
        %v3664 = vadd.f32 %v3471, %v3660
        %v3665 = vadd.f32 %v3472, %v3661
        %s3666 = sld [smem:[#allocation6 + $0x294]]
        %v3667 = vstv %s3666
        %v3668 = vmul.f32 %v3667, %v3603
        %v3669 = vmul.f32 %v3667, %v3594
        %v3670 = vmul.f32 %v3667, %v3596
        %v3671 = vmul.f32 %v3667, %v3598
        %v3672 = vadd.f32 %v3479, %v3668
        %v3673 = vadd.f32 %v3480, %v3669
        %v3674 = vadd.f32 %v3481, %v3670
        %v3675 = vadd.f32 %v3482, %v3671
        %s3676 = sld [smem:[#allocation6 + $0x314]]
        %v3677 = vstv %s3676
        %v3678 = vmul.f32 %v3677, %v3603
        %v3679 = vmul.f32 %v3677, %v3594
        %v3680 = vmul.f32 %v3677, %v3596
        %v3681 = vmul.f32 %v3677, %v3598
        %v3682 = vadd.f32 %v3489, %v3678
        %v3683 = vadd.f32 %v3490, %v3679
        %v3684 = vadd.f32 %v3491, %v3680
        %v3685 = vadd.f32 %v3492, %v3681
        %s3686 = sld [smem:[#allocation6 + $0x394]]
        %v3687 = vstv %s3686
        %v3688 = vmul.f32 %v3687, %v3603
        %v3689 = vmul.f32 %v3687, %v3594
        %v3690 = vmul.f32 %v3687, %v3596
        %v3691 = vmul.f32 %v3687, %v3598
        %v3692 = vadd.f32 %v3499, %v3688
        %v3693 = vadd.f32 %v3500, %v3689
        %v3694 = vadd.f32 %v3501, %v3690
        %v3695 = vadd.f32 %v3502, %v3691
        %s3696 = sld [smem:[#allocation6 + $0x17]]
        %v3697 = vstv %s3696
        %v3698 = vmul.f32 %v3697, %v3570
        %v3699 = vmul.f32 %v3697, %v3575
        %v3700 = vmul.f32 %v3697, %v3580
        %v3701 = vmul.f32 %v3697, %v3585
        %v3702 = vadd.f32 %v3622, %v3698
        %v3703 = vadd.f32 %v3623, %v3699
        %v3704 = vadd.f32 %v3624, %v3700
        %v3705 = vadd.f32 %v3625, %v3701
        %s3706 = sld [smem:[#allocation6 + $0x97]]
        %v3707 = vstv %s3706
        %v3708 = vmul.f32 %v3707, %v3570
        %v3709 = vmul.f32 %v3707, %v3575
        %v3710 = vmul.f32 %v3707, %v3580
        %v3711 = vmul.f32 %v3707, %v3585
        %v3712 = vadd.f32 %v3632, %v3708
        %v3713 = vadd.f32 %v3633, %v3709
        %v3714 = vadd.f32 %v3634, %v3710
        %v3715 = vadd.f32 %v3635, %v3711
        %s3716 = sld [smem:[#allocation6 + $0x117]]
        %v3717 = vstv %s3716
        %v3718 = vmul.f32 %v3717, %v3570
        %v3719 = vmul.f32 %v3717, %v3575
        %v3720 = vmul.f32 %v3717, %v3580
        %v3721 = vmul.f32 %v3717, %v3585
        %v3722 = vadd.f32 %v3642, %v3718
        %v3723 = vadd.f32 %v3643, %v3719
        %v3724 = vadd.f32 %v3644, %v3720
        %v3725 = vadd.f32 %v3645, %v3721
        %s3726 = sld [smem:[#allocation6 + $0x197]]
        %v3727 = vstv %s3726
        %v3728 = vmul.f32 %v3727, %v3570
        %v3729 = vmul.f32 %v3727, %v3575
        %v3730 = vmul.f32 %v3727, %v3580
        %v3731 = vmul.f32 %v3727, %v3585
        %v3732 = vadd.f32 %v3652, %v3728
        %v3733 = vadd.f32 %v3653, %v3729
        %v3734 = vadd.f32 %v3654, %v3730
        %v3735 = vadd.f32 %v3655, %v3731
        %s3736 = sld [smem:[#allocation6 + $0x217]]
        %v3737 = vstv %s3736
        %v3738 = vmul.f32 %v3737, %v3570
        %v3739 = vmul.f32 %v3737, %v3575
        %v3740 = vmul.f32 %v3737, %v3580
        %v3741 = vmul.f32 %v3737, %v3585
        %v3742 = vadd.f32 %v3662, %v3738
        %v3743 = vadd.f32 %v3663, %v3739
        %v3744 = vadd.f32 %v3664, %v3740
        %v3745 = vadd.f32 %v3665, %v3741
        %s3746 = sld [smem:[#allocation6 + $0x297]]
        %v3747 = vstv %s3746
        %v3748 = vmul.f32 %v3747, %v3570
        %v3749 = vmul.f32 %v3747, %v3575
        %v3750 = vmul.f32 %v3747, %v3580
        %v3751 = vmul.f32 %v3747, %v3585
        %v3752 = vadd.f32 %v3672, %v3748
        %v3753 = vadd.f32 %v3673, %v3749
        %v3754 = vadd.f32 %v3674, %v3750
        %v3755 = vadd.f32 %v3675, %v3751
        %s3756 = sld [smem:[#allocation6 + $0x317]]
        %v3757 = vstv %s3756
        %v3758 = vmul.f32 %v3757, %v3570
        %v3759 = vmul.f32 %v3757, %v3575
        %v3760 = vmul.f32 %v3757, %v3580
        %v3761 = vmul.f32 %v3757, %v3585
        %v3762 = vadd.f32 %v3682, %v3758
        %v3763 = vadd.f32 %v3683, %v3759
        %v3764 = vadd.f32 %v3684, %v3760
        %v3765 = vadd.f32 %v3685, %v3761
        %s3766 = sld [smem:[#allocation6 + $0x397]]
        %v3767 = vstv %s3766
        %v3768 = vmul.f32 %v3767, %v3570
        %v3769 = vmul.f32 %v3767, %v3575
        %v3770 = vmul.f32 %v3767, %v3580
        %v3771 = vmul.f32 %v3767, %v3585
        %v3772 = vadd.f32 %v3692, %v3768
        %v3773 = vadd.f32 %v3693, %v3769
        %v3774 = vadd.f32 %v3694, %v3770
        %v3775 = vadd.f32 %v3695, %v3771
        %s3776 = sld [smem:[#allocation6 + $0x1a]]
        %v3777 = vstv %s3776
        %v3778 = vmul.f32 %v3777, %v3606
        %v3779 = vmul.f32 %v3777, %v3608
        %v3780 = vmul.f32 %v3777, %v3610
        %v3781 = vmul.f32 %v3777, %v3615
        %v3782 = vadd.f32 %v3702, %v3778
        %v3783 = vadd.f32 %v3703, %v3779
        %v3784 = vadd.f32 %v3704, %v3780
        %v3785 = vadd.f32 %v3705, %v3781
        %s3786 = sld [smem:[#allocation6 + $0x9a]]
        %v3787 = vstv %s3786
        %v3788 = vmul.f32 %v3787, %v3606
        %v3789 = vmul.f32 %v3787, %v3608
        %v3790 = vmul.f32 %v3787, %v3610
        %v3791 = vmul.f32 %v3787, %v3615
        %v3792 = vadd.f32 %v3712, %v3788
        %v3793 = vadd.f32 %v3713, %v3789
        %v3794 = vadd.f32 %v3714, %v3790
        %v3795 = vadd.f32 %v3715, %v3791
        %s3796 = sld [smem:[#allocation6 + $0x11a]]
        %v3797 = vstv %s3796
        %v3798 = vmul.f32 %v3797, %v3606
        %v3799 = vmul.f32 %v3797, %v3608
        %v3800 = vmul.f32 %v3797, %v3610
        %v3801 = vmul.f32 %v3797, %v3615
        %v3802 = vadd.f32 %v3722, %v3798
        %v3803 = vadd.f32 %v3723, %v3799
        %v3804 = vadd.f32 %v3724, %v3800
        %v3805 = vadd.f32 %v3725, %v3801
        %s3806 = sld [smem:[#allocation6 + $0x19a]]
        %v3807 = vstv %s3806
        %v3808 = vmul.f32 %v3807, %v3606
        %v3809 = vmul.f32 %v3807, %v3608
        %v3810 = vmul.f32 %v3807, %v3610
        %v3811 = vmul.f32 %v3807, %v3615
        %v3812 = vadd.f32 %v3732, %v3808
        %v3813 = vadd.f32 %v3733, %v3809
        %v3814 = vadd.f32 %v3734, %v3810
        %v3815 = vadd.f32 %v3735, %v3811
        %s3816 = sld [smem:[#allocation6 + $0x21a]]
        %v3817 = vstv %s3816
        %v3818 = vmul.f32 %v3817, %v3606
        %v3819 = vmul.f32 %v3817, %v3608
        %v3820 = vmul.f32 %v3817, %v3610
        %v3821 = vmul.f32 %v3817, %v3615
        %v3822 = vadd.f32 %v3742, %v3818
        %v3823 = vadd.f32 %v3743, %v3819
        %v3824 = vadd.f32 %v3744, %v3820
        %v3825 = vadd.f32 %v3745, %v3821
        %s3826 = sld [smem:[#allocation6 + $0x29a]]
        %v3827 = vstv %s3826
        %v3828 = vmul.f32 %v3827, %v3606
        %v3829 = vmul.f32 %v3827, %v3608
        %v3830 = vmul.f32 %v3827, %v3610
        %v3831 = vmul.f32 %v3827, %v3615
        %v3832 = vadd.f32 %v3752, %v3828
        %v3833 = vadd.f32 %v3753, %v3829
        %v3834 = vadd.f32 %v3754, %v3830
        %v3835 = vadd.f32 %v3755, %v3831
        %s3836 = sld [smem:[#allocation6 + $0x31a]]
        %v3837 = vstv %s3836
        %v3838 = vmul.f32 %v3837, %v3606
        %v3839 = vmul.f32 %v3837, %v3608
        %v3840 = vmul.f32 %v3837, %v3610
        %v3841 = vmul.f32 %v3837, %v3615
        %v3842 = vadd.f32 %v3762, %v3838
        %v3843 = vadd.f32 %v3763, %v3839
        %v3844 = vadd.f32 %v3764, %v3840
        %v3845 = vadd.f32 %v3765, %v3841
        %s3846 = sld [smem:[#allocation6 + $0x39a]]
        %v3847 = vstv %s3846
        %v3848 = vmul.f32 %v3847, %v3606
        %v3849 = vmul.f32 %v3847, %v3608
        %v3850 = vmul.f32 %v3847, %v3610
        %v3851 = vmul.f32 %v3847, %v3615
        %v3852 = vadd.f32 %v3772, %v3848
        %v3853 = vadd.f32 %v3773, %v3849
        %v3854 = vadd.f32 %v3774, %v3850
        %v3855 = vadd.f32 %v3775, %v3851
        %3856 = vmatprep.subr.mxu0 0.0
        %3857 = vmatpush1.msra.mxu0 %v441
        %3858 = vmatprep.subr.mxu0 0.0
        %3859 = vmatpush1.msra.mxu0 %v446
        %3860 = vmatprep.subr.mxu0 0.0
        %3861 = vmatpush1.msra.mxu0 0.0
        %3862 = vmatprep.subr.mxu0 0.0
        %3863 = vmatpush1.msra.mxu0 0.0
        %3864 = vmatprep.subr.mxu0 0.0
        %3865 = vmatpush1.msra.mxu0 0.0
        %3866 = vmatprep.subr.mxu0 0.0
        %3867 = vmatpush1.msra.mxu0 0.0
        %3868 = vmatprep.subr.mxu0 0.0
        %3869 = vmatpush1.msra.mxu0 0.0
        %3870 = vmatprep.subr.mxu0 0.0
        %3871 = vmatpush1.msra.mxu0 0.0
        %3872 = vmatprep.subr.mxu0 0.0
        %3873 = vmatpush1.msra.mxu0 0.0
        %3874 = vmatprep.subr.mxu0 0.0
        %3875 = vmatpush1.msra.mxu0 0.0
        %3876 = vmatprep.subr.mxu0 0.0
        %3877 = vmatpush1.msra.mxu0 0.0
        %3878 = vmatprep.subr.mxu0 0.0
        %3879 = vmatpush1.msra.mxu0 0.0
        %3880 = vmatprep.subr.mxu0 0.0
        %3881 = vmatpush1.msra.mxu0 0.0
        %3882 = vmatprep.subr.mxu0 0.0
        %3883 = vmatpush1.msra.mxu0 0.0
        %3884 = vmatprep.subr.mxu0 0.0
        %3885 = vmatpush1.msra.mxu0 0.0
        %3886 = vmatprep.subr.mxu0 0.0
        %3887 = vmatpush1.msra.mxu0 0.0
        %3888 = vmatprep.subr.mxu0 0.0
        %3889 = vmatpush1.msra.mxu0 0.0
        %3890 = vmatprep.subr.mxu0 0.0
        %3891 = vmatpush1.msra.mxu0 0.0
        %3892 = vmatprep.subr.mxu0 0.0
        %3893 = vmatpush1.msra.mxu0 0.0
        %3894 = vmatprep.subr.mxu0 0.0
        %3895 = vmatpush1.msra.mxu0 0.0
        %3896 = vmatprep.subr.mxu0 0.0
        %3897 = vmatpush1.msra.mxu0 0.0
        %3898 = vmatprep.subr.mxu0 0.0
        %3899 = vmatpush1.msra.mxu0 0.0
        %3900 = vmatprep.subr.mxu0 0.0
        %3901 = vmatpush1.msra.mxu0 0.0
        %3902 = vmatprep.subr.mxu0 0.0
        %3903 = vmatpush1.msra.mxu0 0.0
        %3904 = vmatprep.subr.mxu0 0.0
        %3905 = vmatpush1.msra.mxu0 0.0
        %3906 = vmatprep.subr.mxu0 0.0
        %3907 = vmatpush1.msra.mxu0 0.0
        %3908 = vmatprep.subr.mxu0 0.0
        %3909 = vmatpush1.msra.mxu0 0.0
        %3910 = vmatprep.subr.mxu0 0.0
        %3911 = vmatpush1.msra.mxu0 0.0
        %3912 = vmatprep.subr.mxu0 0.0
        %3913 = vmatpush1.msra.mxu0 0.0
        %3914 = vmatprep.subr.mxu0 0.0
        %3915 = vmatpush1.msra.mxu0 0.0
        %3916 = vmatprep.subr.mxu0 0.0
        %3917 = vmatpush1.msra.mxu0 0.0
        %3918 = vmatprep.subr.mxu0 0.0
        %3919 = vmatpush1.msra.mxu0 0.0
        %3920 = vmatprep.mubr.f32.mxu0 0.0
        %3921 = vmatmul.mubr.f32.gmra.mrb[0].mxu0 %v666
        %v3922 = vpop.f32.mrb[0].mxu0
        %v3923 = vadd.f32 0.0, %v3922
        %v3924 = vpop.f32.mrb[0].mxu0
        %3925 = vmatprep.mubr.f32.mxu0 0.0
        %3926 = vmatmul.mubr.f32.gmra.mrb[0].mxu0 %v669
        %v3927 = vpop.f32.mrb[0].mxu0
        %v3928 = vadd.f32 0.0, %v3927
        %v3929 = vpop.f32.mrb[0].mxu0
        %3930 = vmatprep.mubr.f32.mxu0 0.0
        %3931 = vmatmul.mubr.f32.gmra.mrb[0].mxu0 %v672
        %v3932 = vpop.f32.mrb[0].mxu0
        %v3933 = vadd.f32 0.0, %v3932
        %v3934 = vpop.f32.mrb[0].mxu0
        %3935 = vmatprep.mubr.f32.mxu0 0.0
        %3936 = vmatmul.mubr.f32.gmra.mrb[0].mxu0 %v675
        %v3937 = vpop.f32.mrb[0].mxu0
        %v3938 = vadd.f32 0.0, %v3937
        %v3939 = vpop.f32.mrb[0].mxu0
        %3940 = vdwg.mxu0
        %v3945 = vrot.slane %v3923, 7
        %v3946 = vrot.slane %v3928, 7
        %v3947 = vsel %vm766, %v3945, %v3946
        %v3948 = vrot.slane %v3933, 7
        %v3949 = vsel %vm766, %v3946, %v3948
        %v3950 = vrot.slane %v3938, 7
        %v3951 = vsel %vm766, %v3948, %v3950
        %v3956 = vsel %vm766, 0.0, %v3945
        %v3957 = vrot.slane %v3923, 1
        %v3958 = vrot.slane %v3928, 1
        %v3959 = vsel %vm779, %v3957, %v3958
        %v3960 = vrot.slane %v3933, 1
        %v3961 = vsel %vm779, %v3958, %v3960
        %v3962 = vrot.slane %v3938, 1
        %v3963 = vsel %vm779, %v3960, %v3962
        %v3968 = vsel %vm779, %v3962, 0.0
        %s3969 = sld [smem:[#allocation6 + $0x1b]]
        %v3970 = vstv %s3969
        %v3971 = vmul.f32 %v3970, %v3956
        %v3972 = vmul.f32 %v3970, %v3947
        %v3973 = vmul.f32 %v3970, %v3949
        %v3974 = vmul.f32 %v3970, %v3951
        %v3975 = vadd.f32 %v3782, %v3971
        %v3976 = vadd.f32 %v3783, %v3972
        %v3977 = vadd.f32 %v3784, %v3973
        %v3978 = vadd.f32 %v3785, %v3974
        %s3979 = sld [smem:[#allocation6 + $0x9b]]
        %v3980 = vstv %s3979
        %v3981 = vmul.f32 %v3980, %v3956
        %v3982 = vmul.f32 %v3980, %v3947
        %v3983 = vmul.f32 %v3980, %v3949
        %v3984 = vmul.f32 %v3980, %v3951
        %v3985 = vadd.f32 %v3792, %v3981
        %v3986 = vadd.f32 %v3793, %v3982
        %v3987 = vadd.f32 %v3794, %v3983
        %v3988 = vadd.f32 %v3795, %v3984
        %s3989 = sld [smem:[#allocation6 + $0x11b]]
        %v3990 = vstv %s3989
        %v3991 = vmul.f32 %v3990, %v3956
        %v3992 = vmul.f32 %v3990, %v3947
        %v3993 = vmul.f32 %v3990, %v3949
        %v3994 = vmul.f32 %v3990, %v3951
        %v3995 = vadd.f32 %v3802, %v3991
        %v3996 = vadd.f32 %v3803, %v3992
        %v3997 = vadd.f32 %v3804, %v3993
        %v3998 = vadd.f32 %v3805, %v3994
        %s3999 = sld [smem:[#allocation6 + $0x19b]]
        %v4000 = vstv %s3999
        %v4001 = vmul.f32 %v4000, %v3956
        %v4002 = vmul.f32 %v4000, %v3947
        %v4003 = vmul.f32 %v4000, %v3949
        %v4004 = vmul.f32 %v4000, %v3951
        %v4005 = vadd.f32 %v3812, %v4001
        %v4006 = vadd.f32 %v3813, %v4002
        %v4007 = vadd.f32 %v3814, %v4003
        %v4008 = vadd.f32 %v3815, %v4004
        %s4009 = sld [smem:[#allocation6 + $0x21b]]
        %v4010 = vstv %s4009
        %v4011 = vmul.f32 %v4010, %v3956
        %v4012 = vmul.f32 %v4010, %v3947
        %v4013 = vmul.f32 %v4010, %v3949
        %v4014 = vmul.f32 %v4010, %v3951
        %v4015 = vadd.f32 %v3822, %v4011
        %v4016 = vadd.f32 %v3823, %v4012
        %v4017 = vadd.f32 %v3824, %v4013
        %v4018 = vadd.f32 %v3825, %v4014
        %s4019 = sld [smem:[#allocation6 + $0x29b]]
        %v4020 = vstv %s4019
        %v4021 = vmul.f32 %v4020, %v3956
        %v4022 = vmul.f32 %v4020, %v3947
        %v4023 = vmul.f32 %v4020, %v3949
        %v4024 = vmul.f32 %v4020, %v3951
        %v4025 = vadd.f32 %v3832, %v4021
        %v4026 = vadd.f32 %v3833, %v4022
        %v4027 = vadd.f32 %v3834, %v4023
        %v4028 = vadd.f32 %v3835, %v4024
        %s4029 = sld [smem:[#allocation6 + $0x31b]]
        %v4030 = vstv %s4029
        %v4031 = vmul.f32 %v4030, %v3956
        %v4032 = vmul.f32 %v4030, %v3947
        %v4033 = vmul.f32 %v4030, %v3949
        %v4034 = vmul.f32 %v4030, %v3951
        %v4035 = vadd.f32 %v3842, %v4031
        %v4036 = vadd.f32 %v3843, %v4032
        %v4037 = vadd.f32 %v3844, %v4033
        %v4038 = vadd.f32 %v3845, %v4034
        %s4039 = sld [smem:[#allocation6 + $0x39b]]
        %v4040 = vstv %s4039
        %v4041 = vmul.f32 %v4040, %v3956
        %v4042 = vmul.f32 %v4040, %v3947
        %v4043 = vmul.f32 %v4040, %v3949
        %v4044 = vmul.f32 %v4040, %v3951
        %v4045 = vadd.f32 %v3852, %v4041
        %v4046 = vadd.f32 %v3853, %v4042
        %v4047 = vadd.f32 %v3854, %v4043
        %v4048 = vadd.f32 %v3855, %v4044
        %s4049 = sld [smem:[#allocation6 + $0x1e]]
        %v4050 = vstv %s4049
        %v4051 = vmul.f32 %v4050, %v3923
        %v4052 = vmul.f32 %v4050, %v3928
        %v4053 = vmul.f32 %v4050, %v3933
        %v4054 = vmul.f32 %v4050, %v3938
        %v4055 = vadd.f32 %v3975, %v4051
        %v4056 = vadd.f32 %v3976, %v4052
        %v4057 = vadd.f32 %v3977, %v4053
        %v4058 = vadd.f32 %v3978, %v4054
        %s4059 = sld [smem:[#allocation6 + $0x9e]]
        %v4060 = vstv %s4059
        %v4061 = vmul.f32 %v4060, %v3923
        %v4062 = vmul.f32 %v4060, %v3928
        %v4063 = vmul.f32 %v4060, %v3933
        %v4064 = vmul.f32 %v4060, %v3938
        %v4065 = vadd.f32 %v3985, %v4061
        %v4066 = vadd.f32 %v3986, %v4062
        %v4067 = vadd.f32 %v3987, %v4063
        %v4068 = vadd.f32 %v3988, %v4064
        %s4069 = sld [smem:[#allocation6 + $0x11e]]
        %v4070 = vstv %s4069
        %v4071 = vmul.f32 %v4070, %v3923
        %v4072 = vmul.f32 %v4070, %v3928
        %v4073 = vmul.f32 %v4070, %v3933
        %v4074 = vmul.f32 %v4070, %v3938
        %v4075 = vadd.f32 %v3995, %v4071
        %v4076 = vadd.f32 %v3996, %v4072
        %v4077 = vadd.f32 %v3997, %v4073
        %v4078 = vadd.f32 %v3998, %v4074
        %s4079 = sld [smem:[#allocation6 + $0x19e]]
        %v4080 = vstv %s4079
        %v4081 = vmul.f32 %v4080, %v3923
        %v4082 = vmul.f32 %v4080, %v3928
        %v4083 = vmul.f32 %v4080, %v3933
        %v4084 = vmul.f32 %v4080, %v3938
        %v4085 = vadd.f32 %v4005, %v4081
        %v4086 = vadd.f32 %v4006, %v4082
        %v4087 = vadd.f32 %v4007, %v4083
        %v4088 = vadd.f32 %v4008, %v4084
        %s4089 = sld [smem:[#allocation6 + $0x21e]]
        %v4090 = vstv %s4089
        %v4091 = vmul.f32 %v4090, %v3923
        %v4092 = vmul.f32 %v4090, %v3928
        %v4093 = vmul.f32 %v4090, %v3933
        %v4094 = vmul.f32 %v4090, %v3938
        %v4095 = vadd.f32 %v4015, %v4091
        %v4096 = vadd.f32 %v4016, %v4092
        %v4097 = vadd.f32 %v4017, %v4093
        %v4098 = vadd.f32 %v4018, %v4094
        %s4099 = sld [smem:[#allocation6 + $0x29e]]
        %v4100 = vstv %s4099
        %v4101 = vmul.f32 %v4100, %v3923
        %v4102 = vmul.f32 %v4100, %v3928
        %v4103 = vmul.f32 %v4100, %v3933
        %v4104 = vmul.f32 %v4100, %v3938
        %v4105 = vadd.f32 %v4025, %v4101
        %v4106 = vadd.f32 %v4026, %v4102
        %v4107 = vadd.f32 %v4027, %v4103
        %v4108 = vadd.f32 %v4028, %v4104
        %s4109 = sld [smem:[#allocation6 + $0x31e]]
        %v4110 = vstv %s4109
        %v4111 = vmul.f32 %v4110, %v3923
        %v4112 = vmul.f32 %v4110, %v3928
        %v4113 = vmul.f32 %v4110, %v3933
        %v4114 = vmul.f32 %v4110, %v3938
        %v4115 = vadd.f32 %v4035, %v4111
        %v4116 = vadd.f32 %v4036, %v4112
        %v4117 = vadd.f32 %v4037, %v4113
        %v4118 = vadd.f32 %v4038, %v4114
        %s4119 = sld [smem:[#allocation6 + $0x39e]]
        %v4120 = vstv %s4119
        %v4121 = vmul.f32 %v4120, %v3923
        %v4122 = vmul.f32 %v4120, %v3928
        %v4123 = vmul.f32 %v4120, %v3933
        %v4124 = vmul.f32 %v4120, %v3938
        %v4125 = vadd.f32 %v4045, %v4121
        %v4126 = vadd.f32 %v4046, %v4122
        %v4127 = vadd.f32 %v4047, %v4123
        %v4128 = vadd.f32 %v4048, %v4124
        %s4129 = sld [smem:[#allocation6 + $0x21]]
        %v4130 = vstv %s4129
        %v4131 = vmul.f32 %v4130, %v3959
        %v4132 = vmul.f32 %v4130, %v3961
        %v4133 = vmul.f32 %v4130, %v3963
        %v4134 = vmul.f32 %v4130, %v3968
        %v4135 = vadd.f32 %v4055, %v4131
        %v4136 = vadd.f32 %v4056, %v4132
        %v4137 = vadd.f32 %v4057, %v4133
        %v4138 = vadd.f32 %v4058, %v4134
        %s4139 = sld [smem:[#allocation6 + $0xa1]]
        %v4140 = vstv %s4139
        %v4141 = vmul.f32 %v4140, %v3959
        %v4142 = vmul.f32 %v4140, %v3961
        %v4143 = vmul.f32 %v4140, %v3963
        %v4144 = vmul.f32 %v4140, %v3968
        %v4145 = vadd.f32 %v4065, %v4141
        %v4146 = vadd.f32 %v4066, %v4142
        %v4147 = vadd.f32 %v4067, %v4143
        %v4148 = vadd.f32 %v4068, %v4144
        %s4149 = sld [smem:[#allocation6 + $0x121]]
        %v4150 = vstv %s4149
        %v4151 = vmul.f32 %v4150, %v3959
        %v4152 = vmul.f32 %v4150, %v3961
        %v4153 = vmul.f32 %v4150, %v3963
        %v4154 = vmul.f32 %v4150, %v3968
        %v4155 = vadd.f32 %v4075, %v4151
        %v4156 = vadd.f32 %v4076, %v4152
        %v4157 = vadd.f32 %v4077, %v4153
        %v4158 = vadd.f32 %v4078, %v4154
        %s4159 = sld [smem:[#allocation6 + $0x1a1]]
        %v4160 = vstv %s4159
        %v4161 = vmul.f32 %v4160, %v3959
        %v4162 = vmul.f32 %v4160, %v3961
        %v4163 = vmul.f32 %v4160, %v3963
        %v4164 = vmul.f32 %v4160, %v3968
        %v4165 = vadd.f32 %v4085, %v4161
        %v4166 = vadd.f32 %v4086, %v4162
        %v4167 = vadd.f32 %v4087, %v4163
        %v4168 = vadd.f32 %v4088, %v4164
        %s4169 = sld [smem:[#allocation6 + $0x221]]
        %v4170 = vstv %s4169
        %v4171 = vmul.f32 %v4170, %v3959
        %v4172 = vmul.f32 %v4170, %v3961
        %v4173 = vmul.f32 %v4170, %v3963
        %v4174 = vmul.f32 %v4170, %v3968
        %v4175 = vadd.f32 %v4095, %v4171
        %v4176 = vadd.f32 %v4096, %v4172
        %v4177 = vadd.f32 %v4097, %v4173
        %v4178 = vadd.f32 %v4098, %v4174
        %s4179 = sld [smem:[#allocation6 + $0x2a1]]
        %v4180 = vstv %s4179
        %v4181 = vmul.f32 %v4180, %v3959
        %v4182 = vmul.f32 %v4180, %v3961
        %v4183 = vmul.f32 %v4180, %v3963
        %v4184 = vmul.f32 %v4180, %v3968
        %v4185 = vadd.f32 %v4105, %v4181
        %v4186 = vadd.f32 %v4106, %v4182
        %v4187 = vadd.f32 %v4107, %v4183
        %v4188 = vadd.f32 %v4108, %v4184
        %s4189 = sld [smem:[#allocation6 + $0x321]]
        %v4190 = vstv %s4189
        %v4191 = vmul.f32 %v4190, %v3959
        %v4192 = vmul.f32 %v4190, %v3961
        %v4193 = vmul.f32 %v4190, %v3963
        %v4194 = vmul.f32 %v4190, %v3968
        %v4195 = vadd.f32 %v4115, %v4191
        %v4196 = vadd.f32 %v4116, %v4192
        %v4197 = vadd.f32 %v4117, %v4193
        %v4198 = vadd.f32 %v4118, %v4194
        %s4199 = sld [smem:[#allocation6 + $0x3a1]]
        %v4200 = vstv %s4199
        %v4201 = vmul.f32 %v4200, %v3959
        %v4202 = vmul.f32 %v4200, %v3961
        %v4203 = vmul.f32 %v4200, %v3963
        %v4204 = vmul.f32 %v4200, %v3968
        %v4205 = vadd.f32 %v4125, %v4201
        %v4206 = vadd.f32 %v4126, %v4202
        %v4207 = vadd.f32 %v4127, %v4203
        %v4208 = vadd.f32 %v4128, %v4204
        %4209 = vmatprep.subr.mxu0 0.0
        %4210 = vmatpush1.msra.mxu0 %v549
        %4211 = vmatprep.subr.mxu0 0.0
        %4212 = vmatpush1.msra.mxu0 %v554
        %4213 = vmatprep.subr.mxu0 0.0
        %4214 = vmatpush1.msra.mxu0 0.0
        %4215 = vmatprep.subr.mxu0 0.0
        %4216 = vmatpush1.msra.mxu0 0.0
        %4217 = vmatprep.subr.mxu0 0.0
        %4218 = vmatpush1.msra.mxu0 0.0
        %4219 = vmatprep.subr.mxu0 0.0
        %4220 = vmatpush1.msra.mxu0 0.0
        %4221 = vmatprep.subr.mxu0 0.0
        %4222 = vmatpush1.msra.mxu0 0.0
        %4223 = vmatprep.subr.mxu0 0.0
        %4224 = vmatpush1.msra.mxu0 0.0
        %4225 = vmatprep.subr.mxu0 0.0
        %4226 = vmatpush1.msra.mxu0 0.0
        %4227 = vmatprep.subr.mxu0 0.0
        %4228 = vmatpush1.msra.mxu0 0.0
        %4229 = vmatprep.subr.mxu0 0.0
        %4230 = vmatpush1.msra.mxu0 0.0
        %4231 = vmatprep.subr.mxu0 0.0
        %4232 = vmatpush1.msra.mxu0 0.0
        %4233 = vmatprep.subr.mxu0 0.0
        %4234 = vmatpush1.msra.mxu0 0.0
        %4235 = vmatprep.subr.mxu0 0.0
        %4236 = vmatpush1.msra.mxu0 0.0
        %4237 = vmatprep.subr.mxu0 0.0
        %4238 = vmatpush1.msra.mxu0 0.0
        %4239 = vmatprep.subr.mxu0 0.0
        %4240 = vmatpush1.msra.mxu0 0.0
        %4241 = vmatprep.subr.mxu0 0.0
        %4242 = vmatpush1.msra.mxu0 0.0
        %4243 = vmatprep.subr.mxu0 0.0
        %4244 = vmatpush1.msra.mxu0 0.0
        %4245 = vmatprep.subr.mxu0 0.0
        %4246 = vmatpush1.msra.mxu0 0.0
        %4247 = vmatprep.subr.mxu0 0.0
        %4248 = vmatpush1.msra.mxu0 0.0
        %4249 = vmatprep.subr.mxu0 0.0
        %4250 = vmatpush1.msra.mxu0 0.0
        %4251 = vmatprep.subr.mxu0 0.0
        %4252 = vmatpush1.msra.mxu0 0.0
        %4253 = vmatprep.subr.mxu0 0.0
        %4254 = vmatpush1.msra.mxu0 0.0
        %4255 = vmatprep.subr.mxu0 0.0
        %4256 = vmatpush1.msra.mxu0 0.0
        %4257 = vmatprep.subr.mxu0 0.0
        %4258 = vmatpush1.msra.mxu0 0.0
        %4259 = vmatprep.subr.mxu0 0.0
        %4260 = vmatpush1.msra.mxu0 0.0
        %4261 = vmatprep.subr.mxu0 0.0
        %4262 = vmatpush1.msra.mxu0 0.0
        %4263 = vmatprep.subr.mxu0 0.0
        %4264 = vmatpush1.msra.mxu0 0.0
        %4265 = vmatprep.subr.mxu0 0.0
        %4266 = vmatpush1.msra.mxu0 0.0
        %4267 = vmatprep.subr.mxu0 0.0
        %4268 = vmatpush1.msra.mxu0 0.0
        %4269 = vmatprep.subr.mxu0 0.0
        %4270 = vmatpush1.msra.mxu0 0.0
        %4271 = vmatprep.subr.mxu0 0.0
        %4272 = vmatpush1.msra.mxu0 0.0
        %4273 = vmatprep.mubr.f32.mxu0 0.0
        %4274 = vmatmul.mubr.f32.gmra.mrb[0].mxu0 %v666
        %v4275 = vpop.f32.mrb[0].mxu0
        %v4276 = vadd.f32 0.0, %v4275
        %v4277 = vpop.f32.mrb[0].mxu0
        %4278 = vmatprep.mubr.f32.mxu0 0.0
        %4279 = vmatmul.mubr.f32.gmra.mrb[0].mxu0 %v669
        %v4280 = vpop.f32.mrb[0].mxu0
        %v4281 = vadd.f32 0.0, %v4280
        %v4282 = vpop.f32.mrb[0].mxu0
        %4283 = vmatprep.mubr.f32.mxu0 0.0
        %4284 = vmatmul.mubr.f32.gmra.mrb[0].mxu0 %v672
        %v4285 = vpop.f32.mrb[0].mxu0
        %v4286 = vadd.f32 0.0, %v4285
        %v4287 = vpop.f32.mrb[0].mxu0
        %4288 = vmatprep.mubr.f32.mxu0 0.0
        %4289 = vmatmul.mubr.f32.gmra.mrb[0].mxu0 %v675
        %v4290 = vpop.f32.mrb[0].mxu0
        %v4291 = vadd.f32 0.0, %v4290
        %v4292 = vpop.f32.mrb[0].mxu0
        %4293 = vdwg.mxu0
        %v4298 = vrot.slane %v4276, 7
        %v4299 = vrot.slane %v4281, 7
        %v4300 = vsel %vm766, %v4298, %v4299
        %v4301 = vrot.slane %v4286, 7
        %v4302 = vsel %vm766, %v4299, %v4301
        %v4303 = vrot.slane %v4291, 7
        %v4304 = vsel %vm766, %v4301, %v4303
        %v4309 = vsel %vm766, 0.0, %v4298
        %v4310 = vrot.slane %v4276, 1
        %v4311 = vrot.slane %v4281, 1
        %v4312 = vsel %vm779, %v4310, %v4311
        %v4313 = vrot.slane %v4286, 1
        %v4314 = vsel %vm779, %v4311, %v4313
        %v4315 = vrot.slane %v4291, 1
        %v4316 = vsel %vm779, %v4313, %v4315
        %v4321 = vsel %vm779, %v4315, 0.0
        %s4322 = sld [smem:[#allocation6 + $0x1c]]
        %v4323 = vstv %s4322
        %v4324 = vmul.f32 %v4323, %v4309
        %v4325 = vmul.f32 %v4323, %v4300
        %v4326 = vmul.f32 %v4323, %v4302
        %v4327 = vmul.f32 %v4323, %v4304
        %v4328 = vadd.f32 %v4135, %v4324
        %v4329 = vadd.f32 %v4136, %v4325
        %v4330 = vadd.f32 %v4137, %v4326
        %v4331 = vadd.f32 %v4138, %v4327
        %s4332 = sld [smem:[#allocation6 + $0x9c]]
        %v4333 = vstv %s4332
        %v4334 = vmul.f32 %v4333, %v4309
        %v4335 = vmul.f32 %v4333, %v4300
        %v4336 = vmul.f32 %v4333, %v4302
        %v4337 = vmul.f32 %v4333, %v4304
        %v4338 = vadd.f32 %v4145, %v4334
        %v4339 = vadd.f32 %v4146, %v4335
        %v4340 = vadd.f32 %v4147, %v4336
        %v4341 = vadd.f32 %v4148, %v4337
        %s4342 = sld [smem:[#allocation6 + $0x11c]]
        %v4343 = vstv %s4342
        %v4344 = vmul.f32 %v4343, %v4309
        %v4345 = vmul.f32 %v4343, %v4300
        %v4346 = vmul.f32 %v4343, %v4302
        %v4347 = vmul.f32 %v4343, %v4304
        %v4348 = vadd.f32 %v4155, %v4344
        %v4349 = vadd.f32 %v4156, %v4345
        %v4350 = vadd.f32 %v4157, %v4346
        %v4351 = vadd.f32 %v4158, %v4347
        %s4352 = sld [smem:[#allocation6 + $0x19c]]
        %v4353 = vstv %s4352
        %v4354 = vmul.f32 %v4353, %v4309
        %v4355 = vmul.f32 %v4353, %v4300
        %v4356 = vmul.f32 %v4353, %v4302
        %v4357 = vmul.f32 %v4353, %v4304
        %v4358 = vadd.f32 %v4165, %v4354
        %v4359 = vadd.f32 %v4166, %v4355
        %v4360 = vadd.f32 %v4167, %v4356
        %v4361 = vadd.f32 %v4168, %v4357
        %s4362 = sld [smem:[#allocation6 + $0x21c]]
        %v4363 = vstv %s4362
        %v4364 = vmul.f32 %v4363, %v4309
        %v4365 = vmul.f32 %v4363, %v4300
        %v4366 = vmul.f32 %v4363, %v4302
        %v4367 = vmul.f32 %v4363, %v4304
        %v4368 = vadd.f32 %v4175, %v4364
        %v4369 = vadd.f32 %v4176, %v4365
        %v4370 = vadd.f32 %v4177, %v4366
        %v4371 = vadd.f32 %v4178, %v4367
        %s4372 = sld [smem:[#allocation6 + $0x29c]]
        %v4373 = vstv %s4372
        %v4374 = vmul.f32 %v4373, %v4309
        %v4375 = vmul.f32 %v4373, %v4300
        %v4376 = vmul.f32 %v4373, %v4302
        %v4377 = vmul.f32 %v4373, %v4304
        %v4378 = vadd.f32 %v4185, %v4374
        %v4379 = vadd.f32 %v4186, %v4375
        %v4380 = vadd.f32 %v4187, %v4376
        %v4381 = vadd.f32 %v4188, %v4377
        %s4382 = sld [smem:[#allocation6 + $0x31c]]
        %v4383 = vstv %s4382
        %v4384 = vmul.f32 %v4383, %v4309
        %v4385 = vmul.f32 %v4383, %v4300
        %v4386 = vmul.f32 %v4383, %v4302
        %v4387 = vmul.f32 %v4383, %v4304
        %v4388 = vadd.f32 %v4195, %v4384
        %v4389 = vadd.f32 %v4196, %v4385
        %v4390 = vadd.f32 %v4197, %v4386
        %v4391 = vadd.f32 %v4198, %v4387
        %s4392 = sld [smem:[#allocation6 + $0x39c]]
        %v4393 = vstv %s4392
        %v4394 = vmul.f32 %v4393, %v4309
        %v4395 = vmul.f32 %v4393, %v4300
        %v4396 = vmul.f32 %v4393, %v4302
        %v4397 = vmul.f32 %v4393, %v4304
        %v4398 = vadd.f32 %v4205, %v4394
        %v4399 = vadd.f32 %v4206, %v4395
        %v4400 = vadd.f32 %v4207, %v4396
        %v4401 = vadd.f32 %v4208, %v4397
        %s4402 = sld [smem:[#allocation6 + $0x1f]]
        %v4403 = vstv %s4402
        %v4404 = vmul.f32 %v4403, %v4276
        %v4405 = vmul.f32 %v4403, %v4281
        %v4406 = vmul.f32 %v4403, %v4286
        %v4407 = vmul.f32 %v4403, %v4291
        %v4408 = vadd.f32 %v4328, %v4404
        %v4409 = vadd.f32 %v4329, %v4405
        %v4410 = vadd.f32 %v4330, %v4406
        %v4411 = vadd.f32 %v4331, %v4407
        %s4412 = sld [smem:[#allocation6 + $0x9f]]
        %v4413 = vstv %s4412
        %v4414 = vmul.f32 %v4413, %v4276
        %v4415 = vmul.f32 %v4413, %v4281
        %v4416 = vmul.f32 %v4413, %v4286
        %v4417 = vmul.f32 %v4413, %v4291
        %v4418 = vadd.f32 %v4338, %v4414
        %v4419 = vadd.f32 %v4339, %v4415
        %v4420 = vadd.f32 %v4340, %v4416
        %v4421 = vadd.f32 %v4341, %v4417
        %s4422 = sld [smem:[#allocation6 + $0x11f]]
        %v4423 = vstv %s4422
        %v4424 = vmul.f32 %v4423, %v4276
        %v4425 = vmul.f32 %v4423, %v4281
        %v4426 = vmul.f32 %v4423, %v4286
        %v4427 = vmul.f32 %v4423, %v4291
        %v4428 = vadd.f32 %v4348, %v4424
        %v4429 = vadd.f32 %v4349, %v4425
        %v4430 = vadd.f32 %v4350, %v4426
        %v4431 = vadd.f32 %v4351, %v4427
        %s4432 = sld [smem:[#allocation6 + $0x19f]]
        %v4433 = vstv %s4432
        %v4434 = vmul.f32 %v4433, %v4276
        %v4435 = vmul.f32 %v4433, %v4281
        %v4436 = vmul.f32 %v4433, %v4286
        %v4437 = vmul.f32 %v4433, %v4291
        %v4438 = vadd.f32 %v4358, %v4434
        %v4439 = vadd.f32 %v4359, %v4435
        %v4440 = vadd.f32 %v4360, %v4436
        %v4441 = vadd.f32 %v4361, %v4437
        %s4442 = sld [smem:[#allocation6 + $0x21f]]
        %v4443 = vstv %s4442
        %v4444 = vmul.f32 %v4443, %v4276
        %v4445 = vmul.f32 %v4443, %v4281
        %v4446 = vmul.f32 %v4443, %v4286
        %v4447 = vmul.f32 %v4443, %v4291
        %v4448 = vadd.f32 %v4368, %v4444
        %v4449 = vadd.f32 %v4369, %v4445
        %v4450 = vadd.f32 %v4370, %v4446
        %v4451 = vadd.f32 %v4371, %v4447
        %s4452 = sld [smem:[#allocation6 + $0x29f]]
        %v4453 = vstv %s4452
        %v4454 = vmul.f32 %v4453, %v4276
        %v4455 = vmul.f32 %v4453, %v4281
        %v4456 = vmul.f32 %v4453, %v4286
        %v4457 = vmul.f32 %v4453, %v4291
        %v4458 = vadd.f32 %v4378, %v4454
        %v4459 = vadd.f32 %v4379, %v4455
        %v4460 = vadd.f32 %v4380, %v4456
        %v4461 = vadd.f32 %v4381, %v4457
        %s4462 = sld [smem:[#allocation6 + $0x31f]]
        %v4463 = vstv %s4462
        %v4464 = vmul.f32 %v4463, %v4276
        %v4465 = vmul.f32 %v4463, %v4281
        %v4466 = vmul.f32 %v4463, %v4286
        %v4467 = vmul.f32 %v4463, %v4291
        %v4468 = vadd.f32 %v4388, %v4464
        %v4469 = vadd.f32 %v4389, %v4465
        %v4470 = vadd.f32 %v4390, %v4466
        %v4471 = vadd.f32 %v4391, %v4467
        %s4472 = sld [smem:[#allocation6 + $0x39f]]
        %v4473 = vstv %s4472
        %v4474 = vmul.f32 %v4473, %v4276
        %v4475 = vmul.f32 %v4473, %v4281
        %v4476 = vmul.f32 %v4473, %v4286
        %v4477 = vmul.f32 %v4473, %v4291
        %v4478 = vadd.f32 %v4398, %v4474
        %v4479 = vadd.f32 %v4399, %v4475
        %v4480 = vadd.f32 %v4400, %v4476
        %v4481 = vadd.f32 %v4401, %v4477
        %s4482 = sld [smem:[#allocation6 + $0x22]]
        %v4483 = vstv %s4482
        %v4484 = vmul.f32 %v4483, %v4312
        %v4485 = vmul.f32 %v4483, %v4314
        %v4486 = vmul.f32 %v4483, %v4316
        %v4487 = vmul.f32 %v4483, %v4321
        %v4488 = vadd.f32 %v4408, %v4484
        %v4489 = vadd.f32 %v4409, %v4485
        %v4490 = vadd.f32 %v4410, %v4486
        %v4491 = vadd.f32 %v4411, %v4487
        %s4492 = sld [smem:[#allocation6 + $0xa2]]
        %v4493 = vstv %s4492
        %v4494 = vmul.f32 %v4493, %v4312
        %v4495 = vmul.f32 %v4493, %v4314
        %v4496 = vmul.f32 %v4493, %v4316
        %v4497 = vmul.f32 %v4493, %v4321
        %v4498 = vadd.f32 %v4418, %v4494
        %v4499 = vadd.f32 %v4419, %v4495
        %v4500 = vadd.f32 %v4420, %v4496
        %v4501 = vadd.f32 %v4421, %v4497
        %s4502 = sld [smem:[#allocation6 + $0x122]]
        %v4503 = vstv %s4502
        %v4504 = vmul.f32 %v4503, %v4312
        %v4505 = vmul.f32 %v4503, %v4314
        %v4506 = vmul.f32 %v4503, %v4316
        %v4507 = vmul.f32 %v4503, %v4321
        %v4508 = vadd.f32 %v4428, %v4504
        %v4509 = vadd.f32 %v4429, %v4505
        %v4510 = vadd.f32 %v4430, %v4506
        %v4511 = vadd.f32 %v4431, %v4507
        %s4512 = sld [smem:[#allocation6 + $0x1a2]]
        %v4513 = vstv %s4512
        %v4514 = vmul.f32 %v4513, %v4312
        %v4515 = vmul.f32 %v4513, %v4314
        %v4516 = vmul.f32 %v4513, %v4316
        %v4517 = vmul.f32 %v4513, %v4321
        %v4518 = vadd.f32 %v4438, %v4514
        %v4519 = vadd.f32 %v4439, %v4515
        %v4520 = vadd.f32 %v4440, %v4516
        %v4521 = vadd.f32 %v4441, %v4517
        %s4522 = sld [smem:[#allocation6 + $0x222]]
        %v4523 = vstv %s4522
        %v4524 = vmul.f32 %v4523, %v4312
        %v4525 = vmul.f32 %v4523, %v4314
        %v4526 = vmul.f32 %v4523, %v4316
        %v4527 = vmul.f32 %v4523, %v4321
        %v4528 = vadd.f32 %v4448, %v4524
        %v4529 = vadd.f32 %v4449, %v4525
        %v4530 = vadd.f32 %v4450, %v4526
        %v4531 = vadd.f32 %v4451, %v4527
        %s4532 = sld [smem:[#allocation6 + $0x2a2]]
        %v4533 = vstv %s4532
        %v4534 = vmul.f32 %v4533, %v4312
        %v4535 = vmul.f32 %v4533, %v4314
        %v4536 = vmul.f32 %v4533, %v4316
        %v4537 = vmul.f32 %v4533, %v4321
        %v4538 = vadd.f32 %v4458, %v4534
        %v4539 = vadd.f32 %v4459, %v4535
        %v4540 = vadd.f32 %v4460, %v4536
        %v4541 = vadd.f32 %v4461, %v4537
        %s4542 = sld [smem:[#allocation6 + $0x322]]
        %v4543 = vstv %s4542
        %v4544 = vmul.f32 %v4543, %v4312
        %v4545 = vmul.f32 %v4543, %v4314
        %v4546 = vmul.f32 %v4543, %v4316
        %v4547 = vmul.f32 %v4543, %v4321
        %v4548 = vadd.f32 %v4468, %v4544
        %v4549 = vadd.f32 %v4469, %v4545
        %v4550 = vadd.f32 %v4470, %v4546
        %v4551 = vadd.f32 %v4471, %v4547
        %s4552 = sld [smem:[#allocation6 + $0x3a2]]
        %v4553 = vstv %s4552
        %v4554 = vmul.f32 %v4553, %v4312
        %v4555 = vmul.f32 %v4553, %v4314
        %v4556 = vmul.f32 %v4553, %v4316
        %v4557 = vmul.f32 %v4553, %v4321
        %v4558 = vadd.f32 %v4478, %v4554
        %v4559 = vadd.f32 %v4479, %v4555
        %v4560 = vadd.f32 %v4480, %v4556
        %v4561 = vadd.f32 %v4481, %v4557
        %4562 = vmatprep.subr.mxu0 0.0
        %4563 = vmatpush1.msra.mxu0 %v657
        %4564 = vmatprep.subr.mxu0 0.0
        %4565 = vmatpush1.msra.mxu0 %v662
        %4566 = vmatprep.subr.mxu0 0.0
        %4567 = vmatpush1.msra.mxu0 0.0
        %4568 = vmatprep.subr.mxu0 0.0
        %4569 = vmatpush1.msra.mxu0 0.0
        %4570 = vmatprep.subr.mxu0 0.0
        %4571 = vmatpush1.msra.mxu0 0.0
        %4572 = vmatprep.subr.mxu0 0.0
        %4573 = vmatpush1.msra.mxu0 0.0
        %4574 = vmatprep.subr.mxu0 0.0
        %4575 = vmatpush1.msra.mxu0 0.0
        %4576 = vmatprep.subr.mxu0 0.0
        %4577 = vmatpush1.msra.mxu0 0.0
        %4578 = vmatprep.subr.mxu0 0.0
        %4579 = vmatpush1.msra.mxu0 0.0
        %4580 = vmatprep.subr.mxu0 0.0
        %4581 = vmatpush1.msra.mxu0 0.0
        %4582 = vmatprep.subr.mxu0 0.0
        %4583 = vmatpush1.msra.mxu0 0.0
        %4584 = vmatprep.subr.mxu0 0.0
        %4585 = vmatpush1.msra.mxu0 0.0
        %4586 = vmatprep.subr.mxu0 0.0
        %4587 = vmatpush1.msra.mxu0 0.0
        %4588 = vmatprep.subr.mxu0 0.0
        %4589 = vmatpush1.msra.mxu0 0.0
        %4590 = vmatprep.subr.mxu0 0.0
        %4591 = vmatpush1.msra.mxu0 0.0
        %4592 = vmatprep.subr.mxu0 0.0
        %4593 = vmatpush1.msra.mxu0 0.0
        %4594 = vmatprep.subr.mxu0 0.0
        %4595 = vmatpush1.msra.mxu0 0.0
        %4596 = vmatprep.subr.mxu0 0.0
        %4597 = vmatpush1.msra.mxu0 0.0
        %4598 = vmatprep.subr.mxu0 0.0
        %4599 = vmatpush1.msra.mxu0 0.0
        %4600 = vmatprep.subr.mxu0 0.0
        %4601 = vmatpush1.msra.mxu0 0.0
        %4602 = vmatprep.subr.mxu0 0.0
        %4603 = vmatpush1.msra.mxu0 0.0
        %4604 = vmatprep.subr.mxu0 0.0
        %4605 = vmatpush1.msra.mxu0 0.0
        %4606 = vmatprep.subr.mxu0 0.0
        %4607 = vmatpush1.msra.mxu0 0.0
        %4608 = vmatprep.subr.mxu0 0.0
        %4609 = vmatpush1.msra.mxu0 0.0
        %4610 = vmatprep.subr.mxu0 0.0
        %4611 = vmatpush1.msra.mxu0 0.0
        %4612 = vmatprep.subr.mxu0 0.0
        %4613 = vmatpush1.msra.mxu0 0.0
        %4614 = vmatprep.subr.mxu0 0.0
        %4615 = vmatpush1.msra.mxu0 0.0
        %4616 = vmatprep.subr.mxu0 0.0
        %4617 = vmatpush1.msra.mxu0 0.0
        %4618 = vmatprep.subr.mxu0 0.0
        %4619 = vmatpush1.msra.mxu0 0.0
        %4620 = vmatprep.subr.mxu0 0.0
        %4621 = vmatpush1.msra.mxu0 0.0
        %4622 = vmatprep.subr.mxu0 0.0
        %4623 = vmatpush1.msra.mxu0 0.0
        %4624 = vmatprep.subr.mxu0 0.0
        %4625 = vmatpush1.msra.mxu0 0.0
        %4626 = vmatprep.mubr.f32.mxu0 0.0
        %4627 = vmatmul.mubr.f32.gmra.mrb[0].mxu0 %v666
        %v4628 = vpop.f32.mrb[0].mxu0
        %v4629 = vadd.f32 0.0, %v4628
        %v4630 = vpop.f32.mrb[0].mxu0
        %4631 = vmatprep.mubr.f32.mxu0 0.0
        %4632 = vmatmul.mubr.f32.gmra.mrb[0].mxu0 %v669
        %v4633 = vpop.f32.mrb[0].mxu0
        %v4634 = vadd.f32 0.0, %v4633
        %v4635 = vpop.f32.mrb[0].mxu0
        %4636 = vmatprep.mubr.f32.mxu0 0.0
        %4637 = vmatmul.mubr.f32.gmra.mrb[0].mxu0 %v672
        %v4638 = vpop.f32.mrb[0].mxu0
        %v4639 = vadd.f32 0.0, %v4638
        %v4640 = vpop.f32.mrb[0].mxu0
        %4641 = vmatprep.mubr.f32.mxu0 0.0
        %4642 = vmatmul.mubr.f32.gmra.mrb[0].mxu0 %v675
        %v4643 = vpop.f32.mrb[0].mxu0
        %v4644 = vadd.f32 0.0, %v4643
        %v4645 = vpop.f32.mrb[0].mxu0
        %4646 = vdwg.mxu0
        %v4651 = vrot.slane %v4629, 7
        %v4652 = vrot.slane %v4634, 7
        %v4653 = vsel %vm766, %v4651, %v4652
        %v4654 = vrot.slane %v4639, 7
        %v4655 = vsel %vm766, %v4652, %v4654
        %v4656 = vrot.slane %v4644, 7
        %v4657 = vsel %vm766, %v4654, %v4656
        %v4662 = vsel %vm766, 0.0, %v4651
        %v4663 = vrot.slane %v4629, 1
        %v4664 = vrot.slane %v4634, 1
        %v4665 = vsel %vm779, %v4663, %v4664
        %v4666 = vrot.slane %v4639, 1
        %v4667 = vsel %vm779, %v4664, %v4666
        %v4668 = vrot.slane %v4644, 1
        %v4669 = vsel %vm779, %v4666, %v4668
        %v4674 = vsel %vm779, %v4668, 0.0
        %s4675 = sld [smem:[#allocation6 + $0x1d]]
        %v4676 = vstv %s4675
        %v4677 = vmul.f32 %v4676, %v4662
        %v4678 = vmul.f32 %v4676, %v4653
        %v4679 = vmul.f32 %v4676, %v4655
        %v4680 = vmul.f32 %v4676, %v4657
        %v4681 = vadd.f32 %v4488, %v4677
        %v4682 = vadd.f32 %v4489, %v4678
        %v4683 = vadd.f32 %v4490, %v4679
        %v4684 = vadd.f32 %v4491, %v4680
        %s4685 = sld [smem:[#allocation6 + $0x9d]]
        %v4686 = vstv %s4685
        %v4687 = vmul.f32 %v4686, %v4662
        %v4688 = vmul.f32 %v4686, %v4653
        %v4689 = vmul.f32 %v4686, %v4655
        %v4690 = vmul.f32 %v4686, %v4657
        %v4691 = vadd.f32 %v4498, %v4687
        %v4692 = vadd.f32 %v4499, %v4688
        %v4693 = vadd.f32 %v4500, %v4689
        %v4694 = vadd.f32 %v4501, %v4690
        %s4695 = sld [smem:[#allocation6 + $0x11d]]
        %v4696 = vstv %s4695
        %v4697 = vmul.f32 %v4696, %v4662
        %v4698 = vmul.f32 %v4696, %v4653
        %v4699 = vmul.f32 %v4696, %v4655
        %v4700 = vmul.f32 %v4696, %v4657
        %v4701 = vadd.f32 %v4508, %v4697
        %v4702 = vadd.f32 %v4509, %v4698
        %v4703 = vadd.f32 %v4510, %v4699
        %v4704 = vadd.f32 %v4511, %v4700
        %s4705 = sld [smem:[#allocation6 + $0x19d]]
        %v4706 = vstv %s4705
        %v4707 = vmul.f32 %v4706, %v4662
        %v4708 = vmul.f32 %v4706, %v4653
        %v4709 = vmul.f32 %v4706, %v4655
        %v4710 = vmul.f32 %v4706, %v4657
        %v4711 = vadd.f32 %v4518, %v4707
        %v4712 = vadd.f32 %v4519, %v4708
        %v4713 = vadd.f32 %v4520, %v4709
        %v4714 = vadd.f32 %v4521, %v4710
        %s4715 = sld [smem:[#allocation6 + $0x21d]]
        %v4716 = vstv %s4715
        %v4717 = vmul.f32 %v4716, %v4662
        %v4718 = vmul.f32 %v4716, %v4653
        %v4719 = vmul.f32 %v4716, %v4655
        %v4720 = vmul.f32 %v4716, %v4657
        %v4721 = vadd.f32 %v4528, %v4717
        %v4722 = vadd.f32 %v4529, %v4718
        %v4723 = vadd.f32 %v4530, %v4719
        %v4724 = vadd.f32 %v4531, %v4720
        %s4725 = sld [smem:[#allocation6 + $0x29d]]
        %v4726 = vstv %s4725
        %v4727 = vmul.f32 %v4726, %v4662
        %v4728 = vmul.f32 %v4726, %v4653
        %v4729 = vmul.f32 %v4726, %v4655
        %v4730 = vmul.f32 %v4726, %v4657
        %v4731 = vadd.f32 %v4538, %v4727
        %v4732 = vadd.f32 %v4539, %v4728
        %v4733 = vadd.f32 %v4540, %v4729
        %v4734 = vadd.f32 %v4541, %v4730
        %s4735 = sld [smem:[#allocation6 + $0x31d]]
        %v4736 = vstv %s4735
        %v4737 = vmul.f32 %v4736, %v4662
        %v4738 = vmul.f32 %v4736, %v4653
        %v4739 = vmul.f32 %v4736, %v4655
        %v4740 = vmul.f32 %v4736, %v4657
        %v4741 = vadd.f32 %v4548, %v4737
        %v4742 = vadd.f32 %v4549, %v4738
        %v4743 = vadd.f32 %v4550, %v4739
        %v4744 = vadd.f32 %v4551, %v4740
        %s4745 = sld [smem:[#allocation6 + $0x39d]]
        %v4746 = vstv %s4745
        %v4747 = vmul.f32 %v4746, %v4662
        %v4748 = vmul.f32 %v4746, %v4653
        %v4749 = vmul.f32 %v4746, %v4655
        %v4750 = vmul.f32 %v4746, %v4657
        %v4751 = vadd.f32 %v4558, %v4747
        %v4752 = vadd.f32 %v4559, %v4748
        %v4753 = vadd.f32 %v4560, %v4749
        %v4754 = vadd.f32 %v4561, %v4750
        %s4755 = sld [smem:[#allocation6 + $0x20]]
        %v4756 = vstv %s4755
        %v4757 = vmul.f32 %v4756, %v4629
        %v4758 = vmul.f32 %v4756, %v4634
        %v4759 = vmul.f32 %v4756, %v4639
        %v4760 = vmul.f32 %v4756, %v4644
        %v4761 = vadd.f32 %v4681, %v4757
        %v4762 = vadd.f32 %v4682, %v4758
        %v4763 = vadd.f32 %v4683, %v4759
        %v4764 = vadd.f32 %v4684, %v4760
        %s4765 = sld [smem:[#allocation6 + $0xa0]]
        %v4766 = vstv %s4765
        %v4767 = vmul.f32 %v4766, %v4629
        %v4768 = vmul.f32 %v4766, %v4634
        %v4769 = vmul.f32 %v4766, %v4639
        %v4770 = vmul.f32 %v4766, %v4644
        %v4771 = vadd.f32 %v4691, %v4767
        %v4772 = vadd.f32 %v4692, %v4768
        %v4773 = vadd.f32 %v4693, %v4769
        %v4774 = vadd.f32 %v4694, %v4770
        %s4775 = sld [smem:[#allocation6 + $0x120]]
        %v4776 = vstv %s4775
        %v4777 = vmul.f32 %v4776, %v4629
        %v4778 = vmul.f32 %v4776, %v4634
        %v4779 = vmul.f32 %v4776, %v4639
        %v4780 = vmul.f32 %v4776, %v4644
        %v4781 = vadd.f32 %v4701, %v4777
        %v4782 = vadd.f32 %v4702, %v4778
        %v4783 = vadd.f32 %v4703, %v4779
        %v4784 = vadd.f32 %v4704, %v4780
        %s4785 = sld [smem:[#allocation6 + $0x1a0]]
        %v4786 = vstv %s4785
        %v4787 = vmul.f32 %v4786, %v4629
        %v4788 = vmul.f32 %v4786, %v4634
        %v4789 = vmul.f32 %v4786, %v4639
        %v4790 = vmul.f32 %v4786, %v4644
        %v4791 = vadd.f32 %v4711, %v4787
        %v4792 = vadd.f32 %v4712, %v4788
        %v4793 = vadd.f32 %v4713, %v4789
        %v4794 = vadd.f32 %v4714, %v4790
        %s4795 = sld [smem:[#allocation6 + $0x220]]
        %v4796 = vstv %s4795
        %v4797 = vmul.f32 %v4796, %v4629
        %v4798 = vmul.f32 %v4796, %v4634
        %v4799 = vmul.f32 %v4796, %v4639
        %v4800 = vmul.f32 %v4796, %v4644
        %v4801 = vadd.f32 %v4721, %v4797
        %v4802 = vadd.f32 %v4722, %v4798
        %v4803 = vadd.f32 %v4723, %v4799
        %v4804 = vadd.f32 %v4724, %v4800
        %s4805 = sld [smem:[#allocation6 + $0x2a0]]
        %v4806 = vstv %s4805
        %v4807 = vmul.f32 %v4806, %v4629
        %v4808 = vmul.f32 %v4806, %v4634
        %v4809 = vmul.f32 %v4806, %v4639
        %v4810 = vmul.f32 %v4806, %v4644
        %v4811 = vadd.f32 %v4731, %v4807
        %v4812 = vadd.f32 %v4732, %v4808
        %v4813 = vadd.f32 %v4733, %v4809
        %v4814 = vadd.f32 %v4734, %v4810
        %s4815 = sld [smem:[#allocation6 + $0x320]]
        %v4816 = vstv %s4815
        %v4817 = vmul.f32 %v4816, %v4629
        %v4818 = vmul.f32 %v4816, %v4634
        %v4819 = vmul.f32 %v4816, %v4639
        %v4820 = vmul.f32 %v4816, %v4644
        %v4821 = vadd.f32 %v4741, %v4817
        %v4822 = vadd.f32 %v4742, %v4818
        %v4823 = vadd.f32 %v4743, %v4819
        %v4824 = vadd.f32 %v4744, %v4820
        %s4825 = sld [smem:[#allocation6 + $0x3a0]]
        %v4826 = vstv %s4825
        %v4827 = vmul.f32 %v4826, %v4629
        %v4828 = vmul.f32 %v4826, %v4634
        %v4829 = vmul.f32 %v4826, %v4639
        %v4830 = vmul.f32 %v4826, %v4644
        %v4831 = vadd.f32 %v4751, %v4827
        %v4832 = vadd.f32 %v4752, %v4828
        %v4833 = vadd.f32 %v4753, %v4829
        %v4834 = vadd.f32 %v4754, %v4830
        %s4835 = sld [smem:[#allocation6 + $0x23]]
        %v4836 = vstv %s4835
        %v4837 = vmul.f32 %v4836, %v4665
        %v4838 = vmul.f32 %v4836, %v4667
        %v4839 = vmul.f32 %v4836, %v4669
        %v4840 = vmul.f32 %v4836, %v4674
        %v4841 = vadd.f32 %v4761, %v4837
        %v4842 = vadd.f32 %v4762, %v4838
        %v4843 = vadd.f32 %v4763, %v4839
        %v4844 = vadd.f32 %v4764, %v4840
        %s4845 = sld [smem:[#allocation6 + $0xa3]]
        %v4846 = vstv %s4845
        %v4847 = vmul.f32 %v4846, %v4665
        %v4848 = vmul.f32 %v4846, %v4667
        %v4849 = vmul.f32 %v4846, %v4669
        %v4850 = vmul.f32 %v4846, %v4674
        %v4851 = vadd.f32 %v4771, %v4847
        %v4852 = vadd.f32 %v4772, %v4848
        %v4853 = vadd.f32 %v4773, %v4849
        %v4854 = vadd.f32 %v4774, %v4850
        %s4855 = sld [smem:[#allocation6 + $0x123]]
        %v4856 = vstv %s4855
        %v4857 = vmul.f32 %v4856, %v4665
        %v4858 = vmul.f32 %v4856, %v4667
        %v4859 = vmul.f32 %v4856, %v4669
        %v4860 = vmul.f32 %v4856, %v4674
        %v4861 = vadd.f32 %v4781, %v4857
        %v4862 = vadd.f32 %v4782, %v4858
        %v4863 = vadd.f32 %v4783, %v4859
        %v4864 = vadd.f32 %v4784, %v4860
        %s4865 = sld [smem:[#allocation6 + $0x1a3]]
        %v4866 = vstv %s4865
        %v4867 = vmul.f32 %v4866, %v4665
        %v4868 = vmul.f32 %v4866, %v4667
        %v4869 = vmul.f32 %v4866, %v4669
        %v4870 = vmul.f32 %v4866, %v4674
        %v4871 = vadd.f32 %v4791, %v4867
        %v4872 = vadd.f32 %v4792, %v4868
        %v4873 = vadd.f32 %v4793, %v4869
        %v4874 = vadd.f32 %v4794, %v4870
        %s4875 = sld [smem:[#allocation6 + $0x223]]
        %v4876 = vstv %s4875
        %v4877 = vmul.f32 %v4876, %v4665
        %v4878 = vmul.f32 %v4876, %v4667
        %v4879 = vmul.f32 %v4876, %v4669
        %v4880 = vmul.f32 %v4876, %v4674
        %v4881 = vadd.f32 %v4801, %v4877
        %v4882 = vadd.f32 %v4802, %v4878
        %v4883 = vadd.f32 %v4803, %v4879
        %v4884 = vadd.f32 %v4804, %v4880
        %s4885 = sld [smem:[#allocation6 + $0x2a3]]
        %v4886 = vstv %s4885
        %v4887 = vmul.f32 %v4886, %v4665
        %v4888 = vmul.f32 %v4886, %v4667
        %v4889 = vmul.f32 %v4886, %v4669
        %v4890 = vmul.f32 %v4886, %v4674
        %v4891 = vadd.f32 %v4811, %v4887
        %v4892 = vadd.f32 %v4812, %v4888
        %v4893 = vadd.f32 %v4813, %v4889
        %v4894 = vadd.f32 %v4814, %v4890
        %s4895 = sld [smem:[#allocation6 + $0x323]]
        %v4896 = vstv %s4895
        %v4897 = vmul.f32 %v4896, %v4665
        %v4898 = vmul.f32 %v4896, %v4667
        %v4899 = vmul.f32 %v4896, %v4669
        %v4900 = vmul.f32 %v4896, %v4674
        %v4901 = vadd.f32 %v4821, %v4897
        %v4902 = vadd.f32 %v4822, %v4898
        %v4903 = vadd.f32 %v4823, %v4899
        %v4904 = vadd.f32 %v4824, %v4900
        %s4905 = sld [smem:[#allocation6 + $0x3a3]]
        %v4906 = vstv %s4905
        %v4907 = vmul.f32 %v4906, %v4665
        %v4908 = vmul.f32 %v4906, %v4667
        %v4909 = vmul.f32 %v4906, %v4669
        %v4910 = vmul.f32 %v4906, %v4674
        %v4911 = vadd.f32 %v4831, %v4907
        %v4912 = vadd.f32 %v4832, %v4908
        %v4913 = vadd.f32 %v4833, %v4909
        %v4914 = vadd.f32 %v4834, %v4910
        %vm4915 = vcmask 261120
        %4916 = vst.msk [vmem:[%s284] sm:$0xff] %vm4915, %v4841
        %4917 = vst.msk [vmem:[%s284 + $0x8] sm:$0xff] %vm4915, %v4842
        %4918 = vst.msk [vmem:[%s284 + $0x10] sm:$0xff] %vm4915, %v4843
        %4919 = vst.msk [vmem:[%s284 + $0x18] sm:$0xff] %vm4915, %v4844
        %4920 = vst.msk [vmem:[%s284 + $0x20] sm:$0xff] %vm4915, %v4851
        %4921 = vst.msk [vmem:[%s284 + $0x28] sm:$0xff] %vm4915, %v4852
        %4922 = vst.msk [vmem:[%s284 + $0x30] sm:$0xff] %vm4915, %v4853
        %4923 = vst.msk [vmem:[%s284 + $0x38] sm:$0xff] %vm4915, %v4854
        %4924 = vst.msk [vmem:[%s284 + $0x40] sm:$0xff] %vm4915, %v4861
        %4925 = vst.msk [vmem:[%s284 + $0x48] sm:$0xff] %vm4915, %v4862
        %4926 = vst.msk [vmem:[%s284 + $0x50] sm:$0xff] %vm4915, %v4863
        %4927 = vst.msk [vmem:[%s284 + $0x58] sm:$0xff] %vm4915, %v4864
        %4928 = vst.msk [vmem:[%s284 + $0x60] sm:$0xff] %vm4915, %v4871
        %4929 = vst.msk [vmem:[%s284 + $0x68] sm:$0xff] %vm4915, %v4872
        %4930 = vst.msk [vmem:[%s284 + $0x70] sm:$0xff] %vm4915, %v4873
        %4931 = vst.msk [vmem:[%s284 + $0x78] sm:$0xff] %vm4915, %v4874
        %4932 = vst.msk [vmem:[%s284 + $0x80] sm:$0xff] %vm4915, %v4881
        %4933 = vst.msk [vmem:[%s284 + $0x88] sm:$0xff] %vm4915, %v4882
        %4934 = vst.msk [vmem:[%s284 + $0x90] sm:$0xff] %vm4915, %v4883
        %4935 = vst.msk [vmem:[%s284 + $0x98] sm:$0xff] %vm4915, %v4884
        %4936 = vst.msk [vmem:[%s284 + $0xa0] sm:$0xff] %vm4915, %v4891
        %4937 = vst.msk [vmem:[%s284 + $0xa8] sm:$0xff] %vm4915, %v4892
        %4938 = vst.msk [vmem:[%s284 + $0xb0] sm:$0xff] %vm4915, %v4893
        %4939 = vst.msk [vmem:[%s284 + $0xb8] sm:$0xff] %vm4915, %v4894
        %4940 = vst.msk [vmem:[%s284 + $0xc0] sm:$0xff] %vm4915, %v4901
        %4941 = vst.msk [vmem:[%s284 + $0xc8] sm:$0xff] %vm4915, %v4902
        %4942 = vst.msk [vmem:[%s284 + $0xd0] sm:$0xff] %vm4915, %v4903
        %4943 = vst.msk [vmem:[%s284 + $0xd8] sm:$0xff] %vm4915, %v4904
        %4944 = vst.msk [vmem:[%s284 + $0xe0] sm:$0xff] %vm4915, %v4911
        %4945 = vst.msk [vmem:[%s284 + $0xe8] sm:$0xff] %vm4915, %v4912
        %4946 = vst.msk [vmem:[%s284 + $0xf0] sm:$0xff] %vm4915, %v4913
        %4947 = vst.msk [vmem:[%s284 + $0xf8] sm:$0xff] %vm4915, %v4914
        %v4948 = vsel %vm4915, %v4841, 0.0
        %4949 = vadd.xlane.f32.xlu0 %v4948
        %v4950 = vpop.xlane.xlu0 %4949
        %v4951 = vsel %vm4915, %v4842, 0.0
        %4952 = vadd.xlane.f32.xlu0 %v4951
        %v4953 = vpop.xlane.xlu0 %4952
        %v4954 = vsel %vm4915, %v4843, 0.0
        %4955 = vadd.xlane.f32.xlu0 %v4954
        %v4956 = vpop.xlane.xlu0 %4955
        %v4957 = vsel %vm4915, %v4844, 0.0
        %4958 = vadd.xlane.f32.xlu0 %v4957
        %v4959 = vpop.xlane.xlu0 %4958
        %v4960 = vsel %vm4915, %v4851, 0.0
        %4961 = vadd.xlane.f32.xlu0 %v4960
        %v4962 = vpop.xlane.xlu0 %4961
        %v4963 = vsel %vm4915, %v4852, 0.0
        %4964 = vadd.xlane.f32.xlu0 %v4963
        %v4965 = vpop.xlane.xlu0 %4964
        %v4966 = vsel %vm4915, %v4853, 0.0
        %4967 = vadd.xlane.f32.xlu0 %v4966
        %v4968 = vpop.xlane.xlu0 %4967
        %v4969 = vsel %vm4915, %v4854, 0.0
        %4970 = vadd.xlane.f32.xlu0 %v4969
        %v4971 = vpop.xlane.xlu0 %4970
        %v4972 = vsel %vm4915, %v4861, 0.0
        %4973 = vadd.xlane.f32.xlu0 %v4972
        %v4974 = vpop.xlane.xlu0 %4973
        %v4975 = vsel %vm4915, %v4862, 0.0
        %4976 = vadd.xlane.f32.xlu0 %v4975
        %v4977 = vpop.xlane.xlu0 %4976
        %v4978 = vsel %vm4915, %v4863, 0.0
        %4979 = vadd.xlane.f32.xlu0 %v4978
        %v4980 = vpop.xlane.xlu0 %4979
        %v4981 = vsel %vm4915, %v4864, 0.0
        %4982 = vadd.xlane.f32.xlu0 %v4981
        %v4983 = vpop.xlane.xlu0 %4982
        %v4984 = vsel %vm4915, %v4871, 0.0
        %4985 = vadd.xlane.f32.xlu0 %v4984
        %v4986 = vpop.xlane.xlu0 %4985
        %v4987 = vsel %vm4915, %v4872, 0.0
        %4988 = vadd.xlane.f32.xlu0 %v4987
        %v4989 = vpop.xlane.xlu0 %4988
        %v4990 = vsel %vm4915, %v4873, 0.0
        %4991 = vadd.xlane.f32.xlu0 %v4990
        %v4992 = vpop.xlane.xlu0 %4991
        %v4993 = vsel %vm4915, %v4874, 0.0
        %4994 = vadd.xlane.f32.xlu0 %v4993
        %v4995 = vpop.xlane.xlu0 %4994
        %v4996 = vsel %vm4915, %v4881, 0.0
        %4997 = vadd.xlane.f32.xlu0 %v4996
        %v4998 = vpop.xlane.xlu0 %4997
        %v4999 = vsel %vm4915, %v4882, 0.0
        %5000 = vadd.xlane.f32.xlu0 %v4999
        %v5001 = vpop.xlane.xlu0 %5000
        %v5002 = vsel %vm4915, %v4883, 0.0
        %5003 = vadd.xlane.f32.xlu0 %v5002
        %v5004 = vpop.xlane.xlu0 %5003
        %v5005 = vsel %vm4915, %v4884, 0.0
        %5006 = vadd.xlane.f32.xlu0 %v5005
        %v5007 = vpop.xlane.xlu0 %5006
        %v5008 = vsel %vm4915, %v4891, 0.0
        %5009 = vadd.xlane.f32.xlu0 %v5008
        %v5010 = vpop.xlane.xlu0 %5009
        %v5011 = vsel %vm4915, %v4892, 0.0
        %5012 = vadd.xlane.f32.xlu0 %v5011
        %v5013 = vpop.xlane.xlu0 %5012
        %v5014 = vsel %vm4915, %v4893, 0.0
        %5015 = vadd.xlane.f32.xlu0 %v5014
        %v5016 = vpop.xlane.xlu0 %5015
        %v5017 = vsel %vm4915, %v4894, 0.0
        %5018 = vadd.xlane.f32.xlu0 %v5017
        %v5019 = vpop.xlane.xlu0 %5018
        %v5020 = vsel %vm4915, %v4901, 0.0
        %5021 = vadd.xlane.f32.xlu0 %v5020
        %v5022 = vpop.xlane.xlu0 %5021
        %v5023 = vsel %vm4915, %v4902, 0.0
        %5024 = vadd.xlane.f32.xlu0 %v5023
        %v5025 = vpop.xlane.xlu0 %5024
        %v5026 = vsel %vm4915, %v4903, 0.0
        %5027 = vadd.xlane.f32.xlu0 %v5026
        %v5028 = vpop.xlane.xlu0 %5027
        %v5029 = vsel %vm4915, %v4904, 0.0
        %5030 = vadd.xlane.f32.xlu0 %v5029
        %v5031 = vpop.xlane.xlu0 %5030
        %v5032 = vsel %vm4915, %v4911, 0.0
        %5033 = vadd.xlane.f32.xlu0 %v5032
        %v5034 = vpop.xlane.xlu0 %5033
        %v5035 = vsel %vm4915, %v4912, 0.0
        %5036 = vadd.xlane.f32.xlu0 %v5035
        %v5037 = vpop.xlane.xlu0 %5036
        %v5038 = vsel %vm4915, %v4913, 0.0
        %5039 = vadd.xlane.f32.xlu0 %v5038
        %v5040 = vpop.xlane.xlu0 %5039
        %v5041 = vsel %vm4915, %v4914, 0.0
        %5042 = vadd.xlane.f32.xlu0 %v5041
        %v5043 = vpop.xlane.xlu0 %5042
        %v5044 = vadd.f32 %v4950, %v4953
        %v5045 = vadd.f32 %v5044, %v4956
        %v5046 = vadd.f32 %v5045, %v4959
        %v5047 = vrot.slane %v5046, 4
        %v5048 = vadd.f32 %v5046, %v5047
        %v5049 = vrot.slane %v5048, 2
        %v5050 = vadd.f32 %v5048, %v5049
        %v5051 = vrot.slane %v5050, 1
        %v5052 = vadd.f32 %v5050, %v5051
        %v5053 = vadd.f32 %v4962, %v4965
        %v5054 = vadd.f32 %v5053, %v4968
        %v5055 = vadd.f32 %v5054, %v4971
        %v5056 = vrot.slane %v5055, 4
        %v5057 = vadd.f32 %v5055, %v5056
        %v5058 = vrot.slane %v5057, 2
        %v5059 = vadd.f32 %v5057, %v5058
        %v5060 = vrot.slane %v5059, 1
        %v5061 = vadd.f32 %v5059, %v5060
        %v5062 = vadd.f32 %v4974, %v4977
        %v5063 = vadd.f32 %v5062, %v4980
        %v5064 = vadd.f32 %v5063, %v4983
        %v5065 = vrot.slane %v5064, 4
        %v5066 = vadd.f32 %v5064, %v5065
        %v5067 = vrot.slane %v5066, 2
        %v5068 = vadd.f32 %v5066, %v5067
        %v5069 = vrot.slane %v5068, 1
        %v5070 = vadd.f32 %v5068, %v5069
        %v5071 = vadd.f32 %v4986, %v4989
        %v5072 = vadd.f32 %v5071, %v4992
        %v5073 = vadd.f32 %v5072, %v4995
        %v5074 = vrot.slane %v5073, 4
        %v5075 = vadd.f32 %v5073, %v5074
        %v5076 = vrot.slane %v5075, 2
        %v5077 = vadd.f32 %v5075, %v5076
        %v5078 = vrot.slane %v5077, 1
        %v5079 = vadd.f32 %v5077, %v5078
        %v5080 = vadd.f32 %v4998, %v5001
        %v5081 = vadd.f32 %v5080, %v5004
        %v5082 = vadd.f32 %v5081, %v5007
        %v5083 = vrot.slane %v5082, 4
        %v5084 = vadd.f32 %v5082, %v5083
        %v5085 = vrot.slane %v5084, 2
        %v5086 = vadd.f32 %v5084, %v5085
        %v5087 = vrot.slane %v5086, 1
        %v5088 = vadd.f32 %v5086, %v5087
        %v5089 = vadd.f32 %v5010, %v5013
        %v5090 = vadd.f32 %v5089, %v5016
        %v5091 = vadd.f32 %v5090, %v5019
        %v5092 = vrot.slane %v5091, 4
        %v5093 = vadd.f32 %v5091, %v5092
        %v5094 = vrot.slane %v5093, 2
        %v5095 = vadd.f32 %v5093, %v5094
        %v5096 = vrot.slane %v5095, 1
        %v5097 = vadd.f32 %v5095, %v5096
        %v5098 = vadd.f32 %v5022, %v5025
        %v5099 = vadd.f32 %v5098, %v5028
        %v5100 = vadd.f32 %v5099, %v5031
        %v5101 = vrot.slane %v5100, 4
        %v5102 = vadd.f32 %v5100, %v5101
        %v5103 = vrot.slane %v5102, 2
        %v5104 = vadd.f32 %v5102, %v5103
        %v5105 = vrot.slane %v5104, 1
        %v5106 = vadd.f32 %v5104, %v5105
        %v5107 = vadd.f32 %v5034, %v5037
        %v5108 = vadd.f32 %v5107, %v5040
        %v5109 = vadd.f32 %v5108, %v5043
        %v5110 = vrot.slane %v5109, 4
        %v5111 = vadd.f32 %v5109, %v5110
        %v5112 = vrot.slane %v5111, 2
        %v5113 = vadd.f32 %v5111, %v5112
        %v5114 = vrot.slane %v5113, 1
        %v5115 = vadd.f32 %v5113, %v5114
        %vm5116 = vcmask 0
        %5117 = vst.msk [vmem:[%s300] sm:$0x1] %vm5116, %v5052
        %5118 = vst.msk [vmem:[%s300 + $0x1] sm:$0x1] %vm5116, %v5061
        %5119 = vst.msk [vmem:[%s300 + $0x2] sm:$0x1] %vm5116, %v5070
        %5120 = vst.msk [vmem:[%s300 + $0x3] sm:$0x1] %vm5116, %v5079
        %5121 = vst.msk [vmem:[%s300 + $0x4] sm:$0x1] %vm5116, %v5088
        %5122 = vst.msk [vmem:[%s300 + $0x5] sm:$0x1] %vm5116, %v5097
        %5123 = vst.msk [vmem:[%s300 + $0x6] sm:$0x1] %vm5116, %v5106
        %5124 = vst.msk [vmem:[%s300 + $0x7] sm:$0x1] %vm5116, %v5115
        %v5125 = vmul.f32 %v4841, %v4841
        %v5126 = vmul.f32 %v4842, %v4842
        %v5127 = vmul.f32 %v4843, %v4843
        %v5128 = vmul.f32 %v4844, %v4844
        %v5129 = vmul.f32 %v4851, %v4851
        %v5130 = vmul.f32 %v4852, %v4852
        %v5131 = vmul.f32 %v4853, %v4853
        %v5132 = vmul.f32 %v4854, %v4854
        %v5133 = vmul.f32 %v4861, %v4861
        %v5134 = vmul.f32 %v4862, %v4862
        %v5135 = vmul.f32 %v4863, %v4863
        %v5136 = vmul.f32 %v4864, %v4864
        %v5137 = vmul.f32 %v4871, %v4871
        %v5138 = vmul.f32 %v4872, %v4872
        %v5139 = vmul.f32 %v4873, %v4873
        %v5140 = vmul.f32 %v4874, %v4874
        %v5141 = vmul.f32 %v4881, %v4881
        %v5142 = vmul.f32 %v4882, %v4882
        %v5143 = vmul.f32 %v4883, %v4883
        %v5144 = vmul.f32 %v4884, %v4884
        %v5145 = vmul.f32 %v4891, %v4891
        %v5146 = vmul.f32 %v4892, %v4892
        %v5147 = vmul.f32 %v4893, %v4893
        %v5148 = vmul.f32 %v4894, %v4894
        %v5149 = vmul.f32 %v4901, %v4901
        %v5150 = vmul.f32 %v4902, %v4902
        %v5151 = vmul.f32 %v4903, %v4903
        %v5152 = vmul.f32 %v4904, %v4904
        %v5153 = vmul.f32 %v4911, %v4911
        %v5154 = vmul.f32 %v4912, %v4912
        %v5155 = vmul.f32 %v4913, %v4913
        %v5156 = vmul.f32 %v4914, %v4914
        %v5157 = vsel %vm4915, %v5125, 0.0
        %5158 = vadd.xlane.f32.xlu0 %v5157
        %v5159 = vpop.xlane.xlu0 %5158
        %v5160 = vsel %vm4915, %v5126, 0.0
        %5161 = vadd.xlane.f32.xlu0 %v5160
        %v5162 = vpop.xlane.xlu0 %5161
        %v5163 = vsel %vm4915, %v5127, 0.0
        %5164 = vadd.xlane.f32.xlu0 %v5163
        %v5165 = vpop.xlane.xlu0 %5164
        %v5166 = vsel %vm4915, %v5128, 0.0
        %5167 = vadd.xlane.f32.xlu0 %v5166
        %v5168 = vpop.xlane.xlu0 %5167
        %v5169 = vsel %vm4915, %v5129, 0.0
        %5170 = vadd.xlane.f32.xlu0 %v5169
        %v5171 = vpop.xlane.xlu0 %5170
        %v5172 = vsel %vm4915, %v5130, 0.0
        %5173 = vadd.xlane.f32.xlu0 %v5172
        %v5174 = vpop.xlane.xlu0 %5173
        %v5175 = vsel %vm4915, %v5131, 0.0
        %5176 = vadd.xlane.f32.xlu0 %v5175
        %v5177 = vpop.xlane.xlu0 %5176
        %v5178 = vsel %vm4915, %v5132, 0.0
        %5179 = vadd.xlane.f32.xlu0 %v5178
        %v5180 = vpop.xlane.xlu0 %5179
        %v5181 = vsel %vm4915, %v5133, 0.0
        %5182 = vadd.xlane.f32.xlu0 %v5181
        %v5183 = vpop.xlane.xlu0 %5182
        %v5184 = vsel %vm4915, %v5134, 0.0
        %5185 = vadd.xlane.f32.xlu0 %v5184
        %v5186 = vpop.xlane.xlu0 %5185
        %v5187 = vsel %vm4915, %v5135, 0.0
        %5188 = vadd.xlane.f32.xlu0 %v5187
        %v5189 = vpop.xlane.xlu0 %5188
        %v5190 = vsel %vm4915, %v5136, 0.0
        %5191 = vadd.xlane.f32.xlu0 %v5190
        %v5192 = vpop.xlane.xlu0 %5191
        %v5193 = vsel %vm4915, %v5137, 0.0
        %5194 = vadd.xlane.f32.xlu0 %v5193
        %v5195 = vpop.xlane.xlu0 %5194
        %v5196 = vsel %vm4915, %v5138, 0.0
        %5197 = vadd.xlane.f32.xlu0 %v5196
        %v5198 = vpop.xlane.xlu0 %5197
        %v5199 = vsel %vm4915, %v5139, 0.0
        %5200 = vadd.xlane.f32.xlu0 %v5199
        %v5201 = vpop.xlane.xlu0 %5200
        %v5202 = vsel %vm4915, %v5140, 0.0
        %5203 = vadd.xlane.f32.xlu0 %v5202
        %v5204 = vpop.xlane.xlu0 %5203
        %v5205 = vsel %vm4915, %v5141, 0.0
        %5206 = vadd.xlane.f32.xlu0 %v5205
        %v5207 = vpop.xlane.xlu0 %5206
        %v5208 = vsel %vm4915, %v5142, 0.0
        %5209 = vadd.xlane.f32.xlu0 %v5208
        %v5210 = vpop.xlane.xlu0 %5209
        %v5211 = vsel %vm4915, %v5143, 0.0
        %5212 = vadd.xlane.f32.xlu0 %v5211
        %v5213 = vpop.xlane.xlu0 %5212
        %v5214 = vsel %vm4915, %v5144, 0.0
        %5215 = vadd.xlane.f32.xlu0 %v5214
        %v5216 = vpop.xlane.xlu0 %5215
        %v5217 = vsel %vm4915, %v5145, 0.0
        %5218 = vadd.xlane.f32.xlu0 %v5217
        %v5219 = vpop.xlane.xlu0 %5218
        %v5220 = vsel %vm4915, %v5146, 0.0
        %5221 = vadd.xlane.f32.xlu0 %v5220
        %v5222 = vpop.xlane.xlu0 %5221
        %v5223 = vsel %vm4915, %v5147, 0.0
        %5224 = vadd.xlane.f32.xlu0 %v5223
        %v5225 = vpop.xlane.xlu0 %5224
        %v5226 = vsel %vm4915, %v5148, 0.0
        %5227 = vadd.xlane.f32.xlu0 %v5226
        %v5228 = vpop.xlane.xlu0 %5227
        %v5229 = vsel %vm4915, %v5149, 0.0
        %5230 = vadd.xlane.f32.xlu0 %v5229
        %v5231 = vpop.xlane.xlu0 %5230
        %v5232 = vsel %vm4915, %v5150, 0.0
        %5233 = vadd.xlane.f32.xlu0 %v5232
        %v5234 = vpop.xlane.xlu0 %5233
        %v5235 = vsel %vm4915, %v5151, 0.0
        %5236 = vadd.xlane.f32.xlu0 %v5235
        %v5237 = vpop.xlane.xlu0 %5236
        %v5238 = vsel %vm4915, %v5152, 0.0
        %5239 = vadd.xlane.f32.xlu0 %v5238
        %v5240 = vpop.xlane.xlu0 %5239
        %v5241 = vsel %vm4915, %v5153, 0.0
        %5242 = vadd.xlane.f32.xlu0 %v5241
        %v5243 = vpop.xlane.xlu0 %5242
        %v5244 = vsel %vm4915, %v5154, 0.0
        %5245 = vadd.xlane.f32.xlu0 %v5244
        %v5246 = vpop.xlane.xlu0 %5245
        %v5247 = vsel %vm4915, %v5155, 0.0
        %5248 = vadd.xlane.f32.xlu0 %v5247
        %v5249 = vpop.xlane.xlu0 %5248
        %v5250 = vsel %vm4915, %v5156, 0.0
        %5251 = vadd.xlane.f32.xlu0 %v5250
        %v5252 = vpop.xlane.xlu0 %5251
        %v5253 = vadd.f32 %v5159, %v5162
        %v5254 = vadd.f32 %v5253, %v5165
        %v5255 = vadd.f32 %v5254, %v5168
        %v5256 = vrot.slane %v5255, 4
        %v5257 = vadd.f32 %v5255, %v5256
        %v5258 = vrot.slane %v5257, 2
        %v5259 = vadd.f32 %v5257, %v5258
        %v5260 = vrot.slane %v5259, 1
        %v5261 = vadd.f32 %v5259, %v5260
        %v5262 = vadd.f32 %v5171, %v5174
        %v5263 = vadd.f32 %v5262, %v5177
        %v5264 = vadd.f32 %v5263, %v5180
        %v5265 = vrot.slane %v5264, 4
        %v5266 = vadd.f32 %v5264, %v5265
        %v5267 = vrot.slane %v5266, 2
        %v5268 = vadd.f32 %v5266, %v5267
        %v5269 = vrot.slane %v5268, 1
        %v5270 = vadd.f32 %v5268, %v5269
        %v5271 = vadd.f32 %v5183, %v5186
        %v5272 = vadd.f32 %v5271, %v5189
        %v5273 = vadd.f32 %v5272, %v5192
        %v5274 = vrot.slane %v5273, 4
        %v5275 = vadd.f32 %v5273, %v5274
        %v5276 = vrot.slane %v5275, 2
        %v5277 = vadd.f32 %v5275, %v5276
        %v5278 = vrot.slane %v5277, 1
        %v5279 = vadd.f32 %v5277, %v5278
        %v5280 = vadd.f32 %v5195, %v5198
        %v5281 = vadd.f32 %v5280, %v5201
        %v5282 = vadd.f32 %v5281, %v5204
        %v5283 = vrot.slane %v5282, 4
        %v5284 = vadd.f32 %v5282, %v5283
        %v5285 = vrot.slane %v5284, 2
        %v5286 = vadd.f32 %v5284, %v5285
        %v5287 = vrot.slane %v5286, 1
        %v5288 = vadd.f32 %v5286, %v5287
        %v5289 = vadd.f32 %v5207, %v5210
        %v5290 = vadd.f32 %v5289, %v5213
        %v5291 = vadd.f32 %v5290, %v5216
        %v5292 = vrot.slane %v5291, 4
        %v5293 = vadd.f32 %v5291, %v5292
        %v5294 = vrot.slane %v5293, 2
        %v5295 = vadd.f32 %v5293, %v5294
        %v5296 = vrot.slane %v5295, 1
        %v5297 = vadd.f32 %v5295, %v5296
        %v5298 = vadd.f32 %v5219, %v5222
        %v5299 = vadd.f32 %v5298, %v5225
        %v5300 = vadd.f32 %v5299, %v5228
        %v5301 = vrot.slane %v5300, 4
        %v5302 = vadd.f32 %v5300, %v5301
        %v5303 = vrot.slane %v5302, 2
        %v5304 = vadd.f32 %v5302, %v5303
        %v5305 = vrot.slane %v5304, 1
        %v5306 = vadd.f32 %v5304, %v5305
        %v5307 = vadd.f32 %v5231, %v5234
        %v5308 = vadd.f32 %v5307, %v5237
        %v5309 = vadd.f32 %v5308, %v5240
        %v5310 = vrot.slane %v5309, 4
        %v5311 = vadd.f32 %v5309, %v5310
        %v5312 = vrot.slane %v5311, 2
        %v5313 = vadd.f32 %v5311, %v5312
        %v5314 = vrot.slane %v5313, 1
        %v5315 = vadd.f32 %v5313, %v5314
        %v5316 = vadd.f32 %v5243, %v5246
        %v5317 = vadd.f32 %v5316, %v5249
        %v5318 = vadd.f32 %v5317, %v5252
        %v5319 = vrot.slane %v5318, 4
        %v5320 = vadd.f32 %v5318, %v5319
        %v5321 = vrot.slane %v5320, 2
        %v5322 = vadd.f32 %v5320, %v5321
        %v5323 = vrot.slane %v5322, 1
        %v5324 = vadd.f32 %v5322, %v5323
        %5325 = vst.msk [vmem:[%s304] sm:$0x1] %vm5116, %v5261
        %5326 = vst.msk [vmem:[%s304 + $0x1] sm:$0x1] %vm5116, %v5270
        %5327 = vst.msk [vmem:[%s304 + $0x2] sm:$0x1] %vm5116, %v5279
        %5328 = vst.msk [vmem:[%s304 + $0x3] sm:$0x1] %vm5116, %v5288
        %5329 = vst.msk [vmem:[%s304 + $0x4] sm:$0x1] %vm5116, %v5297
        %5330 = vst.msk [vmem:[%s304 + $0x5] sm:$0x1] %vm5116, %v5306
        %5331 = vst.msk [vmem:[%s304 + $0x6] sm:$0x1] %vm5116, %v5315
        %5332 = vst.msk [vmem:[%s304 + $0x7] sm:$0x1] %vm5116, %v5324
        %s5333 = sand.u32 %s122, 1
        %s5334 = scalar_lea.sflag [#allocation4], %s5333
        %s5335 = sand.u32 %s122, 1
        %s5336 = smul.addr %s5335, 256
        %s5337 = scalar_lea.vmem [#allocation7], %s5336
        %p5338 = scmp.lt.s32.totalorder %s25, 1
        %s5339 = scalar_select %p5338, %s25, 1
        %s5340 = smul.addr %s5339, 8
        %s5341 = scalar_lea.vmem %s5, %s5340
        %p5342 = scmp.lt.s32.totalorder %s25, 1
        %s5343 = scalar_select %p5342, %s25, 1
        %s5344 = smul.addr %s5343, 8
        %s5345 = scalar_lea.vmem %s6, %s5344
        // Predicated region
        $region45: #{tpu_custom_call.1} parent=35 // pred_check
          %p5346 = pneg %p132
        $region46: #{tpu_custom_call.1} parent=35 // pred_check_branch
          %5348 = sbr.rel (%p5346) target = $region48
        $region47: #{tpu_custom_call.1} parent=35 // pred_region
          %s5350 = ssub.s32 4096, 4096
          %5351 = vsyncadd %s5334, %s5350
          %s5352 = smul.addr %s25, 32
          %s5353 = smul.addr %s5352, 128
          %s5354 = scalar_lea.hbm %s4, %s5353
          %s5355 = sshll.u32 %s5337, 4
          %s5356 = int_to_ptr.vmem [resolvable:$true] %s5355
          %5361 = dma.vmem_to_hbm [thread:$0]  %s5356, 4096, %s5354, %s5334, 128, 128, 8
        $region48: #{tpu_custom_call.1} parent=35 // pred_fallthru
          _
        // Predicated region
        $region49: #{tpu_custom_call.1} parent=35 // pred_check
          %p5362 = pneg %p158
        $region50: #{tpu_custom_call.1} parent=35 // pred_check_branch
          %5364 = sbr.rel (%p5362) target = $region52
        $region51: #{tpu_custom_call.1} parent=35 // pred_region
          _
        $region52: #{tpu_custom_call.1} parent=35 // pred_fallthru
          _
        // Predicated region
        $region53: #{tpu_custom_call.1} parent=35 // pred_check
          %p5365 = pneg %p184
        $region54: #{tpu_custom_call.1} parent=35 // pred_check_branch
          %5367 = sbr.rel (%p5365) target = $region56
        $region55: #{tpu_custom_call.1} parent=35 // pred_region
          _
        $region56: #{tpu_custom_call.1} parent=35 // pred_fallthru
          _
      $region36: #{tpu_custom_call.1} parent=5 // pred_fallthru
        _
      %p5368 = scmp.le.s32.totalorder 2, %s20
      // Predicated region
      $region57: #{tpu_custom_call.1} parent=5 // pred_check
        %p5369 = pneg %p5368
      $region58: #{tpu_custom_call.1} parent=5 // pred_check_branch
        %5371 = sbr.rel (%p5369) target = $region60
      $region59: #{tpu_custom_call.1} parent=5 // pred_region
        %s5372 = ssub.s32 %s20, 2
        // Predicated region
        $region61: #{tpu_custom_call.1} parent=59 // pred_check
          %p5373 = pneg %p138
        $region62: #{tpu_custom_call.1} parent=59 // pred_check_branch
          %5375 = sbr.rel (%p5373) target = $region64
        $region63: #{tpu_custom_call.1} parent=59 // pred_region
          %s5376 = sand.u32 %s123, 1
          %s5377 = scalar_lea.sflag [#allocation4], %s5376
          %s5378 = sand.u32 %s123, 1
          %s5379 = smul.addr %s5378, 256
          %s5380 = scalar_lea.vmem [#allocation7], %s5379
          %5381 = dma.done %s5377, 4096
        $region64: #{tpu_custom_call.1} parent=59 // pred_fallthru
          _
        // Predicated region
        $region65: #{tpu_custom_call.1} parent=59 // pred_check
          %p5382 = pneg %p164
        $region66: #{tpu_custom_call.1} parent=59 // pred_check_branch
          %5384 = sbr.rel (%p5382) target = $region68
        $region67: #{tpu_custom_call.1} parent=59 // pred_region
          %p5385 = scmp.lt.s32.totalorder %s26, 1
          %s5386 = scalar_select %p5385, %s26, 1
          %s5387 = smul.addr %s5386, 8
          %s5388 = scalar_lea.vmem %s5, %s5387
        $region68: #{tpu_custom_call.1} parent=59 // pred_fallthru
          _
        // Predicated region
        $region69: #{tpu_custom_call.1} parent=59 // pred_check
          %p5389 = pneg %p190
        $region70: #{tpu_custom_call.1} parent=59 // pred_check_branch
          %5391 = sbr.rel (%p5389) target = $region72
        $region71: #{tpu_custom_call.1} parent=59 // pred_region
          %p5392 = scmp.lt.s32.totalorder %s26, 1
          %s5393 = scalar_select %p5392, %s26, 1
          %s5394 = smul.addr %s5393, 8
          %s5395 = scalar_lea.vmem %s6, %s5394
        $region72: #{tpu_custom_call.1} parent=59 // pred_fallthru
          _
      $region60: #{tpu_custom_call.1} parent=5 // pred_fallthru
        _
    $region6: #{tpu_custom_call.1} parent=1 // loop_footer
      %s24 = sadd.s32 1, %s20
    $region7: #{tpu_custom_call.1} parent=1 // loop_footer_branch
      %19 = sbr.rel target = $region3
    $region8: #{tpu_custom_call.1} parent=1 // loop_exit
      _
    %5396 = vsyncpa [#allocation3], 1
    %s5397 = scalar_lea.sflag [#allocation3], 1
    %5398 = vsyncpa %s5397, 1
    %5399 = vsyncpa [#allocation4], 1
    %s5400 = scalar_lea.sflag [#allocation4], 1
    %5401 = vsyncpa %s5400, 1
    %5402 = vsyncpa [#allocation5], 1
    %s5403 = scalar_lea.sflag [#allocation5], 1
    %5404 = vsyncpa %s5403, 1

</llo_original>
